<compile_context>
chip_gen: v5e
topology: v5e:2x2
jax: 0.10.0
libtpu: 0.0.40
codegen_flags: <defaults>
</compile_context>

<pallas_src>
import functools
import math

import jax
import jax.numpy as jnp
from jax.experimental import pallas as pl
from jax.experimental.pallas import tpu as pltpu


# ----------------------------- small math helpers ---------------------------

def _erf(x):
    # Abramowitz & Stegun 7.1.26 rational approximation (|err| < 1.5e-7):
    # matches PyTorch's exact-erf GELU to f32 precision with TPU-supported ops.
    a1, a2, a3, a4, a5 = 0.254829592, -0.284496736, 1.421413741, -1.453152027, 1.061405429
    p = 0.3275911
    ax = jnp.abs(x)
    t = 1.0 / (1.0 + p * ax)
    poly = ((((a5 * t + a4) * t + a3) * t + a2) * t + a1) * t
    y = 1.0 - poly * jnp.exp(-ax * ax)
    return jnp.where(x < 0.0, -y, y)


def _gelu(x):
    return 0.5 * x * (1.0 + _erf(x * (1.0 / math.sqrt(2.0))))


# --------------------------------- the kernel --------------------------------

def _fused_forward_kernel(*refs, num_heads, hidden_size, num_layers):
    (p1_ref, c1w_ref, c1b_ref, c2w_ref, c2b_ref,
     ca_wqkv_ref, ca_bqkv_ref, ca_wo_ref, ca_bo_ref) = refs[:9]
    lstm_refs = refs[9:9 + 3 * num_layers]
    (la_wqkv_ref, la_bqkv_ref, la_wo_ref, la_bo_ref,
     fc1w_ref, fc1b_ref, fc2w_ref, fc2b_ref, fc3w_ref, fc3b_ref,
     o_ref) = refs[9 + 3 * num_layers:]

    TB, L2, K1 = p1_ref.shape            # parity-major conv1 patches (2B, L2, 36)
    B = TB // 2
    C1 = c1w_ref.shape[1]                # 32
    C2 = c2w_ref.shape[1]                # 64
    H = hidden_size
    E = 2 * H

    # ------------- conv1 + ReLU : one (2B*L2, 36) x (36, 32) matmul -----------
    p1 = p1_ref[...].reshape(TB * L2, K1)
    h1 = jnp.maximum(
        jnp.dot(p1, c1w_ref[...], preferred_element_type=jnp.float32) + c1b_ref[...], 0.0)
    h1 = h1.reshape(TB, L2, C1)
    h1e = h1[0:B]                        # conv1 outputs at even time rows (B, L2, C1)
    h1o = h1[B:TB]                       # conv1 outputs at odd  time rows (B, L2, C1)

    # ------------- conv2 + ReLU as a 5-tap accumulation -----------------------
    # output position j reads padded rows 2j+k (k=0..4) == original rows 2j+k-2.
    zrow = jnp.zeros((B, 1, C1), jnp.float32)
    taps = [
        jnp.concatenate([zrow, h1e[:, :L2 - 1, :]], axis=1),   # k=0: rows 2j-2
        jnp.concatenate([zrow, h1o[:, :L2 - 1, :]], axis=1),   # k=1: rows 2j-1
        h1e,                                                    # k=2: rows 2j
        h1o,                                                    # k=3: rows 2j+1
        jnp.concatenate([h1e[:, 1:, :], zrow], axis=1),         # k=4: rows 2j+2
    ]
    acc2 = jnp.zeros((B * L2, C2), jnp.float32) + c2b_ref[...]
    for k in range(5):                                          # 5 accumulating MXU pushes
        acc2 = acc2 + jnp.dot(taps[k].reshape(B * L2, C1),
                              c2w_ref[k * C1:(k + 1) * C1, :],
                              preferred_element_type=jnp.float32)
    h = jnp.maximum(acc2, 0.0).reshape(B, L2, C2)

    # ------------- fused nn.MultiheadAttention (self-attn, eval) --------------
    def mha(x, wqkv, bqkv, wo, bo):
        S, embed = x.shape[1], x.shape[2]
        dh = embed // num_heads
        x2 = x.reshape(B * S, embed)
        qkv = jnp.dot(x2, wqkv, preferred_element_type=jnp.float32) + bqkv
        q, kk, v = qkv[:, :embed], qkv[:, embed:2 * embed], qkv[:, 2 * embed:]
        out = jnp.zeros((B * S, embed), jnp.float32) + bo
        for hd in range(num_heads):                             # static unroll over heads
            sl = slice(hd * dh, (hd + 1) * dh)
            qh = q[:, sl].reshape(B, S, dh)
            kh = kk[:, sl].reshape(B, S, dh)
            vh = v[:, sl].reshape(B, S, dh)
            s = jnp.einsum('bqd,bkd->bqk', qh, kh, preferred_element_type=jnp.float32)
            s = s - jnp.max(s, axis=-1, keepdims=True)
            p = jnp.exp(s)
            p = p / jnp.sum(p, axis=-1, keepdims=True)          # exact (matches PyTorch)
            oh = jnp.einsum('bqk,bkd->bqd', p, vh, preferred_element_type=jnp.float32)
            # per-head out-projection accumulated -> no head concat / extra VMEM slab
            out = out + jnp.dot(oh.reshape(B * S, dh), wo[sl, :],
                                preferred_element_type=jnp.float32)
        return out.reshape(B, S, embed)

    # ------------- one bidirectional LSTM layer -------------------------------
    def bilstm(x, wih, b, whh_bd):
        S, Din = x.shape[1], x.shape[2]
        xp = jnp.dot(x.reshape(B * S, Din), wih, preferred_element_type=jnp.float32) + b
        xp = xp.reshape(B, S, 8 * H)                            # [fwd gates | bwd gates]

        def cell(g, c):                                         # PyTorch gate order i,f,g,o
            i = jax.nn.sigmoid(g[:, 0:H])
            f = jax.nn.sigmoid(g[:, H:2 * H])
            gg = jnp.tanh(g[:, 2 * H:3 * H])
            o = jax.nn.sigmoid(g[:, 3 * H:4 * H])
            c_new = f * c + i * gg
            return o * jnp.tanh(c_new), c_new

        h_cat = jnp.zeros((B, 2 * H), jnp.float32)              # [h_fwd | h_bwd]
        c_f = jnp.zeros((B, H), jnp.float32)
        c_b = jnp.zeros((B, H), jnp.float32)
        hs_f = [None] * S
        hs_b = [None] * S
        for s in range(S):                                      # static unroll (S small)
            tf, tb = s, S - 1 - s
            # ONE block-diagonal (2H, 8H) recurrent matmul serves both directions
            g_all = jnp.dot(h_cat, whh_bd, preferred_element_type=jnp.float32)
            h_f, c_f = cell(xp[:, tf, 0:4 * H] + g_all[:, 0:4 * H], c_f)
            h_b, c_b = cell(xp[:, tb, 4 * H:8 * H] + g_all[:, 4 * H:8 * H], c_b)
            h_cat = jnp.concatenate([h_f, h_b], axis=-1)
            hs_f[tf] = h_f
            hs_b[tb] = h_b
        out_f = jnp.stack(hs_f, axis=1)                         # (B, S, H)
        out_b = jnp.stack(hs_b, axis=1)                         # (B, S, H)
        return jnp.concatenate([out_f, out_b], axis=-1)         # (B, S, 2H)

    # conv self-attention (conv_dropout = identity in eval)
    h = mha(h, ca_wqkv_ref[...], ca_bqkv_ref[...], ca_wo_ref[...], ca_bo_ref[...])
    # bidirectional multi-layer LSTM (inter-layer dropout = identity in eval)
    for l in range(num_layers):
        wih_ref, b_ref, whh_ref = lstm_refs[3 * l:3 * l + 3]
        h = bilstm(h, wih_ref[...], b_ref[...], whh_ref[...])
    # lstm self-attention
    h = mha(h, la_wqkv_ref[...], la_bqkv_ref[...], la_wo_ref[...], la_bo_ref[...])

    # ------------- head: mean over time + fc1(GELU) + fc2(GELU) + fc3 ---------
    ctx = jnp.mean(h, axis=1)                                   # (B, E)
    z = _gelu(jnp.dot(ctx, fc1w_ref[...], preferred_element_type=jnp.float32) + fc1b_ref[...])
    z = _gelu(jnp.dot(z, fc2w_ref[...], preferred_element_type=jnp.float32) + fc2b_ref[...])
    o_ref[...] = jnp.dot(z, fc3w_ref[...], preferred_element_type=jnp.float32) + fc3b_ref[...]


# ----------------------------- parameter handling ----------------------------

def init_params(key, hidden_size, num_layers, output_size, num_heads):
    """Random parameters in PyTorch-native shapes."""
    params = {}

    def nxt():
        nonlocal key
        key, sub = jax.random.split(key)
        return sub

    def w(shape, fan_in):
        return jax.random.uniform(nxt(), shape, jnp.float32, -1.0, 1.0) / math.sqrt(fan_in)

    H = hidden_size
    E = 2 * H
    params["conv1_w"] = w((32, 6, 6), 6 * 6)
    params["conv1_b"] = w((32,), 6 * 6)
    params["conv2_w"] = w((64, 32, 5), 32 * 5)
    params["conv2_b"] = w((64,), 32 * 5)
    params["ca_in_w"] = w((3 * 64, 64), 64)
    params["ca_in_b"] = w((3 * 64,), 64)
    params["ca_out_w"] = w((64, 64), 64)
    params["ca_out_b"] = w((64,), 64)
    for l in range(num_layers):
        din = 64 if l == 0 else 2 * H
        for d in range(2):
            params[f"lstm_w_ih_l{l}_d{d}"] = w((4 * H, din), H)
            params[f"lstm_w_hh_l{l}_d{d}"] = w((4 * H, H), H)
            params[f"lstm_b_ih_l{l}_d{d}"] = w((4 * H,), H)
            params[f"lstm_b_hh_l{l}_d{d}"] = w((4 * H,), H)
    params["la_in_w"] = w((3 * E, E), E)
    params["la_in_b"] = w((3 * E,), E)
    params["la_out_w"] = w((E, E), E)
    params["la_out_b"] = w((E,), E)
    params["fc1_w"] = w((E, E), E)
    params["fc1_b"] = w((E,), E)
    params["fc2_w"] = w((E, E), E)
    params["fc2_b"] = w((E,), E)
    params["fc3_w"] = w((output_size, E), E)
    params["fc3_b"] = w((output_size,), E)
    return params


def prepare_params(p, hidden_size, num_layers, num_heads):
    """One-time transform of PyTorch-layout params into kernel-friendly layout:
    pre-transposed (K, N) weights, reordered conv columns, fused LSTM input
    projections, block-diagonal recurrent weights, combined LSTM biases, and
    the attention 1/sqrt(dh) scale folded into the Q projection."""
    H = hidden_size
    E = 2 * H
    kp = {}

    # conv weights: (Cout, Cin, k) -> rows ordered (k-major, cin-minor), shape (K, N)
    kp["conv1_w"] = jnp.transpose(p["conv1_w"], (2, 1, 0)).reshape(6 * 6, 32)
    kp["conv1_b"] = p["conv1_b"].reshape(1, 32)
    kp["conv2_w"] = jnp.transpose(p["conv2_w"], (2, 1, 0)).reshape(5 * 32, 64)  # tap-major rows
    kp["conv2_b"] = p["conv2_b"].reshape(1, 64)

    def mha_prep(prefix, in_w, in_b, out_w, out_b, embed):
        dh = embed // num_heads
        scale = 1.0 / math.sqrt(dh)
        in_w = in_w.at[:embed].multiply(scale)               # fold 1/sqrt(dh) into Q
        in_b = in_b.at[:embed].multiply(scale)
        kp[prefix + "_wqkv"] = in_w.T                        # (E, 3E)
        kp[prefix + "_bqkv"] = in_b.reshape(1, 3 * embed)
        kp[prefix + "_wo"] = out_w.T                         # (E, E)
        kp[prefix + "_bo"] = out_b.reshape(1, embed)

    mha_prep("ca", p["ca_in_w"], p["ca_in_b"], p["ca_out_w"], p["ca_out_b"], 64)
    mha_prep("la", p["la_in_w"], p["la_in_b"], p["la_out_w"], p["la_out_b"], E)

    for l in range(num_layers):
        kp[f"lstm_wih_l{l}"] = jnp.concatenate(
            [p[f"lstm_w_ih_l{l}_d0"].T, p[f"lstm_w_ih_l{l}_d1"].T], axis=1)   # (Din, 8H)
        b = jnp.concatenate(
            [p[f"lstm_b_ih_l{l}_d0"] + p[f"lstm_b_hh_l{l}_d0"],
             p[f"lstm_b_ih_l{l}_d1"] + p[f"lstm_b_hh_l{l}_d1"]], axis=0)
        kp[f"lstm_b_l{l}"] = b.reshape(1, 8 * H)
        whh_f = p[f"lstm_w_hh_l{l}_d0"].T                                     # (H, 4H)
        whh_b = p[f"lstm_w_hh_l{l}_d1"].T                                     # (H, 4H)
        z = jnp.zeros((H, 4 * H), jnp.float32)
        kp[f"lstm_whh_l{l}"] = jnp.concatenate(                               # (2H, 8H) block-diag
            [jnp.concatenate([whh_f, z], axis=1),
             jnp.concatenate([z, whh_b], axis=1)], axis=0)

    kp["fc1_w"] = p["fc1_w"].T
    kp["fc1_b"] = p["fc1_b"].reshape(1, -1)
    kp["fc2_w"] = p["fc2_w"].T
    kp["fc2_b"] = p["fc2_b"].reshape(1, -1)
    kp["fc3_w"] = p["fc3_w"].T
    kp["fc3_b"] = p["fc3_b"].reshape(1, -1)
    return kp


# --------------------------------- forward -----------------------------------

def _fullspec(shape):
    n = len(shape)
    return pl.BlockSpec(tuple(shape), lambda i, _n=n: (0,) * _n)


def model_forward(kp, x, seq_lens, *, hidden_size, num_layers, num_heads):
    del seq_lens  # unused by the reference forward() (no key-padding mask)
    B, L, Cin = x.shape
    L1 = (L - 6) // 6 + 1                 # conv1: k=6, stride=6, pad=0
    L2 = (L1 + 2 * 2 - 5) // 2 + 1        # conv2: k=5, stride=2, pad=2
    O = kp["fc3_w"].shape[1]

    # conv1 "im2col" is a pure reshape (k == stride, no padding); the even/odd
    # time-row deinterleave for the in-kernel 5-tap conv2 is pure XLA layout
    # plumbing done once here (parity-major along the leading axis: (2B, L2, 36)).
    p1 = x.reshape(B, L1, Cin * 6)
    if L1 % 2:                            # pad one zero row so the parity split is exact
        p1 = jnp.concatenate([p1, jnp.zeros((B, 1, Cin * 6), p1.dtype)], axis=1)
    p1_pm = jnp.concatenate([p1[:, 0::2, :], p1[:, 1::2, :]], axis=0)

    args = [p1_pm,
            kp["conv1_w"], kp["conv1_b"], kp["conv2_w"], kp["conv2_b"],
            kp["ca_wqkv"], kp["ca_bqkv"], kp["ca_wo"], kp["ca_bo"]]
    for l in range(num_layers):
        args += [kp[f"lstm_wih_l{l}"], kp[f"lstm_b_l{l}"], kp[f"lstm_whh_l{l}"]]
    args += [kp["la_wqkv"], kp["la_bqkv"], kp["la_wo"], kp["la_bo"],
             kp["fc1_w"], kp["fc1_b"], kp["fc2_w"], kp["fc2_b"],
             kp["fc3_w"], kp["fc3_b"]]

    kernel = functools.partial(_fused_forward_kernel, num_heads=num_heads,
                               hidden_size=hidden_size, num_layers=num_layers)
    return pl.pallas_call(
        kernel,
        out_shape=jax.ShapeDtypeStruct((B, O), jnp.float32),
        grid=(1,),
        in_specs=[_fullspec(a.shape) for a in args],
        out_specs=_fullspec((B, O)),
        compiler_params=pltpu.CompilerParams(dimension_semantics=("arbitrary",)),
    )(*args)


if __name__ == "__main__":
    hidden_size, num_layers, output_size, num_heads = 32, 2, 5, 4
    B, L = 2, 96  # L divisible by 6 -> conv1 len 16 -> conv2 len 8

    key = jax.random.PRNGKey(0)
    key, kx = jax.random.split(key)
    x = jax.random.normal(kx, (B, L, 6), dtype=jnp.float32)
    seq_lens = jnp.full((B,), L, dtype=jnp.int32)

    params = init_params(key, hidden_size, num_layers, output_size, num_heads)
    kparams = prepare_params(params, hidden_size, num_layers, num_heads)

    fwd = jax.jit(functools.partial(model_forward, hidden_size=hidden_size,
                                    num_layers=num_layers, num_heads=num_heads))
    out = jax.block_until_ready(fwd(kparams, x, seq_lens))
    assert out.shape == (B, output_size) and out.dtype == jnp.float32
    print("KERNEL_OK")
</pallas_src>

<mosaic_0001>
module attributes {stable_mosaic.version = 11 : i64} {
  func.func @_fused_forward_kernel(%arg0: i32, %arg1: memref<4x8x36xf32, #tpu.memory_space<vmem>>, %arg2: memref<36x32xf32, #tpu.memory_space<vmem>>, %arg3: memref<1x32xf32, #tpu.memory_space<vmem>>, %arg4: memref<160x64xf32, #tpu.memory_space<vmem>>, %arg5: memref<1x64xf32, #tpu.memory_space<vmem>>, %arg6: memref<64x192xf32, #tpu.memory_space<vmem>>, %arg7: memref<1x192xf32, #tpu.memory_space<vmem>>, %arg8: memref<64x64xf32, #tpu.memory_space<vmem>>, %arg9: memref<1x64xf32, #tpu.memory_space<vmem>>, %arg10: memref<64x256xf32, #tpu.memory_space<vmem>>, %arg11: memref<1x256xf32, #tpu.memory_space<vmem>>, %arg12: memref<64x256xf32, #tpu.memory_space<vmem>>, %arg13: memref<64x256xf32, #tpu.memory_space<vmem>>, %arg14: memref<1x256xf32, #tpu.memory_space<vmem>>, %arg15: memref<64x256xf32, #tpu.memory_space<vmem>>, %arg16: memref<64x192xf32, #tpu.memory_space<vmem>>, %arg17: memref<1x192xf32, #tpu.memory_space<vmem>>, %arg18: memref<64x64xf32, #tpu.memory_space<vmem>>, %arg19: memref<1x64xf32, #tpu.memory_space<vmem>>, %arg20: memref<64x64xf32, #tpu.memory_space<vmem>>, %arg21: memref<1x64xf32, #tpu.memory_space<vmem>>, %arg22: memref<64x64xf32, #tpu.memory_space<vmem>>, %arg23: memref<1x64xf32, #tpu.memory_space<vmem>>, %arg24: memref<64x5xf32, #tpu.memory_space<vmem>>, %arg25: memref<1x5xf32, #tpu.memory_space<vmem>>, %arg26: memref<2x5xf32, #tpu.memory_space<vmem>>) attributes {dimension_semantics = [#tpu.dimension_semantics<arbitrary>], iteration_bounds = array<i64: 1>, scalar_prefetch = 0 : i64, scratch_operands = 0 : i64, tpu.core_type = #tpu.core_type<tc>, window_params = [{pipeline_mode = #tpu.pipeline_mode<synchronous>, transform_indices = @transform_0, window_bounds = array<i64: 4, 8, 36>}, {pipeline_mode = #tpu.pipeline_mode<synchronous>, transform_indices = @transform_1, window_bounds = array<i64: 36, 32>}, {pipeline_mode = #tpu.pipeline_mode<synchronous>, transform_indices = @transform_2, window_bounds = array<i64: 1, 32>}, {pipeline_mode = #tpu.pipeline_mode<synchronous>, transform_indices = @transform_3, window_bounds = array<i64: 160, 64>}, {pipeline_mode = #tpu.pipeline_mode<synchronous>, transform_indices = @transform_4, window_bounds = array<i64: 1, 64>}, {pipeline_mode = #tpu.pipeline_mode<synchronous>, transform_indices = @transform_5, window_bounds = array<i64: 64, 192>}, {pipeline_mode = #tpu.pipeline_mode<synchronous>, transform_indices = @transform_6, window_bounds = array<i64: 1, 192>}, {pipeline_mode = #tpu.pipeline_mode<synchronous>, transform_indices = @transform_7, window_bounds = array<i64: 64, 64>}, {pipeline_mode = #tpu.pipeline_mode<synchronous>, transform_indices = @transform_8, window_bounds = array<i64: 1, 64>}, {pipeline_mode = #tpu.pipeline_mode<synchronous>, transform_indices = @transform_9, window_bounds = array<i64: 64, 256>}, {pipeline_mode = #tpu.pipeline_mode<synchronous>, transform_indices = @transform_10, window_bounds = array<i64: 1, 256>}, {pipeline_mode = #tpu.pipeline_mode<synchronous>, transform_indices = @transform_11, window_bounds = array<i64: 64, 256>}, {pipeline_mode = #tpu.pipeline_mode<synchronous>, transform_indices = @transform_12, window_bounds = array<i64: 64, 256>}, {pipeline_mode = #tpu.pipeline_mode<synchronous>, transform_indices = @transform_13, window_bounds = array<i64: 1, 256>}, {pipeline_mode = #tpu.pipeline_mode<synchronous>, transform_indices = @transform_14, window_bounds = array<i64: 64, 256>}, {pipeline_mode = #tpu.pipeline_mode<synchronous>, transform_indices = @transform_15, window_bounds = array<i64: 64, 192>}, {pipeline_mode = #tpu.pipeline_mode<synchronous>, transform_indices = @transform_16, window_bounds = array<i64: 1, 192>}, {pipeline_mode = #tpu.pipeline_mode<synchronous>, transform_indices = @transform_17, window_bounds = array<i64: 64, 64>}, {pipeline_mode = #tpu.pipeline_mode<synchronous>, transform_indices = @transform_18, window_bounds = array<i64: 1, 64>}, {pipeline_mode = #tpu.pipeline_mode<synchronous>, transform_indices = @transform_19, window_bounds = array<i64: 64, 64>}, {pipeline_mode = #tpu.pipeline_mode<synchronous>, transform_indices = @transform_20, window_bounds = array<i64: 1, 64>}, {pipeline_mode = #tpu.pipeline_mode<synchronous>, transform_indices = @transform_21, window_bounds = array<i64: 64, 64>}, {pipeline_mode = #tpu.pipeline_mode<synchronous>, transform_indices = @transform_22, window_bounds = array<i64: 1, 64>}, {pipeline_mode = #tpu.pipeline_mode<synchronous>, transform_indices = @transform_23, window_bounds = array<i64: 64, 5>}, {pipeline_mode = #tpu.pipeline_mode<synchronous>, transform_indices = @transform_24, window_bounds = array<i64: 1, 5>}, {pipeline_mode = #tpu.pipeline_mode<synchronous>, transform_indices = @transform_25, window_bounds = array<i64: 2, 5>}]} {
    %c0 = arith.constant 0 : index
    %c0_0 = arith.constant 0 : index
    %c0_1 = arith.constant 0 : index
    %0 = vector.load %arg1[%c0, %c0_0, %c0_1] : memref<4x8x36xf32, #tpu.memory_space<vmem>>, vector<4x8x36xf32>
    %1 = vector.shape_cast %0 : vector<4x8x36xf32> to vector<32x36xf32>
    %c0_2 = arith.constant 0 : index
    %c0_3 = arith.constant 0 : index
    %2 = vector.load %arg2[%c0_2, %c0_3] : memref<36x32xf32, #tpu.memory_space<vmem>>, vector<36x32xf32>
    %cst = arith.constant dense<0.000000e+00> : vector<32x32xf32>
    %3 = tpu.matmul %1, %2, %cst {dimension_numbers = #tpu.dot_dimension_numbers<[1], [0], [0], [1], [0, 0, 1, 1], [], []>} : vector<32x36xf32>, vector<36x32xf32>, vector<32x32xf32> -> vector<32x32xf32>
    %c0_4 = arith.constant 0 : index
    %c0_5 = arith.constant 0 : index
    %4 = vector.load %arg3[%c0_4, %c0_5] : memref<1x32xf32, #tpu.memory_space<vmem>>, vector<1x32xf32>
    %5 = vector.broadcast %4 : vector<1x32xf32> to vector<32x32xf32>
    %6 = arith.addf %3, %5 : vector<32x32xf32>
    %cst_6 = arith.constant 0.000000e+00 : f32
    %7 = vector.broadcast %cst_6 : f32 to vector<32x32xf32>
    %8 = arith.maximumf %6, %7 : vector<32x32xf32>
    %9 = vector.shape_cast %8 : vector<32x32xf32> to vector<4x8x32xf32>
    %10 = vector.extract_strided_slice %9 {offsets = [0, 0, 0], sizes = [2, 8, 32], strides = [1, 1, 1]} : vector<4x8x32xf32> to vector<2x8x32xf32>
    %11 = vector.extract_strided_slice %9 {offsets = [2, 0, 0], sizes = [2, 8, 32], strides = [1, 1, 1]} : vector<4x8x32xf32> to vector<2x8x32xf32>
    %cst_7 = arith.constant 0.000000e+00 : f32
    %12 = vector.broadcast %cst_7 : f32 to vector<2x1x32xf32>
    %13 = vector.extract_strided_slice %10 {offsets = [0, 0, 0], sizes = [2, 7, 32], strides = [1, 1, 1]} : vector<2x8x32xf32> to vector<2x7x32xf32>
    %14 = tpu.concatenate %12, %13 in 1 : vector<2x1x32xf32>, vector<2x7x32xf32> -> vector<2x8x32xf32>
    %15 = vector.extract_strided_slice %11 {offsets = [0, 0, 0], sizes = [2, 7, 32], strides = [1, 1, 1]} : vector<2x8x32xf32> to vector<2x7x32xf32>
    %16 = tpu.concatenate %12, %15 in 1 : vector<2x1x32xf32>, vector<2x7x32xf32> -> vector<2x8x32xf32>
    %17 = vector.extract_strided_slice %10 {offsets = [0, 1, 0], sizes = [2, 7, 32], strides = [1, 1, 1]} : vector<2x8x32xf32> to vector<2x7x32xf32>
    %18 = tpu.concatenate %17, %12 in 1 : vector<2x7x32xf32>, vector<2x1x32xf32> -> vector<2x8x32xf32>
    %cst_8 = arith.constant 0.000000e+00 : f32
    %19 = vector.broadcast %cst_8 : f32 to vector<16x64xf32>
    %c0_9 = arith.constant 0 : index
    %c0_10 = arith.constant 0 : index
    %20 = vector.load %arg5[%c0_9, %c0_10] : memref<1x64xf32, #tpu.memory_space<vmem>>, vector<1x64xf32>
    %21 = vector.broadcast %20 : vector<1x64xf32> to vector<16x64xf32>
    %22 = arith.addf %19, %21 : vector<16x64xf32>
    %23 = vector.shape_cast %14 : vector<2x8x32xf32> to vector<16x32xf32>
    %c0_11 = arith.constant 0 : index
    %c0_12 = arith.constant 0 : index
    %24 = vector.load %arg4[%c0_11, %c0_12] : memref<160x64xf32, #tpu.memory_space<vmem>>, vector<32x64xf32>
    %cst_13 = arith.constant dense<0.000000e+00> : vector<16x64xf32>
    %25 = tpu.matmul %23, %24, %cst_13 {dimension_numbers = #tpu.dot_dimension_numbers<[1], [0], [0], [1], [0, 0, 1, 1], [], []>} : vector<16x32xf32>, vector<32x64xf32>, vector<16x64xf32> -> vector<16x64xf32>
    %26 = arith.addf %22, %25 : vector<16x64xf32>
    %27 = vector.shape_cast %16 : vector<2x8x32xf32> to vector<16x32xf32>
    %c32 = arith.constant 32 : index
    %c0_14 = arith.constant 0 : index
    %28 = vector.load %arg4[%c32, %c0_14] : memref<160x64xf32, #tpu.memory_space<vmem>>, vector<32x64xf32>
    %cst_15 = arith.constant dense<0.000000e+00> : vector<16x64xf32>
    %29 = tpu.matmul %27, %28, %cst_15 {dimension_numbers = #tpu.dot_dimension_numbers<[1], [0], [0], [1], [0, 0, 1, 1], [], []>} : vector<16x32xf32>, vector<32x64xf32>, vector<16x64xf32> -> vector<16x64xf32>
    %30 = arith.addf %26, %29 : vector<16x64xf32>
    %31 = vector.shape_cast %10 : vector<2x8x32xf32> to vector<16x32xf32>
    %c64 = arith.constant 64 : index
    %c0_16 = arith.constant 0 : index
    %32 = vector.load %arg4[%c64, %c0_16] : memref<160x64xf32, #tpu.memory_space<vmem>>, vector<32x64xf32>
    %cst_17 = arith.constant dense<0.000000e+00> : vector<16x64xf32>
    %33 = tpu.matmul %31, %32, %cst_17 {dimension_numbers = #tpu.dot_dimension_numbers<[1], [0], [0], [1], [0, 0, 1, 1], [], []>} : vector<16x32xf32>, vector<32x64xf32>, vector<16x64xf32> -> vector<16x64xf32>
    %34 = arith.addf %30, %33 : vector<16x64xf32>
    %35 = vector.shape_cast %11 : vector<2x8x32xf32> to vector<16x32xf32>
    %c96 = arith.constant 96 : index
    %c0_18 = arith.constant 0 : index
    %36 = vector.load %arg4[%c96, %c0_18] : memref<160x64xf32, #tpu.memory_space<vmem>>, vector<32x64xf32>
    %cst_19 = arith.constant dense<0.000000e+00> : vector<16x64xf32>
    %37 = tpu.matmul %35, %36, %cst_19 {dimension_numbers = #tpu.dot_dimension_numbers<[1], [0], [0], [1], [0, 0, 1, 1], [], []>} : vector<16x32xf32>, vector<32x64xf32>, vector<16x64xf32> -> vector<16x64xf32>
    %38 = arith.addf %34, %37 : vector<16x64xf32>
    %39 = vector.shape_cast %18 : vector<2x8x32xf32> to vector<16x32xf32>
    %c128 = arith.constant 128 : index
    %c0_20 = arith.constant 0 : index
    %40 = vector.load %arg4[%c128, %c0_20] : memref<160x64xf32, #tpu.memory_space<vmem>>, vector<32x64xf32>
    %cst_21 = arith.constant dense<0.000000e+00> : vector<16x64xf32>
    %41 = tpu.matmul %39, %40, %cst_21 {dimension_numbers = #tpu.dot_dimension_numbers<[1], [0], [0], [1], [0, 0, 1, 1], [], []>} : vector<16x32xf32>, vector<32x64xf32>, vector<16x64xf32> -> vector<16x64xf32>
    %42 = arith.addf %38, %41 : vector<16x64xf32>
    %cst_22 = arith.constant 0.000000e+00 : f32
    %43 = vector.broadcast %cst_22 : f32 to vector<16x64xf32>
    %44 = arith.maximumf %42, %43 : vector<16x64xf32>
    %45 = vector.shape_cast %44 : vector<16x64xf32> to vector<2x8x64xf32>
    %c0_23 = arith.constant 0 : index
    %c0_24 = arith.constant 0 : index
    %46 = vector.load %arg6[%c0_23, %c0_24] : memref<64x192xf32, #tpu.memory_space<vmem>>, vector<64x192xf32>
    %c0_25 = arith.constant 0 : index
    %c0_26 = arith.constant 0 : index
    %47 = vector.load %arg7[%c0_25, %c0_26] : memref<1x192xf32, #tpu.memory_space<vmem>>, vector<1x192xf32>
    %c0_27 = arith.constant 0 : index
    %c0_28 = arith.constant 0 : index
    %48 = vector.load %arg8[%c0_27, %c0_28] : memref<64x64xf32, #tpu.memory_space<vmem>>, vector<64x64xf32>
    %c0_29 = arith.constant 0 : index
    %c0_30 = arith.constant 0 : index
    %49 = vector.load %arg9[%c0_29, %c0_30] : memref<1x64xf32, #tpu.memory_space<vmem>>, vector<1x64xf32>
    %50 = vector.shape_cast %45 : vector<2x8x64xf32> to vector<16x64xf32>
    %cst_31 = arith.constant dense<0.000000e+00> : vector<16x192xf32>
    %51 = tpu.matmul %50, %46, %cst_31 {dimension_numbers = #tpu.dot_dimension_numbers<[1], [0], [0], [1], [0, 0, 1, 1], [], []>} : vector<16x64xf32>, vector<64x192xf32>, vector<16x192xf32> -> vector<16x192xf32>
    %52 = vector.broadcast %47 : vector<1x192xf32> to vector<16x192xf32>
    %53 = arith.addf %51, %52 : vector<16x192xf32>
    %54 = vector.extract_strided_slice %53 {offsets = [0, 0], sizes = [16, 64], strides = [1, 1]} : vector<16x192xf32> to vector<16x64xf32>
    %55 = vector.extract_strided_slice %53 {offsets = [0, 64], sizes = [16, 64], strides = [1, 1]} : vector<16x192xf32> to vector<16x64xf32>
    %56 = vector.extract_strided_slice %53 {offsets = [0, 128], sizes = [16, 64], strides = [1, 1]} : vector<16x192xf32> to vector<16x64xf32>
    %cst_32 = arith.constant 0.000000e+00 : f32
    %57 = vector.broadcast %cst_32 : f32 to vector<16x64xf32>
    %58 = vector.broadcast %49 : vector<1x64xf32> to vector<16x64xf32>
    %59 = arith.addf %57, %58 : vector<16x64xf32>
    %60 = vector.extract_strided_slice %54 {offsets = [0, 0], sizes = [16, 16], strides = [1, 1]} : vector<16x64xf32> to vector<16x16xf32>
    %61 = vector.shape_cast %60 : vector<16x16xf32> to vector<2x8x16xf32>
    %62 = vector.extract_strided_slice %55 {offsets = [0, 0], sizes = [16, 16], strides = [1, 1]} : vector<16x64xf32> to vector<16x16xf32>
    %63 = vector.shape_cast %62 : vector<16x16xf32> to vector<2x8x16xf32>
    %64 = vector.extract_strided_slice %56 {offsets = [0, 0], sizes = [16, 16], strides = [1, 1]} : vector<16x64xf32> to vector<16x16xf32>
    %65 = vector.shape_cast %64 : vector<16x16xf32> to vector<2x8x16xf32>
    "tpu.trace_start"() <{level = 10 : i32, message = "bqd,bkd->bqk"}> : () -> ()
    %cst_33 = arith.constant dense<0.000000e+00> : vector<2x8x8xf32>
    %66 = tpu.matmul %61, %63, %cst_33 {dimension_numbers = #tpu.dot_dimension_numbers<[2], [2], [1], [1], [0, 0, 0, 1, 1, 1], [0], [0]>} : vector<2x8x16xf32>, vector<2x8x16xf32>, vector<2x8x8xf32> -> vector<2x8x8xf32>
    "tpu.trace_stop"() : () -> ()
    %cst_34 = arith.constant dense<0xFF800000> : vector<2x8xf32>
    %67 = vector.multi_reduction <maximumf>, %66, %cst_34 [2] : vector<2x8x8xf32> to vector<2x8xf32>
    %68 = vector.shape_cast %67 : vector<2x8xf32> to vector<2x8x1xf32>
    %69 = vector.broadcast %68 : vector<2x8x1xf32> to vector<2x8x8xf32>
    %70 = arith.subf %66, %69 : vector<2x8x8xf32>
    %71 = math.exp %70 : vector<2x8x8xf32>
    %cst_35 = arith.constant dense<0.000000e+00> : vector<2x8xf32>
    %72 = vector.multi_reduction <add>, %71, %cst_35 [2] : vector<2x8x8xf32> to vector<2x8xf32>
    %73 = vector.shape_cast %72 : vector<2x8xf32> to vector<2x8x1xf32>
    %74 = vector.broadcast %73 : vector<2x8x1xf32> to vector<2x8x8xf32>
    %75 = arith.divf %71, %74 : vector<2x8x8xf32>
    "tpu.trace_start"() <{level = 10 : i32, message = "bqk,bkd->bqd"}> : () -> ()
    %cst_36 = arith.constant dense<0.000000e+00> : vector<2x8x16xf32>
    %76 = tpu.matmul %75, %65, %cst_36 {dimension_numbers = #tpu.dot_dimension_numbers<[2], [1], [1], [2], [0, 0, 0, 1, 1, 2], [0], [0]>} : vector<2x8x8xf32>, vector<2x8x16xf32>, vector<2x8x16xf32> -> vector<2x8x16xf32>
    "tpu.trace_stop"() : () -> ()
    %77 = vector.shape_cast %76 : vector<2x8x16xf32> to vector<16x16xf32>
    %78 = vector.extract_strided_slice %48 {offsets = [0, 0], sizes = [16, 64], strides = [1, 1]} : vector<64x64xf32> to vector<16x64xf32>
    %cst_37 = arith.constant dense<0.000000e+00> : vector<16x64xf32>
    %79 = tpu.matmul %77, %78, %cst_37 {dimension_numbers = #tpu.dot_dimension_numbers<[1], [0], [0], [1], [0, 0, 1, 1], [], []>} : vector<16x16xf32>, vector<16x64xf32>, vector<16x64xf32> -> vector<16x64xf32>
    %80 = arith.addf %59, %79 : vector<16x64xf32>
    %81 = vector.extract_strided_slice %54 {offsets = [0, 16], sizes = [16, 16], strides = [1, 1]} : vector<16x64xf32> to vector<16x16xf32>
    %82 = vector.shape_cast %81 : vector<16x16xf32> to vector<2x8x16xf32>
    %83 = vector.extract_strided_slice %55 {offsets = [0, 16], sizes = [16, 16], strides = [1, 1]} : vector<16x64xf32> to vector<16x16xf32>
    %84 = vector.shape_cast %83 : vector<16x16xf32> to vector<2x8x16xf32>
    %85 = vector.extract_strided_slice %56 {offsets = [0, 16], sizes = [16, 16], strides = [1, 1]} : vector<16x64xf32> to vector<16x16xf32>
    %86 = vector.shape_cast %85 : vector<16x16xf32> to vector<2x8x16xf32>
    "tpu.trace_start"() <{level = 10 : i32, message = "bqd,bkd->bqk"}> : () -> ()
    %cst_38 = arith.constant dense<0.000000e+00> : vector<2x8x8xf32>
    %87 = tpu.matmul %82, %84, %cst_38 {dimension_numbers = #tpu.dot_dimension_numbers<[2], [2], [1], [1], [0, 0, 0, 1, 1, 1], [0], [0]>} : vector<2x8x16xf32>, vector<2x8x16xf32>, vector<2x8x8xf32> -> vector<2x8x8xf32>
    "tpu.trace_stop"() : () -> ()
    %cst_39 = arith.constant dense<0xFF800000> : vector<2x8xf32>
    %88 = vector.multi_reduction <maximumf>, %87, %cst_39 [2] : vector<2x8x8xf32> to vector<2x8xf32>
    %89 = vector.shape_cast %88 : vector<2x8xf32> to vector<2x8x1xf32>
    %90 = vector.broadcast %89 : vector<2x8x1xf32> to vector<2x8x8xf32>
    %91 = arith.subf %87, %90 : vector<2x8x8xf32>
    %92 = math.exp %91 : vector<2x8x8xf32>
    %cst_40 = arith.constant dense<0.000000e+00> : vector<2x8xf32>
    %93 = vector.multi_reduction <add>, %92, %cst_40 [2] : vector<2x8x8xf32> to vector<2x8xf32>
    %94 = vector.shape_cast %93 : vector<2x8xf32> to vector<2x8x1xf32>
    %95 = vector.broadcast %94 : vector<2x8x1xf32> to vector<2x8x8xf32>
    %96 = arith.divf %92, %95 : vector<2x8x8xf32>
    "tpu.trace_start"() <{level = 10 : i32, message = "bqk,bkd->bqd"}> : () -> ()
    %cst_41 = arith.constant dense<0.000000e+00> : vector<2x8x16xf32>
    %97 = tpu.matmul %96, %86, %cst_41 {dimension_numbers = #tpu.dot_dimension_numbers<[2], [1], [1], [2], [0, 0, 0, 1, 1, 2], [0], [0]>} : vector<2x8x8xf32>, vector<2x8x16xf32>, vector<2x8x16xf32> -> vector<2x8x16xf32>
    "tpu.trace_stop"() : () -> ()
    %98 = vector.shape_cast %97 : vector<2x8x16xf32> to vector<16x16xf32>
    %99 = vector.extract_strided_slice %48 {offsets = [16, 0], sizes = [16, 64], strides = [1, 1]} : vector<64x64xf32> to vector<16x64xf32>
    %cst_42 = arith.constant dense<0.000000e+00> : vector<16x64xf32>
    %100 = tpu.matmul %98, %99, %cst_42 {dimension_numbers = #tpu.dot_dimension_numbers<[1], [0], [0], [1], [0, 0, 1, 1], [], []>} : vector<16x16xf32>, vector<16x64xf32>, vector<16x64xf32> -> vector<16x64xf32>
    %101 = arith.addf %80, %100 : vector<16x64xf32>
    %102 = vector.extract_strided_slice %54 {offsets = [0, 32], sizes = [16, 16], strides = [1, 1]} : vector<16x64xf32> to vector<16x16xf32>
    %103 = vector.shape_cast %102 : vector<16x16xf32> to vector<2x8x16xf32>
    %104 = vector.extract_strided_slice %55 {offsets = [0, 32], sizes = [16, 16], strides = [1, 1]} : vector<16x64xf32> to vector<16x16xf32>
    %105 = vector.shape_cast %104 : vector<16x16xf32> to vector<2x8x16xf32>
    %106 = vector.extract_strided_slice %56 {offsets = [0, 32], sizes = [16, 16], strides = [1, 1]} : vector<16x64xf32> to vector<16x16xf32>
    %107 = vector.shape_cast %106 : vector<16x16xf32> to vector<2x8x16xf32>
    "tpu.trace_start"() <{level = 10 : i32, message = "bqd,bkd->bqk"}> : () -> ()
    %cst_43 = arith.constant dense<0.000000e+00> : vector<2x8x8xf32>
    %108 = tpu.matmul %103, %105, %cst_43 {dimension_numbers = #tpu.dot_dimension_numbers<[2], [2], [1], [1], [0, 0, 0, 1, 1, 1], [0], [0]>} : vector<2x8x16xf32>, vector<2x8x16xf32>, vector<2x8x8xf32> -> vector<2x8x8xf32>
    "tpu.trace_stop"() : () -> ()
    %cst_44 = arith.constant dense<0xFF800000> : vector<2x8xf32>
    %109 = vector.multi_reduction <maximumf>, %108, %cst_44 [2] : vector<2x8x8xf32> to vector<2x8xf32>
    %110 = vector.shape_cast %109 : vector<2x8xf32> to vector<2x8x1xf32>
    %111 = vector.broadcast %110 : vector<2x8x1xf32> to vector<2x8x8xf32>
    %112 = arith.subf %108, %111 : vector<2x8x8xf32>
    %113 = math.exp %112 : vector<2x8x8xf32>
    %cst_45 = arith.constant dense<0.000000e+00> : vector<2x8xf32>
    %114 = vector.multi_reduction <add>, %113, %cst_45 [2] : vector<2x8x8xf32> to vector<2x8xf32>
    %115 = vector.shape_cast %114 : vector<2x8xf32> to vector<2x8x1xf32>
    %116 = vector.broadcast %115 : vector<2x8x1xf32> to vector<2x8x8xf32>
    %117 = arith.divf %113, %116 : vector<2x8x8xf32>
    "tpu.trace_start"() <{level = 10 : i32, message = "bqk,bkd->bqd"}> : () -> ()
    %cst_46 = arith.constant dense<0.000000e+00> : vector<2x8x16xf32>
    %118 = tpu.matmul %117, %107, %cst_46 {dimension_numbers = #tpu.dot_dimension_numbers<[2], [1], [1], [2], [0, 0, 0, 1, 1, 2], [0], [0]>} : vector<2x8x8xf32>, vector<2x8x16xf32>, vector<2x8x16xf32> -> vector<2x8x16xf32>
    "tpu.trace_stop"() : () -> ()
    %119 = vector.shape_cast %118 : vector<2x8x16xf32> to vector<16x16xf32>
    %120 = vector.extract_strided_slice %48 {offsets = [32, 0], sizes = [16, 64], strides = [1, 1]} : vector<64x64xf32> to vector<16x64xf32>
    %cst_47 = arith.constant dense<0.000000e+00> : vector<16x64xf32>
    %121 = tpu.matmul %119, %120, %cst_47 {dimension_numbers = #tpu.dot_dimension_numbers<[1], [0], [0], [1], [0, 0, 1, 1], [], []>} : vector<16x16xf32>, vector<16x64xf32>, vector<16x64xf32> -> vector<16x64xf32>
    %122 = arith.addf %101, %121 : vector<16x64xf32>
    %123 = vector.extract_strided_slice %54 {offsets = [0, 48], sizes = [16, 16], strides = [1, 1]} : vector<16x64xf32> to vector<16x16xf32>
    %124 = vector.shape_cast %123 : vector<16x16xf32> to vector<2x8x16xf32>
    %125 = vector.extract_strided_slice %55 {offsets = [0, 48], sizes = [16, 16], strides = [1, 1]} : vector<16x64xf32> to vector<16x16xf32>
    %126 = vector.shape_cast %125 : vector<16x16xf32> to vector<2x8x16xf32>
    %127 = vector.extract_strided_slice %56 {offsets = [0, 48], sizes = [16, 16], strides = [1, 1]} : vector<16x64xf32> to vector<16x16xf32>
    %128 = vector.shape_cast %127 : vector<16x16xf32> to vector<2x8x16xf32>
    "tpu.trace_start"() <{level = 10 : i32, message = "bqd,bkd->bqk"}> : () -> ()
    %cst_48 = arith.constant dense<0.000000e+00> : vector<2x8x8xf32>
    %129 = tpu.matmul %124, %126, %cst_48 {dimension_numbers = #tpu.dot_dimension_numbers<[2], [2], [1], [1], [0, 0, 0, 1, 1, 1], [0], [0]>} : vector<2x8x16xf32>, vector<2x8x16xf32>, vector<2x8x8xf32> -> vector<2x8x8xf32>
    "tpu.trace_stop"() : () -> ()
    %cst_49 = arith.constant dense<0xFF800000> : vector<2x8xf32>
    %130 = vector.multi_reduction <maximumf>, %129, %cst_49 [2] : vector<2x8x8xf32> to vector<2x8xf32>
    %131 = vector.shape_cast %130 : vector<2x8xf32> to vector<2x8x1xf32>
    %132 = vector.broadcast %131 : vector<2x8x1xf32> to vector<2x8x8xf32>
    %133 = arith.subf %129, %132 : vector<2x8x8xf32>
    %134 = math.exp %133 : vector<2x8x8xf32>
    %cst_50 = arith.constant dense<0.000000e+00> : vector<2x8xf32>
    %135 = vector.multi_reduction <add>, %134, %cst_50 [2] : vector<2x8x8xf32> to vector<2x8xf32>
    %136 = vector.shape_cast %135 : vector<2x8xf32> to vector<2x8x1xf32>
    %137 = vector.broadcast %136 : vector<2x8x1xf32> to vector<2x8x8xf32>
    %138 = arith.divf %134, %137 : vector<2x8x8xf32>
    "tpu.trace_start"() <{level = 10 : i32, message = "bqk,bkd->bqd"}> : () -> ()
    %cst_51 = arith.constant dense<0.000000e+00> : vector<2x8x16xf32>
    %139 = tpu.matmul %138, %128, %cst_51 {dimension_numbers = #tpu.dot_dimension_numbers<[2], [1], [1], [2], [0, 0, 0, 1, 1, 2], [0], [0]>} : vector<2x8x8xf32>, vector<2x8x16xf32>, vector<2x8x16xf32> -> vector<2x8x16xf32>
    "tpu.trace_stop"() : () -> ()
    %140 = vector.shape_cast %139 : vector<2x8x16xf32> to vector<16x16xf32>
    %141 = vector.extract_strided_slice %48 {offsets = [48, 0], sizes = [16, 64], strides = [1, 1]} : vector<64x64xf32> to vector<16x64xf32>
    %cst_52 = arith.constant dense<0.000000e+00> : vector<16x64xf32>
    %142 = tpu.matmul %140, %141, %cst_52 {dimension_numbers = #tpu.dot_dimension_numbers<[1], [0], [0], [1], [0, 0, 1, 1], [], []>} : vector<16x16xf32>, vector<16x64xf32>, vector<16x64xf32> -> vector<16x64xf32>
    %143 = arith.addf %122, %142 : vector<16x64xf32>
    %144 = vector.shape_cast %143 : vector<16x64xf32> to vector<2x8x64xf32>
    %c0_53 = arith.constant 0 : index
    %c0_54 = arith.constant 0 : index
    %145 = vector.load %arg10[%c0_53, %c0_54] : memref<64x256xf32, #tpu.memory_space<vmem>>, vector<64x256xf32>
    %c0_55 = arith.constant 0 : index
    %c0_56 = arith.constant 0 : index
    %146 = vector.load %arg11[%c0_55, %c0_56] : memref<1x256xf32, #tpu.memory_space<vmem>>, vector<1x256xf32>
    %c0_57 = arith.constant 0 : index
    %c0_58 = arith.constant 0 : index
    %147 = vector.load %arg12[%c0_57, %c0_58] : memref<64x256xf32, #tpu.memory_space<vmem>>, vector<64x256xf32>
    %148 = vector.shape_cast %144 : vector<2x8x64xf32> to vector<16x64xf32>
    %cst_59 = arith.constant dense<0.000000e+00> : vector<16x256xf32>
    %149 = tpu.matmul %148, %145, %cst_59 {dimension_numbers = #tpu.dot_dimension_numbers<[1], [0], [0], [1], [0, 0, 1, 1], [], []>} : vector<16x64xf32>, vector<64x256xf32>, vector<16x256xf32> -> vector<16x256xf32>
    %150 = vector.broadcast %146 : vector<1x256xf32> to vector<16x256xf32>
    %151 = arith.addf %149, %150 : vector<16x256xf32>
    %152 = vector.shape_cast %151 : vector<16x256xf32> to vector<2x8x256xf32>
    %cst_60 = arith.constant 0.000000e+00 : f32
    %153 = vector.broadcast %cst_60 : f32 to vector<2x64xf32>
    %cst_61 = arith.constant 0.000000e+00 : f32
    %154 = vector.broadcast %cst_61 : f32 to vector<2x32xf32>
    %cst_62 = arith.constant 0.000000e+00 : f32
    %155 = vector.broadcast %cst_62 : f32 to vector<2x32xf32>
    %cst_63 = arith.constant dense<0.000000e+00> : vector<2x256xf32>
    %156 = tpu.matmul %153, %147, %cst_63 {dimension_numbers = #tpu.dot_dimension_numbers<[1], [0], [0], [1], [0, 0, 1, 1], [], []>} : vector<2x64xf32>, vector<64x256xf32>, vector<2x256xf32> -> vector<2x256xf32>
    %157 = vector.extract_strided_slice %152 {offsets = [0, 0, 0], sizes = [2, 1, 128], strides = [1, 1, 1]} : vector<2x8x256xf32> to vector<2x1x128xf32>
    %158 = vector.shape_cast %157 : vector<2x1x128xf32> to vector<2x128xf32>
    %159 = vector.extract_strided_slice %156 {offsets = [0, 0], sizes = [2, 128], strides = [1, 1]} : vector<2x256xf32> to vector<2x128xf32>
    %160 = arith.addf %158, %159 : vector<2x128xf32>
    %161 = vector.extract_strided_slice %160 {offsets = [0, 0], sizes = [2, 32], strides = [1, 1]} : vector<2x128xf32> to vector<2x32xf32>
    %162 = arith.negf %161 : vector<2x32xf32>
    %163 = math.exp %162 : vector<2x32xf32>
    %cst_64 = arith.constant 1.000000e+00 : f32
    %164 = vector.broadcast %cst_64 : f32 to vector<2x32xf32>
    %165 = arith.addf %164, %163 : vector<2x32xf32>
    %166 = arith.divf %164, %165 : vector<2x32xf32>
    %167 = vector.extract_strided_slice %160 {offsets = [0, 32], sizes = [2, 32], strides = [1, 1]} : vector<2x128xf32> to vector<2x32xf32>
    %168 = arith.negf %167 : vector<2x32xf32>
    %169 = math.exp %168 : vector<2x32xf32>
    %cst_65 = arith.constant 1.000000e+00 : f32
    %170 = vector.broadcast %cst_65 : f32 to vector<2x32xf32>
    %171 = arith.addf %170, %169 : vector<2x32xf32>
    %172 = arith.divf %170, %171 : vector<2x32xf32>
    %173 = vector.extract_strided_slice %160 {offsets = [0, 64], sizes = [2, 32], strides = [1, 1]} : vector<2x128xf32> to vector<2x32xf32>
    %174 = math.tanh %173 : vector<2x32xf32>
    %175 = vector.extract_strided_slice %160 {offsets = [0, 96], sizes = [2, 32], strides = [1, 1]} : vector<2x128xf32> to vector<2x32xf32>
    %176 = arith.negf %175 : vector<2x32xf32>
    %177 = math.exp %176 : vector<2x32xf32>
    %cst_66 = arith.constant 1.000000e+00 : f32
    %178 = vector.broadcast %cst_66 : f32 to vector<2x32xf32>
    %179 = arith.addf %178, %177 : vector<2x32xf32>
    %180 = arith.divf %178, %179 : vector<2x32xf32>
    %181 = arith.mulf %172, %154 : vector<2x32xf32>
    %182 = arith.mulf %166, %174 : vector<2x32xf32>
    %183 = arith.addf %181, %182 : vector<2x32xf32>
    %184 = math.tanh %183 : vector<2x32xf32>
    %185 = arith.mulf %180, %184 : vector<2x32xf32>
    %186 = vector.extract_strided_slice %152 {offsets = [0, 7, 128], sizes = [2, 1, 128], strides = [1, 1, 1]} : vector<2x8x256xf32> to vector<2x1x128xf32>
    %187 = vector.shape_cast %186 : vector<2x1x128xf32> to vector<2x128xf32>
    %188 = vector.extract_strided_slice %156 {offsets = [0, 128], sizes = [2, 128], strides = [1, 1]} : vector<2x256xf32> to vector<2x128xf32>
    %189 = arith.addf %187, %188 : vector<2x128xf32>
    %190 = vector.extract_strided_slice %189 {offsets = [0, 0], sizes = [2, 32], strides = [1, 1]} : vector<2x128xf32> to vector<2x32xf32>
    %191 = arith.negf %190 : vector<2x32xf32>
    %192 = math.exp %191 : vector<2x32xf32>
    %cst_67 = arith.constant 1.000000e+00 : f32
    %193 = vector.broadcast %cst_67 : f32 to vector<2x32xf32>
    %194 = arith.addf %193, %192 : vector<2x32xf32>
    %195 = arith.divf %193, %194 : vector<2x32xf32>
    %196 = vector.extract_strided_slice %189 {offsets = [0, 32], sizes = [2, 32], strides = [1, 1]} : vector<2x128xf32> to vector<2x32xf32>
    %197 = arith.negf %196 : vector<2x32xf32>
    %198 = math.exp %197 : vector<2x32xf32>
    %cst_68 = arith.constant 1.000000e+00 : f32
    %199 = vector.broadcast %cst_68 : f32 to vector<2x32xf32>
    %200 = arith.addf %199, %198 : vector<2x32xf32>
    %201 = arith.divf %199, %200 : vector<2x32xf32>
    %202 = vector.extract_strided_slice %189 {offsets = [0, 64], sizes = [2, 32], strides = [1, 1]} : vector<2x128xf32> to vector<2x32xf32>
    %203 = math.tanh %202 : vector<2x32xf32>
    %204 = vector.extract_strided_slice %189 {offsets = [0, 96], sizes = [2, 32], strides = [1, 1]} : vector<2x128xf32> to vector<2x32xf32>
    %205 = arith.negf %204 : vector<2x32xf32>
    %206 = math.exp %205 : vector<2x32xf32>
    %cst_69 = arith.constant 1.000000e+00 : f32
    %207 = vector.broadcast %cst_69 : f32 to vector<2x32xf32>
    %208 = arith.addf %207, %206 : vector<2x32xf32>
    %209 = arith.divf %207, %208 : vector<2x32xf32>
    %210 = arith.mulf %201, %155 : vector<2x32xf32>
    %211 = arith.mulf %195, %203 : vector<2x32xf32>
    %212 = arith.addf %210, %211 : vector<2x32xf32>
    %213 = math.tanh %212 : vector<2x32xf32>
    %214 = arith.mulf %209, %213 : vector<2x32xf32>
    %215 = tpu.concatenate %185, %214 in 1 : vector<2x32xf32>, vector<2x32xf32> -> vector<2x64xf32>
    %cst_70 = arith.constant dense<0.000000e+00> : vector<2x256xf32>
    %216 = tpu.matmul %215, %147, %cst_70 {dimension_numbers = #tpu.dot_dimension_numbers<[1], [0], [0], [1], [0, 0, 1, 1], [], []>} : vector<2x64xf32>, vector<64x256xf32>, vector<2x256xf32> -> vector<2x256xf32>
    %217 = vector.extract_strided_slice %152 {offsets = [0, 1, 0], sizes = [2, 1, 128], strides = [1, 1, 1]} : vector<2x8x256xf32> to vector<2x1x128xf32>
    %218 = vector.shape_cast %217 : vector<2x1x128xf32> to vector<2x128xf32>
    %219 = vector.extract_strided_slice %216 {offsets = [0, 0], sizes = [2, 128], strides = [1, 1]} : vector<2x256xf32> to vector<2x128xf32>
    %220 = arith.addf %218, %219 : vector<2x128xf32>
    %221 = vector.extract_strided_slice %220 {offsets = [0, 0], sizes = [2, 32], strides = [1, 1]} : vector<2x128xf32> to vector<2x32xf32>
    %222 = arith.negf %221 : vector<2x32xf32>
    %223 = math.exp %222 : vector<2x32xf32>
    %cst_71 = arith.constant 1.000000e+00 : f32
    %224 = vector.broadcast %cst_71 : f32 to vector<2x32xf32>
    %225 = arith.addf %224, %223 : vector<2x32xf32>
    %226 = arith.divf %224, %225 : vector<2x32xf32>
    %227 = vector.extract_strided_slice %220 {offsets = [0, 32], sizes = [2, 32], strides = [1, 1]} : vector<2x128xf32> to vector<2x32xf32>
    %228 = arith.negf %227 : vector<2x32xf32>
    %229 = math.exp %228 : vector<2x32xf32>
    %cst_72 = arith.constant 1.000000e+00 : f32
    %230 = vector.broadcast %cst_72 : f32 to vector<2x32xf32>
    %231 = arith.addf %230, %229 : vector<2x32xf32>
    %232 = arith.divf %230, %231 : vector<2x32xf32>
    %233 = vector.extract_strided_slice %220 {offsets = [0, 64], sizes = [2, 32], strides = [1, 1]} : vector<2x128xf32> to vector<2x32xf32>
    %234 = math.tanh %233 : vector<2x32xf32>
    %235 = vector.extract_strided_slice %220 {offsets = [0, 96], sizes = [2, 32], strides = [1, 1]} : vector<2x128xf32> to vector<2x32xf32>
    %236 = arith.negf %235 : vector<2x32xf32>
    %237 = math.exp %236 : vector<2x32xf32>
    %cst_73 = arith.constant 1.000000e+00 : f32
    %238 = vector.broadcast %cst_73 : f32 to vector<2x32xf32>
    %239 = arith.addf %238, %237 : vector<2x32xf32>
    %240 = arith.divf %238, %239 : vector<2x32xf32>
    %241 = arith.mulf %232, %183 : vector<2x32xf32>
    %242 = arith.mulf %226, %234 : vector<2x32xf32>
    %243 = arith.addf %241, %242 : vector<2x32xf32>
    %244 = math.tanh %243 : vector<2x32xf32>
    %245 = arith.mulf %240, %244 : vector<2x32xf32>
    %246 = vector.extract_strided_slice %152 {offsets = [0, 6, 128], sizes = [2, 1, 128], strides = [1, 1, 1]} : vector<2x8x256xf32> to vector<2x1x128xf32>
    %247 = vector.shape_cast %246 : vector<2x1x128xf32> to vector<2x128xf32>
    %248 = vector.extract_strided_slice %216 {offsets = [0, 128], sizes = [2, 128], strides = [1, 1]} : vector<2x256xf32> to vector<2x128xf32>
    %249 = arith.addf %247, %248 : vector<2x128xf32>
    %250 = vector.extract_strided_slice %249 {offsets = [0, 0], sizes = [2, 32], strides = [1, 1]} : vector<2x128xf32> to vector<2x32xf32>
    %251 = arith.negf %250 : vector<2x32xf32>
    %252 = math.exp %251 : vector<2x32xf32>
    %cst_74 = arith.constant 1.000000e+00 : f32
    %253 = vector.broadcast %cst_74 : f32 to vector<2x32xf32>
    %254 = arith.addf %253, %252 : vector<2x32xf32>
    %255 = arith.divf %253, %254 : vector<2x32xf32>
    %256 = vector.extract_strided_slice %249 {offsets = [0, 32], sizes = [2, 32], strides = [1, 1]} : vector<2x128xf32> to vector<2x32xf32>
    %257 = arith.negf %256 : vector<2x32xf32>
    %258 = math.exp %257 : vector<2x32xf32>
    %cst_75 = arith.constant 1.000000e+00 : f32
    %259 = vector.broadcast %cst_75 : f32 to vector<2x32xf32>
    %260 = arith.addf %259, %258 : vector<2x32xf32>
    %261 = arith.divf %259, %260 : vector<2x32xf32>
    %262 = vector.extract_strided_slice %249 {offsets = [0, 64], sizes = [2, 32], strides = [1, 1]} : vector<2x128xf32> to vector<2x32xf32>
    %263 = math.tanh %262 : vector<2x32xf32>
    %264 = vector.extract_strided_slice %249 {offsets = [0, 96], sizes = [2, 32], strides = [1, 1]} : vector<2x128xf32> to vector<2x32xf32>
    %265 = arith.negf %264 : vector<2x32xf32>
    %266 = math.exp %265 : vector<2x32xf32>
    %cst_76 = arith.constant 1.000000e+00 : f32
    %267 = vector.broadcast %cst_76 : f32 to vector<2x32xf32>
    %268 = arith.addf %267, %266 : vector<2x32xf32>
    %269 = arith.divf %267, %268 : vector<2x32xf32>
    %270 = arith.mulf %261, %212 : vector<2x32xf32>
    %271 = arith.mulf %255, %263 : vector<2x32xf32>
    %272 = arith.addf %270, %271 : vector<2x32xf32>
    %273 = math.tanh %272 : vector<2x32xf32>
    %274 = arith.mulf %269, %273 : vector<2x32xf32>
    %275 = tpu.concatenate %245, %274 in 1 : vector<2x32xf32>, vector<2x32xf32> -> vector<2x64xf32>
    %cst_77 = arith.constant dense<0.000000e+00> : vector<2x256xf32>
    %276 = tpu.matmul %275, %147, %cst_77 {dimension_numbers = #tpu.dot_dimension_numbers<[1], [0], [0], [1], [0, 0, 1, 1], [], []>} : vector<2x64xf32>, vector<64x256xf32>, vector<2x256xf32> -> vector<2x256xf32>
    %277 = vector.extract_strided_slice %152 {offsets = [0, 2, 0], sizes = [2, 1, 128], strides = [1, 1, 1]} : vector<2x8x256xf32> to vector<2x1x128xf32>
    %278 = vector.shape_cast %277 : vector<2x1x128xf32> to vector<2x128xf32>
    %279 = vector.extract_strided_slice %276 {offsets = [0, 0], sizes = [2, 128], strides = [1, 1]} : vector<2x256xf32> to vector<2x128xf32>
    %280 = arith.addf %278, %279 : vector<2x128xf32>
    %281 = vector.extract_strided_slice %280 {offsets = [0, 0], sizes = [2, 32], strides = [1, 1]} : vector<2x128xf32> to vector<2x32xf32>
    %282 = arith.negf %281 : vector<2x32xf32>
    %283 = math.exp %282 : vector<2x32xf32>
    %cst_78 = arith.constant 1.000000e+00 : f32
    %284 = vector.broadcast %cst_78 : f32 to vector<2x32xf32>
    %285 = arith.addf %284, %283 : vector<2x32xf32>
    %286 = arith.divf %284, %285 : vector<2x32xf32>
    %287 = vector.extract_strided_slice %280 {offsets = [0, 32], sizes = [2, 32], strides = [1, 1]} : vector<2x128xf32> to vector<2x32xf32>
    %288 = arith.negf %287 : vector<2x32xf32>
    %289 = math.exp %288 : vector<2x32xf32>
    %cst_79 = arith.constant 1.000000e+00 : f32
    %290 = vector.broadcast %cst_79 : f32 to vector<2x32xf32>
    %291 = arith.addf %290, %289 : vector<2x32xf32>
    %292 = arith.divf %290, %291 : vector<2x32xf32>
    %293 = vector.extract_strided_slice %280 {offsets = [0, 64], sizes = [2, 32], strides = [1, 1]} : vector<2x128xf32> to vector<2x32xf32>
    %294 = math.tanh %293 : vector<2x32xf32>
    %295 = vector.extract_strided_slice %280 {offsets = [0, 96], sizes = [2, 32], strides = [1, 1]} : vector<2x128xf32> to vector<2x32xf32>
    %296 = arith.negf %295 : vector<2x32xf32>
    %297 = math.exp %296 : vector<2x32xf32>
    %cst_80 = arith.constant 1.000000e+00 : f32
    %298 = vector.broadcast %cst_80 : f32 to vector<2x32xf32>
    %299 = arith.addf %298, %297 : vector<2x32xf32>
    %300 = arith.divf %298, %299 : vector<2x32xf32>
    %301 = arith.mulf %292, %243 : vector<2x32xf32>
    %302 = arith.mulf %286, %294 : vector<2x32xf32>
    %303 = arith.addf %301, %302 : vector<2x32xf32>
    %304 = math.tanh %303 : vector<2x32xf32>
    %305 = arith.mulf %300, %304 : vector<2x32xf32>
    %306 = vector.extract_strided_slice %152 {offsets = [0, 5, 128], sizes = [2, 1, 128], strides = [1, 1, 1]} : vector<2x8x256xf32> to vector<2x1x128xf32>
    %307 = vector.shape_cast %306 : vector<2x1x128xf32> to vector<2x128xf32>
    %308 = vector.extract_strided_slice %276 {offsets = [0, 128], sizes = [2, 128], strides = [1, 1]} : vector<2x256xf32> to vector<2x128xf32>
    %309 = arith.addf %307, %308 : vector<2x128xf32>
    %310 = vector.extract_strided_slice %309 {offsets = [0, 0], sizes = [2, 32], strides = [1, 1]} : vector<2x128xf32> to vector<2x32xf32>
    %311 = arith.negf %310 : vector<2x32xf32>
    %312 = math.exp %311 : vector<2x32xf32>
    %cst_81 = arith.constant 1.000000e+00 : f32
    %313 = vector.broadcast %cst_81 : f32 to vector<2x32xf32>
    %314 = arith.addf %313, %312 : vector<2x32xf32>
    %315 = arith.divf %313, %314 : vector<2x32xf32>
    %316 = vector.extract_strided_slice %309 {offsets = [0, 32], sizes = [2, 32], strides = [1, 1]} : vector<2x128xf32> to vector<2x32xf32>
    %317 = arith.negf %316 : vector<2x32xf32>
    %318 = math.exp %317 : vector<2x32xf32>
    %cst_82 = arith.constant 1.000000e+00 : f32
    %319 = vector.broadcast %cst_82 : f32 to vector<2x32xf32>
    %320 = arith.addf %319, %318 : vector<2x32xf32>
    %321 = arith.divf %319, %320 : vector<2x32xf32>
    %322 = vector.extract_strided_slice %309 {offsets = [0, 64], sizes = [2, 32], strides = [1, 1]} : vector<2x128xf32> to vector<2x32xf32>
    %323 = math.tanh %322 : vector<2x32xf32>
    %324 = vector.extract_strided_slice %309 {offsets = [0, 96], sizes = [2, 32], strides = [1, 1]} : vector<2x128xf32> to vector<2x32xf32>
    %325 = arith.negf %324 : vector<2x32xf32>
    %326 = math.exp %325 : vector<2x32xf32>
    %cst_83 = arith.constant 1.000000e+00 : f32
    %327 = vector.broadcast %cst_83 : f32 to vector<2x32xf32>
    %328 = arith.addf %327, %326 : vector<2x32xf32>
    %329 = arith.divf %327, %328 : vector<2x32xf32>
    %330 = arith.mulf %321, %272 : vector<2x32xf32>
    %331 = arith.mulf %315, %323 : vector<2x32xf32>
    %332 = arith.addf %330, %331 : vector<2x32xf32>
    %333 = math.tanh %332 : vector<2x32xf32>
    %334 = arith.mulf %329, %333 : vector<2x32xf32>
    %335 = tpu.concatenate %305, %334 in 1 : vector<2x32xf32>, vector<2x32xf32> -> vector<2x64xf32>
    %cst_84 = arith.constant dense<0.000000e+00> : vector<2x256xf32>
    %336 = tpu.matmul %335, %147, %cst_84 {dimension_numbers = #tpu.dot_dimension_numbers<[1], [0], [0], [1], [0, 0, 1, 1], [], []>} : vector<2x64xf32>, vector<64x256xf32>, vector<2x256xf32> -> vector<2x256xf32>
    %337 = vector.extract_strided_slice %152 {offsets = [0, 3, 0], sizes = [2, 1, 128], strides = [1, 1, 1]} : vector<2x8x256xf32> to vector<2x1x128xf32>
    %338 = vector.shape_cast %337 : vector<2x1x128xf32> to vector<2x128xf32>
    %339 = vector.extract_strided_slice %336 {offsets = [0, 0], sizes = [2, 128], strides = [1, 1]} : vector<2x256xf32> to vector<2x128xf32>
    %340 = arith.addf %338, %339 : vector<2x128xf32>
    %341 = vector.extract_strided_slice %340 {offsets = [0, 0], sizes = [2, 32], strides = [1, 1]} : vector<2x128xf32> to vector<2x32xf32>
    %342 = arith.negf %341 : vector<2x32xf32>
    %343 = math.exp %342 : vector<2x32xf32>
    %cst_85 = arith.constant 1.000000e+00 : f32
    %344 = vector.broadcast %cst_85 : f32 to vector<2x32xf32>
    %345 = arith.addf %344, %343 : vector<2x32xf32>
    %346 = arith.divf %344, %345 : vector<2x32xf32>
    %347 = vector.extract_strided_slice %340 {offsets = [0, 32], sizes = [2, 32], strides = [1, 1]} : vector<2x128xf32> to vector<2x32xf32>
    %348 = arith.negf %347 : vector<2x32xf32>
    %349 = math.exp %348 : vector<2x32xf32>
    %cst_86 = arith.constant 1.000000e+00 : f32
    %350 = vector.broadcast %cst_86 : f32 to vector<2x32xf32>
    %351 = arith.addf %350, %349 : vector<2x32xf32>
    %352 = arith.divf %350, %351 : vector<2x32xf32>
    %353 = vector.extract_strided_slice %340 {offsets = [0, 64], sizes = [2, 32], strides = [1, 1]} : vector<2x128xf32> to vector<2x32xf32>
    %354 = math.tanh %353 : vector<2x32xf32>
    %355 = vector.extract_strided_slice %340 {offsets = [0, 96], sizes = [2, 32], strides = [1, 1]} : vector<2x128xf32> to vector<2x32xf32>
    %356 = arith.negf %355 : vector<2x32xf32>
    %357 = math.exp %356 : vector<2x32xf32>
    %cst_87 = arith.constant 1.000000e+00 : f32
    %358 = vector.broadcast %cst_87 : f32 to vector<2x32xf32>
    %359 = arith.addf %358, %357 : vector<2x32xf32>
    %360 = arith.divf %358, %359 : vector<2x32xf32>
    %361 = arith.mulf %352, %303 : vector<2x32xf32>
    %362 = arith.mulf %346, %354 : vector<2x32xf32>
    %363 = arith.addf %361, %362 : vector<2x32xf32>
    %364 = math.tanh %363 : vector<2x32xf32>
    %365 = arith.mulf %360, %364 : vector<2x32xf32>
    %366 = vector.extract_strided_slice %152 {offsets = [0, 4, 128], sizes = [2, 1, 128], strides = [1, 1, 1]} : vector<2x8x256xf32> to vector<2x1x128xf32>
    %367 = vector.shape_cast %366 : vector<2x1x128xf32> to vector<2x128xf32>
    %368 = vector.extract_strided_slice %336 {offsets = [0, 128], sizes = [2, 128], strides = [1, 1]} : vector<2x256xf32> to vector<2x128xf32>
    %369 = arith.addf %367, %368 : vector<2x128xf32>
    %370 = vector.extract_strided_slice %369 {offsets = [0, 0], sizes = [2, 32], strides = [1, 1]} : vector<2x128xf32> to vector<2x32xf32>
    %371 = arith.negf %370 : vector<2x32xf32>
    %372 = math.exp %371 : vector<2x32xf32>
    %cst_88 = arith.constant 1.000000e+00 : f32
    %373 = vector.broadcast %cst_88 : f32 to vector<2x32xf32>
    %374 = arith.addf %373, %372 : vector<2x32xf32>
    %375 = arith.divf %373, %374 : vector<2x32xf32>
    %376 = vector.extract_strided_slice %369 {offsets = [0, 32], sizes = [2, 32], strides = [1, 1]} : vector<2x128xf32> to vector<2x32xf32>
    %377 = arith.negf %376 : vector<2x32xf32>
    %378 = math.exp %377 : vector<2x32xf32>
    %cst_89 = arith.constant 1.000000e+00 : f32
    %379 = vector.broadcast %cst_89 : f32 to vector<2x32xf32>
    %380 = arith.addf %379, %378 : vector<2x32xf32>
    %381 = arith.divf %379, %380 : vector<2x32xf32>
    %382 = vector.extract_strided_slice %369 {offsets = [0, 64], sizes = [2, 32], strides = [1, 1]} : vector<2x128xf32> to vector<2x32xf32>
    %383 = math.tanh %382 : vector<2x32xf32>
    %384 = vector.extract_strided_slice %369 {offsets = [0, 96], sizes = [2, 32], strides = [1, 1]} : vector<2x128xf32> to vector<2x32xf32>
    %385 = arith.negf %384 : vector<2x32xf32>
    %386 = math.exp %385 : vector<2x32xf32>
    %cst_90 = arith.constant 1.000000e+00 : f32
    %387 = vector.broadcast %cst_90 : f32 to vector<2x32xf32>
    %388 = arith.addf %387, %386 : vector<2x32xf32>
    %389 = arith.divf %387, %388 : vector<2x32xf32>
    %390 = arith.mulf %381, %332 : vector<2x32xf32>
    %391 = arith.mulf %375, %383 : vector<2x32xf32>
    %392 = arith.addf %390, %391 : vector<2x32xf32>
    %393 = math.tanh %392 : vector<2x32xf32>
    %394 = arith.mulf %389, %393 : vector<2x32xf32>
    %395 = tpu.concatenate %365, %394 in 1 : vector<2x32xf32>, vector<2x32xf32> -> vector<2x64xf32>
    %cst_91 = arith.constant dense<0.000000e+00> : vector<2x256xf32>
    %396 = tpu.matmul %395, %147, %cst_91 {dimension_numbers = #tpu.dot_dimension_numbers<[1], [0], [0], [1], [0, 0, 1, 1], [], []>} : vector<2x64xf32>, vector<64x256xf32>, vector<2x256xf32> -> vector<2x256xf32>
    %397 = vector.extract_strided_slice %152 {offsets = [0, 4, 0], sizes = [2, 1, 128], strides = [1, 1, 1]} : vector<2x8x256xf32> to vector<2x1x128xf32>
    %398 = vector.shape_cast %397 : vector<2x1x128xf32> to vector<2x128xf32>
    %399 = vector.extract_strided_slice %396 {offsets = [0, 0], sizes = [2, 128], strides = [1, 1]} : vector<2x256xf32> to vector<2x128xf32>
    %400 = arith.addf %398, %399 : vector<2x128xf32>
    %401 = vector.extract_strided_slice %400 {offsets = [0, 0], sizes = [2, 32], strides = [1, 1]} : vector<2x128xf32> to vector<2x32xf32>
    %402 = arith.negf %401 : vector<2x32xf32>
    %403 = math.exp %402 : vector<2x32xf32>
    %cst_92 = arith.constant 1.000000e+00 : f32
    %404 = vector.broadcast %cst_92 : f32 to vector<2x32xf32>
    %405 = arith.addf %404, %403 : vector<2x32xf32>
    %406 = arith.divf %404, %405 : vector<2x32xf32>
    %407 = vector.extract_strided_slice %400 {offsets = [0, 32], sizes = [2, 32], strides = [1, 1]} : vector<2x128xf32> to vector<2x32xf32>
    %408 = arith.negf %407 : vector<2x32xf32>
    %409 = math.exp %408 : vector<2x32xf32>
    %cst_93 = arith.constant 1.000000e+00 : f32
    %410 = vector.broadcast %cst_93 : f32 to vector<2x32xf32>
    %411 = arith.addf %410, %409 : vector<2x32xf32>
    %412 = arith.divf %410, %411 : vector<2x32xf32>
    %413 = vector.extract_strided_slice %400 {offsets = [0, 64], sizes = [2, 32], strides = [1, 1]} : vector<2x128xf32> to vector<2x32xf32>
    %414 = math.tanh %413 : vector<2x32xf32>
    %415 = vector.extract_strided_slice %400 {offsets = [0, 96], sizes = [2, 32], strides = [1, 1]} : vector<2x128xf32> to vector<2x32xf32>
    %416 = arith.negf %415 : vector<2x32xf32>
    %417 = math.exp %416 : vector<2x32xf32>
    %cst_94 = arith.constant 1.000000e+00 : f32
    %418 = vector.broadcast %cst_94 : f32 to vector<2x32xf32>
    %419 = arith.addf %418, %417 : vector<2x32xf32>
    %420 = arith.divf %418, %419 : vector<2x32xf32>
    %421 = arith.mulf %412, %363 : vector<2x32xf32>
    %422 = arith.mulf %406, %414 : vector<2x32xf32>
    %423 = arith.addf %421, %422 : vector<2x32xf32>
    %424 = math.tanh %423 : vector<2x32xf32>
    %425 = arith.mulf %420, %424 : vector<2x32xf32>
    %426 = vector.extract_strided_slice %152 {offsets = [0, 3, 128], sizes = [2, 1, 128], strides = [1, 1, 1]} : vector<2x8x256xf32> to vector<2x1x128xf32>
    %427 = vector.shape_cast %426 : vector<2x1x128xf32> to vector<2x128xf32>
    %428 = vector.extract_strided_slice %396 {offsets = [0, 128], sizes = [2, 128], strides = [1, 1]} : vector<2x256xf32> to vector<2x128xf32>
    %429 = arith.addf %427, %428 : vector<2x128xf32>
    %430 = vector.extract_strided_slice %429 {offsets = [0, 0], sizes = [2, 32], strides = [1, 1]} : vector<2x128xf32> to vector<2x32xf32>
    %431 = arith.negf %430 : vector<2x32xf32>
    %432 = math.exp %431 : vector<2x32xf32>
    %cst_95 = arith.constant 1.000000e+00 : f32
    %433 = vector.broadcast %cst_95 : f32 to vector<2x32xf32>
    %434 = arith.addf %433, %432 : vector<2x32xf32>
    %435 = arith.divf %433, %434 : vector<2x32xf32>
    %436 = vector.extract_strided_slice %429 {offsets = [0, 32], sizes = [2, 32], strides = [1, 1]} : vector<2x128xf32> to vector<2x32xf32>
    %437 = arith.negf %436 : vector<2x32xf32>
    %438 = math.exp %437 : vector<2x32xf32>
    %cst_96 = arith.constant 1.000000e+00 : f32
    %439 = vector.broadcast %cst_96 : f32 to vector<2x32xf32>
    %440 = arith.addf %439, %438 : vector<2x32xf32>
    %441 = arith.divf %439, %440 : vector<2x32xf32>
    %442 = vector.extract_strided_slice %429 {offsets = [0, 64], sizes = [2, 32], strides = [1, 1]} : vector<2x128xf32> to vector<2x32xf32>
    %443 = math.tanh %442 : vector<2x32xf32>
    %444 = vector.extract_strided_slice %429 {offsets = [0, 96], sizes = [2, 32], strides = [1, 1]} : vector<2x128xf32> to vector<2x32xf32>
    %445 = arith.negf %444 : vector<2x32xf32>
    %446 = math.exp %445 : vector<2x32xf32>
    %cst_97 = arith.constant 1.000000e+00 : f32
    %447 = vector.broadcast %cst_97 : f32 to vector<2x32xf32>
    %448 = arith.addf %447, %446 : vector<2x32xf32>
    %449 = arith.divf %447, %448 : vector<2x32xf32>
    %450 = arith.mulf %441, %392 : vector<2x32xf32>
    %451 = arith.mulf %435, %443 : vector<2x32xf32>
    %452 = arith.addf %450, %451 : vector<2x32xf32>
    %453 = math.tanh %452 : vector<2x32xf32>
    %454 = arith.mulf %449, %453 : vector<2x32xf32>
    %455 = tpu.concatenate %425, %454 in 1 : vector<2x32xf32>, vector<2x32xf32> -> vector<2x64xf32>
    %cst_98 = arith.constant dense<0.000000e+00> : vector<2x256xf32>
    %456 = tpu.matmul %455, %147, %cst_98 {dimension_numbers = #tpu.dot_dimension_numbers<[1], [0], [0], [1], [0, 0, 1, 1], [], []>} : vector<2x64xf32>, vector<64x256xf32>, vector<2x256xf32> -> vector<2x256xf32>
    %457 = vector.extract_strided_slice %152 {offsets = [0, 5, 0], sizes = [2, 1, 128], strides = [1, 1, 1]} : vector<2x8x256xf32> to vector<2x1x128xf32>
    %458 = vector.shape_cast %457 : vector<2x1x128xf32> to vector<2x128xf32>
    %459 = vector.extract_strided_slice %456 {offsets = [0, 0], sizes = [2, 128], strides = [1, 1]} : vector<2x256xf32> to vector<2x128xf32>
    %460 = arith.addf %458, %459 : vector<2x128xf32>
    %461 = vector.extract_strided_slice %460 {offsets = [0, 0], sizes = [2, 32], strides = [1, 1]} : vector<2x128xf32> to vector<2x32xf32>
    %462 = arith.negf %461 : vector<2x32xf32>
    %463 = math.exp %462 : vector<2x32xf32>
    %cst_99 = arith.constant 1.000000e+00 : f32
    %464 = vector.broadcast %cst_99 : f32 to vector<2x32xf32>
    %465 = arith.addf %464, %463 : vector<2x32xf32>
    %466 = arith.divf %464, %465 : vector<2x32xf32>
    %467 = vector.extract_strided_slice %460 {offsets = [0, 32], sizes = [2, 32], strides = [1, 1]} : vector<2x128xf32> to vector<2x32xf32>
    %468 = arith.negf %467 : vector<2x32xf32>
    %469 = math.exp %468 : vector<2x32xf32>
    %cst_100 = arith.constant 1.000000e+00 : f32
    %470 = vector.broadcast %cst_100 : f32 to vector<2x32xf32>
    %471 = arith.addf %470, %469 : vector<2x32xf32>
    %472 = arith.divf %470, %471 : vector<2x32xf32>
    %473 = vector.extract_strided_slice %460 {offsets = [0, 64], sizes = [2, 32], strides = [1, 1]} : vector<2x128xf32> to vector<2x32xf32>
    %474 = math.tanh %473 : vector<2x32xf32>
    %475 = vector.extract_strided_slice %460 {offsets = [0, 96], sizes = [2, 32], strides = [1, 1]} : vector<2x128xf32> to vector<2x32xf32>
    %476 = arith.negf %475 : vector<2x32xf32>
    %477 = math.exp %476 : vector<2x32xf32>
    %cst_101 = arith.constant 1.000000e+00 : f32
    %478 = vector.broadcast %cst_101 : f32 to vector<2x32xf32>
    %479 = arith.addf %478, %477 : vector<2x32xf32>
    %480 = arith.divf %478, %479 : vector<2x32xf32>
    %481 = arith.mulf %472, %423 : vector<2x32xf32>
    %482 = arith.mulf %466, %474 : vector<2x32xf32>
    %483 = arith.addf %481, %482 : vector<2x32xf32>
    %484 = math.tanh %483 : vector<2x32xf32>
    %485 = arith.mulf %480, %484 : vector<2x32xf32>
    %486 = vector.extract_strided_slice %152 {offsets = [0, 2, 128], sizes = [2, 1, 128], strides = [1, 1, 1]} : vector<2x8x256xf32> to vector<2x1x128xf32>
    %487 = vector.shape_cast %486 : vector<2x1x128xf32> to vector<2x128xf32>
    %488 = vector.extract_strided_slice %456 {offsets = [0, 128], sizes = [2, 128], strides = [1, 1]} : vector<2x256xf32> to vector<2x128xf32>
    %489 = arith.addf %487, %488 : vector<2x128xf32>
    %490 = vector.extract_strided_slice %489 {offsets = [0, 0], sizes = [2, 32], strides = [1, 1]} : vector<2x128xf32> to vector<2x32xf32>
    %491 = arith.negf %490 : vector<2x32xf32>
    %492 = math.exp %491 : vector<2x32xf32>
    %cst_102 = arith.constant 1.000000e+00 : f32
    %493 = vector.broadcast %cst_102 : f32 to vector<2x32xf32>
    %494 = arith.addf %493, %492 : vector<2x32xf32>
    %495 = arith.divf %493, %494 : vector<2x32xf32>
    %496 = vector.extract_strided_slice %489 {offsets = [0, 32], sizes = [2, 32], strides = [1, 1]} : vector<2x128xf32> to vector<2x32xf32>
    %497 = arith.negf %496 : vector<2x32xf32>
    %498 = math.exp %497 : vector<2x32xf32>
    %cst_103 = arith.constant 1.000000e+00 : f32
    %499 = vector.broadcast %cst_103 : f32 to vector<2x32xf32>
    %500 = arith.addf %499, %498 : vector<2x32xf32>
    %501 = arith.divf %499, %500 : vector<2x32xf32>
    %502 = vector.extract_strided_slice %489 {offsets = [0, 64], sizes = [2, 32], strides = [1, 1]} : vector<2x128xf32> to vector<2x32xf32>
    %503 = math.tanh %502 : vector<2x32xf32>
    %504 = vector.extract_strided_slice %489 {offsets = [0, 96], sizes = [2, 32], strides = [1, 1]} : vector<2x128xf32> to vector<2x32xf32>
    %505 = arith.negf %504 : vector<2x32xf32>
    %506 = math.exp %505 : vector<2x32xf32>
    %cst_104 = arith.constant 1.000000e+00 : f32
    %507 = vector.broadcast %cst_104 : f32 to vector<2x32xf32>
    %508 = arith.addf %507, %506 : vector<2x32xf32>
    %509 = arith.divf %507, %508 : vector<2x32xf32>
    %510 = arith.mulf %501, %452 : vector<2x32xf32>
    %511 = arith.mulf %495, %503 : vector<2x32xf32>
    %512 = arith.addf %510, %511 : vector<2x32xf32>
    %513 = math.tanh %512 : vector<2x32xf32>
    %514 = arith.mulf %509, %513 : vector<2x32xf32>
    %515 = tpu.concatenate %485, %514 in 1 : vector<2x32xf32>, vector<2x32xf32> -> vector<2x64xf32>
    %cst_105 = arith.constant dense<0.000000e+00> : vector<2x256xf32>
    %516 = tpu.matmul %515, %147, %cst_105 {dimension_numbers = #tpu.dot_dimension_numbers<[1], [0], [0], [1], [0, 0, 1, 1], [], []>} : vector<2x64xf32>, vector<64x256xf32>, vector<2x256xf32> -> vector<2x256xf32>
    %517 = vector.extract_strided_slice %152 {offsets = [0, 6, 0], sizes = [2, 1, 128], strides = [1, 1, 1]} : vector<2x8x256xf32> to vector<2x1x128xf32>
    %518 = vector.shape_cast %517 : vector<2x1x128xf32> to vector<2x128xf32>
    %519 = vector.extract_strided_slice %516 {offsets = [0, 0], sizes = [2, 128], strides = [1, 1]} : vector<2x256xf32> to vector<2x128xf32>
    %520 = arith.addf %518, %519 : vector<2x128xf32>
    %521 = vector.extract_strided_slice %520 {offsets = [0, 0], sizes = [2, 32], strides = [1, 1]} : vector<2x128xf32> to vector<2x32xf32>
    %522 = arith.negf %521 : vector<2x32xf32>
    %523 = math.exp %522 : vector<2x32xf32>
    %cst_106 = arith.constant 1.000000e+00 : f32
    %524 = vector.broadcast %cst_106 : f32 to vector<2x32xf32>
    %525 = arith.addf %524, %523 : vector<2x32xf32>
    %526 = arith.divf %524, %525 : vector<2x32xf32>
    %527 = vector.extract_strided_slice %520 {offsets = [0, 32], sizes = [2, 32], strides = [1, 1]} : vector<2x128xf32> to vector<2x32xf32>
    %528 = arith.negf %527 : vector<2x32xf32>
    %529 = math.exp %528 : vector<2x32xf32>
    %cst_107 = arith.constant 1.000000e+00 : f32
    %530 = vector.broadcast %cst_107 : f32 to vector<2x32xf32>
    %531 = arith.addf %530, %529 : vector<2x32xf32>
    %532 = arith.divf %530, %531 : vector<2x32xf32>
    %533 = vector.extract_strided_slice %520 {offsets = [0, 64], sizes = [2, 32], strides = [1, 1]} : vector<2x128xf32> to vector<2x32xf32>
    %534 = math.tanh %533 : vector<2x32xf32>
    %535 = vector.extract_strided_slice %520 {offsets = [0, 96], sizes = [2, 32], strides = [1, 1]} : vector<2x128xf32> to vector<2x32xf32>
    %536 = arith.negf %535 : vector<2x32xf32>
    %537 = math.exp %536 : vector<2x32xf32>
    %cst_108 = arith.constant 1.000000e+00 : f32
    %538 = vector.broadcast %cst_108 : f32 to vector<2x32xf32>
    %539 = arith.addf %538, %537 : vector<2x32xf32>
    %540 = arith.divf %538, %539 : vector<2x32xf32>
    %541 = arith.mulf %532, %483 : vector<2x32xf32>
    %542 = arith.mulf %526, %534 : vector<2x32xf32>
    %543 = arith.addf %541, %542 : vector<2x32xf32>
    %544 = math.tanh %543 : vector<2x32xf32>
    %545 = arith.mulf %540, %544 : vector<2x32xf32>
    %546 = vector.extract_strided_slice %152 {offsets = [0, 1, 128], sizes = [2, 1, 128], strides = [1, 1, 1]} : vector<2x8x256xf32> to vector<2x1x128xf32>
    %547 = vector.shape_cast %546 : vector<2x1x128xf32> to vector<2x128xf32>
    %548 = vector.extract_strided_slice %516 {offsets = [0, 128], sizes = [2, 128], strides = [1, 1]} : vector<2x256xf32> to vector<2x128xf32>
    %549 = arith.addf %547, %548 : vector<2x128xf32>
    %550 = vector.extract_strided_slice %549 {offsets = [0, 0], sizes = [2, 32], strides = [1, 1]} : vector<2x128xf32> to vector<2x32xf32>
    %551 = arith.negf %550 : vector<2x32xf32>
    %552 = math.exp %551 : vector<2x32xf32>
    %cst_109 = arith.constant 1.000000e+00 : f32
    %553 = vector.broadcast %cst_109 : f32 to vector<2x32xf32>
    %554 = arith.addf %553, %552 : vector<2x32xf32>
    %555 = arith.divf %553, %554 : vector<2x32xf32>
    %556 = vector.extract_strided_slice %549 {offsets = [0, 32], sizes = [2, 32], strides = [1, 1]} : vector<2x128xf32> to vector<2x32xf32>
    %557 = arith.negf %556 : vector<2x32xf32>
    %558 = math.exp %557 : vector<2x32xf32>
    %cst_110 = arith.constant 1.000000e+00 : f32
    %559 = vector.broadcast %cst_110 : f32 to vector<2x32xf32>
    %560 = arith.addf %559, %558 : vector<2x32xf32>
    %561 = arith.divf %559, %560 : vector<2x32xf32>
    %562 = vector.extract_strided_slice %549 {offsets = [0, 64], sizes = [2, 32], strides = [1, 1]} : vector<2x128xf32> to vector<2x32xf32>
    %563 = math.tanh %562 : vector<2x32xf32>
    %564 = vector.extract_strided_slice %549 {offsets = [0, 96], sizes = [2, 32], strides = [1, 1]} : vector<2x128xf32> to vector<2x32xf32>
    %565 = arith.negf %564 : vector<2x32xf32>
    %566 = math.exp %565 : vector<2x32xf32>
    %cst_111 = arith.constant 1.000000e+00 : f32
    %567 = vector.broadcast %cst_111 : f32 to vector<2x32xf32>
    %568 = arith.addf %567, %566 : vector<2x32xf32>
    %569 = arith.divf %567, %568 : vector<2x32xf32>
    %570 = arith.mulf %561, %512 : vector<2x32xf32>
    %571 = arith.mulf %555, %563 : vector<2x32xf32>
    %572 = arith.addf %570, %571 : vector<2x32xf32>
    %573 = math.tanh %572 : vector<2x32xf32>
    %574 = arith.mulf %569, %573 : vector<2x32xf32>
    %575 = tpu.concatenate %545, %574 in 1 : vector<2x32xf32>, vector<2x32xf32> -> vector<2x64xf32>
    %cst_112 = arith.constant dense<0.000000e+00> : vector<2x256xf32>
    %576 = tpu.matmul %575, %147, %cst_112 {dimension_numbers = #tpu.dot_dimension_numbers<[1], [0], [0], [1], [0, 0, 1, 1], [], []>} : vector<2x64xf32>, vector<64x256xf32>, vector<2x256xf32> -> vector<2x256xf32>
    %577 = vector.extract_strided_slice %152 {offsets = [0, 7, 0], sizes = [2, 1, 128], strides = [1, 1, 1]} : vector<2x8x256xf32> to vector<2x1x128xf32>
    %578 = vector.shape_cast %577 : vector<2x1x128xf32> to vector<2x128xf32>
    %579 = vector.extract_strided_slice %576 {offsets = [0, 0], sizes = [2, 128], strides = [1, 1]} : vector<2x256xf32> to vector<2x128xf32>
    %580 = arith.addf %578, %579 : vector<2x128xf32>
    %581 = vector.extract_strided_slice %580 {offsets = [0, 0], sizes = [2, 32], strides = [1, 1]} : vector<2x128xf32> to vector<2x32xf32>
    %582 = arith.negf %581 : vector<2x32xf32>
    %583 = math.exp %582 : vector<2x32xf32>
    %cst_113 = arith.constant 1.000000e+00 : f32
    %584 = vector.broadcast %cst_113 : f32 to vector<2x32xf32>
    %585 = arith.addf %584, %583 : vector<2x32xf32>
    %586 = arith.divf %584, %585 : vector<2x32xf32>
    %587 = vector.extract_strided_slice %580 {offsets = [0, 32], sizes = [2, 32], strides = [1, 1]} : vector<2x128xf32> to vector<2x32xf32>
    %588 = arith.negf %587 : vector<2x32xf32>
    %589 = math.exp %588 : vector<2x32xf32>
    %cst_114 = arith.constant 1.000000e+00 : f32
    %590 = vector.broadcast %cst_114 : f32 to vector<2x32xf32>
    %591 = arith.addf %590, %589 : vector<2x32xf32>
    %592 = arith.divf %590, %591 : vector<2x32xf32>
    %593 = vector.extract_strided_slice %580 {offsets = [0, 64], sizes = [2, 32], strides = [1, 1]} : vector<2x128xf32> to vector<2x32xf32>
    %594 = math.tanh %593 : vector<2x32xf32>
    %595 = vector.extract_strided_slice %580 {offsets = [0, 96], sizes = [2, 32], strides = [1, 1]} : vector<2x128xf32> to vector<2x32xf32>
    %596 = arith.negf %595 : vector<2x32xf32>
    %597 = math.exp %596 : vector<2x32xf32>
    %cst_115 = arith.constant 1.000000e+00 : f32
    %598 = vector.broadcast %cst_115 : f32 to vector<2x32xf32>
    %599 = arith.addf %598, %597 : vector<2x32xf32>
    %600 = arith.divf %598, %599 : vector<2x32xf32>
    %601 = arith.mulf %592, %543 : vector<2x32xf32>
    %602 = arith.mulf %586, %594 : vector<2x32xf32>
    %603 = arith.addf %601, %602 : vector<2x32xf32>
    %604 = math.tanh %603 : vector<2x32xf32>
    %605 = arith.mulf %600, %604 : vector<2x32xf32>
    %606 = vector.extract_strided_slice %152 {offsets = [0, 0, 128], sizes = [2, 1, 128], strides = [1, 1, 1]} : vector<2x8x256xf32> to vector<2x1x128xf32>
    %607 = vector.shape_cast %606 : vector<2x1x128xf32> to vector<2x128xf32>
    %608 = vector.extract_strided_slice %576 {offsets = [0, 128], sizes = [2, 128], strides = [1, 1]} : vector<2x256xf32> to vector<2x128xf32>
    %609 = arith.addf %607, %608 : vector<2x128xf32>
    %610 = vector.extract_strided_slice %609 {offsets = [0, 0], sizes = [2, 32], strides = [1, 1]} : vector<2x128xf32> to vector<2x32xf32>
    %611 = arith.negf %610 : vector<2x32xf32>
    %612 = math.exp %611 : vector<2x32xf32>
    %cst_116 = arith.constant 1.000000e+00 : f32
    %613 = vector.broadcast %cst_116 : f32 to vector<2x32xf32>
    %614 = arith.addf %613, %612 : vector<2x32xf32>
    %615 = arith.divf %613, %614 : vector<2x32xf32>
    %616 = vector.extract_strided_slice %609 {offsets = [0, 32], sizes = [2, 32], strides = [1, 1]} : vector<2x128xf32> to vector<2x32xf32>
    %617 = arith.negf %616 : vector<2x32xf32>
    %618 = math.exp %617 : vector<2x32xf32>
    %cst_117 = arith.constant 1.000000e+00 : f32
    %619 = vector.broadcast %cst_117 : f32 to vector<2x32xf32>
    %620 = arith.addf %619, %618 : vector<2x32xf32>
    %621 = arith.divf %619, %620 : vector<2x32xf32>
    %622 = vector.extract_strided_slice %609 {offsets = [0, 64], sizes = [2, 32], strides = [1, 1]} : vector<2x128xf32> to vector<2x32xf32>
    %623 = math.tanh %622 : vector<2x32xf32>
    %624 = vector.extract_strided_slice %609 {offsets = [0, 96], sizes = [2, 32], strides = [1, 1]} : vector<2x128xf32> to vector<2x32xf32>
    %625 = arith.negf %624 : vector<2x32xf32>
    %626 = math.exp %625 : vector<2x32xf32>
    %cst_118 = arith.constant 1.000000e+00 : f32
    %627 = vector.broadcast %cst_118 : f32 to vector<2x32xf32>
    %628 = arith.addf %627, %626 : vector<2x32xf32>
    %629 = arith.divf %627, %628 : vector<2x32xf32>
    %630 = arith.mulf %621, %572 : vector<2x32xf32>
    %631 = arith.mulf %615, %623 : vector<2x32xf32>
    %632 = arith.addf %630, %631 : vector<2x32xf32>
    %633 = math.tanh %632 : vector<2x32xf32>
    %634 = arith.mulf %629, %633 : vector<2x32xf32>
    %635 = vector.shape_cast %185 : vector<2x32xf32> to vector<2x1x32xf32>
    %636 = vector.shape_cast %245 : vector<2x32xf32> to vector<2x1x32xf32>
    %637 = vector.shape_cast %305 : vector<2x32xf32> to vector<2x1x32xf32>
    %638 = vector.shape_cast %365 : vector<2x32xf32> to vector<2x1x32xf32>
    %639 = vector.shape_cast %425 : vector<2x32xf32> to vector<2x1x32xf32>
    %640 = vector.shape_cast %485 : vector<2x32xf32> to vector<2x1x32xf32>
    %641 = vector.shape_cast %545 : vector<2x32xf32> to vector<2x1x32xf32>
    %642 = vector.shape_cast %605 : vector<2x32xf32> to vector<2x1x32xf32>
    %643 = tpu.concatenate %635, %636, %637, %638, %639, %640, %641, %642 in 1 : vector<2x1x32xf32>, vector<2x1x32xf32>, vector<2x1x32xf32>, vector<2x1x32xf32>, vector<2x1x32xf32>, vector<2x1x32xf32>, vector<2x1x32xf32>, vector<2x1x32xf32> -> vector<2x8x32xf32>
    %644 = vector.shape_cast %634 : vector<2x32xf32> to vector<2x1x32xf32>
    %645 = vector.shape_cast %574 : vector<2x32xf32> to vector<2x1x32xf32>
    %646 = vector.shape_cast %514 : vector<2x32xf32> to vector<2x1x32xf32>
    %647 = vector.shape_cast %454 : vector<2x32xf32> to vector<2x1x32xf32>
    %648 = vector.shape_cast %394 : vector<2x32xf32> to vector<2x1x32xf32>
    %649 = vector.shape_cast %334 : vector<2x32xf32> to vector<2x1x32xf32>
    %650 = vector.shape_cast %274 : vector<2x32xf32> to vector<2x1x32xf32>
    %651 = vector.shape_cast %214 : vector<2x32xf32> to vector<2x1x32xf32>
    %652 = tpu.concatenate %644, %645, %646, %647, %648, %649, %650, %651 in 1 : vector<2x1x32xf32>, vector<2x1x32xf32>, vector<2x1x32xf32>, vector<2x1x32xf32>, vector<2x1x32xf32>, vector<2x1x32xf32>, vector<2x1x32xf32>, vector<2x1x32xf32> -> vector<2x8x32xf32>
    %653 = tpu.concatenate %643, %652 in 2 : vector<2x8x32xf32>, vector<2x8x32xf32> -> vector<2x8x64xf32>
    %c0_119 = arith.constant 0 : index
    %c0_120 = arith.constant 0 : index
    %654 = vector.load %arg13[%c0_119, %c0_120] : memref<64x256xf32, #tpu.memory_space<vmem>>, vector<64x256xf32>
    %c0_121 = arith.constant 0 : index
    %c0_122 = arith.constant 0 : index
    %655 = vector.load %arg14[%c0_121, %c0_122] : memref<1x256xf32, #tpu.memory_space<vmem>>, vector<1x256xf32>
    %c0_123 = arith.constant 0 : index
    %c0_124 = arith.constant 0 : index
    %656 = vector.load %arg15[%c0_123, %c0_124] : memref<64x256xf32, #tpu.memory_space<vmem>>, vector<64x256xf32>
    %657 = vector.shape_cast %653 : vector<2x8x64xf32> to vector<16x64xf32>
    %cst_125 = arith.constant dense<0.000000e+00> : vector<16x256xf32>
    %658 = tpu.matmul %657, %654, %cst_125 {dimension_numbers = #tpu.dot_dimension_numbers<[1], [0], [0], [1], [0, 0, 1, 1], [], []>} : vector<16x64xf32>, vector<64x256xf32>, vector<16x256xf32> -> vector<16x256xf32>
    %659 = vector.broadcast %655 : vector<1x256xf32> to vector<16x256xf32>
    %660 = arith.addf %658, %659 : vector<16x256xf32>
    %661 = vector.shape_cast %660 : vector<16x256xf32> to vector<2x8x256xf32>
    %cst_126 = arith.constant 0.000000e+00 : f32
    %662 = vector.broadcast %cst_126 : f32 to vector<2x64xf32>
    %cst_127 = arith.constant 0.000000e+00 : f32
    %663 = vector.broadcast %cst_127 : f32 to vector<2x32xf32>
    %cst_128 = arith.constant 0.000000e+00 : f32
    %664 = vector.broadcast %cst_128 : f32 to vector<2x32xf32>
    %cst_129 = arith.constant dense<0.000000e+00> : vector<2x256xf32>
    %665 = tpu.matmul %662, %656, %cst_129 {dimension_numbers = #tpu.dot_dimension_numbers<[1], [0], [0], [1], [0, 0, 1, 1], [], []>} : vector<2x64xf32>, vector<64x256xf32>, vector<2x256xf32> -> vector<2x256xf32>
    %666 = vector.extract_strided_slice %661 {offsets = [0, 0, 0], sizes = [2, 1, 128], strides = [1, 1, 1]} : vector<2x8x256xf32> to vector<2x1x128xf32>
    %667 = vector.shape_cast %666 : vector<2x1x128xf32> to vector<2x128xf32>
    %668 = vector.extract_strided_slice %665 {offsets = [0, 0], sizes = [2, 128], strides = [1, 1]} : vector<2x256xf32> to vector<2x128xf32>
    %669 = arith.addf %667, %668 : vector<2x128xf32>
    %670 = vector.extract_strided_slice %669 {offsets = [0, 0], sizes = [2, 32], strides = [1, 1]} : vector<2x128xf32> to vector<2x32xf32>
    %671 = arith.negf %670 : vector<2x32xf32>
    %672 = math.exp %671 : vector<2x32xf32>
    %cst_130 = arith.constant 1.000000e+00 : f32
    %673 = vector.broadcast %cst_130 : f32 to vector<2x32xf32>
    %674 = arith.addf %673, %672 : vector<2x32xf32>
    %675 = arith.divf %673, %674 : vector<2x32xf32>
    %676 = vector.extract_strided_slice %669 {offsets = [0, 32], sizes = [2, 32], strides = [1, 1]} : vector<2x128xf32> to vector<2x32xf32>
    %677 = arith.negf %676 : vector<2x32xf32>
    %678 = math.exp %677 : vector<2x32xf32>
    %cst_131 = arith.constant 1.000000e+00 : f32
    %679 = vector.broadcast %cst_131 : f32 to vector<2x32xf32>
    %680 = arith.addf %679, %678 : vector<2x32xf32>
    %681 = arith.divf %679, %680 : vector<2x32xf32>
    %682 = vector.extract_strided_slice %669 {offsets = [0, 64], sizes = [2, 32], strides = [1, 1]} : vector<2x128xf32> to vector<2x32xf32>
    %683 = math.tanh %682 : vector<2x32xf32>
    %684 = vector.extract_strided_slice %669 {offsets = [0, 96], sizes = [2, 32], strides = [1, 1]} : vector<2x128xf32> to vector<2x32xf32>
    %685 = arith.negf %684 : vector<2x32xf32>
    %686 = math.exp %685 : vector<2x32xf32>
    %cst_132 = arith.constant 1.000000e+00 : f32
    %687 = vector.broadcast %cst_132 : f32 to vector<2x32xf32>
    %688 = arith.addf %687, %686 : vector<2x32xf32>
    %689 = arith.divf %687, %688 : vector<2x32xf32>
    %690 = arith.mulf %681, %663 : vector<2x32xf32>
    %691 = arith.mulf %675, %683 : vector<2x32xf32>
    %692 = arith.addf %690, %691 : vector<2x32xf32>
    %693 = math.tanh %692 : vector<2x32xf32>
    %694 = arith.mulf %689, %693 : vector<2x32xf32>
    %695 = vector.extract_strided_slice %661 {offsets = [0, 7, 128], sizes = [2, 1, 128], strides = [1, 1, 1]} : vector<2x8x256xf32> to vector<2x1x128xf32>
    %696 = vector.shape_cast %695 : vector<2x1x128xf32> to vector<2x128xf32>
    %697 = vector.extract_strided_slice %665 {offsets = [0, 128], sizes = [2, 128], strides = [1, 1]} : vector<2x256xf32> to vector<2x128xf32>
    %698 = arith.addf %696, %697 : vector<2x128xf32>
    %699 = vector.extract_strided_slice %698 {offsets = [0, 0], sizes = [2, 32], strides = [1, 1]} : vector<2x128xf32> to vector<2x32xf32>
    %700 = arith.negf %699 : vector<2x32xf32>
    %701 = math.exp %700 : vector<2x32xf32>
    %cst_133 = arith.constant 1.000000e+00 : f32
    %702 = vector.broadcast %cst_133 : f32 to vector<2x32xf32>
    %703 = arith.addf %702, %701 : vector<2x32xf32>
    %704 = arith.divf %702, %703 : vector<2x32xf32>
    %705 = vector.extract_strided_slice %698 {offsets = [0, 32], sizes = [2, 32], strides = [1, 1]} : vector<2x128xf32> to vector<2x32xf32>
    %706 = arith.negf %705 : vector<2x32xf32>
    %707 = math.exp %706 : vector<2x32xf32>
    %cst_134 = arith.constant 1.000000e+00 : f32
    %708 = vector.broadcast %cst_134 : f32 to vector<2x32xf32>
    %709 = arith.addf %708, %707 : vector<2x32xf32>
    %710 = arith.divf %708, %709 : vector<2x32xf32>
    %711 = vector.extract_strided_slice %698 {offsets = [0, 64], sizes = [2, 32], strides = [1, 1]} : vector<2x128xf32> to vector<2x32xf32>
    %712 = math.tanh %711 : vector<2x32xf32>
    %713 = vector.extract_strided_slice %698 {offsets = [0, 96], sizes = [2, 32], strides = [1, 1]} : vector<2x128xf32> to vector<2x32xf32>
    %714 = arith.negf %713 : vector<2x32xf32>
    %715 = math.exp %714 : vector<2x32xf32>
    %cst_135 = arith.constant 1.000000e+00 : f32
    %716 = vector.broadcast %cst_135 : f32 to vector<2x32xf32>
    %717 = arith.addf %716, %715 : vector<2x32xf32>
    %718 = arith.divf %716, %717 : vector<2x32xf32>
    %719 = arith.mulf %710, %664 : vector<2x32xf32>
    %720 = arith.mulf %704, %712 : vector<2x32xf32>
    %721 = arith.addf %719, %720 : vector<2x32xf32>
    %722 = math.tanh %721 : vector<2x32xf32>
    %723 = arith.mulf %718, %722 : vector<2x32xf32>
    %724 = tpu.concatenate %694, %723 in 1 : vector<2x32xf32>, vector<2x32xf32> -> vector<2x64xf32>
    %cst_136 = arith.constant dense<0.000000e+00> : vector<2x256xf32>
    %725 = tpu.matmul %724, %656, %cst_136 {dimension_numbers = #tpu.dot_dimension_numbers<[1], [0], [0], [1], [0, 0, 1, 1], [], []>} : vector<2x64xf32>, vector<64x256xf32>, vector<2x256xf32> -> vector<2x256xf32>
    %726 = vector.extract_strided_slice %661 {offsets = [0, 1, 0], sizes = [2, 1, 128], strides = [1, 1, 1]} : vector<2x8x256xf32> to vector<2x1x128xf32>
    %727 = vector.shape_cast %726 : vector<2x1x128xf32> to vector<2x128xf32>
    %728 = vector.extract_strided_slice %725 {offsets = [0, 0], sizes = [2, 128], strides = [1, 1]} : vector<2x256xf32> to vector<2x128xf32>
    %729 = arith.addf %727, %728 : vector<2x128xf32>
    %730 = vector.extract_strided_slice %729 {offsets = [0, 0], sizes = [2, 32], strides = [1, 1]} : vector<2x128xf32> to vector<2x32xf32>
    %731 = arith.negf %730 : vector<2x32xf32>
    %732 = math.exp %731 : vector<2x32xf32>
    %cst_137 = arith.constant 1.000000e+00 : f32
    %733 = vector.broadcast %cst_137 : f32 to vector<2x32xf32>
    %734 = arith.addf %733, %732 : vector<2x32xf32>
    %735 = arith.divf %733, %734 : vector<2x32xf32>
    %736 = vector.extract_strided_slice %729 {offsets = [0, 32], sizes = [2, 32], strides = [1, 1]} : vector<2x128xf32> to vector<2x32xf32>
    %737 = arith.negf %736 : vector<2x32xf32>
    %738 = math.exp %737 : vector<2x32xf32>
    %cst_138 = arith.constant 1.000000e+00 : f32
    %739 = vector.broadcast %cst_138 : f32 to vector<2x32xf32>
    %740 = arith.addf %739, %738 : vector<2x32xf32>
    %741 = arith.divf %739, %740 : vector<2x32xf32>
    %742 = vector.extract_strided_slice %729 {offsets = [0, 64], sizes = [2, 32], strides = [1, 1]} : vector<2x128xf32> to vector<2x32xf32>
    %743 = math.tanh %742 : vector<2x32xf32>
    %744 = vector.extract_strided_slice %729 {offsets = [0, 96], sizes = [2, 32], strides = [1, 1]} : vector<2x128xf32> to vector<2x32xf32>
    %745 = arith.negf %744 : vector<2x32xf32>
    %746 = math.exp %745 : vector<2x32xf32>
    %cst_139 = arith.constant 1.000000e+00 : f32
    %747 = vector.broadcast %cst_139 : f32 to vector<2x32xf32>
    %748 = arith.addf %747, %746 : vector<2x32xf32>
    %749 = arith.divf %747, %748 : vector<2x32xf32>
    %750 = arith.mulf %741, %692 : vector<2x32xf32>
    %751 = arith.mulf %735, %743 : vector<2x32xf32>
    %752 = arith.addf %750, %751 : vector<2x32xf32>
    %753 = math.tanh %752 : vector<2x32xf32>
    %754 = arith.mulf %749, %753 : vector<2x32xf32>
    %755 = vector.extract_strided_slice %661 {offsets = [0, 6, 128], sizes = [2, 1, 128], strides = [1, 1, 1]} : vector<2x8x256xf32> to vector<2x1x128xf32>
    %756 = vector.shape_cast %755 : vector<2x1x128xf32> to vector<2x128xf32>
    %757 = vector.extract_strided_slice %725 {offsets = [0, 128], sizes = [2, 128], strides = [1, 1]} : vector<2x256xf32> to vector<2x128xf32>
    %758 = arith.addf %756, %757 : vector<2x128xf32>
    %759 = vector.extract_strided_slice %758 {offsets = [0, 0], sizes = [2, 32], strides = [1, 1]} : vector<2x128xf32> to vector<2x32xf32>
    %760 = arith.negf %759 : vector<2x32xf32>
    %761 = math.exp %760 : vector<2x32xf32>
    %cst_140 = arith.constant 1.000000e+00 : f32
    %762 = vector.broadcast %cst_140 : f32 to vector<2x32xf32>
    %763 = arith.addf %762, %761 : vector<2x32xf32>
    %764 = arith.divf %762, %763 : vector<2x32xf32>
    %765 = vector.extract_strided_slice %758 {offsets = [0, 32], sizes = [2, 32], strides = [1, 1]} : vector<2x128xf32> to vector<2x32xf32>
    %766 = arith.negf %765 : vector<2x32xf32>
    %767 = math.exp %766 : vector<2x32xf32>
    %cst_141 = arith.constant 1.000000e+00 : f32
    %768 = vector.broadcast %cst_141 : f32 to vector<2x32xf32>
    %769 = arith.addf %768, %767 : vector<2x32xf32>
    %770 = arith.divf %768, %769 : vector<2x32xf32>
    %771 = vector.extract_strided_slice %758 {offsets = [0, 64], sizes = [2, 32], strides = [1, 1]} : vector<2x128xf32> to vector<2x32xf32>
    %772 = math.tanh %771 : vector<2x32xf32>
    %773 = vector.extract_strided_slice %758 {offsets = [0, 96], sizes = [2, 32], strides = [1, 1]} : vector<2x128xf32> to vector<2x32xf32>
    %774 = arith.negf %773 : vector<2x32xf32>
    %775 = math.exp %774 : vector<2x32xf32>
    %cst_142 = arith.constant 1.000000e+00 : f32
    %776 = vector.broadcast %cst_142 : f32 to vector<2x32xf32>
    %777 = arith.addf %776, %775 : vector<2x32xf32>
    %778 = arith.divf %776, %777 : vector<2x32xf32>
    %779 = arith.mulf %770, %721 : vector<2x32xf32>
    %780 = arith.mulf %764, %772 : vector<2x32xf32>
    %781 = arith.addf %779, %780 : vector<2x32xf32>
    %782 = math.tanh %781 : vector<2x32xf32>
    %783 = arith.mulf %778, %782 : vector<2x32xf32>
    %784 = tpu.concatenate %754, %783 in 1 : vector<2x32xf32>, vector<2x32xf32> -> vector<2x64xf32>
    %cst_143 = arith.constant dense<0.000000e+00> : vector<2x256xf32>
    %785 = tpu.matmul %784, %656, %cst_143 {dimension_numbers = #tpu.dot_dimension_numbers<[1], [0], [0], [1], [0, 0, 1, 1], [], []>} : vector<2x64xf32>, vector<64x256xf32>, vector<2x256xf32> -> vector<2x256xf32>
    %786 = vector.extract_strided_slice %661 {offsets = [0, 2, 0], sizes = [2, 1, 128], strides = [1, 1, 1]} : vector<2x8x256xf32> to vector<2x1x128xf32>
    %787 = vector.shape_cast %786 : vector<2x1x128xf32> to vector<2x128xf32>
    %788 = vector.extract_strided_slice %785 {offsets = [0, 0], sizes = [2, 128], strides = [1, 1]} : vector<2x256xf32> to vector<2x128xf32>
    %789 = arith.addf %787, %788 : vector<2x128xf32>
    %790 = vector.extract_strided_slice %789 {offsets = [0, 0], sizes = [2, 32], strides = [1, 1]} : vector<2x128xf32> to vector<2x32xf32>
    %791 = arith.negf %790 : vector<2x32xf32>
    %792 = math.exp %791 : vector<2x32xf32>
    %cst_144 = arith.constant 1.000000e+00 : f32
    %793 = vector.broadcast %cst_144 : f32 to vector<2x32xf32>
    %794 = arith.addf %793, %792 : vector<2x32xf32>
    %795 = arith.divf %793, %794 : vector<2x32xf32>
    %796 = vector.extract_strided_slice %789 {offsets = [0, 32], sizes = [2, 32], strides = [1, 1]} : vector<2x128xf32> to vector<2x32xf32>
    %797 = arith.negf %796 : vector<2x32xf32>
    %798 = math.exp %797 : vector<2x32xf32>
    %cst_145 = arith.constant 1.000000e+00 : f32
    %799 = vector.broadcast %cst_145 : f32 to vector<2x32xf32>
    %800 = arith.addf %799, %798 : vector<2x32xf32>
    %801 = arith.divf %799, %800 : vector<2x32xf32>
    %802 = vector.extract_strided_slice %789 {offsets = [0, 64], sizes = [2, 32], strides = [1, 1]} : vector<2x128xf32> to vector<2x32xf32>
    %803 = math.tanh %802 : vector<2x32xf32>
    %804 = vector.extract_strided_slice %789 {offsets = [0, 96], sizes = [2, 32], strides = [1, 1]} : vector<2x128xf32> to vector<2x32xf32>
    %805 = arith.negf %804 : vector<2x32xf32>
    %806 = math.exp %805 : vector<2x32xf32>
    %cst_146 = arith.constant 1.000000e+00 : f32
    %807 = vector.broadcast %cst_146 : f32 to vector<2x32xf32>
    %808 = arith.addf %807, %806 : vector<2x32xf32>
    %809 = arith.divf %807, %808 : vector<2x32xf32>
    %810 = arith.mulf %801, %752 : vector<2x32xf32>
    %811 = arith.mulf %795, %803 : vector<2x32xf32>
    %812 = arith.addf %810, %811 : vector<2x32xf32>
    %813 = math.tanh %812 : vector<2x32xf32>
    %814 = arith.mulf %809, %813 : vector<2x32xf32>
    %815 = vector.extract_strided_slice %661 {offsets = [0, 5, 128], sizes = [2, 1, 128], strides = [1, 1, 1]} : vector<2x8x256xf32> to vector<2x1x128xf32>
    %816 = vector.shape_cast %815 : vector<2x1x128xf32> to vector<2x128xf32>
    %817 = vector.extract_strided_slice %785 {offsets = [0, 128], sizes = [2, 128], strides = [1, 1]} : vector<2x256xf32> to vector<2x128xf32>
    %818 = arith.addf %816, %817 : vector<2x128xf32>
    %819 = vector.extract_strided_slice %818 {offsets = [0, 0], sizes = [2, 32], strides = [1, 1]} : vector<2x128xf32> to vector<2x32xf32>
    %820 = arith.negf %819 : vector<2x32xf32>
    %821 = math.exp %820 : vector<2x32xf32>
    %cst_147 = arith.constant 1.000000e+00 : f32
    %822 = vector.broadcast %cst_147 : f32 to vector<2x32xf32>
    %823 = arith.addf %822, %821 : vector<2x32xf32>
    %824 = arith.divf %822, %823 : vector<2x32xf32>
    %825 = vector.extract_strided_slice %818 {offsets = [0, 32], sizes = [2, 32], strides = [1, 1]} : vector<2x128xf32> to vector<2x32xf32>
    %826 = arith.negf %825 : vector<2x32xf32>
    %827 = math.exp %826 : vector<2x32xf32>
    %cst_148 = arith.constant 1.000000e+00 : f32
    %828 = vector.broadcast %cst_148 : f32 to vector<2x32xf32>
    %829 = arith.addf %828, %827 : vector<2x32xf32>
    %830 = arith.divf %828, %829 : vector<2x32xf32>
    %831 = vector.extract_strided_slice %818 {offsets = [0, 64], sizes = [2, 32], strides = [1, 1]} : vector<2x128xf32> to vector<2x32xf32>
    %832 = math.tanh %831 : vector<2x32xf32>
    %833 = vector.extract_strided_slice %818 {offsets = [0, 96], sizes = [2, 32], strides = [1, 1]} : vector<2x128xf32> to vector<2x32xf32>
    %834 = arith.negf %833 : vector<2x32xf32>
    %835 = math.exp %834 : vector<2x32xf32>
    %cst_149 = arith.constant 1.000000e+00 : f32
    %836 = vector.broadcast %cst_149 : f32 to vector<2x32xf32>
    %837 = arith.addf %836, %835 : vector<2x32xf32>
    %838 = arith.divf %836, %837 : vector<2x32xf32>
    %839 = arith.mulf %830, %781 : vector<2x32xf32>
    %840 = arith.mulf %824, %832 : vector<2x32xf32>
    %841 = arith.addf %839, %840 : vector<2x32xf32>
    %842 = math.tanh %841 : vector<2x32xf32>
    %843 = arith.mulf %838, %842 : vector<2x32xf32>
    %844 = tpu.concatenate %814, %843 in 1 : vector<2x32xf32>, vector<2x32xf32> -> vector<2x64xf32>
    %cst_150 = arith.constant dense<0.000000e+00> : vector<2x256xf32>
    %845 = tpu.matmul %844, %656, %cst_150 {dimension_numbers = #tpu.dot_dimension_numbers<[1], [0], [0], [1], [0, 0, 1, 1], [], []>} : vector<2x64xf32>, vector<64x256xf32>, vector<2x256xf32> -> vector<2x256xf32>
    %846 = vector.extract_strided_slice %661 {offsets = [0, 3, 0], sizes = [2, 1, 128], strides = [1, 1, 1]} : vector<2x8x256xf32> to vector<2x1x128xf32>
    %847 = vector.shape_cast %846 : vector<2x1x128xf32> to vector<2x128xf32>
    %848 = vector.extract_strided_slice %845 {offsets = [0, 0], sizes = [2, 128], strides = [1, 1]} : vector<2x256xf32> to vector<2x128xf32>
    %849 = arith.addf %847, %848 : vector<2x128xf32>
    %850 = vector.extract_strided_slice %849 {offsets = [0, 0], sizes = [2, 32], strides = [1, 1]} : vector<2x128xf32> to vector<2x32xf32>
    %851 = arith.negf %850 : vector<2x32xf32>
    %852 = math.exp %851 : vector<2x32xf32>
    %cst_151 = arith.constant 1.000000e+00 : f32
    %853 = vector.broadcast %cst_151 : f32 to vector<2x32xf32>
    %854 = arith.addf %853, %852 : vector<2x32xf32>
    %855 = arith.divf %853, %854 : vector<2x32xf32>
    %856 = vector.extract_strided_slice %849 {offsets = [0, 32], sizes = [2, 32], strides = [1, 1]} : vector<2x128xf32> to vector<2x32xf32>
    %857 = arith.negf %856 : vector<2x32xf32>
    %858 = math.exp %857 : vector<2x32xf32>
    %cst_152 = arith.constant 1.000000e+00 : f32
    %859 = vector.broadcast %cst_152 : f32 to vector<2x32xf32>
    %860 = arith.addf %859, %858 : vector<2x32xf32>
    %861 = arith.divf %859, %860 : vector<2x32xf32>
    %862 = vector.extract_strided_slice %849 {offsets = [0, 64], sizes = [2, 32], strides = [1, 1]} : vector<2x128xf32> to vector<2x32xf32>
    %863 = math.tanh %862 : vector<2x32xf32>
    %864 = vector.extract_strided_slice %849 {offsets = [0, 96], sizes = [2, 32], strides = [1, 1]} : vector<2x128xf32> to vector<2x32xf32>
    %865 = arith.negf %864 : vector<2x32xf32>
    %866 = math.exp %865 : vector<2x32xf32>
    %cst_153 = arith.constant 1.000000e+00 : f32
    %867 = vector.broadcast %cst_153 : f32 to vector<2x32xf32>
    %868 = arith.addf %867, %866 : vector<2x32xf32>
    %869 = arith.divf %867, %868 : vector<2x32xf32>
    %870 = arith.mulf %861, %812 : vector<2x32xf32>
    %871 = arith.mulf %855, %863 : vector<2x32xf32>
    %872 = arith.addf %870, %871 : vector<2x32xf32>
    %873 = math.tanh %872 : vector<2x32xf32>
    %874 = arith.mulf %869, %873 : vector<2x32xf32>
    %875 = vector.extract_strided_slice %661 {offsets = [0, 4, 128], sizes = [2, 1, 128], strides = [1, 1, 1]} : vector<2x8x256xf32> to vector<2x1x128xf32>
    %876 = vector.shape_cast %875 : vector<2x1x128xf32> to vector<2x128xf32>
    %877 = vector.extract_strided_slice %845 {offsets = [0, 128], sizes = [2, 128], strides = [1, 1]} : vector<2x256xf32> to vector<2x128xf32>
    %878 = arith.addf %876, %877 : vector<2x128xf32>
    %879 = vector.extract_strided_slice %878 {offsets = [0, 0], sizes = [2, 32], strides = [1, 1]} : vector<2x128xf32> to vector<2x32xf32>
    %880 = arith.negf %879 : vector<2x32xf32>
    %881 = math.exp %880 : vector<2x32xf32>
    %cst_154 = arith.constant 1.000000e+00 : f32
    %882 = vector.broadcast %cst_154 : f32 to vector<2x32xf32>
    %883 = arith.addf %882, %881 : vector<2x32xf32>
    %884 = arith.divf %882, %883 : vector<2x32xf32>
    %885 = vector.extract_strided_slice %878 {offsets = [0, 32], sizes = [2, 32], strides = [1, 1]} : vector<2x128xf32> to vector<2x32xf32>
    %886 = arith.negf %885 : vector<2x32xf32>
    %887 = math.exp %886 : vector<2x32xf32>
    %cst_155 = arith.constant 1.000000e+00 : f32
    %888 = vector.broadcast %cst_155 : f32 to vector<2x32xf32>
    %889 = arith.addf %888, %887 : vector<2x32xf32>
    %890 = arith.divf %888, %889 : vector<2x32xf32>
    %891 = vector.extract_strided_slice %878 {offsets = [0, 64], sizes = [2, 32], strides = [1, 1]} : vector<2x128xf32> to vector<2x32xf32>
    %892 = math.tanh %891 : vector<2x32xf32>
    %893 = vector.extract_strided_slice %878 {offsets = [0, 96], sizes = [2, 32], strides = [1, 1]} : vector<2x128xf32> to vector<2x32xf32>
    %894 = arith.negf %893 : vector<2x32xf32>
    %895 = math.exp %894 : vector<2x32xf32>
    %cst_156 = arith.constant 1.000000e+00 : f32
    %896 = vector.broadcast %cst_156 : f32 to vector<2x32xf32>
    %897 = arith.addf %896, %895 : vector<2x32xf32>
    %898 = arith.divf %896, %897 : vector<2x32xf32>
    %899 = arith.mulf %890, %841 : vector<2x32xf32>
    %900 = arith.mulf %884, %892 : vector<2x32xf32>
    %901 = arith.addf %899, %900 : vector<2x32xf32>
    %902 = math.tanh %901 : vector<2x32xf32>
    %903 = arith.mulf %898, %902 : vector<2x32xf32>
    %904 = tpu.concatenate %874, %903 in 1 : vector<2x32xf32>, vector<2x32xf32> -> vector<2x64xf32>
    %cst_157 = arith.constant dense<0.000000e+00> : vector<2x256xf32>
    %905 = tpu.matmul %904, %656, %cst_157 {dimension_numbers = #tpu.dot_dimension_numbers<[1], [0], [0], [1], [0, 0, 1, 1], [], []>} : vector<2x64xf32>, vector<64x256xf32>, vector<2x256xf32> -> vector<2x256xf32>
    %906 = vector.extract_strided_slice %661 {offsets = [0, 4, 0], sizes = [2, 1, 128], strides = [1, 1, 1]} : vector<2x8x256xf32> to vector<2x1x128xf32>
    %907 = vector.shape_cast %906 : vector<2x1x128xf32> to vector<2x128xf32>
    %908 = vector.extract_strided_slice %905 {offsets = [0, 0], sizes = [2, 128], strides = [1, 1]} : vector<2x256xf32> to vector<2x128xf32>
    %909 = arith.addf %907, %908 : vector<2x128xf32>
    %910 = vector.extract_strided_slice %909 {offsets = [0, 0], sizes = [2, 32], strides = [1, 1]} : vector<2x128xf32> to vector<2x32xf32>
    %911 = arith.negf %910 : vector<2x32xf32>
    %912 = math.exp %911 : vector<2x32xf32>
    %cst_158 = arith.constant 1.000000e+00 : f32
    %913 = vector.broadcast %cst_158 : f32 to vector<2x32xf32>
    %914 = arith.addf %913, %912 : vector<2x32xf32>
    %915 = arith.divf %913, %914 : vector<2x32xf32>
    %916 = vector.extract_strided_slice %909 {offsets = [0, 32], sizes = [2, 32], strides = [1, 1]} : vector<2x128xf32> to vector<2x32xf32>
    %917 = arith.negf %916 : vector<2x32xf32>
    %918 = math.exp %917 : vector<2x32xf32>
    %cst_159 = arith.constant 1.000000e+00 : f32
    %919 = vector.broadcast %cst_159 : f32 to vector<2x32xf32>
    %920 = arith.addf %919, %918 : vector<2x32xf32>
    %921 = arith.divf %919, %920 : vector<2x32xf32>
    %922 = vector.extract_strided_slice %909 {offsets = [0, 64], sizes = [2, 32], strides = [1, 1]} : vector<2x128xf32> to vector<2x32xf32>
    %923 = math.tanh %922 : vector<2x32xf32>
    %924 = vector.extract_strided_slice %909 {offsets = [0, 96], sizes = [2, 32], strides = [1, 1]} : vector<2x128xf32> to vector<2x32xf32>
    %925 = arith.negf %924 : vector<2x32xf32>
    %926 = math.exp %925 : vector<2x32xf32>
    %cst_160 = arith.constant 1.000000e+00 : f32
    %927 = vector.broadcast %cst_160 : f32 to vector<2x32xf32>
    %928 = arith.addf %927, %926 : vector<2x32xf32>
    %929 = arith.divf %927, %928 : vector<2x32xf32>
    %930 = arith.mulf %921, %872 : vector<2x32xf32>
    %931 = arith.mulf %915, %923 : vector<2x32xf32>
    %932 = arith.addf %930, %931 : vector<2x32xf32>
    %933 = math.tanh %932 : vector<2x32xf32>
    %934 = arith.mulf %929, %933 : vector<2x32xf32>
    %935 = vector.extract_strided_slice %661 {offsets = [0, 3, 128], sizes = [2, 1, 128], strides = [1, 1, 1]} : vector<2x8x256xf32> to vector<2x1x128xf32>
    %936 = vector.shape_cast %935 : vector<2x1x128xf32> to vector<2x128xf32>
    %937 = vector.extract_strided_slice %905 {offsets = [0, 128], sizes = [2, 128], strides = [1, 1]} : vector<2x256xf32> to vector<2x128xf32>
    %938 = arith.addf %936, %937 : vector<2x128xf32>
    %939 = vector.extract_strided_slice %938 {offsets = [0, 0], sizes = [2, 32], strides = [1, 1]} : vector<2x128xf32> to vector<2x32xf32>
    %940 = arith.negf %939 : vector<2x32xf32>
    %941 = math.exp %940 : vector<2x32xf32>
    %cst_161 = arith.constant 1.000000e+00 : f32
    %942 = vector.broadcast %cst_161 : f32 to vector<2x32xf32>
    %943 = arith.addf %942, %941 : vector<2x32xf32>
    %944 = arith.divf %942, %943 : vector<2x32xf32>
    %945 = vector.extract_strided_slice %938 {offsets = [0, 32], sizes = [2, 32], strides = [1, 1]} : vector<2x128xf32> to vector<2x32xf32>
    %946 = arith.negf %945 : vector<2x32xf32>
    %947 = math.exp %946 : vector<2x32xf32>
    %cst_162 = arith.constant 1.000000e+00 : f32
    %948 = vector.broadcast %cst_162 : f32 to vector<2x32xf32>
    %949 = arith.addf %948, %947 : vector<2x32xf32>
    %950 = arith.divf %948, %949 : vector<2x32xf32>
    %951 = vector.extract_strided_slice %938 {offsets = [0, 64], sizes = [2, 32], strides = [1, 1]} : vector<2x128xf32> to vector<2x32xf32>
    %952 = math.tanh %951 : vector<2x32xf32>
    %953 = vector.extract_strided_slice %938 {offsets = [0, 96], sizes = [2, 32], strides = [1, 1]} : vector<2x128xf32> to vector<2x32xf32>
    %954 = arith.negf %953 : vector<2x32xf32>
    %955 = math.exp %954 : vector<2x32xf32>
    %cst_163 = arith.constant 1.000000e+00 : f32
    %956 = vector.broadcast %cst_163 : f32 to vector<2x32xf32>
    %957 = arith.addf %956, %955 : vector<2x32xf32>
    %958 = arith.divf %956, %957 : vector<2x32xf32>
    %959 = arith.mulf %950, %901 : vector<2x32xf32>
    %960 = arith.mulf %944, %952 : vector<2x32xf32>
    %961 = arith.addf %959, %960 : vector<2x32xf32>
    %962 = math.tanh %961 : vector<2x32xf32>
    %963 = arith.mulf %958, %962 : vector<2x32xf32>
    %964 = tpu.concatenate %934, %963 in 1 : vector<2x32xf32>, vector<2x32xf32> -> vector<2x64xf32>
    %cst_164 = arith.constant dense<0.000000e+00> : vector<2x256xf32>
    %965 = tpu.matmul %964, %656, %cst_164 {dimension_numbers = #tpu.dot_dimension_numbers<[1], [0], [0], [1], [0, 0, 1, 1], [], []>} : vector<2x64xf32>, vector<64x256xf32>, vector<2x256xf32> -> vector<2x256xf32>
    %966 = vector.extract_strided_slice %661 {offsets = [0, 5, 0], sizes = [2, 1, 128], strides = [1, 1, 1]} : vector<2x8x256xf32> to vector<2x1x128xf32>
    %967 = vector.shape_cast %966 : vector<2x1x128xf32> to vector<2x128xf32>
    %968 = vector.extract_strided_slice %965 {offsets = [0, 0], sizes = [2, 128], strides = [1, 1]} : vector<2x256xf32> to vector<2x128xf32>
    %969 = arith.addf %967, %968 : vector<2x128xf32>
    %970 = vector.extract_strided_slice %969 {offsets = [0, 0], sizes = [2, 32], strides = [1, 1]} : vector<2x128xf32> to vector<2x32xf32>
    %971 = arith.negf %970 : vector<2x32xf32>
    %972 = math.exp %971 : vector<2x32xf32>
    %cst_165 = arith.constant 1.000000e+00 : f32
    %973 = vector.broadcast %cst_165 : f32 to vector<2x32xf32>
    %974 = arith.addf %973, %972 : vector<2x32xf32>
    %975 = arith.divf %973, %974 : vector<2x32xf32>
    %976 = vector.extract_strided_slice %969 {offsets = [0, 32], sizes = [2, 32], strides = [1, 1]} : vector<2x128xf32> to vector<2x32xf32>
    %977 = arith.negf %976 : vector<2x32xf32>
    %978 = math.exp %977 : vector<2x32xf32>
    %cst_166 = arith.constant 1.000000e+00 : f32
    %979 = vector.broadcast %cst_166 : f32 to vector<2x32xf32>
    %980 = arith.addf %979, %978 : vector<2x32xf32>
    %981 = arith.divf %979, %980 : vector<2x32xf32>
    %982 = vector.extract_strided_slice %969 {offsets = [0, 64], sizes = [2, 32], strides = [1, 1]} : vector<2x128xf32> to vector<2x32xf32>
    %983 = math.tanh %982 : vector<2x32xf32>
    %984 = vector.extract_strided_slice %969 {offsets = [0, 96], sizes = [2, 32], strides = [1, 1]} : vector<2x128xf32> to vector<2x32xf32>
    %985 = arith.negf %984 : vector<2x32xf32>
    %986 = math.exp %985 : vector<2x32xf32>
    %cst_167 = arith.constant 1.000000e+00 : f32
    %987 = vector.broadcast %cst_167 : f32 to vector<2x32xf32>
    %988 = arith.addf %987, %986 : vector<2x32xf32>
    %989 = arith.divf %987, %988 : vector<2x32xf32>
    %990 = arith.mulf %981, %932 : vector<2x32xf32>
    %991 = arith.mulf %975, %983 : vector<2x32xf32>
    %992 = arith.addf %990, %991 : vector<2x32xf32>
    %993 = math.tanh %992 : vector<2x32xf32>
    %994 = arith.mulf %989, %993 : vector<2x32xf32>
    %995 = vector.extract_strided_slice %661 {offsets = [0, 2, 128], sizes = [2, 1, 128], strides = [1, 1, 1]} : vector<2x8x256xf32> to vector<2x1x128xf32>
    %996 = vector.shape_cast %995 : vector<2x1x128xf32> to vector<2x128xf32>
    %997 = vector.extract_strided_slice %965 {offsets = [0, 128], sizes = [2, 128], strides = [1, 1]} : vector<2x256xf32> to vector<2x128xf32>
    %998 = arith.addf %996, %997 : vector<2x128xf32>
    %999 = vector.extract_strided_slice %998 {offsets = [0, 0], sizes = [2, 32], strides = [1, 1]} : vector<2x128xf32> to vector<2x32xf32>
    %1000 = arith.negf %999 : vector<2x32xf32>
    %1001 = math.exp %1000 : vector<2x32xf32>
    %cst_168 = arith.constant 1.000000e+00 : f32
    %1002 = vector.broadcast %cst_168 : f32 to vector<2x32xf32>
    %1003 = arith.addf %1002, %1001 : vector<2x32xf32>
    %1004 = arith.divf %1002, %1003 : vector<2x32xf32>
    %1005 = vector.extract_strided_slice %998 {offsets = [0, 32], sizes = [2, 32], strides = [1, 1]} : vector<2x128xf32> to vector<2x32xf32>
    %1006 = arith.negf %1005 : vector<2x32xf32>
    %1007 = math.exp %1006 : vector<2x32xf32>
    %cst_169 = arith.constant 1.000000e+00 : f32
    %1008 = vector.broadcast %cst_169 : f32 to vector<2x32xf32>
    %1009 = arith.addf %1008, %1007 : vector<2x32xf32>
    %1010 = arith.divf %1008, %1009 : vector<2x32xf32>
    %1011 = vector.extract_strided_slice %998 {offsets = [0, 64], sizes = [2, 32], strides = [1, 1]} : vector<2x128xf32> to vector<2x32xf32>
    %1012 = math.tanh %1011 : vector<2x32xf32>
    %1013 = vector.extract_strided_slice %998 {offsets = [0, 96], sizes = [2, 32], strides = [1, 1]} : vector<2x128xf32> to vector<2x32xf32>
    %1014 = arith.negf %1013 : vector<2x32xf32>
    %1015 = math.exp %1014 : vector<2x32xf32>
    %cst_170 = arith.constant 1.000000e+00 : f32
    %1016 = vector.broadcast %cst_170 : f32 to vector<2x32xf32>
    %1017 = arith.addf %1016, %1015 : vector<2x32xf32>
    %1018 = arith.divf %1016, %1017 : vector<2x32xf32>
    %1019 = arith.mulf %1010, %961 : vector<2x32xf32>
    %1020 = arith.mulf %1004, %1012 : vector<2x32xf32>
    %1021 = arith.addf %1019, %1020 : vector<2x32xf32>
    %1022 = math.tanh %1021 : vector<2x32xf32>
    %1023 = arith.mulf %1018, %1022 : vector<2x32xf32>
    %1024 = tpu.concatenate %994, %1023 in 1 : vector<2x32xf32>, vector<2x32xf32> -> vector<2x64xf32>
    %cst_171 = arith.constant dense<0.000000e+00> : vector<2x256xf32>
    %1025 = tpu.matmul %1024, %656, %cst_171 {dimension_numbers = #tpu.dot_dimension_numbers<[1], [0], [0], [1], [0, 0, 1, 1], [], []>} : vector<2x64xf32>, vector<64x256xf32>, vector<2x256xf32> -> vector<2x256xf32>
    %1026 = vector.extract_strided_slice %661 {offsets = [0, 6, 0], sizes = [2, 1, 128], strides = [1, 1, 1]} : vector<2x8x256xf32> to vector<2x1x128xf32>
    %1027 = vector.shape_cast %1026 : vector<2x1x128xf32> to vector<2x128xf32>
    %1028 = vector.extract_strided_slice %1025 {offsets = [0, 0], sizes = [2, 128], strides = [1, 1]} : vector<2x256xf32> to vector<2x128xf32>
    %1029 = arith.addf %1027, %1028 : vector<2x128xf32>
    %1030 = vector.extract_strided_slice %1029 {offsets = [0, 0], sizes = [2, 32], strides = [1, 1]} : vector<2x128xf32> to vector<2x32xf32>
    %1031 = arith.negf %1030 : vector<2x32xf32>
    %1032 = math.exp %1031 : vector<2x32xf32>
    %cst_172 = arith.constant 1.000000e+00 : f32
    %1033 = vector.broadcast %cst_172 : f32 to vector<2x32xf32>
    %1034 = arith.addf %1033, %1032 : vector<2x32xf32>
    %1035 = arith.divf %1033, %1034 : vector<2x32xf32>
    %1036 = vector.extract_strided_slice %1029 {offsets = [0, 32], sizes = [2, 32], strides = [1, 1]} : vector<2x128xf32> to vector<2x32xf32>
    %1037 = arith.negf %1036 : vector<2x32xf32>
    %1038 = math.exp %1037 : vector<2x32xf32>
    %cst_173 = arith.constant 1.000000e+00 : f32
    %1039 = vector.broadcast %cst_173 : f32 to vector<2x32xf32>
    %1040 = arith.addf %1039, %1038 : vector<2x32xf32>
    %1041 = arith.divf %1039, %1040 : vector<2x32xf32>
    %1042 = vector.extract_strided_slice %1029 {offsets = [0, 64], sizes = [2, 32], strides = [1, 1]} : vector<2x128xf32> to vector<2x32xf32>
    %1043 = math.tanh %1042 : vector<2x32xf32>
    %1044 = vector.extract_strided_slice %1029 {offsets = [0, 96], sizes = [2, 32], strides = [1, 1]} : vector<2x128xf32> to vector<2x32xf32>
    %1045 = arith.negf %1044 : vector<2x32xf32>
    %1046 = math.exp %1045 : vector<2x32xf32>
    %cst_174 = arith.constant 1.000000e+00 : f32
    %1047 = vector.broadcast %cst_174 : f32 to vector<2x32xf32>
    %1048 = arith.addf %1047, %1046 : vector<2x32xf32>
    %1049 = arith.divf %1047, %1048 : vector<2x32xf32>
    %1050 = arith.mulf %1041, %992 : vector<2x32xf32>
    %1051 = arith.mulf %1035, %1043 : vector<2x32xf32>
    %1052 = arith.addf %1050, %1051 : vector<2x32xf32>
    %1053 = math.tanh %1052 : vector<2x32xf32>
    %1054 = arith.mulf %1049, %1053 : vector<2x32xf32>
    %1055 = vector.extract_strided_slice %661 {offsets = [0, 1, 128], sizes = [2, 1, 128], strides = [1, 1, 1]} : vector<2x8x256xf32> to vector<2x1x128xf32>
    %1056 = vector.shape_cast %1055 : vector<2x1x128xf32> to vector<2x128xf32>
    %1057 = vector.extract_strided_slice %1025 {offsets = [0, 128], sizes = [2, 128], strides = [1, 1]} : vector<2x256xf32> to vector<2x128xf32>
    %1058 = arith.addf %1056, %1057 : vector<2x128xf32>
    %1059 = vector.extract_strided_slice %1058 {offsets = [0, 0], sizes = [2, 32], strides = [1, 1]} : vector<2x128xf32> to vector<2x32xf32>
    %1060 = arith.negf %1059 : vector<2x32xf32>
    %1061 = math.exp %1060 : vector<2x32xf32>
    %cst_175 = arith.constant 1.000000e+00 : f32
    %1062 = vector.broadcast %cst_175 : f32 to vector<2x32xf32>
    %1063 = arith.addf %1062, %1061 : vector<2x32xf32>
    %1064 = arith.divf %1062, %1063 : vector<2x32xf32>
    %1065 = vector.extract_strided_slice %1058 {offsets = [0, 32], sizes = [2, 32], strides = [1, 1]} : vector<2x128xf32> to vector<2x32xf32>
    %1066 = arith.negf %1065 : vector<2x32xf32>
    %1067 = math.exp %1066 : vector<2x32xf32>
    %cst_176 = arith.constant 1.000000e+00 : f32
    %1068 = vector.broadcast %cst_176 : f32 to vector<2x32xf32>
    %1069 = arith.addf %1068, %1067 : vector<2x32xf32>
    %1070 = arith.divf %1068, %1069 : vector<2x32xf32>
    %1071 = vector.extract_strided_slice %1058 {offsets = [0, 64], sizes = [2, 32], strides = [1, 1]} : vector<2x128xf32> to vector<2x32xf32>
    %1072 = math.tanh %1071 : vector<2x32xf32>
    %1073 = vector.extract_strided_slice %1058 {offsets = [0, 96], sizes = [2, 32], strides = [1, 1]} : vector<2x128xf32> to vector<2x32xf32>
    %1074 = arith.negf %1073 : vector<2x32xf32>
    %1075 = math.exp %1074 : vector<2x32xf32>
    %cst_177 = arith.constant 1.000000e+00 : f32
    %1076 = vector.broadcast %cst_177 : f32 to vector<2x32xf32>
    %1077 = arith.addf %1076, %1075 : vector<2x32xf32>
    %1078 = arith.divf %1076, %1077 : vector<2x32xf32>
    %1079 = arith.mulf %1070, %1021 : vector<2x32xf32>
    %1080 = arith.mulf %1064, %1072 : vector<2x32xf32>
    %1081 = arith.addf %1079, %1080 : vector<2x32xf32>
    %1082 = math.tanh %1081 : vector<2x32xf32>
    %1083 = arith.mulf %1078, %1082 : vector<2x32xf32>
    %1084 = tpu.concatenate %1054, %1083 in 1 : vector<2x32xf32>, vector<2x32xf32> -> vector<2x64xf32>
    %cst_178 = arith.constant dense<0.000000e+00> : vector<2x256xf32>
    %1085 = tpu.matmul %1084, %656, %cst_178 {dimension_numbers = #tpu.dot_dimension_numbers<[1], [0], [0], [1], [0, 0, 1, 1], [], []>} : vector<2x64xf32>, vector<64x256xf32>, vector<2x256xf32> -> vector<2x256xf32>
    %1086 = vector.extract_strided_slice %661 {offsets = [0, 7, 0], sizes = [2, 1, 128], strides = [1, 1, 1]} : vector<2x8x256xf32> to vector<2x1x128xf32>
    %1087 = vector.shape_cast %1086 : vector<2x1x128xf32> to vector<2x128xf32>
    %1088 = vector.extract_strided_slice %1085 {offsets = [0, 0], sizes = [2, 128], strides = [1, 1]} : vector<2x256xf32> to vector<2x128xf32>
    %1089 = arith.addf %1087, %1088 : vector<2x128xf32>
    %1090 = vector.extract_strided_slice %1089 {offsets = [0, 0], sizes = [2, 32], strides = [1, 1]} : vector<2x128xf32> to vector<2x32xf32>
    %1091 = arith.negf %1090 : vector<2x32xf32>
    %1092 = math.exp %1091 : vector<2x32xf32>
    %cst_179 = arith.constant 1.000000e+00 : f32
    %1093 = vector.broadcast %cst_179 : f32 to vector<2x32xf32>
    %1094 = arith.addf %1093, %1092 : vector<2x32xf32>
    %1095 = arith.divf %1093, %1094 : vector<2x32xf32>
    %1096 = vector.extract_strided_slice %1089 {offsets = [0, 32], sizes = [2, 32], strides = [1, 1]} : vector<2x128xf32> to vector<2x32xf32>
    %1097 = arith.negf %1096 : vector<2x32xf32>
    %1098 = math.exp %1097 : vector<2x32xf32>
    %cst_180 = arith.constant 1.000000e+00 : f32
    %1099 = vector.broadcast %cst_180 : f32 to vector<2x32xf32>
    %1100 = arith.addf %1099, %1098 : vector<2x32xf32>
    %1101 = arith.divf %1099, %1100 : vector<2x32xf32>
    %1102 = vector.extract_strided_slice %1089 {offsets = [0, 64], sizes = [2, 32], strides = [1, 1]} : vector<2x128xf32> to vector<2x32xf32>
    %1103 = math.tanh %1102 : vector<2x32xf32>
    %1104 = vector.extract_strided_slice %1089 {offsets = [0, 96], sizes = [2, 32], strides = [1, 1]} : vector<2x128xf32> to vector<2x32xf32>
    %1105 = arith.negf %1104 : vector<2x32xf32>
    %1106 = math.exp %1105 : vector<2x32xf32>
    %cst_181 = arith.constant 1.000000e+00 : f32
    %1107 = vector.broadcast %cst_181 : f32 to vector<2x32xf32>
    %1108 = arith.addf %1107, %1106 : vector<2x32xf32>
    %1109 = arith.divf %1107, %1108 : vector<2x32xf32>
    %1110 = arith.mulf %1101, %1052 : vector<2x32xf32>
    %1111 = arith.mulf %1095, %1103 : vector<2x32xf32>
    %1112 = arith.addf %1110, %1111 : vector<2x32xf32>
    %1113 = math.tanh %1112 : vector<2x32xf32>
    %1114 = arith.mulf %1109, %1113 : vector<2x32xf32>
    %1115 = vector.extract_strided_slice %661 {offsets = [0, 0, 128], sizes = [2, 1, 128], strides = [1, 1, 1]} : vector<2x8x256xf32> to vector<2x1x128xf32>
    %1116 = vector.shape_cast %1115 : vector<2x1x128xf32> to vector<2x128xf32>
    %1117 = vector.extract_strided_slice %1085 {offsets = [0, 128], sizes = [2, 128], strides = [1, 1]} : vector<2x256xf32> to vector<2x128xf32>
    %1118 = arith.addf %1116, %1117 : vector<2x128xf32>
    %1119 = vector.extract_strided_slice %1118 {offsets = [0, 0], sizes = [2, 32], strides = [1, 1]} : vector<2x128xf32> to vector<2x32xf32>
    %1120 = arith.negf %1119 : vector<2x32xf32>
    %1121 = math.exp %1120 : vector<2x32xf32>
    %cst_182 = arith.constant 1.000000e+00 : f32
    %1122 = vector.broadcast %cst_182 : f32 to vector<2x32xf32>
    %1123 = arith.addf %1122, %1121 : vector<2x32xf32>
    %1124 = arith.divf %1122, %1123 : vector<2x32xf32>
    %1125 = vector.extract_strided_slice %1118 {offsets = [0, 32], sizes = [2, 32], strides = [1, 1]} : vector<2x128xf32> to vector<2x32xf32>
    %1126 = arith.negf %1125 : vector<2x32xf32>
    %1127 = math.exp %1126 : vector<2x32xf32>
    %cst_183 = arith.constant 1.000000e+00 : f32
    %1128 = vector.broadcast %cst_183 : f32 to vector<2x32xf32>
    %1129 = arith.addf %1128, %1127 : vector<2x32xf32>
    %1130 = arith.divf %1128, %1129 : vector<2x32xf32>
    %1131 = vector.extract_strided_slice %1118 {offsets = [0, 64], sizes = [2, 32], strides = [1, 1]} : vector<2x128xf32> to vector<2x32xf32>
    %1132 = math.tanh %1131 : vector<2x32xf32>
    %1133 = vector.extract_strided_slice %1118 {offsets = [0, 96], sizes = [2, 32], strides = [1, 1]} : vector<2x128xf32> to vector<2x32xf32>
    %1134 = arith.negf %1133 : vector<2x32xf32>
    %1135 = math.exp %1134 : vector<2x32xf32>
    %cst_184 = arith.constant 1.000000e+00 : f32
    %1136 = vector.broadcast %cst_184 : f32 to vector<2x32xf32>
    %1137 = arith.addf %1136, %1135 : vector<2x32xf32>
    %1138 = arith.divf %1136, %1137 : vector<2x32xf32>
    %1139 = arith.mulf %1130, %1081 : vector<2x32xf32>
    %1140 = arith.mulf %1124, %1132 : vector<2x32xf32>
    %1141 = arith.addf %1139, %1140 : vector<2x32xf32>
    %1142 = math.tanh %1141 : vector<2x32xf32>
    %1143 = arith.mulf %1138, %1142 : vector<2x32xf32>
    %1144 = vector.shape_cast %694 : vector<2x32xf32> to vector<2x1x32xf32>
    %1145 = vector.shape_cast %754 : vector<2x32xf32> to vector<2x1x32xf32>
    %1146 = vector.shape_cast %814 : vector<2x32xf32> to vector<2x1x32xf32>
    %1147 = vector.shape_cast %874 : vector<2x32xf32> to vector<2x1x32xf32>
    %1148 = vector.shape_cast %934 : vector<2x32xf32> to vector<2x1x32xf32>
    %1149 = vector.shape_cast %994 : vector<2x32xf32> to vector<2x1x32xf32>
    %1150 = vector.shape_cast %1054 : vector<2x32xf32> to vector<2x1x32xf32>
    %1151 = vector.shape_cast %1114 : vector<2x32xf32> to vector<2x1x32xf32>
    %1152 = tpu.concatenate %1144, %1145, %1146, %1147, %1148, %1149, %1150, %1151 in 1 : vector<2x1x32xf32>, vector<2x1x32xf32>, vector<2x1x32xf32>, vector<2x1x32xf32>, vector<2x1x32xf32>, vector<2x1x32xf32>, vector<2x1x32xf32>, vector<2x1x32xf32> -> vector<2x8x32xf32>
    %1153 = vector.shape_cast %1143 : vector<2x32xf32> to vector<2x1x32xf32>
    %1154 = vector.shape_cast %1083 : vector<2x32xf32> to vector<2x1x32xf32>
    %1155 = vector.shape_cast %1023 : vector<2x32xf32> to vector<2x1x32xf32>
    %1156 = vector.shape_cast %963 : vector<2x32xf32> to vector<2x1x32xf32>
    %1157 = vector.shape_cast %903 : vector<2x32xf32> to vector<2x1x32xf32>
    %1158 = vector.shape_cast %843 : vector<2x32xf32> to vector<2x1x32xf32>
    %1159 = vector.shape_cast %783 : vector<2x32xf32> to vector<2x1x32xf32>
    %1160 = vector.shape_cast %723 : vector<2x32xf32> to vector<2x1x32xf32>
    %1161 = tpu.concatenate %1153, %1154, %1155, %1156, %1157, %1158, %1159, %1160 in 1 : vector<2x1x32xf32>, vector<2x1x32xf32>, vector<2x1x32xf32>, vector<2x1x32xf32>, vector<2x1x32xf32>, vector<2x1x32xf32>, vector<2x1x32xf32>, vector<2x1x32xf32> -> vector<2x8x32xf32>
    %1162 = tpu.concatenate %1152, %1161 in 2 : vector<2x8x32xf32>, vector<2x8x32xf32> -> vector<2x8x64xf32>
    %c0_185 = arith.constant 0 : index
    %c0_186 = arith.constant 0 : index
    %1163 = vector.load %arg16[%c0_185, %c0_186] : memref<64x192xf32, #tpu.memory_space<vmem>>, vector<64x192xf32>
    %c0_187 = arith.constant 0 : index
    %c0_188 = arith.constant 0 : index
    %1164 = vector.load %arg17[%c0_187, %c0_188] : memref<1x192xf32, #tpu.memory_space<vmem>>, vector<1x192xf32>
    %c0_189 = arith.constant 0 : index
    %c0_190 = arith.constant 0 : index
    %1165 = vector.load %arg18[%c0_189, %c0_190] : memref<64x64xf32, #tpu.memory_space<vmem>>, vector<64x64xf32>
    %c0_191 = arith.constant 0 : index
    %c0_192 = arith.constant 0 : index
    %1166 = vector.load %arg19[%c0_191, %c0_192] : memref<1x64xf32, #tpu.memory_space<vmem>>, vector<1x64xf32>
    %1167 = vector.shape_cast %1162 : vector<2x8x64xf32> to vector<16x64xf32>
    %cst_193 = arith.constant dense<0.000000e+00> : vector<16x192xf32>
    %1168 = tpu.matmul %1167, %1163, %cst_193 {dimension_numbers = #tpu.dot_dimension_numbers<[1], [0], [0], [1], [0, 0, 1, 1], [], []>} : vector<16x64xf32>, vector<64x192xf32>, vector<16x192xf32> -> vector<16x192xf32>
    %1169 = vector.broadcast %1164 : vector<1x192xf32> to vector<16x192xf32>
    %1170 = arith.addf %1168, %1169 : vector<16x192xf32>
    %1171 = vector.extract_strided_slice %1170 {offsets = [0, 0], sizes = [16, 64], strides = [1, 1]} : vector<16x192xf32> to vector<16x64xf32>
    %1172 = vector.extract_strided_slice %1170 {offsets = [0, 64], sizes = [16, 64], strides = [1, 1]} : vector<16x192xf32> to vector<16x64xf32>
    %1173 = vector.extract_strided_slice %1170 {offsets = [0, 128], sizes = [16, 64], strides = [1, 1]} : vector<16x192xf32> to vector<16x64xf32>
    %cst_194 = arith.constant 0.000000e+00 : f32
    %1174 = vector.broadcast %cst_194 : f32 to vector<16x64xf32>
    %1175 = vector.broadcast %1166 : vector<1x64xf32> to vector<16x64xf32>
    %1176 = arith.addf %1174, %1175 : vector<16x64xf32>
    %1177 = vector.extract_strided_slice %1171 {offsets = [0, 0], sizes = [16, 16], strides = [1, 1]} : vector<16x64xf32> to vector<16x16xf32>
    %1178 = vector.shape_cast %1177 : vector<16x16xf32> to vector<2x8x16xf32>
    %1179 = vector.extract_strided_slice %1172 {offsets = [0, 0], sizes = [16, 16], strides = [1, 1]} : vector<16x64xf32> to vector<16x16xf32>
    %1180 = vector.shape_cast %1179 : vector<16x16xf32> to vector<2x8x16xf32>
    %1181 = vector.extract_strided_slice %1173 {offsets = [0, 0], sizes = [16, 16], strides = [1, 1]} : vector<16x64xf32> to vector<16x16xf32>
    %1182 = vector.shape_cast %1181 : vector<16x16xf32> to vector<2x8x16xf32>
    "tpu.trace_start"() <{level = 10 : i32, message = "bqd,bkd->bqk"}> : () -> ()
    %cst_195 = arith.constant dense<0.000000e+00> : vector<2x8x8xf32>
    %1183 = tpu.matmul %1178, %1180, %cst_195 {dimension_numbers = #tpu.dot_dimension_numbers<[2], [2], [1], [1], [0, 0, 0, 1, 1, 1], [0], [0]>} : vector<2x8x16xf32>, vector<2x8x16xf32>, vector<2x8x8xf32> -> vector<2x8x8xf32>
    "tpu.trace_stop"() : () -> ()
    %cst_196 = arith.constant dense<0xFF800000> : vector<2x8xf32>
    %1184 = vector.multi_reduction <maximumf>, %1183, %cst_196 [2] : vector<2x8x8xf32> to vector<2x8xf32>
    %1185 = vector.shape_cast %1184 : vector<2x8xf32> to vector<2x8x1xf32>
    %1186 = vector.broadcast %1185 : vector<2x8x1xf32> to vector<2x8x8xf32>
    %1187 = arith.subf %1183, %1186 : vector<2x8x8xf32>
    %1188 = math.exp %1187 : vector<2x8x8xf32>
    %cst_197 = arith.constant dense<0.000000e+00> : vector<2x8xf32>
    %1189 = vector.multi_reduction <add>, %1188, %cst_197 [2] : vector<2x8x8xf32> to vector<2x8xf32>
    %1190 = vector.shape_cast %1189 : vector<2x8xf32> to vector<2x8x1xf32>
    %1191 = vector.broadcast %1190 : vector<2x8x1xf32> to vector<2x8x8xf32>
    %1192 = arith.divf %1188, %1191 : vector<2x8x8xf32>
    "tpu.trace_start"() <{level = 10 : i32, message = "bqk,bkd->bqd"}> : () -> ()
    %cst_198 = arith.constant dense<0.000000e+00> : vector<2x8x16xf32>
    %1193 = tpu.matmul %1192, %1182, %cst_198 {dimension_numbers = #tpu.dot_dimension_numbers<[2], [1], [1], [2], [0, 0, 0, 1, 1, 2], [0], [0]>} : vector<2x8x8xf32>, vector<2x8x16xf32>, vector<2x8x16xf32> -> vector<2x8x16xf32>
    "tpu.trace_stop"() : () -> ()
    %1194 = vector.shape_cast %1193 : vector<2x8x16xf32> to vector<16x16xf32>
    %1195 = vector.extract_strided_slice %1165 {offsets = [0, 0], sizes = [16, 64], strides = [1, 1]} : vector<64x64xf32> to vector<16x64xf32>
    %cst_199 = arith.constant dense<0.000000e+00> : vector<16x64xf32>
    %1196 = tpu.matmul %1194, %1195, %cst_199 {dimension_numbers = #tpu.dot_dimension_numbers<[1], [0], [0], [1], [0, 0, 1, 1], [], []>} : vector<16x16xf32>, vector<16x64xf32>, vector<16x64xf32> -> vector<16x64xf32>
    %1197 = arith.addf %1176, %1196 : vector<16x64xf32>
    %1198 = vector.extract_strided_slice %1171 {offsets = [0, 16], sizes = [16, 16], strides = [1, 1]} : vector<16x64xf32> to vector<16x16xf32>
    %1199 = vector.shape_cast %1198 : vector<16x16xf32> to vector<2x8x16xf32>
    %1200 = vector.extract_strided_slice %1172 {offsets = [0, 16], sizes = [16, 16], strides = [1, 1]} : vector<16x64xf32> to vector<16x16xf32>
    %1201 = vector.shape_cast %1200 : vector<16x16xf32> to vector<2x8x16xf32>
    %1202 = vector.extract_strided_slice %1173 {offsets = [0, 16], sizes = [16, 16], strides = [1, 1]} : vector<16x64xf32> to vector<16x16xf32>
    %1203 = vector.shape_cast %1202 : vector<16x16xf32> to vector<2x8x16xf32>
    "tpu.trace_start"() <{level = 10 : i32, message = "bqd,bkd->bqk"}> : () -> ()
    %cst_200 = arith.constant dense<0.000000e+00> : vector<2x8x8xf32>
    %1204 = tpu.matmul %1199, %1201, %cst_200 {dimension_numbers = #tpu.dot_dimension_numbers<[2], [2], [1], [1], [0, 0, 0, 1, 1, 1], [0], [0]>} : vector<2x8x16xf32>, vector<2x8x16xf32>, vector<2x8x8xf32> -> vector<2x8x8xf32>
    "tpu.trace_stop"() : () -> ()
    %cst_201 = arith.constant dense<0xFF800000> : vector<2x8xf32>
    %1205 = vector.multi_reduction <maximumf>, %1204, %cst_201 [2] : vector<2x8x8xf32> to vector<2x8xf32>
    %1206 = vector.shape_cast %1205 : vector<2x8xf32> to vector<2x8x1xf32>
    %1207 = vector.broadcast %1206 : vector<2x8x1xf32> to vector<2x8x8xf32>
    %1208 = arith.subf %1204, %1207 : vector<2x8x8xf32>
    %1209 = math.exp %1208 : vector<2x8x8xf32>
    %cst_202 = arith.constant dense<0.000000e+00> : vector<2x8xf32>
    %1210 = vector.multi_reduction <add>, %1209, %cst_202 [2] : vector<2x8x8xf32> to vector<2x8xf32>
    %1211 = vector.shape_cast %1210 : vector<2x8xf32> to vector<2x8x1xf32>
    %1212 = vector.broadcast %1211 : vector<2x8x1xf32> to vector<2x8x8xf32>
    %1213 = arith.divf %1209, %1212 : vector<2x8x8xf32>
    "tpu.trace_start"() <{level = 10 : i32, message = "bqk,bkd->bqd"}> : () -> ()
    %cst_203 = arith.constant dense<0.000000e+00> : vector<2x8x16xf32>
    %1214 = tpu.matmul %1213, %1203, %cst_203 {dimension_numbers = #tpu.dot_dimension_numbers<[2], [1], [1], [2], [0, 0, 0, 1, 1, 2], [0], [0]>} : vector<2x8x8xf32>, vector<2x8x16xf32>, vector<2x8x16xf32> -> vector<2x8x16xf32>
    "tpu.trace_stop"() : () -> ()
    %1215 = vector.shape_cast %1214 : vector<2x8x16xf32> to vector<16x16xf32>
    %1216 = vector.extract_strided_slice %1165 {offsets = [16, 0], sizes = [16, 64], strides = [1, 1]} : vector<64x64xf32> to vector<16x64xf32>
    %cst_204 = arith.constant dense<0.000000e+00> : vector<16x64xf32>
    %1217 = tpu.matmul %1215, %1216, %cst_204 {dimension_numbers = #tpu.dot_dimension_numbers<[1], [0], [0], [1], [0, 0, 1, 1], [], []>} : vector<16x16xf32>, vector<16x64xf32>, vector<16x64xf32> -> vector<16x64xf32>
    %1218 = arith.addf %1197, %1217 : vector<16x64xf32>
    %1219 = vector.extract_strided_slice %1171 {offsets = [0, 32], sizes = [16, 16], strides = [1, 1]} : vector<16x64xf32> to vector<16x16xf32>
    %1220 = vector.shape_cast %1219 : vector<16x16xf32> to vector<2x8x16xf32>
    %1221 = vector.extract_strided_slice %1172 {offsets = [0, 32], sizes = [16, 16], strides = [1, 1]} : vector<16x64xf32> to vector<16x16xf32>
    %1222 = vector.shape_cast %1221 : vector<16x16xf32> to vector<2x8x16xf32>
    %1223 = vector.extract_strided_slice %1173 {offsets = [0, 32], sizes = [16, 16], strides = [1, 1]} : vector<16x64xf32> to vector<16x16xf32>
    %1224 = vector.shape_cast %1223 : vector<16x16xf32> to vector<2x8x16xf32>
    "tpu.trace_start"() <{level = 10 : i32, message = "bqd,bkd->bqk"}> : () -> ()
    %cst_205 = arith.constant dense<0.000000e+00> : vector<2x8x8xf32>
    %1225 = tpu.matmul %1220, %1222, %cst_205 {dimension_numbers = #tpu.dot_dimension_numbers<[2], [2], [1], [1], [0, 0, 0, 1, 1, 1], [0], [0]>} : vector<2x8x16xf32>, vector<2x8x16xf32>, vector<2x8x8xf32> -> vector<2x8x8xf32>
    "tpu.trace_stop"() : () -> ()
    %cst_206 = arith.constant dense<0xFF800000> : vector<2x8xf32>
    %1226 = vector.multi_reduction <maximumf>, %1225, %cst_206 [2] : vector<2x8x8xf32> to vector<2x8xf32>
    %1227 = vector.shape_cast %1226 : vector<2x8xf32> to vector<2x8x1xf32>
    %1228 = vector.broadcast %1227 : vector<2x8x1xf32> to vector<2x8x8xf32>
    %1229 = arith.subf %1225, %1228 : vector<2x8x8xf32>
    %1230 = math.exp %1229 : vector<2x8x8xf32>
    %cst_207 = arith.constant dense<0.000000e+00> : vector<2x8xf32>
    %1231 = vector.multi_reduction <add>, %1230, %cst_207 [2] : vector<2x8x8xf32> to vector<2x8xf32>
    %1232 = vector.shape_cast %1231 : vector<2x8xf32> to vector<2x8x1xf32>
    %1233 = vector.broadcast %1232 : vector<2x8x1xf32> to vector<2x8x8xf32>
    %1234 = arith.divf %1230, %1233 : vector<2x8x8xf32>
    "tpu.trace_start"() <{level = 10 : i32, message = "bqk,bkd->bqd"}> : () -> ()
    %cst_208 = arith.constant dense<0.000000e+00> : vector<2x8x16xf32>
    %1235 = tpu.matmul %1234, %1224, %cst_208 {dimension_numbers = #tpu.dot_dimension_numbers<[2], [1], [1], [2], [0, 0, 0, 1, 1, 2], [0], [0]>} : vector<2x8x8xf32>, vector<2x8x16xf32>, vector<2x8x16xf32> -> vector<2x8x16xf32>
    "tpu.trace_stop"() : () -> ()
    %1236 = vector.shape_cast %1235 : vector<2x8x16xf32> to vector<16x16xf32>
    %1237 = vector.extract_strided_slice %1165 {offsets = [32, 0], sizes = [16, 64], strides = [1, 1]} : vector<64x64xf32> to vector<16x64xf32>
    %cst_209 = arith.constant dense<0.000000e+00> : vector<16x64xf32>
    %1238 = tpu.matmul %1236, %1237, %cst_209 {dimension_numbers = #tpu.dot_dimension_numbers<[1], [0], [0], [1], [0, 0, 1, 1], [], []>} : vector<16x16xf32>, vector<16x64xf32>, vector<16x64xf32> -> vector<16x64xf32>
    %1239 = arith.addf %1218, %1238 : vector<16x64xf32>
    %1240 = vector.extract_strided_slice %1171 {offsets = [0, 48], sizes = [16, 16], strides = [1, 1]} : vector<16x64xf32> to vector<16x16xf32>
    %1241 = vector.shape_cast %1240 : vector<16x16xf32> to vector<2x8x16xf32>
    %1242 = vector.extract_strided_slice %1172 {offsets = [0, 48], sizes = [16, 16], strides = [1, 1]} : vector<16x64xf32> to vector<16x16xf32>
    %1243 = vector.shape_cast %1242 : vector<16x16xf32> to vector<2x8x16xf32>
    %1244 = vector.extract_strided_slice %1173 {offsets = [0, 48], sizes = [16, 16], strides = [1, 1]} : vector<16x64xf32> to vector<16x16xf32>
    %1245 = vector.shape_cast %1244 : vector<16x16xf32> to vector<2x8x16xf32>
    "tpu.trace_start"() <{level = 10 : i32, message = "bqd,bkd->bqk"}> : () -> ()
    %cst_210 = arith.constant dense<0.000000e+00> : vector<2x8x8xf32>
    %1246 = tpu.matmul %1241, %1243, %cst_210 {dimension_numbers = #tpu.dot_dimension_numbers<[2], [2], [1], [1], [0, 0, 0, 1, 1, 1], [0], [0]>} : vector<2x8x16xf32>, vector<2x8x16xf32>, vector<2x8x8xf32> -> vector<2x8x8xf32>
    "tpu.trace_stop"() : () -> ()
    %cst_211 = arith.constant dense<0xFF800000> : vector<2x8xf32>
    %1247 = vector.multi_reduction <maximumf>, %1246, %cst_211 [2] : vector<2x8x8xf32> to vector<2x8xf32>
    %1248 = vector.shape_cast %1247 : vector<2x8xf32> to vector<2x8x1xf32>
    %1249 = vector.broadcast %1248 : vector<2x8x1xf32> to vector<2x8x8xf32>
    %1250 = arith.subf %1246, %1249 : vector<2x8x8xf32>
    %1251 = math.exp %1250 : vector<2x8x8xf32>
    %cst_212 = arith.constant dense<0.000000e+00> : vector<2x8xf32>
    %1252 = vector.multi_reduction <add>, %1251, %cst_212 [2] : vector<2x8x8xf32> to vector<2x8xf32>
    %1253 = vector.shape_cast %1252 : vector<2x8xf32> to vector<2x8x1xf32>
    %1254 = vector.broadcast %1253 : vector<2x8x1xf32> to vector<2x8x8xf32>
    %1255 = arith.divf %1251, %1254 : vector<2x8x8xf32>
    "tpu.trace_start"() <{level = 10 : i32, message = "bqk,bkd->bqd"}> : () -> ()
    %cst_213 = arith.constant dense<0.000000e+00> : vector<2x8x16xf32>
    %1256 = tpu.matmul %1255, %1245, %cst_213 {dimension_numbers = #tpu.dot_dimension_numbers<[2], [1], [1], [2], [0, 0, 0, 1, 1, 2], [0], [0]>} : vector<2x8x8xf32>, vector<2x8x16xf32>, vector<2x8x16xf32> -> vector<2x8x16xf32>
    "tpu.trace_stop"() : () -> ()
    %1257 = vector.shape_cast %1256 : vector<2x8x16xf32> to vector<16x16xf32>
    %1258 = vector.extract_strided_slice %1165 {offsets = [48, 0], sizes = [16, 64], strides = [1, 1]} : vector<64x64xf32> to vector<16x64xf32>
    %cst_214 = arith.constant dense<0.000000e+00> : vector<16x64xf32>
    %1259 = tpu.matmul %1257, %1258, %cst_214 {dimension_numbers = #tpu.dot_dimension_numbers<[1], [0], [0], [1], [0, 0, 1, 1], [], []>} : vector<16x16xf32>, vector<16x64xf32>, vector<16x64xf32> -> vector<16x64xf32>
    %1260 = arith.addf %1239, %1259 : vector<16x64xf32>
    %1261 = vector.shape_cast %1260 : vector<16x64xf32> to vector<2x8x64xf32>
    %cst_215 = arith.constant dense<0.000000e+00> : vector<2x64xf32>
    %1262 = vector.multi_reduction <add>, %1261, %cst_215 [1] : vector<2x8x64xf32> to vector<2x64xf32>
    %cst_216 = arith.constant 8.000000e+00 : f32
    %1263 = vector.broadcast %cst_216 : f32 to vector<2x64xf32>
    %1264 = arith.divf %1262, %1263 : vector<2x64xf32>
    %c0_217 = arith.constant 0 : index
    %c0_218 = arith.constant 0 : index
    %1265 = vector.load %arg20[%c0_217, %c0_218] : memref<64x64xf32, #tpu.memory_space<vmem>>, vector<64x64xf32>
    %cst_219 = arith.constant dense<0.000000e+00> : vector<2x64xf32>
    %1266 = tpu.matmul %1264, %1265, %cst_219 {dimension_numbers = #tpu.dot_dimension_numbers<[1], [0], [0], [1], [0, 0, 1, 1], [], []>} : vector<2x64xf32>, vector<64x64xf32>, vector<2x64xf32> -> vector<2x64xf32>
    %c0_220 = arith.constant 0 : index
    %c0_221 = arith.constant 0 : index
    %1267 = vector.load %arg21[%c0_220, %c0_221] : memref<1x64xf32, #tpu.memory_space<vmem>>, vector<1x64xf32>
    %1268 = vector.broadcast %1267 : vector<1x64xf32> to vector<2x64xf32>
    %1269 = arith.addf %1266, %1268 : vector<2x64xf32>
    %cst_222 = arith.constant 5.000000e-01 : f32
    %1270 = vector.broadcast %cst_222 : f32 to vector<2x64xf32>
    %1271 = arith.mulf %1270, %1269 : vector<2x64xf32>
    %cst_223 = arith.constant 0.707106769 : f32
    %1272 = vector.broadcast %cst_223 : f32 to vector<2x64xf32>
    %1273 = arith.mulf %1269, %1272 : vector<2x64xf32>
    %1274 = math.absf %1273 : vector<2x64xf32>
    %cst_224 = arith.constant 0.327591091 : f32
    %1275 = vector.broadcast %cst_224 : f32 to vector<2x64xf32>
    %1276 = arith.mulf %1275, %1274 : vector<2x64xf32>
    %cst_225 = arith.constant 1.000000e+00 : f32
    %1277 = vector.broadcast %cst_225 : f32 to vector<2x64xf32>
    %1278 = arith.addf %1277, %1276 : vector<2x64xf32>
    %cst_226 = arith.constant 1.000000e+00 : f32
    %1279 = vector.broadcast %cst_226 : f32 to vector<2x64xf32>
    %1280 = arith.divf %1279, %1278 : vector<2x64xf32>
    %cst_227 = arith.constant 1.06140542 : f32
    %1281 = vector.broadcast %cst_227 : f32 to vector<2x64xf32>
    %1282 = arith.mulf %1281, %1280 : vector<2x64xf32>
    %cst_228 = arith.constant -1.45315206 : f32
    %1283 = vector.broadcast %cst_228 : f32 to vector<2x64xf32>
    %1284 = arith.addf %1282, %1283 : vector<2x64xf32>
    %1285 = arith.mulf %1284, %1280 : vector<2x64xf32>
    %cst_229 = arith.constant 1.42141378 : f32
    %1286 = vector.broadcast %cst_229 : f32 to vector<2x64xf32>
    %1287 = arith.addf %1285, %1286 : vector<2x64xf32>
    %1288 = arith.mulf %1287, %1280 : vector<2x64xf32>
    %cst_230 = arith.constant -0.284496725 : f32
    %1289 = vector.broadcast %cst_230 : f32 to vector<2x64xf32>
    %1290 = arith.addf %1288, %1289 : vector<2x64xf32>
    %1291 = arith.mulf %1290, %1280 : vector<2x64xf32>
    %cst_231 = arith.constant 0.254829586 : f32
    %1292 = vector.broadcast %cst_231 : f32 to vector<2x64xf32>
    %1293 = arith.addf %1291, %1292 : vector<2x64xf32>
    %1294 = arith.mulf %1293, %1280 : vector<2x64xf32>
    %cst_232 = arith.constant 0.000000e+00 : f32
    %1295 = vector.broadcast %cst_232 : f32 to vector<2x64xf32>
    %1296 = arith.subf %1295, %1274 : vector<2x64xf32>
    %1297 = arith.mulf %1296, %1274 : vector<2x64xf32>
    %1298 = math.exp %1297 : vector<2x64xf32>
    %1299 = arith.mulf %1294, %1298 : vector<2x64xf32>
    %cst_233 = arith.constant 1.000000e+00 : f32
    %1300 = vector.broadcast %cst_233 : f32 to vector<2x64xf32>
    %1301 = arith.subf %1300, %1299 : vector<2x64xf32>
    %cst_234 = arith.constant 0.000000e+00 : f32
    %1302 = vector.broadcast %cst_234 : f32 to vector<2x64xf32>
    %1303 = arith.cmpf olt, %1273, %1302 : vector<2x64xf32>
    %cst_235 = arith.constant 0.000000e+00 : f32
    %1304 = vector.broadcast %cst_235 : f32 to vector<2x64xf32>
    %1305 = arith.subf %1304, %1301 : vector<2x64xf32>
    %1306 = arith.select %1303, %1305, %1301 : vector<2x64xi1>, vector<2x64xf32>
    %cst_236 = arith.constant 1.000000e+00 : f32
    %1307 = vector.broadcast %cst_236 : f32 to vector<2x64xf32>
    %1308 = arith.addf %1307, %1306 : vector<2x64xf32>
    %1309 = arith.mulf %1271, %1308 : vector<2x64xf32>
    %c0_237 = arith.constant 0 : index
    %c0_238 = arith.constant 0 : index
    %1310 = vector.load %arg22[%c0_237, %c0_238] : memref<64x64xf32, #tpu.memory_space<vmem>>, vector<64x64xf32>
    %cst_239 = arith.constant dense<0.000000e+00> : vector<2x64xf32>
    %1311 = tpu.matmul %1309, %1310, %cst_239 {dimension_numbers = #tpu.dot_dimension_numbers<[1], [0], [0], [1], [0, 0, 1, 1], [], []>} : vector<2x64xf32>, vector<64x64xf32>, vector<2x64xf32> -> vector<2x64xf32>
    %c0_240 = arith.constant 0 : index
    %c0_241 = arith.constant 0 : index
    %1312 = vector.load %arg23[%c0_240, %c0_241] : memref<1x64xf32, #tpu.memory_space<vmem>>, vector<1x64xf32>
    %1313 = vector.broadcast %1312 : vector<1x64xf32> to vector<2x64xf32>
    %1314 = arith.addf %1311, %1313 : vector<2x64xf32>
    %cst_242 = arith.constant 5.000000e-01 : f32
    %1315 = vector.broadcast %cst_242 : f32 to vector<2x64xf32>
    %1316 = arith.mulf %1315, %1314 : vector<2x64xf32>
    %cst_243 = arith.constant 0.707106769 : f32
    %1317 = vector.broadcast %cst_243 : f32 to vector<2x64xf32>
    %1318 = arith.mulf %1314, %1317 : vector<2x64xf32>
    %1319 = math.absf %1318 : vector<2x64xf32>
    %cst_244 = arith.constant 0.327591091 : f32
    %1320 = vector.broadcast %cst_244 : f32 to vector<2x64xf32>
    %1321 = arith.mulf %1320, %1319 : vector<2x64xf32>
    %cst_245 = arith.constant 1.000000e+00 : f32
    %1322 = vector.broadcast %cst_245 : f32 to vector<2x64xf32>
    %1323 = arith.addf %1322, %1321 : vector<2x64xf32>
    %cst_246 = arith.constant 1.000000e+00 : f32
    %1324 = vector.broadcast %cst_246 : f32 to vector<2x64xf32>
    %1325 = arith.divf %1324, %1323 : vector<2x64xf32>
    %cst_247 = arith.constant 1.06140542 : f32
    %1326 = vector.broadcast %cst_247 : f32 to vector<2x64xf32>
    %1327 = arith.mulf %1326, %1325 : vector<2x64xf32>
    %cst_248 = arith.constant -1.45315206 : f32
    %1328 = vector.broadcast %cst_248 : f32 to vector<2x64xf32>
    %1329 = arith.addf %1327, %1328 : vector<2x64xf32>
    %1330 = arith.mulf %1329, %1325 : vector<2x64xf32>
    %cst_249 = arith.constant 1.42141378 : f32
    %1331 = vector.broadcast %cst_249 : f32 to vector<2x64xf32>
    %1332 = arith.addf %1330, %1331 : vector<2x64xf32>
    %1333 = arith.mulf %1332, %1325 : vector<2x64xf32>
    %cst_250 = arith.constant -0.284496725 : f32
    %1334 = vector.broadcast %cst_250 : f32 to vector<2x64xf32>
    %1335 = arith.addf %1333, %1334 : vector<2x64xf32>
    %1336 = arith.mulf %1335, %1325 : vector<2x64xf32>
    %cst_251 = arith.constant 0.254829586 : f32
    %1337 = vector.broadcast %cst_251 : f32 to vector<2x64xf32>
    %1338 = arith.addf %1336, %1337 : vector<2x64xf32>
    %1339 = arith.mulf %1338, %1325 : vector<2x64xf32>
    %cst_252 = arith.constant 0.000000e+00 : f32
    %1340 = vector.broadcast %cst_252 : f32 to vector<2x64xf32>
    %1341 = arith.subf %1340, %1319 : vector<2x64xf32>
    %1342 = arith.mulf %1341, %1319 : vector<2x64xf32>
    %1343 = math.exp %1342 : vector<2x64xf32>
    %1344 = arith.mulf %1339, %1343 : vector<2x64xf32>
    %cst_253 = arith.constant 1.000000e+00 : f32
    %1345 = vector.broadcast %cst_253 : f32 to vector<2x64xf32>
    %1346 = arith.subf %1345, %1344 : vector<2x64xf32>
    %cst_254 = arith.constant 0.000000e+00 : f32
    %1347 = vector.broadcast %cst_254 : f32 to vector<2x64xf32>
    %1348 = arith.cmpf olt, %1318, %1347 : vector<2x64xf32>
    %cst_255 = arith.constant 0.000000e+00 : f32
    %1349 = vector.broadcast %cst_255 : f32 to vector<2x64xf32>
    %1350 = arith.subf %1349, %1346 : vector<2x64xf32>
    %1351 = arith.select %1348, %1350, %1346 : vector<2x64xi1>, vector<2x64xf32>
    %cst_256 = arith.constant 1.000000e+00 : f32
    %1352 = vector.broadcast %cst_256 : f32 to vector<2x64xf32>
    %1353 = arith.addf %1352, %1351 : vector<2x64xf32>
    %1354 = arith.mulf %1316, %1353 : vector<2x64xf32>
    %c0_257 = arith.constant 0 : index
    %c0_258 = arith.constant 0 : index
    %1355 = vector.load %arg24[%c0_257, %c0_258] : memref<64x5xf32, #tpu.memory_space<vmem>>, vector<64x5xf32>
    %cst_259 = arith.constant dense<0.000000e+00> : vector<2x5xf32>
    %1356 = tpu.matmul %1354, %1355, %cst_259 {dimension_numbers = #tpu.dot_dimension_numbers<[1], [0], [0], [1], [0, 0, 1, 1], [], []>} : vector<2x64xf32>, vector<64x5xf32>, vector<2x5xf32> -> vector<2x5xf32>
    %c0_260 = arith.constant 0 : index
    %c0_261 = arith.constant 0 : index
    %1357 = vector.load %arg25[%c0_260, %c0_261] : memref<1x5xf32, #tpu.memory_space<vmem>>, vector<1x5xf32>
    %1358 = vector.broadcast %1357 : vector<1x5xf32> to vector<2x5xf32>
    %1359 = arith.addf %1356, %1358 : vector<2x5xf32>
    %c0_262 = arith.constant 0 : index
    %c0_263 = arith.constant 0 : index
    %1360 = vector.load %arg26[%c0_262, %c0_263] : memref<2x5xf32, #tpu.memory_space<vmem>>, vector<2x5xf32>
    tpu.vector_store %arg26[%c0_262, %c0_263], %1359 {strides = array<i32>} : memref<2x5xf32, #tpu.memory_space<vmem>>, vector<2x5xf32>,
    return
  }
  func.func @transform_0(%arg0: i32) -> (i32, i32, i32) {
    %c0_i32 = arith.constant 0 : i32
    %c0_i32_0 = arith.constant 0 : i32
    %c0_i32_1 = arith.constant 0 : i32
    %c0_i32_2 = arith.constant 0 : i32
    return %c0_i32, %c0_i32_0, %c0_i32_1 : i32, i32, i32
  }
  func.func @transform_1(%arg0: i32) -> (i32, i32) {
    %c0_i32 = arith.constant 0 : i32
    %c0_i32_0 = arith.constant 0 : i32
    %c0_i32_1 = arith.constant 0 : i32
    return %c0_i32, %c0_i32_0 : i32, i32
  }
  func.func @transform_2(%arg0: i32) -> (i32, i32) {
    %c0_i32 = arith.constant 0 : i32
    %c0_i32_0 = arith.constant 0 : i32
    %c0_i32_1 = arith.constant 0 : i32
    return %c0_i32, %c0_i32_0 : i32, i32
  }
  func.func @transform_3(%arg0: i32) -> (i32, i32) {
    %c0_i32 = arith.constant 0 : i32
    %c0_i32_0 = arith.constant 0 : i32
    %c0_i32_1 = arith.constant 0 : i32
    return %c0_i32, %c0_i32_0 : i32, i32
  }
  func.func @transform_4(%arg0: i32) -> (i32, i32) {
    %c0_i32 = arith.constant 0 : i32
    %c0_i32_0 = arith.constant 0 : i32
    %c0_i32_1 = arith.constant 0 : i32
    return %c0_i32, %c0_i32_0 : i32, i32
  }
  func.func @transform_5(%arg0: i32) -> (i32, i32) {
    %c0_i32 = arith.constant 0 : i32
    %c0_i32_0 = arith.constant 0 : i32
    %c0_i32_1 = arith.constant 0 : i32
    return %c0_i32, %c0_i32_0 : i32, i32
  }
  func.func @transform_6(%arg0: i32) -> (i32, i32) {
    %c0_i32 = arith.constant 0 : i32
    %c0_i32_0 = arith.constant 0 : i32
    %c0_i32_1 = arith.constant 0 : i32
    return %c0_i32, %c0_i32_0 : i32, i32
  }
  func.func @transform_7(%arg0: i32) -> (i32, i32) {
    %c0_i32 = arith.constant 0 : i32
    %c0_i32_0 = arith.constant 0 : i32
    %c0_i32_1 = arith.constant 0 : i32
    return %c0_i32, %c0_i32_0 : i32, i32
  }
  func.func @transform_8(%arg0: i32) -> (i32, i32) {
    %c0_i32 = arith.constant 0 : i32
    %c0_i32_0 = arith.constant 0 : i32
    %c0_i32_1 = arith.constant 0 : i32
    return %c0_i32, %c0_i32_0 : i32, i32
  }
  func.func @transform_9(%arg0: i32) -> (i32, i32) {
    %c0_i32 = arith.constant 0 : i32
    %c0_i32_0 = arith.constant 0 : i32
    %c0_i32_1 = arith.constant 0 : i32
    return %c0_i32, %c0_i32_0 : i32, i32
  }
  func.func @transform_10(%arg0: i32) -> (i32, i32) {
    %c0_i32 = arith.constant 0 : i32
    %c0_i32_0 = arith.constant 0 : i32
    %c0_i32_1 = arith.constant 0 : i32
    return %c0_i32, %c0_i32_0 : i32, i32
  }
  func.func @transform_11(%arg0: i32) -> (i32, i32) {
    %c0_i32 = arith.constant 0 : i32
    %c0_i32_0 = arith.constant 0 : i32
    %c0_i32_1 = arith.constant 0 : i32
    return %c0_i32, %c0_i32_0 : i32, i32
  }
  func.func @transform_12(%arg0: i32) -> (i32, i32) {
    %c0_i32 = arith.constant 0 : i32
    %c0_i32_0 = arith.constant 0 : i32
    %c0_i32_1 = arith.constant 0 : i32
    return %c0_i32, %c0_i32_0 : i32, i32
  }
  func.func @transform_13(%arg0: i32) -> (i32, i32) {
    %c0_i32 = arith.constant 0 : i32
    %c0_i32_0 = arith.constant 0 : i32
    %c0_i32_1 = arith.constant 0 : i32
    return %c0_i32, %c0_i32_0 : i32, i32
  }
  func.func @transform_14(%arg0: i32) -> (i32, i32) {
    %c0_i32 = arith.constant 0 : i32
    %c0_i32_0 = arith.constant 0 : i32
    %c0_i32_1 = arith.constant 0 : i32
    return %c0_i32, %c0_i32_0 : i32, i32
  }
  func.func @transform_15(%arg0: i32) -> (i32, i32) {
    %c0_i32 = arith.constant 0 : i32
    %c0_i32_0 = arith.constant 0 : i32
    %c0_i32_1 = arith.constant 0 : i32
    return %c0_i32, %c0_i32_0 : i32, i32
  }
  func.func @transform_16(%arg0: i32) -> (i32, i32) {
    %c0_i32 = arith.constant 0 : i32
    %c0_i32_0 = arith.constant 0 : i32
    %c0_i32_1 = arith.constant 0 : i32
    return %c0_i32, %c0_i32_0 : i32, i32
  }
  func.func @transform_17(%arg0: i32) -> (i32, i32) {
    %c0_i32 = arith.constant 0 : i32
    %c0_i32_0 = arith.constant 0 : i32
    %c0_i32_1 = arith.constant 0 : i32
    return %c0_i32, %c0_i32_0 : i32, i32
  }
  func.func @transform_18(%arg0: i32) -> (i32, i32) {
    %c0_i32 = arith.constant 0 : i32
    %c0_i32_0 = arith.constant 0 : i32
    %c0_i32_1 = arith.constant 0 : i32
    return %c0_i32, %c0_i32_0 : i32, i32
  }
  func.func @transform_19(%arg0: i32) -> (i32, i32) {
    %c0_i32 = arith.constant 0 : i32
    %c0_i32_0 = arith.constant 0 : i32
    %c0_i32_1 = arith.constant 0 : i32
    return %c0_i32, %c0_i32_0 : i32, i32
  }
  func.func @transform_20(%arg0: i32) -> (i32, i32) {
    %c0_i32 = arith.constant 0 : i32
    %c0_i32_0 = arith.constant 0 : i32
    %c0_i32_1 = arith.constant 0 : i32
    return %c0_i32, %c0_i32_0 : i32, i32
  }
  func.func @transform_21(%arg0: i32) -> (i32, i32) {
    %c0_i32 = arith.constant 0 : i32
    %c0_i32_0 = arith.constant 0 : i32
    %c0_i32_1 = arith.constant 0 : i32
    return %c0_i32, %c0_i32_0 : i32, i32
  }
  func.func @transform_22(%arg0: i32) -> (i32, i32) {
    %c0_i32 = arith.constant 0 : i32
    %c0_i32_0 = arith.constant 0 : i32
    %c0_i32_1 = arith.constant 0 : i32
    return %c0_i32, %c0_i32_0 : i32, i32
  }
  func.func @transform_23(%arg0: i32) -> (i32, i32) {
    %c0_i32 = arith.constant 0 : i32
    %c0_i32_0 = arith.constant 0 : i32
    %c0_i32_1 = arith.constant 0 : i32
    return %c0_i32, %c0_i32_0 : i32, i32
  }
  func.func @transform_24(%arg0: i32) -> (i32, i32) {
    %c0_i32 = arith.constant 0 : i32
    %c0_i32_0 = arith.constant 0 : i32
    %c0_i32_1 = arith.constant 0 : i32
    return %c0_i32, %c0_i32_0 : i32, i32
  }
  func.func @transform_25(%arg0: i32) -> (i32, i32) {
    %c0_i32 = arith.constant 0 : i32
    %c0_i32_0 = arith.constant 0 : i32
    %c0_i32_1 = arith.constant 0 : i32
    return %c0_i32, %c0_i32_0 : i32, i32
  }
}

</mosaic_0001>

<llo_original>
// kernel: model_forward.1
$region0: #{model_forward.1}
  #allocation0 [shape = 'u32[]', space=smem, size = 0x4, offset = 0x4, fixed_abs, tag = 'smem constant byte address 0x4 - core index']
  #allocation1 [shape = 'u32[72,128]{1,0:T(1,128)}', space=vmem, size = 0x9000, scoped, tag = 'internal scratch']
  %s0 = inlined_call_operand.vmem [shape: f32[4,8,36], index: 0, kind: input, shape index: {}]
  %s1 = inlined_call_operand.vmem [shape: f32[36,32], index: 1, kind: input, shape index: {}]
  %s2 = inlined_call_operand.vmem [shape: f32[1,32], index: 2, kind: input, shape index: {}]
  %s3 = inlined_call_operand.vmem [shape: f32[160,64], index: 3, kind: input, shape index: {}]
  %s4 = inlined_call_operand.vmem [shape: f32[1,64], index: 4, kind: input, shape index: {}]
  %s5 = inlined_call_operand.vmem [shape: f32[64,192], index: 5, kind: input, shape index: {}]
  %s6 = inlined_call_operand.vmem [shape: f32[1,192], index: 6, kind: input, shape index: {}]
  %s7 = inlined_call_operand.vmem [shape: f32[64,64], index: 7, kind: input, shape index: {}]
  %s8 = inlined_call_operand.vmem [shape: f32[1,64], index: 8, kind: input, shape index: {}]
  %s9 = inlined_call_operand.vmem [shape: f32[64,256], index: 9, kind: input, shape index: {}]
  %s10 = inlined_call_operand.vmem [shape: f32[1,256], index: 10, kind: input, shape index: {}]
  %s11 = inlined_call_operand.vmem [shape: f32[64,256], index: 11, kind: input, shape index: {}]
  %s12 = inlined_call_operand.vmem [shape: f32[64,256], index: 12, kind: input, shape index: {}]
  %s13 = inlined_call_operand.vmem [shape: f32[1,256], index: 13, kind: input, shape index: {}]
  %s14 = inlined_call_operand.vmem [shape: f32[64,256], index: 14, kind: input, shape index: {}]
  %s15 = inlined_call_operand.hbm [shape: f32[64,192], index: 15, kind: input, shape index: {}]
  %s16 = inlined_call_operand.vmem [shape: f32[1,192], index: 16, kind: input, shape index: {}]
  %s17 = inlined_call_operand.vmem [shape: f32[64,64], index: 17, kind: input, shape index: {}]
  %s18 = inlined_call_operand.vmem [shape: f32[1,64], index: 18, kind: input, shape index: {}]
  %s19 = inlined_call_operand.hbm [shape: f32[64,64], index: 19, kind: input, shape index: {}]
  %s20 = inlined_call_operand.vmem [shape: f32[1,64], index: 20, kind: input, shape index: {}]
  %s21 = inlined_call_operand.hbm [shape: f32[64,64], index: 21, kind: input, shape index: {}]
  %s22 = inlined_call_operand.vmem [shape: f32[1,64], index: 22, kind: input, shape index: {}]
  %s23 = inlined_call_operand.vmem [shape: f32[64,5], index: 23, kind: input, shape index: {}]
  %s24 = inlined_call_operand.vmem [shape: f32[1,5], index: 24, kind: input, shape index: {}]
  %s25 = inlined_call_operand.hbm [shape: f32[2,5], index: 25, kind: output, shape index: {}]
  %s26 = sld [smem:[#allocation0]]
  $region122: #{model_forward.1} parent=0
    _
  %s28 = ssub.s32 1, %s26
  %s29 = scalar_select 0, %s28, %s26
  $region1: #{model_forward.1} parent=0
    #allocation2 [shape = 'u8[65536]{0}', space=vmem, size = 0x10000, scoped, tag = 'input window, operand 15, single buffered']
    #allocation3 [shape = 's32[1]{0}', space=sflag, size = 0x4, scoped, tag = 'scoped memory for model_forward.1']
    #allocation4 [shape = 's32[1]{0}', space=sflag, size = 0x4, scoped, tag = 'scoped memory for model_forward.1']
    #allocation5 [shape = 'u8[32768]{0}', space=vmem, size = 0x8000, scoped, tag = 'input window, operand 19, single buffered']
    #allocation6 [shape = 's32[1]{0}', space=sflag, size = 0x4, scoped, tag = 'scoped memory for model_forward.1']
    #allocation7 [shape = 'u8[32768]{0}', space=vmem, size = 0x8000, scoped, tag = 'input window, operand 21, single buffered']
    #allocation8 [shape = 'u8[1024]{0}', space=vmem, size = 0x400, scoped, tag = 'output window, operand 0, single buffered']
    %30 = vsyncpa [#allocation3], 0
    %31 = vsyncpa [#allocation6], 0
    %32 = vsyncpa [#allocation4], 0
    // Predicated region
    $region2: #{model_forward.1} parent=1 // pred_check
      _
    $region3: #{model_forward.1} parent=1 // pred_check_branch
      %34 = sbr.rel (0) target = $region5
    $region4: #{model_forward.1} parent=1 // pred_region
      _
    $region5: #{model_forward.1} parent=1 // pred_fallthru
      _
    // Predicated region
    $region6: #{model_forward.1} parent=1 // pred_check
      _
    $region7: #{model_forward.1} parent=1 // pred_check_branch
      %36 = sbr.rel (0) target = $region9
    $region8: #{model_forward.1} parent=1 // pred_region
      _
    $region9: #{model_forward.1} parent=1 // pred_fallthru
      _
    // Predicated region
    $region10: #{model_forward.1} parent=1 // pred_check
      _
    $region11: #{model_forward.1} parent=1 // pred_check_branch
      %38 = sbr.rel (0) target = $region13
    $region12: #{model_forward.1} parent=1 // pred_region
      _
    $region13: #{model_forward.1} parent=1 // pred_fallthru
      _
    // Predicated region
    $region14: #{model_forward.1} parent=1 // pred_check
      _
    $region15: #{model_forward.1} parent=1 // pred_check_branch
      %40 = sbr.rel (0) target = $region17
    $region16: #{model_forward.1} parent=1 // pred_region
      _
    $region17: #{model_forward.1} parent=1 // pred_fallthru
      _
    // Predicated region
    $region18: #{model_forward.1} parent=1 // pred_check
      _
    $region19: #{model_forward.1} parent=1 // pred_check_branch
      %42 = sbr.rel (0) target = $region21
    $region20: #{model_forward.1} parent=1 // pred_region
      _
    $region21: #{model_forward.1} parent=1 // pred_fallthru
      _
    // Predicated region
    $region22: #{model_forward.1} parent=1 // pred_check
      _
    $region23: #{model_forward.1} parent=1 // pred_check_branch
      %44 = sbr.rel (0) target = $region25
    $region24: #{model_forward.1} parent=1 // pred_region
      _
    $region25: #{model_forward.1} parent=1 // pred_fallthru
      _
    // Predicated region
    $region26: #{model_forward.1} parent=1 // pred_check
      _
    $region27: #{model_forward.1} parent=1 // pred_check_branch
      %46 = sbr.rel (0) target = $region29
    $region28: #{model_forward.1} parent=1 // pred_region
      _
    $region29: #{model_forward.1} parent=1 // pred_fallthru
      _
    // Predicated region
    $region30: #{model_forward.1} parent=1 // pred_check
      _
    $region31: #{model_forward.1} parent=1 // pred_check_branch
      %48 = sbr.rel (0) target = $region33
    $region32: #{model_forward.1} parent=1 // pred_region
      _
    $region33: #{model_forward.1} parent=1 // pred_fallthru
      _
    // Predicated region
    $region34: #{model_forward.1} parent=1 // pred_check
      _
    $region35: #{model_forward.1} parent=1 // pred_check_branch
      %50 = sbr.rel (0) target = $region37
    $region36: #{model_forward.1} parent=1 // pred_region
      _
    $region37: #{model_forward.1} parent=1 // pred_fallthru
      _
    // Predicated region
    $region38: #{model_forward.1} parent=1 // pred_check
      _
    $region39: #{model_forward.1} parent=1 // pred_check_branch
      %52 = sbr.rel (0) target = $region41
    $region40: #{model_forward.1} parent=1 // pred_region
      _
    $region41: #{model_forward.1} parent=1 // pred_fallthru
      _
    // Predicated region
    $region42: #{model_forward.1} parent=1 // pred_check
      _
    $region43: #{model_forward.1} parent=1 // pred_check_branch
      %54 = sbr.rel (0) target = $region45
    $region44: #{model_forward.1} parent=1 // pred_region
      _
    $region45: #{model_forward.1} parent=1 // pred_fallthru
      _
    // Predicated region
    $region46: #{model_forward.1} parent=1 // pred_check
      _
    $region47: #{model_forward.1} parent=1 // pred_check_branch
      %56 = sbr.rel (0) target = $region49
    $region48: #{model_forward.1} parent=1 // pred_region
      _
    $region49: #{model_forward.1} parent=1 // pred_fallthru
      _
    // Predicated region
    $region50: #{model_forward.1} parent=1 // pred_check
      _
    $region51: #{model_forward.1} parent=1 // pred_check_branch
      %58 = sbr.rel (0) target = $region53
    $region52: #{model_forward.1} parent=1 // pred_region
      _
    $region53: #{model_forward.1} parent=1 // pred_fallthru
      _
    // Predicated region
    $region54: #{model_forward.1} parent=1 // pred_check
      _
    $region55: #{model_forward.1} parent=1 // pred_check_branch
      %60 = sbr.rel (0) target = $region57
    $region56: #{model_forward.1} parent=1 // pred_region
      _
    $region57: #{model_forward.1} parent=1 // pred_fallthru
      _
    // Predicated region
    $region58: #{model_forward.1} parent=1 // pred_check
      _
    $region59: #{model_forward.1} parent=1 // pred_check_branch
      %62 = sbr.rel (0) target = $region61
    $region60: #{model_forward.1} parent=1 // pred_region
      _
    $region61: #{model_forward.1} parent=1 // pred_fallthru
      _
    // Predicated region
    $region62: #{model_forward.1} parent=1 // pred_check
      _
    $region63: #{model_forward.1} parent=1 // pred_check_branch
      %64 = sbr.rel (0) target = $region65
    $region64: #{model_forward.1} parent=1 // pred_region
      %66 = vsyncadd [#allocation3], 0
      %s67 = sshll.u32 %s15, 4
      %s68 = int_to_ptr.hbm [resolvable:$true] %s67
      %s69 = sshll.u32 [#allocation2], 4
      %s70 = int_to_ptr.vmem [resolvable:$true] %s69
      %75 = dma.hbm_to_vmem [thread:$0]  %s68, 2048, %s70, [#allocation3], 256, 256, 16
    $region65: #{model_forward.1} parent=1 // pred_fallthru
      _
    // Predicated region
    $region66: #{model_forward.1} parent=1 // pred_check
      _
    $region67: #{model_forward.1} parent=1 // pred_check_branch
      %77 = sbr.rel (0) target = $region69
    $region68: #{model_forward.1} parent=1 // pred_region
      _
    $region69: #{model_forward.1} parent=1 // pred_fallthru
      _
    // Predicated region
    $region70: #{model_forward.1} parent=1 // pred_check
      _
    $region71: #{model_forward.1} parent=1 // pred_check_branch
      %79 = sbr.rel (0) target = $region73
    $region72: #{model_forward.1} parent=1 // pred_region
      _
    $region73: #{model_forward.1} parent=1 // pred_fallthru
      _
    // Predicated region
    $region74: #{model_forward.1} parent=1 // pred_check
      _
    $region75: #{model_forward.1} parent=1 // pred_check_branch
      %81 = sbr.rel (0) target = $region77
    $region76: #{model_forward.1} parent=1 // pred_region
      _
    $region77: #{model_forward.1} parent=1 // pred_fallthru
      _
    // Predicated region
    $region78: #{model_forward.1} parent=1 // pred_check
      _
    $region79: #{model_forward.1} parent=1 // pred_check_branch
      %83 = sbr.rel (0) target = $region81
    $region80: #{model_forward.1} parent=1 // pred_region
      %85 = vsyncadd [#allocation6], 0
      %s86 = sshll.u32 %s19, 4
      %s87 = int_to_ptr.hbm [resolvable:$true] %s86
      %s88 = sshll.u32 [#allocation5], 4
      %s89 = int_to_ptr.vmem [resolvable:$true] %s88
      %94 = dma.hbm_to_vmem [thread:$0]  %s87, 1024, %s89, [#allocation6], 128, 128, 8
    $region81: #{model_forward.1} parent=1 // pred_fallthru
      _
    // Predicated region
    $region82: #{model_forward.1} parent=1 // pred_check
      _
    $region83: #{model_forward.1} parent=1 // pred_check_branch
      %96 = sbr.rel (0) target = $region85
    $region84: #{model_forward.1} parent=1 // pred_region
      _
    $region85: #{model_forward.1} parent=1 // pred_fallthru
      _
    // Predicated region
    $region86: #{model_forward.1} parent=1 // pred_check
      _
    $region87: #{model_forward.1} parent=1 // pred_check_branch
      %98 = sbr.rel (0) target = $region89
    $region88: #{model_forward.1} parent=1 // pred_region
      %100 = vsyncadd [#allocation6], 0
      %s101 = sshll.u32 %s21, 4
      %s102 = int_to_ptr.hbm [resolvable:$true] %s101
      %s103 = sshll.u32 [#allocation7], 4
      %s104 = int_to_ptr.vmem [resolvable:$true] %s103
      %109 = dma.hbm_to_vmem [thread:$0]  %s102, 1024, %s104, [#allocation6], 128, 128, 8
    $region89: #{model_forward.1} parent=1 // pred_fallthru
      _
    // Predicated region
    $region90: #{model_forward.1} parent=1 // pred_check
      _
    $region91: #{model_forward.1} parent=1 // pred_check_branch
      %111 = sbr.rel (0) target = $region93
    $region92: #{model_forward.1} parent=1 // pred_region
      _
    $region93: #{model_forward.1} parent=1 // pred_fallthru
      _
    // Predicated region
    $region94: #{model_forward.1} parent=1 // pred_check
      _
    $region95: #{model_forward.1} parent=1 // pred_check_branch
      %113 = sbr.rel (0) target = $region97
    $region96: #{model_forward.1} parent=1 // pred_region
      _
    $region97: #{model_forward.1} parent=1 // pred_fallthru
      _
    // Predicated region
    $region98: #{model_forward.1} parent=1 // pred_check
      _
    $region99: #{model_forward.1} parent=1 // pred_check_branch
      %115 = sbr.rel (0) target = $region101
    $region100: #{model_forward.1} parent=1 // pred_region
      _
    $region101: #{model_forward.1} parent=1 // pred_fallthru
      _
    // Predicated region
    $region102: #{model_forward.1} parent=1 // pred_check
      _
    $region103: #{model_forward.1} parent=1 // pred_check_branch
      %117 = sbr.rel (0) target = $region105
    $region104: #{model_forward.1} parent=1 // pred_region
      %119 = dma.done [#allocation3], 2048
    $region105: #{model_forward.1} parent=1 // pred_fallthru
      _
    // Predicated region
    $region106: #{model_forward.1} parent=1 // pred_check
      _
    $region107: #{model_forward.1} parent=1 // pred_check_branch
      %121 = sbr.rel (0) target = $region109
    $region108: #{model_forward.1} parent=1 // pred_region
      %123 = dma.done [#allocation6], 1024
    $region109: #{model_forward.1} parent=1 // pred_fallthru
      _
    // Predicated region
    $region110: #{model_forward.1} parent=1 // pred_check
      _
    $region111: #{model_forward.1} parent=1 // pred_check_branch
      %125 = sbr.rel (0) target = $region113
    $region112: #{model_forward.1} parent=1 // pred_region
      %127 = dma.done [#allocation6], 1024
    $region113: #{model_forward.1} parent=1 // pred_fallthru
      _
    %v128 = vld [vmem:[%s0] sm:$0xff]
    %v129 = vld [vmem:[%s0 + $0x8] sm:$0xff]
    %v130 = vld [vmem:[%s0 + $0x10] sm:$0xff]
    %v131 = vld [vmem:[%s0 + $0x18] sm:$0xff]
    %v132 = vld [vmem:[%s1] sm:$0xff]
    %v133 = vld [vmem:[%s1 + $0x8] sm:$0xff]
    %v134 = vld [vmem:[%s1 + $0x10] sm:$0xff]
    %v135 = vld [vmem:[%s1 + $0x18] sm:$0xff]
    %v136 = vld [vmem:[%s1 + $0x20] sm:$0xf]
    %v137 = vld [vmem:[%s2] sm:$0x1]
    %v139 = vperm.slane %v137, 0
    %vm141 = vcmask 293888
    %v143 = vsel %vm141, %v128, 0
    %v146 = vsel %vm141, %v129, 0
    %v149 = vsel %vm141, %v130, 0
    %v152 = vsel %vm141, %v131, 0
    %vm154 = vcmask 1043456
    %v156 = vsel %vm154, %v136, 0
    %158 = vmatpush.msra.mxu0 0.0
    %159 = vmatpush.msra.mxu0 0.0
    %160 = vmatpush.msra.mxu0 0.0
    %161 = vmatpush.msra.mxu0 0.0
    %162 = vmatpush.msra.mxu0 0.0
    %163 = vmatpush.msra.mxu0 0.0
    %164 = vmatpush.msra.mxu0 0.0
    %165 = vmatpush.msra.mxu0 0.0
    %166 = vmatpush.msra.mxu0 0.0
    %167 = vmatpush.msra.mxu0 0.0
    %168 = vmatpush.msra.mxu0 0.0
    %169 = vmatpush.msra.mxu0 %v156
    %170 = vmatpush.msra.mxu0 %v135
    %171 = vmatpush.msra.mxu0 %v134
    %172 = vmatpush.msra.mxu0 %v133
    %173 = vmatpush.msra.mxu0 %v132
    %174 = vmatmul.f32.gmra.mxu0 %v143
    %v175 = vpop.f32.mrf.mxu0
    %v176 = vadd.f32 %v139, %v175
    %177 = vmatmul.f32.gmra.mxu0 %v146
    %v178 = vpop.f32.mrf.mxu0
    %v179 = vadd.f32 %v139, %v178
    %180 = vmatmul.f32.gmra.mxu0 %v149
    %v181 = vpop.f32.mrf.mxu0
    %v182 = vadd.f32 %v139, %v181
    %183 = vmatmul.f32.gmra.mxu0 %v152
    %v184 = vpop.f32.mrf.mxu0
    %v185 = vadd.f32 %v139, %v184
    %186 = vdwg.mxu0
    %v187 = vmax.f32 %v176, 0.0
    %v188 = vmax.f32 %v179, 0.0
    %v189 = vmax.f32 %v182, 0.0
    %v190 = vmax.f32 %v185, 0.0
    %v193 = vrot.slane %v187, 7
    %v194 = vrot.slane %v188, 7
    %vm197 = vcmask 1040384
    %v198 = vsel %vm197, 0.0, %v193
    %v199 = vsel %vm197, 0.0, %v194
    %v202 = vrot.slane %v189, 7
    %v203 = vrot.slane %v190, 7
    %v206 = vsel %vm197, 0.0, %v202
    %v207 = vsel %vm197, 0.0, %v203
    %v208 = vrot.slane %v187, 1
    %v209 = vrot.slane %v188, 1
    %vm212 = vcmask 1046528
    %v213 = vsel %vm212, %v208, 0.0
    %v214 = vsel %vm212, %v209, 0.0
    %v215 = vld [vmem:[%s4] sm:$0x1]
    %v217 = vperm.slane %v215, 0
    %v219 = vadd.f32 %v217, 0.0
    %v220 = vld [vmem:[%s3] sm:$0xff]
    %v221 = vld [vmem:[%s3 + $0x8] sm:$0xff]
    %v222 = vld [vmem:[%s3 + $0x10] sm:$0xff]
    %v223 = vld [vmem:[%s3 + $0x18] sm:$0xff]
    %vm224 = vcmask 261120
    %v226 = vsel %vm224, %v198, 0
    %v229 = vsel %vm224, %v199, 0
    %231 = vmatpush.msra.mxu0 0.0
    %232 = vmatpush.msra.mxu0 0.0
    %233 = vmatpush.msra.mxu0 0.0
    %234 = vmatpush.msra.mxu0 0.0
    %235 = vmatpush.msra.mxu0 0.0
    %236 = vmatpush.msra.mxu0 0.0
    %237 = vmatpush.msra.mxu0 0.0
    %238 = vmatpush.msra.mxu0 0.0
    %239 = vmatpush.msra.mxu0 0.0
    %240 = vmatpush.msra.mxu0 0.0
    %241 = vmatpush.msra.mxu0 0.0
    %242 = vmatpush.msra.mxu0 0.0
    %243 = vmatpush.msra.mxu0 %v223
    %244 = vmatpush.msra.mxu0 %v222
    %245 = vmatpush.msra.mxu0 %v221
    %246 = vmatpush.msra.mxu0 %v220
    %247 = vmatmul.f32.gmra.mxu0 %v226
    %v248 = vpop.f32.mrf.mxu0
    %v249 = vadd.f32 0.0, %v248
    %250 = vmatmul.f32.gmra.mxu0 %v229
    %v251 = vpop.f32.mrf.mxu0
    %v252 = vadd.f32 0.0, %v251
    %253 = vdwg.mxu0
    %v254 = vadd.f32 %v219, %v249
    %v255 = vadd.f32 %v219, %v252
    %v256 = vld [vmem:[%s3 + $0x20] sm:$0xff]
    %v257 = vld [vmem:[%s3 + $0x28] sm:$0xff]
    %v258 = vld [vmem:[%s3 + $0x30] sm:$0xff]
    %v259 = vld [vmem:[%s3 + $0x38] sm:$0xff]
    %v261 = vsel %vm224, %v206, 0
    %v264 = vsel %vm224, %v207, 0
    %266 = vmatpush.msra.mxu0 0.0
    %267 = vmatpush.msra.mxu0 0.0
    %268 = vmatpush.msra.mxu0 0.0
    %269 = vmatpush.msra.mxu0 0.0
    %270 = vmatpush.msra.mxu0 0.0
    %271 = vmatpush.msra.mxu0 0.0
    %272 = vmatpush.msra.mxu0 0.0
    %273 = vmatpush.msra.mxu0 0.0
    %274 = vmatpush.msra.mxu0 0.0
    %275 = vmatpush.msra.mxu0 0.0
    %276 = vmatpush.msra.mxu0 0.0
    %277 = vmatpush.msra.mxu0 0.0
    %278 = vmatpush.msra.mxu0 %v259
    %279 = vmatpush.msra.mxu0 %v258
    %280 = vmatpush.msra.mxu0 %v257
    %281 = vmatpush.msra.mxu0 %v256
    %282 = vmatmul.f32.gmra.mxu0 %v261
    %v283 = vpop.f32.mrf.mxu0
    %v284 = vadd.f32 0.0, %v283
    %285 = vmatmul.f32.gmra.mxu0 %v264
    %v286 = vpop.f32.mrf.mxu0
    %v287 = vadd.f32 0.0, %v286
    %288 = vdwg.mxu0
    %v289 = vadd.f32 %v254, %v284
    %v290 = vadd.f32 %v255, %v287
    %v291 = vld [vmem:[%s3 + $0x40] sm:$0xff]
    %v292 = vld [vmem:[%s3 + $0x48] sm:$0xff]
    %v293 = vld [vmem:[%s3 + $0x50] sm:$0xff]
    %v294 = vld [vmem:[%s3 + $0x58] sm:$0xff]
    %v295 = vsel %vm224, %v187, 0
    %v297 = vsel %vm224, %v188, 0
    %299 = vmatpush.msra.mxu0 0.0
    %300 = vmatpush.msra.mxu0 0.0
    %301 = vmatpush.msra.mxu0 0.0
    %302 = vmatpush.msra.mxu0 0.0
    %303 = vmatpush.msra.mxu0 0.0
    %304 = vmatpush.msra.mxu0 0.0
    %305 = vmatpush.msra.mxu0 0.0
    %306 = vmatpush.msra.mxu0 0.0
    %307 = vmatpush.msra.mxu0 0.0
    %308 = vmatpush.msra.mxu0 0.0
    %309 = vmatpush.msra.mxu0 0.0
    %310 = vmatpush.msra.mxu0 0.0
    %311 = vmatpush.msra.mxu0 %v294
    %312 = vmatpush.msra.mxu0 %v293
    %313 = vmatpush.msra.mxu0 %v292
    %314 = vmatpush.msra.mxu0 %v291
    %315 = vmatmul.f32.gmra.mxu0 %v295
    %v316 = vpop.f32.mrf.mxu0
    %v317 = vadd.f32 0.0, %v316
    %318 = vmatmul.f32.gmra.mxu0 %v297
    %v319 = vpop.f32.mrf.mxu0
    %v320 = vadd.f32 0.0, %v319
    %321 = vdwg.mxu0
    %v322 = vadd.f32 %v289, %v317
    %v323 = vadd.f32 %v290, %v320
    %v324 = vld [vmem:[%s3 + $0x60] sm:$0xff]
    %v325 = vld [vmem:[%s3 + $0x68] sm:$0xff]
    %v326 = vld [vmem:[%s3 + $0x70] sm:$0xff]
    %v327 = vld [vmem:[%s3 + $0x78] sm:$0xff]
    %v328 = vsel %vm224, %v189, 0
    %v330 = vsel %vm224, %v190, 0
    %332 = vmatpush.msra.mxu0 0.0
    %333 = vmatpush.msra.mxu0 0.0
    %334 = vmatpush.msra.mxu0 0.0
    %335 = vmatpush.msra.mxu0 0.0
    %336 = vmatpush.msra.mxu0 0.0
    %337 = vmatpush.msra.mxu0 0.0
    %338 = vmatpush.msra.mxu0 0.0
    %339 = vmatpush.msra.mxu0 0.0
    %340 = vmatpush.msra.mxu0 0.0
    %341 = vmatpush.msra.mxu0 0.0
    %342 = vmatpush.msra.mxu0 0.0
    %343 = vmatpush.msra.mxu0 0.0
    %344 = vmatpush.msra.mxu0 %v327
    %345 = vmatpush.msra.mxu0 %v326
    %346 = vmatpush.msra.mxu0 %v325
    %347 = vmatpush.msra.mxu0 %v324
    %348 = vmatmul.f32.gmra.mxu0 %v328
    %v349 = vpop.f32.mrf.mxu0
    %v350 = vadd.f32 0.0, %v349
    %351 = vmatmul.f32.gmra.mxu0 %v330
    %v352 = vpop.f32.mrf.mxu0
    %v353 = vadd.f32 0.0, %v352
    %354 = vdwg.mxu0
    %v355 = vadd.f32 %v322, %v350
    %v356 = vadd.f32 %v323, %v353
    %v357 = vld [vmem:[%s3 + $0x80] sm:$0xff]
    %v358 = vld [vmem:[%s3 + $0x88] sm:$0xff]
    %v359 = vld [vmem:[%s3 + $0x90] sm:$0xff]
    %v360 = vld [vmem:[%s3 + $0x98] sm:$0xff]
    %v362 = vsel %vm224, %v213, 0
    %v365 = vsel %vm224, %v214, 0
    %367 = vmatpush.msra.mxu0 0.0
    %368 = vmatpush.msra.mxu0 0.0
    %369 = vmatpush.msra.mxu0 0.0
    %370 = vmatpush.msra.mxu0 0.0
    %371 = vmatpush.msra.mxu0 0.0
    %372 = vmatpush.msra.mxu0 0.0
    %373 = vmatpush.msra.mxu0 0.0
    %374 = vmatpush.msra.mxu0 0.0
    %375 = vmatpush.msra.mxu0 0.0
    %376 = vmatpush.msra.mxu0 0.0
    %377 = vmatpush.msra.mxu0 0.0
    %378 = vmatpush.msra.mxu0 0.0
    %379 = vmatpush.msra.mxu0 %v360
    %380 = vmatpush.msra.mxu0 %v359
    %381 = vmatpush.msra.mxu0 %v358
    %382 = vmatpush.msra.mxu0 %v357
    %383 = vmatmul.f32.gmra.mxu0 %v362
    %v384 = vpop.f32.mrf.mxu0
    %v385 = vadd.f32 0.0, %v384
    %386 = vmatmul.f32.gmra.mxu0 %v365
    %v387 = vpop.f32.mrf.mxu0
    %v388 = vadd.f32 0.0, %v387
    %389 = vdwg.mxu0
    %v390 = vadd.f32 %v355, %v385
    %v391 = vadd.f32 %v356, %v388
    %v392 = vmax.f32 %v390, 0.0
    %v393 = vmax.f32 %v391, 0.0
    %v394 = vld [vmem:[%s5] sm:$0xff]
    %v395 = vld [vmem:[%s5 + $0x8] sm:$0xff]
    %v396 = vld [vmem:[%s5 + $0x10] sm:$0xff]
    %v397 = vld [vmem:[%s5 + $0x18] sm:$0xff]
    %v398 = vld [vmem:[%s5 + $0x20] sm:$0xff]
    %v399 = vld [vmem:[%s5 + $0x28] sm:$0xff]
    %v400 = vld [vmem:[%s5 + $0x30] sm:$0xff]
    %v401 = vld [vmem:[%s5 + $0x38] sm:$0xff]
    %v402 = vld [vmem:[%s5 + $0x40] sm:$0xff]
    %v403 = vld [vmem:[%s5 + $0x48] sm:$0xff]
    %v404 = vld [vmem:[%s5 + $0x50] sm:$0xff]
    %v405 = vld [vmem:[%s5 + $0x58] sm:$0xff]
    %v406 = vld [vmem:[%s5 + $0x60] sm:$0xff]
    %v407 = vld [vmem:[%s5 + $0x68] sm:$0xff]
    %v408 = vld [vmem:[%s5 + $0x70] sm:$0xff]
    %v409 = vld [vmem:[%s5 + $0x78] sm:$0xff]
    %v410 = vld [vmem:[%s6] sm:$0x3]
    %v411 = vld [vmem:[%s7] sm:$0xff]
    %v412 = vld [vmem:[%s7 + $0x8] sm:$0xff]
    %v413 = vld [vmem:[%s7 + $0x10] sm:$0xff]
    %v414 = vld [vmem:[%s7 + $0x18] sm:$0xff]
    %v415 = vld [vmem:[%s7 + $0x20] sm:$0xff]
    %v416 = vld [vmem:[%s7 + $0x28] sm:$0xff]
    %v417 = vld [vmem:[%s7 + $0x30] sm:$0xff]
    %v418 = vld [vmem:[%s7 + $0x38] sm:$0xff]
    %v419 = vld [vmem:[%s8] sm:$0x1]
    %v421 = vperm.slane %v410, 0
    %v422 = vperm.slane %v410, 1
    %vm425 = vcmask 523264
    %v427 = vsel %vm425, %v392, 0
    %v430 = vsel %vm425, %v393, 0
    %432 = vmatpush.msra.mxu0 0.0
    %433 = vmatpush.msra.mxu0 0.0
    %434 = vmatpush.msra.mxu0 0.0
    %435 = vmatpush.msra.mxu0 0.0
    %436 = vmatpush.msra.mxu0 0.0
    %437 = vmatpush.msra.mxu0 0.0
    %438 = vmatpush.msra.mxu0 0.0
    %439 = vmatpush.msra.mxu0 0.0
    %440 = vmatpush.msra.mxu0 %v408
    %441 = vmatpush.msra.mxu0 %v406
    %442 = vmatpush.msra.mxu0 %v404
    %443 = vmatpush.msra.mxu0 %v402
    %444 = vmatpush.msra.mxu0 %v400
    %445 = vmatpush.msra.mxu0 %v398
    %446 = vmatpush.msra.mxu0 %v396
    %447 = vmatpush.msra.mxu0 %v394
    %448 = vmatmul.f32.gmra.mxu0 %v427
    %v449 = vpop.f32.mrf.mxu0
    %v450 = vadd.f32 %v421, %v449
    %451 = vmatmul.f32.gmra.mxu0 %v430
    %v452 = vpop.f32.mrf.mxu0
    %v453 = vadd.f32 %v421, %v452
    %454 = vdwg.mxu0
    %455 = vmatpush.msra.mxu0 0.0
    %456 = vmatpush.msra.mxu0 0.0
    %457 = vmatpush.msra.mxu0 0.0
    %458 = vmatpush.msra.mxu0 0.0
    %459 = vmatpush.msra.mxu0 0.0
    %460 = vmatpush.msra.mxu0 0.0
    %461 = vmatpush.msra.mxu0 0.0
    %462 = vmatpush.msra.mxu0 0.0
    %463 = vmatpush.msra.mxu0 %v409
    %464 = vmatpush.msra.mxu0 %v407
    %465 = vmatpush.msra.mxu0 %v405
    %466 = vmatpush.msra.mxu0 %v403
    %467 = vmatpush.msra.mxu0 %v401
    %468 = vmatpush.msra.mxu0 %v399
    %469 = vmatpush.msra.mxu0 %v397
    %470 = vmatpush.msra.mxu0 %v395
    %471 = vmatmul.f32.gmra.mxu0 %v427
    %v472 = vpop.f32.mrf.mxu0
    %v473 = vadd.f32 %v422, %v472
    %474 = vmatmul.f32.gmra.mxu0 %v430
    %v475 = vpop.f32.mrf.mxu0
    %v476 = vadd.f32 %v422, %v475
    %477 = vdwg.mxu0
    %v479 = vperm.slane %v419, 0
    %v481 = vadd.f32 %v479, 0.0
    %483 = vrot.lane.b32.xlu0 %v450, 64
    %v484 = vpop.permute.xlu0 %483
    %vm485 = vcmask 130048
    %v486 = vsel %vm485, %v450, 0
    %v488 = vsel %vm485, %v484, 0
    %490 = vmatpush.xpose.msra.mxu0 0.0
    %491 = vmatpush.xpose.msra.mxu0 0.0
    %492 = vmatpush.xpose.msra.mxu0 0.0
    %493 = vmatpush.xpose.msra.mxu0 0.0
    %494 = vmatpush.xpose.msra.mxu0 0.0
    %495 = vmatpush.xpose.msra.mxu0 0.0
    %496 = vmatpush.xpose.msra.mxu0 0.0
    %497 = vmatpush.xpose.msra.mxu0 0.0
    %498 = vmatpush.xpose.msra.mxu0 0.0
    %499 = vmatpush.xpose.msra.mxu0 0.0
    %500 = vmatpush.xpose.msra.mxu0 0.0
    %501 = vmatpush.xpose.msra.mxu0 0.0
    %502 = vmatpush.xpose.msra.mxu0 0.0
    %503 = vmatpush.xpose.msra.mxu0 0.0
    %504 = vmatpush.xpose.msra.mxu0 0.0
    %505 = vmatpush.xpose.msra.mxu0 %v488
    %506 = vmatmul.f32.gmra.mxu0 %v486
    %v507 = vpop.f32.mrf.mxu0
    %v508 = vadd.f32 0.0, %v507
    %509 = vdwg.mxu0
    %511 = vrot.lane.b32.xlu0 %v453, 64
    %v512 = vpop.permute.xlu0 %511
    %v513 = vsel %vm485, %v453, 0
    %v515 = vsel %vm485, %v512, 0
    %517 = vmatpush.xpose.msra.mxu0 0.0
    %518 = vmatpush.xpose.msra.mxu0 0.0
    %519 = vmatpush.xpose.msra.mxu0 0.0
    %520 = vmatpush.xpose.msra.mxu0 0.0
    %521 = vmatpush.xpose.msra.mxu0 0.0
    %522 = vmatpush.xpose.msra.mxu0 0.0
    %523 = vmatpush.xpose.msra.mxu0 0.0
    %524 = vmatpush.xpose.msra.mxu0 0.0
    %525 = vmatpush.xpose.msra.mxu0 0.0
    %526 = vmatpush.xpose.msra.mxu0 0.0
    %527 = vmatpush.xpose.msra.mxu0 0.0
    %528 = vmatpush.xpose.msra.mxu0 0.0
    %529 = vmatpush.xpose.msra.mxu0 0.0
    %530 = vmatpush.xpose.msra.mxu0 0.0
    %531 = vmatpush.xpose.msra.mxu0 0.0
    %532 = vmatpush.xpose.msra.mxu0 %v515
    %533 = vmatmul.f32.gmra.mxu0 %v513
    %v534 = vpop.f32.mrf.mxu0
    %v535 = vadd.f32 0.0, %v534
    %536 = vdwg.mxu0
    %vm537 = vcmask 64512
    %v538 = vsel %vm537, %v508, -inf
    %539 = vmax.xlane.f32.xlu0 %v538
    %v540 = vpop.xlane.xlu0 %539
    %v541 = vsel %vm537, %v535, -inf
    %542 = vmax.xlane.f32.xlu0 %v541
    %v543 = vpop.xlane.xlu0 %542
    %v544 = vsub.f32 %v508, %v540
    %v545 = vsub.f32 %v535, %v543
    %v546 = vmul.f32 %v544, 1.442695
    %v547 = vpow.pop %v546
    %v548 = vmul.f32 %v545, 1.442695
    %v549 = vpow.pop %v548
    %v550 = vsel %vm537, %v547, 0.0
    %551 = vadd.xlane.f32.xlu0 %v550
    %v552 = vpop.xlane.xlu0 %551
    %v553 = vsel %vm537, %v549, 0.0
    %554 = vadd.xlane.f32.xlu0 %v553
    %v555 = vpop.xlane.xlu0 %554
    %v556 = vrcp.pop %v552
    %v557 = vmul.f32 %v552, %v556
    %v558 = vsub.f32 1.0, %v557
    %v559 = vmul.f32 %v556, %v558
    %v560 = vadd.f32 %v556, %v559
    %vm561 = vweird.f32 %v552
    %vm562 = vweird.f32 %v556
    %vm563 = vmor %vm561, %vm562
    %v564 = vsel %vm563, %v556, %v560
    %v565 = vand.u32 2147483647, %v552
    %vm566 = vcmp.eq.f32.partialorder %v565, 8.507059e+37
    %v567 = vand.u32 %v552, 2147483648
    %v568 = vor.u32 1.1754944e-38, %v567
    %v569 = vsel %vm566, %v568, %v564
    %v570 = vmul.f32 %v547, %v569
    %v571 = vrcp.pop %v555
    %v572 = vmul.f32 %v555, %v571
    %v573 = vsub.f32 1.0, %v572
    %v574 = vmul.f32 %v571, %v573
    %v575 = vadd.f32 %v571, %v574
    %vm576 = vweird.f32 %v555
    %vm577 = vweird.f32 %v571
    %vm578 = vmor %vm576, %vm577
    %v579 = vsel %vm578, %v571, %v575
    %v580 = vand.u32 2147483647, %v555
    %vm581 = vcmp.eq.f32.partialorder %v580, 8.507059e+37
    %v582 = vand.u32 %v555, 2147483648
    %v583 = vor.u32 1.1754944e-38, %v582
    %v584 = vsel %vm581, %v583, %v579
    %v585 = vmul.f32 %v549, %v584
    %v587 = vsel %vm537, %v570, 0
    %589 = vmatpush.msra.mxu0 0.0
    %590 = vmatpush.msra.mxu0 0.0
    %591 = vmatpush.msra.mxu0 0.0
    %592 = vmatpush.msra.mxu0 0.0
    %593 = vmatpush.msra.mxu0 0.0
    %594 = vmatpush.msra.mxu0 0.0
    %595 = vmatpush.msra.mxu0 0.0
    %596 = vmatpush.msra.mxu0 0.0
    %597 = vmatpush.msra.mxu0 0.0
    %598 = vmatpush.msra.mxu0 0.0
    %599 = vmatpush.msra.mxu0 0.0
    %600 = vmatpush.msra.mxu0 0.0
    %601 = vmatpush.msra.mxu0 0.0
    %602 = vmatpush.msra.mxu0 0.0
    %603 = vmatpush.msra.mxu0 0.0
    %604 = vmatpush.msra.mxu0 %v473
    %605 = vmatmul.f32.gmra.mxu0 %v587
    %v606 = vpop.f32.mrf.mxu0
    %v607 = vadd.f32 0.0, %v606
    %608 = vdwg.mxu0
    %v610 = vsel %vm537, %v585, 0
    %612 = vmatpush.msra.mxu0 0.0
    %613 = vmatpush.msra.mxu0 0.0
    %614 = vmatpush.msra.mxu0 0.0
    %615 = vmatpush.msra.mxu0 0.0
    %616 = vmatpush.msra.mxu0 0.0
    %617 = vmatpush.msra.mxu0 0.0
    %618 = vmatpush.msra.mxu0 0.0
    %619 = vmatpush.msra.mxu0 0.0
    %620 = vmatpush.msra.mxu0 0.0
    %621 = vmatpush.msra.mxu0 0.0
    %622 = vmatpush.msra.mxu0 0.0
    %623 = vmatpush.msra.mxu0 0.0
    %624 = vmatpush.msra.mxu0 0.0
    %625 = vmatpush.msra.mxu0 0.0
    %626 = vmatpush.msra.mxu0 0.0
    %627 = vmatpush.msra.mxu0 %v476
    %628 = vmatmul.f32.gmra.mxu0 %v610
    %v629 = vpop.f32.mrf.mxu0
    %v630 = vadd.f32 0.0, %v629
    %631 = vdwg.mxu0
    %v633 = vsel %vm485, %v607, 0
    %v636 = vsel %vm485, %v630, 0
    %638 = vmatpush.msra.mxu0 0.0
    %639 = vmatpush.msra.mxu0 0.0
    %640 = vmatpush.msra.mxu0 0.0
    %641 = vmatpush.msra.mxu0 0.0
    %642 = vmatpush.msra.mxu0 0.0
    %643 = vmatpush.msra.mxu0 0.0
    %644 = vmatpush.msra.mxu0 0.0
    %645 = vmatpush.msra.mxu0 0.0
    %646 = vmatpush.msra.mxu0 0.0
    %647 = vmatpush.msra.mxu0 0.0
    %648 = vmatpush.msra.mxu0 0.0
    %649 = vmatpush.msra.mxu0 0.0
    %650 = vmatpush.msra.mxu0 0.0
    %651 = vmatpush.msra.mxu0 0.0
    %652 = vmatpush.msra.mxu0 %v412
    %653 = vmatpush.msra.mxu0 %v411
    %654 = vmatmul.f32.gmra.mxu0 %v633
    %v655 = vpop.f32.mrf.mxu0
    %v656 = vadd.f32 0.0, %v655
    %657 = vmatmul.f32.gmra.mxu0 %v636
    %v658 = vpop.f32.mrf.mxu0
    %v659 = vadd.f32 0.0, %v658
    %660 = vdwg.mxu0
    %v661 = vadd.f32 %v481, %v656
    %v662 = vadd.f32 %v481, %v659
    %663 = vrot.lane.b32.xlu0 %v450, 112
    %v664 = vpop.permute.xlu0 %663
    %665 = vrot.lane.b32.xlu0 %v450, 48
    %v666 = vpop.permute.xlu0 %665
    %v667 = vsel %vm485, %v664, 0
    %v669 = vsel %vm485, %v666, 0
    %671 = vmatpush.xpose.msra.mxu0 0.0
    %672 = vmatpush.xpose.msra.mxu0 0.0
    %673 = vmatpush.xpose.msra.mxu0 0.0
    %674 = vmatpush.xpose.msra.mxu0 0.0
    %675 = vmatpush.xpose.msra.mxu0 0.0
    %676 = vmatpush.xpose.msra.mxu0 0.0
    %677 = vmatpush.xpose.msra.mxu0 0.0
    %678 = vmatpush.xpose.msra.mxu0 0.0
    %679 = vmatpush.xpose.msra.mxu0 0.0
    %680 = vmatpush.xpose.msra.mxu0 0.0
    %681 = vmatpush.xpose.msra.mxu0 0.0
    %682 = vmatpush.xpose.msra.mxu0 0.0
    %683 = vmatpush.xpose.msra.mxu0 0.0
    %684 = vmatpush.xpose.msra.mxu0 0.0
    %685 = vmatpush.xpose.msra.mxu0 0.0
    %686 = vmatpush.xpose.msra.mxu0 %v669
    %687 = vmatmul.f32.gmra.mxu0 %v667
    %v688 = vpop.f32.mrf.mxu0
    %v689 = vadd.f32 0.0, %v688
    %690 = vdwg.mxu0
    %691 = vrot.lane.b32.xlu0 %v453, 112
    %v692 = vpop.permute.xlu0 %691
    %693 = vrot.lane.b32.xlu0 %v453, 48
    %v694 = vpop.permute.xlu0 %693
    %v695 = vsel %vm485, %v692, 0
    %v697 = vsel %vm485, %v694, 0
    %699 = vmatpush.xpose.msra.mxu0 0.0
    %700 = vmatpush.xpose.msra.mxu0 0.0
    %701 = vmatpush.xpose.msra.mxu0 0.0
    %702 = vmatpush.xpose.msra.mxu0 0.0
    %703 = vmatpush.xpose.msra.mxu0 0.0
    %704 = vmatpush.xpose.msra.mxu0 0.0
    %705 = vmatpush.xpose.msra.mxu0 0.0
    %706 = vmatpush.xpose.msra.mxu0 0.0
    %707 = vmatpush.xpose.msra.mxu0 0.0
    %708 = vmatpush.xpose.msra.mxu0 0.0
    %709 = vmatpush.xpose.msra.mxu0 0.0
    %710 = vmatpush.xpose.msra.mxu0 0.0
    %711 = vmatpush.xpose.msra.mxu0 0.0
    %712 = vmatpush.xpose.msra.mxu0 0.0
    %713 = vmatpush.xpose.msra.mxu0 0.0
    %714 = vmatpush.xpose.msra.mxu0 %v697
    %715 = vmatmul.f32.gmra.mxu0 %v695
    %v716 = vpop.f32.mrf.mxu0
    %v717 = vadd.f32 0.0, %v716
    %718 = vdwg.mxu0
    %v719 = vsel %vm537, %v689, -inf
    %720 = vmax.xlane.f32.xlu0 %v719
    %v721 = vpop.xlane.xlu0 %720
    %v722 = vsel %vm537, %v717, -inf
    %723 = vmax.xlane.f32.xlu0 %v722
    %v724 = vpop.xlane.xlu0 %723
    %v725 = vsub.f32 %v689, %v721
    %v726 = vsub.f32 %v717, %v724
    %v727 = vmul.f32 %v725, 1.442695
    %v728 = vpow.pop %v727
    %v729 = vmul.f32 %v726, 1.442695
    %v730 = vpow.pop %v729
    %v731 = vsel %vm537, %v728, 0.0
    %732 = vadd.xlane.f32.xlu0 %v731
    %v733 = vpop.xlane.xlu0 %732
    %v734 = vsel %vm537, %v730, 0.0
    %735 = vadd.xlane.f32.xlu0 %v734
    %v736 = vpop.xlane.xlu0 %735
    %v737 = vrcp.pop %v733
    %v738 = vmul.f32 %v733, %v737
    %v739 = vsub.f32 1.0, %v738
    %v740 = vmul.f32 %v737, %v739
    %v741 = vadd.f32 %v737, %v740
    %vm742 = vweird.f32 %v733
    %vm743 = vweird.f32 %v737
    %vm744 = vmor %vm742, %vm743
    %v745 = vsel %vm744, %v737, %v741
    %v746 = vand.u32 2147483647, %v733
    %vm747 = vcmp.eq.f32.partialorder %v746, 8.507059e+37
    %v748 = vand.u32 %v733, 2147483648
    %v749 = vor.u32 1.1754944e-38, %v748
    %v750 = vsel %vm747, %v749, %v745
    %v751 = vmul.f32 %v728, %v750
    %v752 = vrcp.pop %v736
    %v753 = vmul.f32 %v736, %v752
    %v754 = vsub.f32 1.0, %v753
    %v755 = vmul.f32 %v752, %v754
    %v756 = vadd.f32 %v752, %v755
    %vm757 = vweird.f32 %v736
    %vm758 = vweird.f32 %v752
    %vm759 = vmor %vm757, %vm758
    %v760 = vsel %vm759, %v752, %v756
    %v761 = vand.u32 2147483647, %v736
    %vm762 = vcmp.eq.f32.partialorder %v761, 8.507059e+37
    %v763 = vand.u32 %v736, 2147483648
    %v764 = vor.u32 1.1754944e-38, %v763
    %v765 = vsel %vm762, %v764, %v760
    %v766 = vmul.f32 %v730, %v765
    %768 = vrot.lane.b32.xlu0 %v473, 112
    %v769 = vpop.permute.xlu0 %768
    %v772 = vsel %vm537, %v751, 0
    %774 = vmatpush.msra.mxu0 0.0
    %775 = vmatpush.msra.mxu0 0.0
    %776 = vmatpush.msra.mxu0 0.0
    %777 = vmatpush.msra.mxu0 0.0
    %778 = vmatpush.msra.mxu0 0.0
    %779 = vmatpush.msra.mxu0 0.0
    %780 = vmatpush.msra.mxu0 0.0
    %781 = vmatpush.msra.mxu0 0.0
    %782 = vmatpush.msra.mxu0 0.0
    %783 = vmatpush.msra.mxu0 0.0
    %784 = vmatpush.msra.mxu0 0.0
    %785 = vmatpush.msra.mxu0 0.0
    %786 = vmatpush.msra.mxu0 0.0
    %787 = vmatpush.msra.mxu0 0.0
    %788 = vmatpush.msra.mxu0 0.0
    %789 = vmatpush.msra.mxu0 %v769
    %790 = vmatmul.f32.gmra.mxu0 %v772
    %v791 = vpop.f32.mrf.mxu0
    %v792 = vadd.f32 0.0, %v791
    %793 = vdwg.mxu0
    %795 = vrot.lane.b32.xlu0 %v476, 112
    %v796 = vpop.permute.xlu0 %795
    %v799 = vsel %vm537, %v766, 0
    %801 = vmatpush.msra.mxu0 0.0
    %802 = vmatpush.msra.mxu0 0.0
    %803 = vmatpush.msra.mxu0 0.0
    %804 = vmatpush.msra.mxu0 0.0
    %805 = vmatpush.msra.mxu0 0.0
    %806 = vmatpush.msra.mxu0 0.0
    %807 = vmatpush.msra.mxu0 0.0
    %808 = vmatpush.msra.mxu0 0.0
    %809 = vmatpush.msra.mxu0 0.0
    %810 = vmatpush.msra.mxu0 0.0
    %811 = vmatpush.msra.mxu0 0.0
    %812 = vmatpush.msra.mxu0 0.0
    %813 = vmatpush.msra.mxu0 0.0
    %814 = vmatpush.msra.mxu0 0.0
    %815 = vmatpush.msra.mxu0 0.0
    %816 = vmatpush.msra.mxu0 %v796
    %817 = vmatmul.f32.gmra.mxu0 %v799
    %v818 = vpop.f32.mrf.mxu0
    %v819 = vadd.f32 0.0, %v818
    %820 = vdwg.mxu0
    %v822 = vsel %vm485, %v792, 0
    %v825 = vsel %vm485, %v819, 0
    %827 = vmatpush.msra.mxu0 0.0
    %828 = vmatpush.msra.mxu0 0.0
    %829 = vmatpush.msra.mxu0 0.0
    %830 = vmatpush.msra.mxu0 0.0
    %831 = vmatpush.msra.mxu0 0.0
    %832 = vmatpush.msra.mxu0 0.0
    %833 = vmatpush.msra.mxu0 0.0
    %834 = vmatpush.msra.mxu0 0.0
    %835 = vmatpush.msra.mxu0 0.0
    %836 = vmatpush.msra.mxu0 0.0
    %837 = vmatpush.msra.mxu0 0.0
    %838 = vmatpush.msra.mxu0 0.0
    %839 = vmatpush.msra.mxu0 0.0
    %840 = vmatpush.msra.mxu0 0.0
    %841 = vmatpush.msra.mxu0 %v414
    %842 = vmatpush.msra.mxu0 %v413
    %843 = vmatmul.f32.gmra.mxu0 %v822
    %v844 = vpop.f32.mrf.mxu0
    %v845 = vadd.f32 0.0, %v844
    %846 = vmatmul.f32.gmra.mxu0 %v825
    %v847 = vpop.f32.mrf.mxu0
    %v848 = vadd.f32 0.0, %v847
    %849 = vdwg.mxu0
    %v850 = vadd.f32 %v661, %v845
    %v851 = vadd.f32 %v662, %v848
    %852 = vrot.lane.b32.xlu0 %v450, 96
    %v853 = vpop.permute.xlu0 %852
    %854 = vrot.lane.b32.xlu0 %v450, 32
    %v855 = vpop.permute.xlu0 %854
    %v856 = vsel %vm485, %v853, 0
    %v858 = vsel %vm485, %v855, 0
    %860 = vmatpush.xpose.msra.mxu0 0.0
    %861 = vmatpush.xpose.msra.mxu0 0.0
    %862 = vmatpush.xpose.msra.mxu0 0.0
    %863 = vmatpush.xpose.msra.mxu0 0.0
    %864 = vmatpush.xpose.msra.mxu0 0.0
    %865 = vmatpush.xpose.msra.mxu0 0.0
    %866 = vmatpush.xpose.msra.mxu0 0.0
    %867 = vmatpush.xpose.msra.mxu0 0.0
    %868 = vmatpush.xpose.msra.mxu0 0.0
    %869 = vmatpush.xpose.msra.mxu0 0.0
    %870 = vmatpush.xpose.msra.mxu0 0.0
    %871 = vmatpush.xpose.msra.mxu0 0.0
    %872 = vmatpush.xpose.msra.mxu0 0.0
    %873 = vmatpush.xpose.msra.mxu0 0.0
    %874 = vmatpush.xpose.msra.mxu0 0.0
    %875 = vmatpush.xpose.msra.mxu0 %v858
    %876 = vmatmul.f32.gmra.mxu0 %v856
    %v877 = vpop.f32.mrf.mxu0
    %v878 = vadd.f32 0.0, %v877
    %879 = vdwg.mxu0
    %880 = vrot.lane.b32.xlu0 %v453, 96
    %v881 = vpop.permute.xlu0 %880
    %882 = vrot.lane.b32.xlu0 %v453, 32
    %v883 = vpop.permute.xlu0 %882
    %v884 = vsel %vm485, %v881, 0
    %v886 = vsel %vm485, %v883, 0
    %888 = vmatpush.xpose.msra.mxu0 0.0
    %889 = vmatpush.xpose.msra.mxu0 0.0
    %890 = vmatpush.xpose.msra.mxu0 0.0
    %891 = vmatpush.xpose.msra.mxu0 0.0
    %892 = vmatpush.xpose.msra.mxu0 0.0
    %893 = vmatpush.xpose.msra.mxu0 0.0
    %894 = vmatpush.xpose.msra.mxu0 0.0
    %895 = vmatpush.xpose.msra.mxu0 0.0
    %896 = vmatpush.xpose.msra.mxu0 0.0
    %897 = vmatpush.xpose.msra.mxu0 0.0
    %898 = vmatpush.xpose.msra.mxu0 0.0
    %899 = vmatpush.xpose.msra.mxu0 0.0
    %900 = vmatpush.xpose.msra.mxu0 0.0
    %901 = vmatpush.xpose.msra.mxu0 0.0
    %902 = vmatpush.xpose.msra.mxu0 0.0
    %903 = vmatpush.xpose.msra.mxu0 %v886
    %904 = vmatmul.f32.gmra.mxu0 %v884
    %v905 = vpop.f32.mrf.mxu0
    %v906 = vadd.f32 0.0, %v905
    %907 = vdwg.mxu0
    %v908 = vsel %vm537, %v878, -inf
    %909 = vmax.xlane.f32.xlu0 %v908
    %v910 = vpop.xlane.xlu0 %909
    %v911 = vsel %vm537, %v906, -inf
    %912 = vmax.xlane.f32.xlu0 %v911
    %v913 = vpop.xlane.xlu0 %912
    %v914 = vsub.f32 %v878, %v910
    %v915 = vsub.f32 %v906, %v913
    %v916 = vmul.f32 %v914, 1.442695
    %v917 = vpow.pop %v916
    %v918 = vmul.f32 %v915, 1.442695
    %v919 = vpow.pop %v918
    %v920 = vsel %vm537, %v917, 0.0
    %921 = vadd.xlane.f32.xlu0 %v920
    %v922 = vpop.xlane.xlu0 %921
    %v923 = vsel %vm537, %v919, 0.0
    %924 = vadd.xlane.f32.xlu0 %v923
    %v925 = vpop.xlane.xlu0 %924
    %v926 = vrcp.pop %v922
    %v927 = vmul.f32 %v922, %v926
    %v928 = vsub.f32 1.0, %v927
    %v929 = vmul.f32 %v926, %v928
    %v930 = vadd.f32 %v926, %v929
    %vm931 = vweird.f32 %v922
    %vm932 = vweird.f32 %v926
    %vm933 = vmor %vm931, %vm932
    %v934 = vsel %vm933, %v926, %v930
    %v935 = vand.u32 2147483647, %v922
    %vm936 = vcmp.eq.f32.partialorder %v935, 8.507059e+37
    %v937 = vand.u32 %v922, 2147483648
    %v938 = vor.u32 1.1754944e-38, %v937
    %v939 = vsel %vm936, %v938, %v934
    %v940 = vmul.f32 %v917, %v939
    %v941 = vrcp.pop %v925
    %v942 = vmul.f32 %v925, %v941
    %v943 = vsub.f32 1.0, %v942
    %v944 = vmul.f32 %v941, %v943
    %v945 = vadd.f32 %v941, %v944
    %vm946 = vweird.f32 %v925
    %vm947 = vweird.f32 %v941
    %vm948 = vmor %vm946, %vm947
    %v949 = vsel %vm948, %v941, %v945
    %v950 = vand.u32 2147483647, %v925
    %vm951 = vcmp.eq.f32.partialorder %v950, 8.507059e+37
    %v952 = vand.u32 %v925, 2147483648
    %v953 = vor.u32 1.1754944e-38, %v952
    %v954 = vsel %vm951, %v953, %v949
    %v955 = vmul.f32 %v919, %v954
    %956 = vrot.lane.b32.xlu0 %v473, 96
    %v957 = vpop.permute.xlu0 %956
    %v960 = vsel %vm537, %v940, 0
    %962 = vmatpush.msra.mxu0 0.0
    %963 = vmatpush.msra.mxu0 0.0
    %964 = vmatpush.msra.mxu0 0.0
    %965 = vmatpush.msra.mxu0 0.0
    %966 = vmatpush.msra.mxu0 0.0
    %967 = vmatpush.msra.mxu0 0.0
    %968 = vmatpush.msra.mxu0 0.0
    %969 = vmatpush.msra.mxu0 0.0
    %970 = vmatpush.msra.mxu0 0.0
    %971 = vmatpush.msra.mxu0 0.0
    %972 = vmatpush.msra.mxu0 0.0
    %973 = vmatpush.msra.mxu0 0.0
    %974 = vmatpush.msra.mxu0 0.0
    %975 = vmatpush.msra.mxu0 0.0
    %976 = vmatpush.msra.mxu0 0.0
    %977 = vmatpush.msra.mxu0 %v957
    %978 = vmatmul.f32.gmra.mxu0 %v960
    %v979 = vpop.f32.mrf.mxu0
    %v980 = vadd.f32 0.0, %v979
    %981 = vdwg.mxu0
    %982 = vrot.lane.b32.xlu0 %v476, 96
    %v983 = vpop.permute.xlu0 %982
    %v986 = vsel %vm537, %v955, 0
    %988 = vmatpush.msra.mxu0 0.0
    %989 = vmatpush.msra.mxu0 0.0
    %990 = vmatpush.msra.mxu0 0.0
    %991 = vmatpush.msra.mxu0 0.0
    %992 = vmatpush.msra.mxu0 0.0
    %993 = vmatpush.msra.mxu0 0.0
    %994 = vmatpush.msra.mxu0 0.0
    %995 = vmatpush.msra.mxu0 0.0
    %996 = vmatpush.msra.mxu0 0.0
    %997 = vmatpush.msra.mxu0 0.0
    %998 = vmatpush.msra.mxu0 0.0
    %999 = vmatpush.msra.mxu0 0.0
    %1000 = vmatpush.msra.mxu0 0.0
    %1001 = vmatpush.msra.mxu0 0.0
    %1002 = vmatpush.msra.mxu0 0.0
    %1003 = vmatpush.msra.mxu0 %v983
    %1004 = vmatmul.f32.gmra.mxu0 %v986
    %v1005 = vpop.f32.mrf.mxu0
    %v1006 = vadd.f32 0.0, %v1005
    %1007 = vdwg.mxu0
    %v1009 = vsel %vm485, %v980, 0
    %v1012 = vsel %vm485, %v1006, 0
    %1014 = vmatpush.msra.mxu0 0.0
    %1015 = vmatpush.msra.mxu0 0.0
    %1016 = vmatpush.msra.mxu0 0.0
    %1017 = vmatpush.msra.mxu0 0.0
    %1018 = vmatpush.msra.mxu0 0.0
    %1019 = vmatpush.msra.mxu0 0.0
    %1020 = vmatpush.msra.mxu0 0.0
    %1021 = vmatpush.msra.mxu0 0.0
    %1022 = vmatpush.msra.mxu0 0.0
    %1023 = vmatpush.msra.mxu0 0.0
    %1024 = vmatpush.msra.mxu0 0.0
    %1025 = vmatpush.msra.mxu0 0.0
    %1026 = vmatpush.msra.mxu0 0.0
    %1027 = vmatpush.msra.mxu0 0.0
    %1028 = vmatpush.msra.mxu0 %v416
    %1029 = vmatpush.msra.mxu0 %v415
    %1030 = vmatmul.f32.gmra.mxu0 %v1009
    %v1031 = vpop.f32.mrf.mxu0
    %v1032 = vadd.f32 0.0, %v1031
    %1033 = vmatmul.f32.gmra.mxu0 %v1012
    %v1034 = vpop.f32.mrf.mxu0
    %v1035 = vadd.f32 0.0, %v1034
    %1036 = vdwg.mxu0
    %v1037 = vadd.f32 %v850, %v1032
    %v1038 = vadd.f32 %v851, %v1035
    %1039 = vrot.lane.b32.xlu0 %v450, 80
    %v1040 = vpop.permute.xlu0 %1039
    %1041 = vrot.lane.b32.xlu0 %v450, 16
    %v1042 = vpop.permute.xlu0 %1041
    %v1043 = vsel %vm485, %v1040, 0
    %v1045 = vsel %vm485, %v1042, 0
    %1047 = vmatpush.xpose.msra.mxu0 0.0
    %1048 = vmatpush.xpose.msra.mxu0 0.0
    %1049 = vmatpush.xpose.msra.mxu0 0.0
    %1050 = vmatpush.xpose.msra.mxu0 0.0
    %1051 = vmatpush.xpose.msra.mxu0 0.0
    %1052 = vmatpush.xpose.msra.mxu0 0.0
    %1053 = vmatpush.xpose.msra.mxu0 0.0
    %1054 = vmatpush.xpose.msra.mxu0 0.0
    %1055 = vmatpush.xpose.msra.mxu0 0.0
    %1056 = vmatpush.xpose.msra.mxu0 0.0
    %1057 = vmatpush.xpose.msra.mxu0 0.0
    %1058 = vmatpush.xpose.msra.mxu0 0.0
    %1059 = vmatpush.xpose.msra.mxu0 0.0
    %1060 = vmatpush.xpose.msra.mxu0 0.0
    %1061 = vmatpush.xpose.msra.mxu0 0.0
    %1062 = vmatpush.xpose.msra.mxu0 %v1045
    %1063 = vmatmul.f32.gmra.mxu0 %v1043
    %v1064 = vpop.f32.mrf.mxu0
    %v1065 = vadd.f32 0.0, %v1064
    %1066 = vdwg.mxu0
    %1067 = vrot.lane.b32.xlu0 %v453, 80
    %v1068 = vpop.permute.xlu0 %1067
    %1069 = vrot.lane.b32.xlu0 %v453, 16
    %v1070 = vpop.permute.xlu0 %1069
    %v1071 = vsel %vm485, %v1068, 0
    %v1073 = vsel %vm485, %v1070, 0
    %1075 = vmatpush.xpose.msra.mxu0 0.0
    %1076 = vmatpush.xpose.msra.mxu0 0.0
    %1077 = vmatpush.xpose.msra.mxu0 0.0
    %1078 = vmatpush.xpose.msra.mxu0 0.0
    %1079 = vmatpush.xpose.msra.mxu0 0.0
    %1080 = vmatpush.xpose.msra.mxu0 0.0
    %1081 = vmatpush.xpose.msra.mxu0 0.0
    %1082 = vmatpush.xpose.msra.mxu0 0.0
    %1083 = vmatpush.xpose.msra.mxu0 0.0
    %1084 = vmatpush.xpose.msra.mxu0 0.0
    %1085 = vmatpush.xpose.msra.mxu0 0.0
    %1086 = vmatpush.xpose.msra.mxu0 0.0
    %1087 = vmatpush.xpose.msra.mxu0 0.0
    %1088 = vmatpush.xpose.msra.mxu0 0.0
    %1089 = vmatpush.xpose.msra.mxu0 0.0
    %1090 = vmatpush.xpose.msra.mxu0 %v1073
    %1091 = vmatmul.f32.gmra.mxu0 %v1071
    %v1092 = vpop.f32.mrf.mxu0
    %v1093 = vadd.f32 0.0, %v1092
    %1094 = vdwg.mxu0
    %v1095 = vsel %vm537, %v1065, -inf
    %1096 = vmax.xlane.f32.xlu0 %v1095
    %v1097 = vpop.xlane.xlu0 %1096
    %v1098 = vsel %vm537, %v1093, -inf
    %1099 = vmax.xlane.f32.xlu0 %v1098
    %v1100 = vpop.xlane.xlu0 %1099
    %v1101 = vsub.f32 %v1065, %v1097
    %v1102 = vsub.f32 %v1093, %v1100
    %v1103 = vmul.f32 %v1101, 1.442695
    %v1104 = vpow.pop %v1103
    %v1105 = vmul.f32 %v1102, 1.442695
    %v1106 = vpow.pop %v1105
    %v1107 = vsel %vm537, %v1104, 0.0
    %1108 = vadd.xlane.f32.xlu0 %v1107
    %v1109 = vpop.xlane.xlu0 %1108
    %v1110 = vsel %vm537, %v1106, 0.0
    %1111 = vadd.xlane.f32.xlu0 %v1110
    %v1112 = vpop.xlane.xlu0 %1111
    %v1113 = vrcp.pop %v1109
    %v1114 = vmul.f32 %v1109, %v1113
    %v1115 = vsub.f32 1.0, %v1114
    %v1116 = vmul.f32 %v1113, %v1115
    %v1117 = vadd.f32 %v1113, %v1116
    %vm1118 = vweird.f32 %v1109
    %vm1119 = vweird.f32 %v1113
    %vm1120 = vmor %vm1118, %vm1119
    %v1121 = vsel %vm1120, %v1113, %v1117
    %v1122 = vand.u32 2147483647, %v1109
    %vm1123 = vcmp.eq.f32.partialorder %v1122, 8.507059e+37
    %v1124 = vand.u32 %v1109, 2147483648
    %v1125 = vor.u32 1.1754944e-38, %v1124
    %v1126 = vsel %vm1123, %v1125, %v1121
    %v1127 = vmul.f32 %v1104, %v1126
    %v1128 = vrcp.pop %v1112
    %v1129 = vmul.f32 %v1112, %v1128
    %v1130 = vsub.f32 1.0, %v1129
    %v1131 = vmul.f32 %v1128, %v1130
    %v1132 = vadd.f32 %v1128, %v1131
    %vm1133 = vweird.f32 %v1112
    %vm1134 = vweird.f32 %v1128
    %vm1135 = vmor %vm1133, %vm1134
    %v1136 = vsel %vm1135, %v1128, %v1132
    %v1137 = vand.u32 2147483647, %v1112
    %vm1138 = vcmp.eq.f32.partialorder %v1137, 8.507059e+37
    %v1139 = vand.u32 %v1112, 2147483648
    %v1140 = vor.u32 1.1754944e-38, %v1139
    %v1141 = vsel %vm1138, %v1140, %v1136
    %v1142 = vmul.f32 %v1106, %v1141
    %1143 = vrot.lane.b32.xlu0 %v473, 80
    %v1144 = vpop.permute.xlu0 %1143
    %v1147 = vsel %vm537, %v1127, 0
    %1149 = vmatpush.msra.mxu0 0.0
    %1150 = vmatpush.msra.mxu0 0.0
    %1151 = vmatpush.msra.mxu0 0.0
    %1152 = vmatpush.msra.mxu0 0.0
    %1153 = vmatpush.msra.mxu0 0.0
    %1154 = vmatpush.msra.mxu0 0.0
    %1155 = vmatpush.msra.mxu0 0.0
    %1156 = vmatpush.msra.mxu0 0.0
    %1157 = vmatpush.msra.mxu0 0.0
    %1158 = vmatpush.msra.mxu0 0.0
    %1159 = vmatpush.msra.mxu0 0.0
    %1160 = vmatpush.msra.mxu0 0.0
    %1161 = vmatpush.msra.mxu0 0.0
    %1162 = vmatpush.msra.mxu0 0.0
    %1163 = vmatpush.msra.mxu0 0.0
    %1164 = vmatpush.msra.mxu0 %v1144
    %1165 = vmatmul.f32.gmra.mxu0 %v1147
    %v1166 = vpop.f32.mrf.mxu0
    %v1167 = vadd.f32 0.0, %v1166
    %1168 = vdwg.mxu0
    %1169 = vrot.lane.b32.xlu0 %v476, 80
    %v1170 = vpop.permute.xlu0 %1169
    %v1173 = vsel %vm537, %v1142, 0
    %1175 = vmatpush.msra.mxu0 0.0
    %1176 = vmatpush.msra.mxu0 0.0
    %1177 = vmatpush.msra.mxu0 0.0
    %1178 = vmatpush.msra.mxu0 0.0
    %1179 = vmatpush.msra.mxu0 0.0
    %1180 = vmatpush.msra.mxu0 0.0
    %1181 = vmatpush.msra.mxu0 0.0
    %1182 = vmatpush.msra.mxu0 0.0
    %1183 = vmatpush.msra.mxu0 0.0
    %1184 = vmatpush.msra.mxu0 0.0
    %1185 = vmatpush.msra.mxu0 0.0
    %1186 = vmatpush.msra.mxu0 0.0
    %1187 = vmatpush.msra.mxu0 0.0
    %1188 = vmatpush.msra.mxu0 0.0
    %1189 = vmatpush.msra.mxu0 0.0
    %1190 = vmatpush.msra.mxu0 %v1170
    %1191 = vmatmul.f32.gmra.mxu0 %v1173
    %v1192 = vpop.f32.mrf.mxu0
    %v1193 = vadd.f32 0.0, %v1192
    %1194 = vdwg.mxu0
    %v1196 = vsel %vm485, %v1167, 0
    %v1199 = vsel %vm485, %v1193, 0
    %1201 = vmatpush.msra.mxu0 0.0
    %1202 = vmatpush.msra.mxu0 0.0
    %1203 = vmatpush.msra.mxu0 0.0
    %1204 = vmatpush.msra.mxu0 0.0
    %1205 = vmatpush.msra.mxu0 0.0
    %1206 = vmatpush.msra.mxu0 0.0
    %1207 = vmatpush.msra.mxu0 0.0
    %1208 = vmatpush.msra.mxu0 0.0
    %1209 = vmatpush.msra.mxu0 0.0
    %1210 = vmatpush.msra.mxu0 0.0
    %1211 = vmatpush.msra.mxu0 0.0
    %1212 = vmatpush.msra.mxu0 0.0
    %1213 = vmatpush.msra.mxu0 0.0
    %1214 = vmatpush.msra.mxu0 0.0
    %1215 = vmatpush.msra.mxu0 %v418
    %1216 = vmatpush.msra.mxu0 %v417
    %1217 = vmatmul.f32.gmra.mxu0 %v1196
    %v1218 = vpop.f32.mrf.mxu0
    %v1219 = vadd.f32 0.0, %v1218
    %1220 = vmatmul.f32.gmra.mxu0 %v1199
    %v1221 = vpop.f32.mrf.mxu0
    %v1222 = vadd.f32 0.0, %v1221
    %1223 = vdwg.mxu0
    %v1224 = vadd.f32 %v1037, %v1219
    %v1225 = vadd.f32 %v1038, %v1222
    %v1226 = vld [vmem:[%s9] sm:$0xff]
    %v1227 = vld [vmem:[%s9 + $0x8] sm:$0xff]
    %v1228 = vld [vmem:[%s9 + $0x10] sm:$0xff]
    %v1229 = vld [vmem:[%s9 + $0x18] sm:$0xff]
    %v1230 = vld [vmem:[%s9 + $0x20] sm:$0xff]
    %v1231 = vld [vmem:[%s9 + $0x28] sm:$0xff]
    %v1232 = vld [vmem:[%s9 + $0x30] sm:$0xff]
    %v1233 = vld [vmem:[%s9 + $0x38] sm:$0xff]
    %v1234 = vld [vmem:[%s9 + $0x40] sm:$0xff]
    %v1235 = vld [vmem:[%s9 + $0x48] sm:$0xff]
    %v1236 = vld [vmem:[%s9 + $0x50] sm:$0xff]
    %v1237 = vld [vmem:[%s9 + $0x58] sm:$0xff]
    %v1238 = vld [vmem:[%s9 + $0x60] sm:$0xff]
    %v1239 = vld [vmem:[%s9 + $0x68] sm:$0xff]
    %v1240 = vld [vmem:[%s9 + $0x70] sm:$0xff]
    %v1241 = vld [vmem:[%s9 + $0x78] sm:$0xff]
    %v1242 = vld [vmem:[%s10] sm:$0x3]
    %v1243 = vld [vmem:[%s11] sm:$0xff]
    %v1244 = vld [vmem:[%s11 + $0x8] sm:$0xff]
    %v1245 = vld [vmem:[%s11 + $0x10] sm:$0xff]
    %v1246 = vld [vmem:[%s11 + $0x18] sm:$0xff]
    %v1247 = vld [vmem:[%s11 + $0x20] sm:$0xff]
    %v1248 = vld [vmem:[%s11 + $0x28] sm:$0xff]
    %v1249 = vld [vmem:[%s11 + $0x30] sm:$0xff]
    %v1250 = vld [vmem:[%s11 + $0x38] sm:$0xff]
    %v1251 = vld [vmem:[%s11 + $0x40] sm:$0xff]
    %v1252 = vld [vmem:[%s11 + $0x48] sm:$0xff]
    %v1253 = vld [vmem:[%s11 + $0x50] sm:$0xff]
    %v1254 = vld [vmem:[%s11 + $0x58] sm:$0xff]
    %v1255 = vld [vmem:[%s11 + $0x60] sm:$0xff]
    %v1256 = vld [vmem:[%s11 + $0x68] sm:$0xff]
    %v1257 = vld [vmem:[%s11 + $0x70] sm:$0xff]
    %v1258 = vld [vmem:[%s11 + $0x78] sm:$0xff]
    %v1260 = vperm.slane %v1242, 0
    %v1261 = vperm.slane %v1242, 1
    %v1265 = vsel %vm425, %v1224, 0
    %v1268 = vsel %vm425, %v1225, 0
    %1270 = vmatpush.msra.mxu0 0.0
    %1271 = vmatpush.msra.mxu0 0.0
    %1272 = vmatpush.msra.mxu0 0.0
    %1273 = vmatpush.msra.mxu0 0.0
    %1274 = vmatpush.msra.mxu0 0.0
    %1275 = vmatpush.msra.mxu0 0.0
    %1276 = vmatpush.msra.mxu0 0.0
    %1277 = vmatpush.msra.mxu0 0.0
    %1278 = vmatpush.msra.mxu0 %v1240
    %1279 = vmatpush.msra.mxu0 %v1238
    %1280 = vmatpush.msra.mxu0 %v1236
    %1281 = vmatpush.msra.mxu0 %v1234
    %1282 = vmatpush.msra.mxu0 %v1232
    %1283 = vmatpush.msra.mxu0 %v1230
    %1284 = vmatpush.msra.mxu0 %v1228
    %1285 = vmatpush.msra.mxu0 %v1226
    %1286 = vmatmul.f32.gmra.mxu0 %v1265
    %v1287 = vpop.f32.mrf.mxu0
    %v1288 = vadd.f32 %v1260, %v1287
    %1289 = vmatmul.f32.gmra.mxu0 %v1268
    %v1290 = vpop.f32.mrf.mxu0
    %v1291 = vadd.f32 %v1260, %v1290
    %1292 = vdwg.mxu0
    %1293 = vmatpush.msra.mxu0 0.0
    %1294 = vmatpush.msra.mxu0 0.0
    %1295 = vmatpush.msra.mxu0 0.0
    %1296 = vmatpush.msra.mxu0 0.0
    %1297 = vmatpush.msra.mxu0 0.0
    %1298 = vmatpush.msra.mxu0 0.0
    %1299 = vmatpush.msra.mxu0 0.0
    %1300 = vmatpush.msra.mxu0 0.0
    %1301 = vmatpush.msra.mxu0 %v1241
    %1302 = vmatpush.msra.mxu0 %v1239
    %1303 = vmatpush.msra.mxu0 %v1237
    %1304 = vmatpush.msra.mxu0 %v1235
    %1305 = vmatpush.msra.mxu0 %v1233
    %1306 = vmatpush.msra.mxu0 %v1231
    %1307 = vmatpush.msra.mxu0 %v1229
    %1308 = vmatpush.msra.mxu0 %v1227
    %1309 = vmatmul.f32.gmra.mxu0 %v1265
    %v1310 = vpop.f32.mrf.mxu0
    %v1311 = vadd.f32 %v1261, %v1310
    %1312 = vmatmul.f32.gmra.mxu0 %v1268
    %v1313 = vpop.f32.mrf.mxu0
    %v1314 = vadd.f32 %v1261, %v1313
    %1315 = vdwg.mxu0
    %v1317 = vsel %vm425, 0.0, 0
    %1319 = vmatpush.msra.mxu0 0.0
    %1320 = vmatpush.msra.mxu0 0.0
    %1321 = vmatpush.msra.mxu0 0.0
    %1322 = vmatpush.msra.mxu0 0.0
    %1323 = vmatpush.msra.mxu0 0.0
    %1324 = vmatpush.msra.mxu0 0.0
    %1325 = vmatpush.msra.mxu0 0.0
    %1326 = vmatpush.msra.mxu0 0.0
    %1327 = vmatpush.msra.mxu0 %v1257
    %1328 = vmatpush.msra.mxu0 %v1255
    %1329 = vmatpush.msra.mxu0 %v1253
    %1330 = vmatpush.msra.mxu0 %v1251
    %1331 = vmatpush.msra.mxu0 %v1249
    %1332 = vmatpush.msra.mxu0 %v1247
    %1333 = vmatpush.msra.mxu0 %v1245
    %1334 = vmatpush.msra.mxu0 %v1243
    %1335 = vmatmul.f32.gmra.mxu0 %v1317
    %v1336 = vpop.f32.mrf.mxu0
    %v1337 = vadd.f32 0.0, %v1336
    %1338 = vdwg.mxu0
    %1339 = vmatpush.msra.mxu0 0.0
    %1340 = vmatpush.msra.mxu0 0.0
    %1341 = vmatpush.msra.mxu0 0.0
    %1342 = vmatpush.msra.mxu0 0.0
    %1343 = vmatpush.msra.mxu0 0.0
    %1344 = vmatpush.msra.mxu0 0.0
    %1345 = vmatpush.msra.mxu0 0.0
    %1346 = vmatpush.msra.mxu0 0.0
    %1347 = vmatpush.msra.mxu0 %v1258
    %1348 = vmatpush.msra.mxu0 %v1256
    %1349 = vmatpush.msra.mxu0 %v1254
    %1350 = vmatpush.msra.mxu0 %v1252
    %1351 = vmatpush.msra.mxu0 %v1250
    %1352 = vmatpush.msra.mxu0 %v1248
    %1353 = vmatpush.msra.mxu0 %v1246
    %1354 = vmatpush.msra.mxu0 %v1244
    %1355 = vmatmul.f32.gmra.mxu0 %v1317
    %v1356 = vpop.f32.mrf.mxu0
    %v1357 = vadd.f32 0.0, %v1356
    %1358 = vdwg.mxu0
    %v1360 = vrot.slane %v1337, 1
    %v1363 = vadd.f32 %v1288, %v1337
    %v1364 = vadd.f32 %v1291, %v1360
    %v1365 = vxor.u32 %v1363, 2147483648
    %v1366 = vxor.u32 %v1364, 2147483648
    %v1367 = vmul.f32 %v1365, 1.442695
    %v1368 = vpow.pop %v1367
    %v1369 = vmul.f32 %v1366, 1.442695
    %v1370 = vpow.pop %v1369
    %v1371 = vadd.f32 %v1368, 1.0
    %v1372 = vadd.f32 %v1370, 1.0
    %v1373 = vrcp.pop %v1371
    %v1374 = vmul.f32 %v1371, %v1373
    %v1375 = vsub.f32 1.0, %v1374
    %v1376 = vmul.f32 %v1373, %v1375
    %v1377 = vadd.f32 %v1373, %v1376
    %vm1378 = vweird.f32 %v1371
    %vm1379 = vweird.f32 %v1373
    %vm1380 = vmor %vm1378, %vm1379
    %v1381 = vsel %vm1380, %v1373, %v1377
    %v1382 = vand.u32 2147483647, %v1371
    %vm1383 = vcmp.eq.f32.partialorder %v1382, 8.507059e+37
    %v1384 = vand.u32 %v1371, 2147483648
    %v1385 = vor.u32 1.1754944e-38, %v1384
    %v1386 = vsel %vm1383, %v1385, %v1381
    %v1387 = vmul.f32 1.0, %v1386
    %v1388 = vrcp.pop %v1372
    %v1389 = vmul.f32 %v1372, %v1388
    %v1390 = vsub.f32 1.0, %v1389
    %v1391 = vmul.f32 %v1388, %v1390
    %v1392 = vadd.f32 %v1388, %v1391
    %vm1393 = vweird.f32 %v1372
    %vm1394 = vweird.f32 %v1388
    %vm1395 = vmor %vm1393, %vm1394
    %v1396 = vsel %vm1395, %v1388, %v1392
    %v1397 = vand.u32 2147483647, %v1372
    %vm1398 = vcmp.eq.f32.partialorder %v1397, 8.507059e+37
    %v1399 = vand.u32 %v1372, 2147483648
    %v1400 = vor.u32 1.1754944e-38, %v1399
    %v1401 = vsel %vm1398, %v1400, %v1396
    %v1402 = vmul.f32 1.0, %v1401
    %v1403 = vtanh.pop %v1363
    %v1404 = vtanh.pop %v1364
    %v1405 = vmul.f32 %v1387, 0.0
    %v1406 = vmul.f32 %v1402, 0.0
    %1409 = vrot.lane.b32.xlu0 %v1403, 64
    %v1410 = vpop.permute.xlu0 %1409
    %1411 = vrot.lane.b32.xlu0 %v1404, 64
    %v1412 = vpop.permute.xlu0 %1411
    %v1415 = vmul.f32 %v1387, %v1410
    %v1416 = vmul.f32 %v1402, %v1412
    %1419 = vrot.lane.b32.xlu0 %v1415, 32
    %v1420 = vpop.permute.xlu0 %1419
    %1421 = vrot.lane.b32.xlu0 %v1416, 32
    %v1422 = vpop.permute.xlu0 %1421
    %v1425 = vadd.f32 %v1405, %v1420
    %v1426 = vadd.f32 %v1406, %v1422
    %v1427 = vtanh.pop %v1425
    %v1428 = vtanh.pop %v1426
    %1431 = vrot.lane.b32.xlu0 %v1427, 64
    %v1432 = vpop.permute.xlu0 %1431
    %1433 = vrot.lane.b32.xlu0 %v1428, 64
    %v1434 = vpop.permute.xlu0 %1433
    %v1437 = vmul.f32 %v1387, %v1432
    %v1438 = vmul.f32 %v1402, %v1434
    %v1440 = vrot.slane %v1357, 1
    %v1441 = vrot.slane %v1357, 2
    %v1444 = vadd.f32 %v1311, %v1440
    %v1445 = vadd.f32 %v1314, %v1441
    %v1446 = vxor.u32 %v1444, 2147483648
    %v1447 = vxor.u32 %v1445, 2147483648
    %v1448 = vmul.f32 %v1446, 1.442695
    %v1449 = vpow.pop %v1448
    %v1450 = vmul.f32 %v1447, 1.442695
    %v1451 = vpow.pop %v1450
    %v1452 = vadd.f32 %v1449, 1.0
    %v1453 = vadd.f32 %v1451, 1.0
    %v1454 = vrcp.pop %v1452
    %v1455 = vmul.f32 %v1452, %v1454
    %v1456 = vsub.f32 1.0, %v1455
    %v1457 = vmul.f32 %v1454, %v1456
    %v1458 = vadd.f32 %v1454, %v1457
    %vm1459 = vweird.f32 %v1452
    %vm1460 = vweird.f32 %v1454
    %vm1461 = vmor %vm1459, %vm1460
    %v1462 = vsel %vm1461, %v1454, %v1458
    %v1463 = vand.u32 2147483647, %v1452
    %vm1464 = vcmp.eq.f32.partialorder %v1463, 8.507059e+37
    %v1465 = vand.u32 %v1452, 2147483648
    %v1466 = vor.u32 1.1754944e-38, %v1465
    %v1467 = vsel %vm1464, %v1466, %v1462
    %v1468 = vmul.f32 1.0, %v1467
    %v1469 = vrcp.pop %v1453
    %v1470 = vmul.f32 %v1453, %v1469
    %v1471 = vsub.f32 1.0, %v1470
    %v1472 = vmul.f32 %v1469, %v1471
    %v1473 = vadd.f32 %v1469, %v1472
    %vm1474 = vweird.f32 %v1453
    %vm1475 = vweird.f32 %v1469
    %vm1476 = vmor %vm1474, %vm1475
    %v1477 = vsel %vm1476, %v1469, %v1473
    %v1478 = vand.u32 2147483647, %v1453
    %vm1479 = vcmp.eq.f32.partialorder %v1478, 8.507059e+37
    %v1480 = vand.u32 %v1453, 2147483648
    %v1481 = vor.u32 1.1754944e-38, %v1480
    %v1482 = vsel %vm1479, %v1481, %v1477
    %v1483 = vmul.f32 1.0, %v1482
    %v1484 = vtanh.pop %v1444
    %v1485 = vtanh.pop %v1445
    %v1486 = vmul.f32 %v1468, 0.0
    %v1487 = vmul.f32 %v1483, 0.0
    %1490 = vrot.lane.b32.xlu0 %v1484, 64
    %v1491 = vpop.permute.xlu0 %1490
    %1492 = vrot.lane.b32.xlu0 %v1485, 64
    %v1493 = vpop.permute.xlu0 %1492
    %v1496 = vmul.f32 %v1468, %v1491
    %v1497 = vmul.f32 %v1483, %v1493
    %1500 = vrot.lane.b32.xlu0 %v1496, 32
    %v1501 = vpop.permute.xlu0 %1500
    %1502 = vrot.lane.b32.xlu0 %v1497, 32
    %v1503 = vpop.permute.xlu0 %1502
    %v1506 = vadd.f32 %v1486, %v1501
    %v1507 = vadd.f32 %v1487, %v1503
    %v1508 = vtanh.pop %v1506
    %v1509 = vtanh.pop %v1507
    %1512 = vrot.lane.b32.xlu0 %v1508, 64
    %v1513 = vpop.permute.xlu0 %1512
    %1514 = vrot.lane.b32.xlu0 %v1509, 64
    %v1515 = vpop.permute.xlu0 %1514
    %v1518 = vmul.f32 %v1468, %v1513
    %v1519 = vmul.f32 %v1483, %v1515
    %v1522 = vrot.slane %v1438, 7
    %vm1523 = vcmask 1041409
    %v1524 = vsel %vm1523, %v1522, %v1437
    %1525 = vrot.lane.b32.xlu0 %v1524, 32
    %v1526 = vpop.permute.xlu0 %1525
    %v1530 = vrot.slane %v1518, 7
    %v1531 = vrot.slane %v1519, 6
    %v1532 = vsel %vm1523, %v1531, %v1530
    %1533 = vrot.lane.b32.xlu0 %v1532, 64
    %v1534 = vpop.permute.xlu0 %1533
    %v1536 = vsel %vm224, %v1526, %v1534
    %v1538 = vsel %vm425, %v1536, 0
    %1540 = vmatpush.msra.mxu0 0.0
    %1541 = vmatpush.msra.mxu0 0.0
    %1542 = vmatpush.msra.mxu0 0.0
    %1543 = vmatpush.msra.mxu0 0.0
    %1544 = vmatpush.msra.mxu0 0.0
    %1545 = vmatpush.msra.mxu0 0.0
    %1546 = vmatpush.msra.mxu0 0.0
    %1547 = vmatpush.msra.mxu0 0.0
    %1548 = vmatpush.msra.mxu0 %v1257
    %1549 = vmatpush.msra.mxu0 %v1255
    %1550 = vmatpush.msra.mxu0 %v1253
    %1551 = vmatpush.msra.mxu0 %v1251
    %1552 = vmatpush.msra.mxu0 %v1249
    %1553 = vmatpush.msra.mxu0 %v1247
    %1554 = vmatpush.msra.mxu0 %v1245
    %1555 = vmatpush.msra.mxu0 %v1243
    %1556 = vmatmul.f32.gmra.mxu0 %v1538
    %v1557 = vpop.f32.mrf.mxu0
    %v1558 = vadd.f32 0.0, %v1557
    %1559 = vdwg.mxu0
    %1560 = vmatpush.msra.mxu0 0.0
    %1561 = vmatpush.msra.mxu0 0.0
    %1562 = vmatpush.msra.mxu0 0.0
    %1563 = vmatpush.msra.mxu0 0.0
    %1564 = vmatpush.msra.mxu0 0.0
    %1565 = vmatpush.msra.mxu0 0.0
    %1566 = vmatpush.msra.mxu0 0.0
    %1567 = vmatpush.msra.mxu0 0.0
    %1568 = vmatpush.msra.mxu0 %v1258
    %1569 = vmatpush.msra.mxu0 %v1256
    %1570 = vmatpush.msra.mxu0 %v1254
    %1571 = vmatpush.msra.mxu0 %v1252
    %1572 = vmatpush.msra.mxu0 %v1250
    %1573 = vmatpush.msra.mxu0 %v1248
    %1574 = vmatpush.msra.mxu0 %v1246
    %1575 = vmatpush.msra.mxu0 %v1244
    %1576 = vmatmul.f32.gmra.mxu0 %v1538
    %v1577 = vpop.f32.mrf.mxu0
    %v1578 = vadd.f32 0.0, %v1577
    %1579 = vdwg.mxu0
    %v1581 = vrot.slane %v1558, 7
    %v1584 = vadd.f32 %v1288, %v1581
    %v1585 = vadd.f32 %v1291, %v1558
    %v1586 = vxor.u32 %v1584, 2147483648
    %v1587 = vxor.u32 %v1585, 2147483648
    %v1588 = vmul.f32 %v1586, 1.442695
    %v1589 = vpow.pop %v1588
    %v1590 = vmul.f32 %v1587, 1.442695
    %v1591 = vpow.pop %v1590
    %v1592 = vadd.f32 %v1589, 1.0
    %v1593 = vadd.f32 %v1591, 1.0
    %v1594 = vrcp.pop %v1592
    %v1595 = vmul.f32 %v1592, %v1594
    %v1596 = vsub.f32 1.0, %v1595
    %v1597 = vmul.f32 %v1594, %v1596
    %v1598 = vadd.f32 %v1594, %v1597
    %vm1599 = vweird.f32 %v1592
    %vm1600 = vweird.f32 %v1594
    %vm1601 = vmor %vm1599, %vm1600
    %v1602 = vsel %vm1601, %v1594, %v1598
    %v1603 = vand.u32 2147483647, %v1592
    %vm1604 = vcmp.eq.f32.partialorder %v1603, 8.507059e+37
    %v1605 = vand.u32 %v1592, 2147483648
    %v1606 = vor.u32 1.1754944e-38, %v1605
    %v1607 = vsel %vm1604, %v1606, %v1602
    %v1608 = vmul.f32 1.0, %v1607
    %v1609 = vrcp.pop %v1593
    %v1610 = vmul.f32 %v1593, %v1609
    %v1611 = vsub.f32 1.0, %v1610
    %v1612 = vmul.f32 %v1609, %v1611
    %v1613 = vadd.f32 %v1609, %v1612
    %vm1614 = vweird.f32 %v1593
    %vm1615 = vweird.f32 %v1609
    %vm1616 = vmor %vm1614, %vm1615
    %v1617 = vsel %vm1616, %v1609, %v1613
    %v1618 = vand.u32 2147483647, %v1593
    %vm1619 = vcmp.eq.f32.partialorder %v1618, 8.507059e+37
    %v1620 = vand.u32 %v1593, 2147483648
    %v1621 = vor.u32 1.1754944e-38, %v1620
    %v1622 = vsel %vm1619, %v1621, %v1617
    %v1623 = vmul.f32 1.0, %v1622
    %v1624 = vtanh.pop %v1584
    %v1625 = vtanh.pop %v1585
    %v1628 = vrot.slane %v1425, 7
    %v1629 = vrot.slane %v1426, 7
    %v1632 = vmul.f32 %v1608, %v1628
    %v1633 = vmul.f32 %v1623, %v1629
    %1636 = vrot.lane.b32.xlu0 %v1624, 64
    %v1637 = vpop.permute.xlu0 %1636
    %1638 = vrot.lane.b32.xlu0 %v1625, 64
    %v1639 = vpop.permute.xlu0 %1638
    %v1642 = vmul.f32 %v1608, %v1637
    %v1643 = vmul.f32 %v1623, %v1639
    %1646 = vrot.lane.b32.xlu0 %v1642, 32
    %v1647 = vpop.permute.xlu0 %1646
    %1648 = vrot.lane.b32.xlu0 %v1643, 32
    %v1649 = vpop.permute.xlu0 %1648
    %v1652 = vadd.f32 %v1632, %v1647
    %v1653 = vadd.f32 %v1633, %v1649
    %v1654 = vtanh.pop %v1652
    %v1655 = vtanh.pop %v1653
    %1658 = vrot.lane.b32.xlu0 %v1654, 64
    %v1659 = vpop.permute.xlu0 %1658
    %1660 = vrot.lane.b32.xlu0 %v1655, 64
    %v1661 = vpop.permute.xlu0 %1660
    %v1664 = vmul.f32 %v1608, %v1659
    %v1665 = vmul.f32 %v1623, %v1661
    %v1667 = vrot.slane %v1578, 2
    %v1668 = vrot.slane %v1578, 3
    %v1671 = vadd.f32 %v1311, %v1667
    %v1672 = vadd.f32 %v1314, %v1668
    %v1673 = vxor.u32 %v1671, 2147483648
    %v1674 = vxor.u32 %v1672, 2147483648
    %v1675 = vmul.f32 %v1673, 1.442695
    %v1676 = vpow.pop %v1675
    %v1677 = vmul.f32 %v1674, 1.442695
    %v1678 = vpow.pop %v1677
    %v1679 = vadd.f32 %v1676, 1.0
    %v1680 = vadd.f32 %v1678, 1.0
    %v1681 = vrcp.pop %v1679
    %v1682 = vmul.f32 %v1679, %v1681
    %v1683 = vsub.f32 1.0, %v1682
    %v1684 = vmul.f32 %v1681, %v1683
    %v1685 = vadd.f32 %v1681, %v1684
    %vm1686 = vweird.f32 %v1679
    %vm1687 = vweird.f32 %v1681
    %vm1688 = vmor %vm1686, %vm1687
    %v1689 = vsel %vm1688, %v1681, %v1685
    %v1690 = vand.u32 2147483647, %v1679
    %vm1691 = vcmp.eq.f32.partialorder %v1690, 8.507059e+37
    %v1692 = vand.u32 %v1679, 2147483648
    %v1693 = vor.u32 1.1754944e-38, %v1692
    %v1694 = vsel %vm1691, %v1693, %v1689
    %v1695 = vmul.f32 1.0, %v1694
    %v1696 = vrcp.pop %v1680
    %v1697 = vmul.f32 %v1680, %v1696
    %v1698 = vsub.f32 1.0, %v1697
    %v1699 = vmul.f32 %v1696, %v1698
    %v1700 = vadd.f32 %v1696, %v1699
    %vm1701 = vweird.f32 %v1680
    %vm1702 = vweird.f32 %v1696
    %vm1703 = vmor %vm1701, %vm1702
    %v1704 = vsel %vm1703, %v1696, %v1700
    %v1705 = vand.u32 2147483647, %v1680
    %vm1706 = vcmp.eq.f32.partialorder %v1705, 8.507059e+37
    %v1707 = vand.u32 %v1680, 2147483648
    %v1708 = vor.u32 1.1754944e-38, %v1707
    %v1709 = vsel %vm1706, %v1708, %v1704
    %v1710 = vmul.f32 1.0, %v1709
    %v1711 = vtanh.pop %v1671
    %v1712 = vtanh.pop %v1672
    %v1715 = vrot.slane %v1506, 1
    %v1716 = vrot.slane %v1507, 1
    %v1719 = vmul.f32 %v1695, %v1715
    %v1720 = vmul.f32 %v1710, %v1716
    %1723 = vrot.lane.b32.xlu0 %v1711, 64
    %v1724 = vpop.permute.xlu0 %1723
    %1725 = vrot.lane.b32.xlu0 %v1712, 64
    %v1726 = vpop.permute.xlu0 %1725
    %v1729 = vmul.f32 %v1695, %v1724
    %v1730 = vmul.f32 %v1710, %v1726
    %1733 = vrot.lane.b32.xlu0 %v1729, 32
    %v1734 = vpop.permute.xlu0 %1733
    %1735 = vrot.lane.b32.xlu0 %v1730, 32
    %v1736 = vpop.permute.xlu0 %1735
    %v1739 = vadd.f32 %v1719, %v1734
    %v1740 = vadd.f32 %v1720, %v1736
    %v1741 = vtanh.pop %v1739
    %v1742 = vtanh.pop %v1740
    %1745 = vrot.lane.b32.xlu0 %v1741, 64
    %v1746 = vpop.permute.xlu0 %1745
    %1747 = vrot.lane.b32.xlu0 %v1742, 64
    %v1748 = vpop.permute.xlu0 %1747
    %v1751 = vmul.f32 %v1695, %v1746
    %v1752 = vmul.f32 %v1710, %v1748
    %v1755 = vrot.slane %v1665, 7
    %vm1756 = vcmask 1042434
    %v1757 = vsel %vm1756, %v1755, %v1664
    %1758 = vrot.lane.b32.xlu0 %v1757, 32
    %v1759 = vpop.permute.xlu0 %1758
    %v1763 = vrot.slane %v1751, 5
    %v1764 = vrot.slane %v1752, 4
    %v1765 = vsel %vm1756, %v1764, %v1763
    %1766 = vrot.lane.b32.xlu0 %v1765, 64
    %v1767 = vpop.permute.xlu0 %1766
    %v1769 = vsel %vm224, %v1759, %v1767
    %v1771 = vrot.slane %v1769, 1
    %v1772 = vsel %vm425, %v1771, 0
    %1774 = vmatpush.msra.mxu0 0.0
    %1775 = vmatpush.msra.mxu0 0.0
    %1776 = vmatpush.msra.mxu0 0.0
    %1777 = vmatpush.msra.mxu0 0.0
    %1778 = vmatpush.msra.mxu0 0.0
    %1779 = vmatpush.msra.mxu0 0.0
    %1780 = vmatpush.msra.mxu0 0.0
    %1781 = vmatpush.msra.mxu0 0.0
    %1782 = vmatpush.msra.mxu0 %v1257
    %1783 = vmatpush.msra.mxu0 %v1255
    %1784 = vmatpush.msra.mxu0 %v1253
    %1785 = vmatpush.msra.mxu0 %v1251
    %1786 = vmatpush.msra.mxu0 %v1249
    %1787 = vmatpush.msra.mxu0 %v1247
    %1788 = vmatpush.msra.mxu0 %v1245
    %1789 = vmatpush.msra.mxu0 %v1243
    %1790 = vmatmul.f32.gmra.mxu0 %v1772
    %v1791 = vpop.f32.mrf.mxu0
    %v1792 = vadd.f32 0.0, %v1791
    %1793 = vdwg.mxu0
    %1794 = vmatpush.msra.mxu0 0.0
    %1795 = vmatpush.msra.mxu0 0.0
    %1796 = vmatpush.msra.mxu0 0.0
    %1797 = vmatpush.msra.mxu0 0.0
    %1798 = vmatpush.msra.mxu0 0.0
    %1799 = vmatpush.msra.mxu0 0.0
    %1800 = vmatpush.msra.mxu0 0.0
    %1801 = vmatpush.msra.mxu0 0.0
    %1802 = vmatpush.msra.mxu0 %v1258
    %1803 = vmatpush.msra.mxu0 %v1256
    %1804 = vmatpush.msra.mxu0 %v1254
    %1805 = vmatpush.msra.mxu0 %v1252
    %1806 = vmatpush.msra.mxu0 %v1250
    %1807 = vmatpush.msra.mxu0 %v1248
    %1808 = vmatpush.msra.mxu0 %v1246
    %1809 = vmatpush.msra.mxu0 %v1244
    %1810 = vmatmul.f32.gmra.mxu0 %v1772
    %v1811 = vpop.f32.mrf.mxu0
    %v1812 = vadd.f32 0.0, %v1811
    %1813 = vdwg.mxu0
    %v1815 = vrot.slane %v1792, 6
    %v1816 = vrot.slane %v1792, 7
    %v1819 = vadd.f32 %v1288, %v1815
    %v1820 = vadd.f32 %v1291, %v1816
    %v1821 = vxor.u32 %v1819, 2147483648
    %v1822 = vxor.u32 %v1820, 2147483648
    %v1823 = vmul.f32 %v1821, 1.442695
    %v1824 = vpow.pop %v1823
    %v1825 = vmul.f32 %v1822, 1.442695
    %v1826 = vpow.pop %v1825
    %v1827 = vadd.f32 %v1824, 1.0
    %v1828 = vadd.f32 %v1826, 1.0
    %v1829 = vrcp.pop %v1827
    %v1830 = vmul.f32 %v1827, %v1829
    %v1831 = vsub.f32 1.0, %v1830
    %v1832 = vmul.f32 %v1829, %v1831
    %v1833 = vadd.f32 %v1829, %v1832
    %vm1834 = vweird.f32 %v1827
    %vm1835 = vweird.f32 %v1829
    %vm1836 = vmor %vm1834, %vm1835
    %v1837 = vsel %vm1836, %v1829, %v1833
    %v1838 = vand.u32 2147483647, %v1827
    %vm1839 = vcmp.eq.f32.partialorder %v1838, 8.507059e+37
    %v1840 = vand.u32 %v1827, 2147483648
    %v1841 = vor.u32 1.1754944e-38, %v1840
    %v1842 = vsel %vm1839, %v1841, %v1837
    %v1843 = vmul.f32 1.0, %v1842
    %v1844 = vrcp.pop %v1828
    %v1845 = vmul.f32 %v1828, %v1844
    %v1846 = vsub.f32 1.0, %v1845
    %v1847 = vmul.f32 %v1844, %v1846
    %v1848 = vadd.f32 %v1844, %v1847
    %vm1849 = vweird.f32 %v1828
    %vm1850 = vweird.f32 %v1844
    %vm1851 = vmor %vm1849, %vm1850
    %v1852 = vsel %vm1851, %v1844, %v1848
    %v1853 = vand.u32 2147483647, %v1828
    %vm1854 = vcmp.eq.f32.partialorder %v1853, 8.507059e+37
    %v1855 = vand.u32 %v1828, 2147483648
    %v1856 = vor.u32 1.1754944e-38, %v1855
    %v1857 = vsel %vm1854, %v1856, %v1852
    %v1858 = vmul.f32 1.0, %v1857
    %v1859 = vtanh.pop %v1819
    %v1860 = vtanh.pop %v1820
    %v1863 = vrot.slane %v1652, 7
    %v1864 = vrot.slane %v1653, 7
    %v1867 = vmul.f32 %v1843, %v1863
    %v1868 = vmul.f32 %v1858, %v1864
    %1871 = vrot.lane.b32.xlu0 %v1859, 64
    %v1872 = vpop.permute.xlu0 %1871
    %1873 = vrot.lane.b32.xlu0 %v1860, 64
    %v1874 = vpop.permute.xlu0 %1873
    %v1877 = vmul.f32 %v1843, %v1872
    %v1878 = vmul.f32 %v1858, %v1874
    %1881 = vrot.lane.b32.xlu0 %v1877, 32
    %v1882 = vpop.permute.xlu0 %1881
    %1883 = vrot.lane.b32.xlu0 %v1878, 32
    %v1884 = vpop.permute.xlu0 %1883
    %v1887 = vadd.f32 %v1867, %v1882
    %v1888 = vadd.f32 %v1868, %v1884
    %v1889 = vtanh.pop %v1887
    %v1890 = vtanh.pop %v1888
    %1893 = vrot.lane.b32.xlu0 %v1889, 64
    %v1894 = vpop.permute.xlu0 %1893
    %1895 = vrot.lane.b32.xlu0 %v1890, 64
    %v1896 = vpop.permute.xlu0 %1895
    %v1899 = vmul.f32 %v1843, %v1894
    %v1900 = vmul.f32 %v1858, %v1896
    %v1902 = vrot.slane %v1812, 3
    %v1903 = vrot.slane %v1812, 4
    %v1906 = vadd.f32 %v1311, %v1902
    %v1907 = vadd.f32 %v1314, %v1903
    %v1908 = vxor.u32 %v1906, 2147483648
    %v1909 = vxor.u32 %v1907, 2147483648
    %v1910 = vmul.f32 %v1908, 1.442695
    %v1911 = vpow.pop %v1910
    %v1912 = vmul.f32 %v1909, 1.442695
    %v1913 = vpow.pop %v1912
    %v1914 = vadd.f32 %v1911, 1.0
    %v1915 = vadd.f32 %v1913, 1.0
    %v1916 = vrcp.pop %v1914
    %v1917 = vmul.f32 %v1914, %v1916
    %v1918 = vsub.f32 1.0, %v1917
    %v1919 = vmul.f32 %v1916, %v1918
    %v1920 = vadd.f32 %v1916, %v1919
    %vm1921 = vweird.f32 %v1914
    %vm1922 = vweird.f32 %v1916
    %vm1923 = vmor %vm1921, %vm1922
    %v1924 = vsel %vm1923, %v1916, %v1920
    %v1925 = vand.u32 2147483647, %v1914
    %vm1926 = vcmp.eq.f32.partialorder %v1925, 8.507059e+37
    %v1927 = vand.u32 %v1914, 2147483648
    %v1928 = vor.u32 1.1754944e-38, %v1927
    %v1929 = vsel %vm1926, %v1928, %v1924
    %v1930 = vmul.f32 1.0, %v1929
    %v1931 = vrcp.pop %v1915
    %v1932 = vmul.f32 %v1915, %v1931
    %v1933 = vsub.f32 1.0, %v1932
    %v1934 = vmul.f32 %v1931, %v1933
    %v1935 = vadd.f32 %v1931, %v1934
    %vm1936 = vweird.f32 %v1915
    %vm1937 = vweird.f32 %v1931
    %vm1938 = vmor %vm1936, %vm1937
    %v1939 = vsel %vm1938, %v1931, %v1935
    %v1940 = vand.u32 2147483647, %v1915
    %vm1941 = vcmp.eq.f32.partialorder %v1940, 8.507059e+37
    %v1942 = vand.u32 %v1915, 2147483648
    %v1943 = vor.u32 1.1754944e-38, %v1942
    %v1944 = vsel %vm1941, %v1943, %v1939
    %v1945 = vmul.f32 1.0, %v1944
    %v1946 = vtanh.pop %v1906
    %v1947 = vtanh.pop %v1907
    %v1950 = vrot.slane %v1739, 1
    %v1951 = vrot.slane %v1740, 1
    %v1954 = vmul.f32 %v1930, %v1950
    %v1955 = vmul.f32 %v1945, %v1951
    %1958 = vrot.lane.b32.xlu0 %v1946, 64
    %v1959 = vpop.permute.xlu0 %1958
    %1960 = vrot.lane.b32.xlu0 %v1947, 64
    %v1961 = vpop.permute.xlu0 %1960
    %v1964 = vmul.f32 %v1930, %v1959
    %v1965 = vmul.f32 %v1945, %v1961
    %1968 = vrot.lane.b32.xlu0 %v1964, 32
    %v1969 = vpop.permute.xlu0 %1968
    %1970 = vrot.lane.b32.xlu0 %v1965, 32
    %v1971 = vpop.permute.xlu0 %1970
    %v1974 = vadd.f32 %v1954, %v1969
    %v1975 = vadd.f32 %v1955, %v1971
    %v1976 = vtanh.pop %v1974
    %v1977 = vtanh.pop %v1975
    %1980 = vrot.lane.b32.xlu0 %v1976, 64
    %v1981 = vpop.permute.xlu0 %1980
    %1982 = vrot.lane.b32.xlu0 %v1977, 64
    %v1983 = vpop.permute.xlu0 %1982
    %v1986 = vmul.f32 %v1930, %v1981
    %v1987 = vmul.f32 %v1945, %v1983
    %v1990 = vrot.slane %v1900, 7
    %vm1991 = vcmask 1043459
    %v1992 = vsel %vm1991, %v1990, %v1899
    %1993 = vrot.lane.b32.xlu0 %v1992, 32
    %v1994 = vpop.permute.xlu0 %1993
    %v1998 = vrot.slane %v1986, 3
    %v1999 = vrot.slane %v1987, 2
    %v2000 = vsel %vm1991, %v1999, %v1998
    %2001 = vrot.lane.b32.xlu0 %v2000, 64
    %v2002 = vpop.permute.xlu0 %2001
    %v2004 = vsel %vm224, %v1994, %v2002
    %v2006 = vrot.slane %v2004, 2
    %v2007 = vsel %vm425, %v2006, 0
    %2009 = vmatpush.msra.mxu0 0.0
    %2010 = vmatpush.msra.mxu0 0.0
    %2011 = vmatpush.msra.mxu0 0.0
    %2012 = vmatpush.msra.mxu0 0.0
    %2013 = vmatpush.msra.mxu0 0.0
    %2014 = vmatpush.msra.mxu0 0.0
    %2015 = vmatpush.msra.mxu0 0.0
    %2016 = vmatpush.msra.mxu0 0.0
    %2017 = vmatpush.msra.mxu0 %v1257
    %2018 = vmatpush.msra.mxu0 %v1255
    %2019 = vmatpush.msra.mxu0 %v1253
    %2020 = vmatpush.msra.mxu0 %v1251
    %2021 = vmatpush.msra.mxu0 %v1249
    %2022 = vmatpush.msra.mxu0 %v1247
    %2023 = vmatpush.msra.mxu0 %v1245
    %2024 = vmatpush.msra.mxu0 %v1243
    %2025 = vmatmul.f32.gmra.mxu0 %v2007
    %v2026 = vpop.f32.mrf.mxu0
    %v2027 = vadd.f32 0.0, %v2026
    %2028 = vdwg.mxu0
    %2029 = vmatpush.msra.mxu0 0.0
    %2030 = vmatpush.msra.mxu0 0.0
    %2031 = vmatpush.msra.mxu0 0.0
    %2032 = vmatpush.msra.mxu0 0.0
    %2033 = vmatpush.msra.mxu0 0.0
    %2034 = vmatpush.msra.mxu0 0.0
    %2035 = vmatpush.msra.mxu0 0.0
    %2036 = vmatpush.msra.mxu0 0.0
    %2037 = vmatpush.msra.mxu0 %v1258
    %2038 = vmatpush.msra.mxu0 %v1256
    %2039 = vmatpush.msra.mxu0 %v1254
    %2040 = vmatpush.msra.mxu0 %v1252
    %2041 = vmatpush.msra.mxu0 %v1250
    %2042 = vmatpush.msra.mxu0 %v1248
    %2043 = vmatpush.msra.mxu0 %v1246
    %2044 = vmatpush.msra.mxu0 %v1244
    %2045 = vmatmul.f32.gmra.mxu0 %v2007
    %v2046 = vpop.f32.mrf.mxu0
    %v2047 = vadd.f32 0.0, %v2046
    %2048 = vdwg.mxu0
    %v2050 = vrot.slane %v2027, 5
    %v2051 = vrot.slane %v2027, 6
    %v2054 = vadd.f32 %v1288, %v2050
    %v2055 = vadd.f32 %v1291, %v2051
    %v2056 = vxor.u32 %v2054, 2147483648
    %v2057 = vxor.u32 %v2055, 2147483648
    %v2058 = vmul.f32 %v2056, 1.442695
    %v2059 = vpow.pop %v2058
    %v2060 = vmul.f32 %v2057, 1.442695
    %v2061 = vpow.pop %v2060
    %v2062 = vadd.f32 %v2059, 1.0
    %v2063 = vadd.f32 %v2061, 1.0
    %v2064 = vrcp.pop %v2062
    %v2065 = vmul.f32 %v2062, %v2064
    %v2066 = vsub.f32 1.0, %v2065
    %v2067 = vmul.f32 %v2064, %v2066
    %v2068 = vadd.f32 %v2064, %v2067
    %vm2069 = vweird.f32 %v2062
    %vm2070 = vweird.f32 %v2064
    %vm2071 = vmor %vm2069, %vm2070
    %v2072 = vsel %vm2071, %v2064, %v2068
    %v2073 = vand.u32 2147483647, %v2062
    %vm2074 = vcmp.eq.f32.partialorder %v2073, 8.507059e+37
    %v2075 = vand.u32 %v2062, 2147483648
    %v2076 = vor.u32 1.1754944e-38, %v2075
    %v2077 = vsel %vm2074, %v2076, %v2072
    %v2078 = vmul.f32 1.0, %v2077
    %v2079 = vrcp.pop %v2063
    %v2080 = vmul.f32 %v2063, %v2079
    %v2081 = vsub.f32 1.0, %v2080
    %v2082 = vmul.f32 %v2079, %v2081
    %v2083 = vadd.f32 %v2079, %v2082
    %vm2084 = vweird.f32 %v2063
    %vm2085 = vweird.f32 %v2079
    %vm2086 = vmor %vm2084, %vm2085
    %v2087 = vsel %vm2086, %v2079, %v2083
    %v2088 = vand.u32 2147483647, %v2063
    %vm2089 = vcmp.eq.f32.partialorder %v2088, 8.507059e+37
    %v2090 = vand.u32 %v2063, 2147483648
    %v2091 = vor.u32 1.1754944e-38, %v2090
    %v2092 = vsel %vm2089, %v2091, %v2087
    %v2093 = vmul.f32 1.0, %v2092
    %v2094 = vtanh.pop %v2054
    %v2095 = vtanh.pop %v2055
    %v2098 = vrot.slane %v1887, 7
    %v2099 = vrot.slane %v1888, 7
    %v2102 = vmul.f32 %v2078, %v2098
    %v2103 = vmul.f32 %v2093, %v2099
    %2106 = vrot.lane.b32.xlu0 %v2094, 64
    %v2107 = vpop.permute.xlu0 %2106
    %2108 = vrot.lane.b32.xlu0 %v2095, 64
    %v2109 = vpop.permute.xlu0 %2108
    %v2112 = vmul.f32 %v2078, %v2107
    %v2113 = vmul.f32 %v2093, %v2109
    %2116 = vrot.lane.b32.xlu0 %v2112, 32
    %v2117 = vpop.permute.xlu0 %2116
    %2118 = vrot.lane.b32.xlu0 %v2113, 32
    %v2119 = vpop.permute.xlu0 %2118
    %v2122 = vadd.f32 %v2102, %v2117
    %v2123 = vadd.f32 %v2103, %v2119
    %v2124 = vtanh.pop %v2122
    %v2125 = vtanh.pop %v2123
    %2128 = vrot.lane.b32.xlu0 %v2124, 64
    %v2129 = vpop.permute.xlu0 %2128
    %2130 = vrot.lane.b32.xlu0 %v2125, 64
    %v2131 = vpop.permute.xlu0 %2130
    %v2134 = vmul.f32 %v2078, %v2129
    %v2135 = vmul.f32 %v2093, %v2131
    %v2137 = vrot.slane %v2047, 4
    %v2138 = vrot.slane %v2047, 5
    %v2141 = vadd.f32 %v1311, %v2137
    %v2142 = vadd.f32 %v1314, %v2138
    %v2143 = vxor.u32 %v2141, 2147483648
    %v2144 = vxor.u32 %v2142, 2147483648
    %v2145 = vmul.f32 %v2143, 1.442695
    %v2146 = vpow.pop %v2145
    %v2147 = vmul.f32 %v2144, 1.442695
    %v2148 = vpow.pop %v2147
    %v2149 = vadd.f32 %v2146, 1.0
    %v2150 = vadd.f32 %v2148, 1.0
    %v2151 = vrcp.pop %v2149
    %v2152 = vmul.f32 %v2149, %v2151
    %v2153 = vsub.f32 1.0, %v2152
    %v2154 = vmul.f32 %v2151, %v2153
    %v2155 = vadd.f32 %v2151, %v2154
    %vm2156 = vweird.f32 %v2149
    %vm2157 = vweird.f32 %v2151
    %vm2158 = vmor %vm2156, %vm2157
    %v2159 = vsel %vm2158, %v2151, %v2155
    %v2160 = vand.u32 2147483647, %v2149
    %vm2161 = vcmp.eq.f32.partialorder %v2160, 8.507059e+37
    %v2162 = vand.u32 %v2149, 2147483648
    %v2163 = vor.u32 1.1754944e-38, %v2162
    %v2164 = vsel %vm2161, %v2163, %v2159
    %v2165 = vmul.f32 1.0, %v2164
    %v2166 = vrcp.pop %v2150
    %v2167 = vmul.f32 %v2150, %v2166
    %v2168 = vsub.f32 1.0, %v2167
    %v2169 = vmul.f32 %v2166, %v2168
    %v2170 = vadd.f32 %v2166, %v2169
    %vm2171 = vweird.f32 %v2150
    %vm2172 = vweird.f32 %v2166
    %vm2173 = vmor %vm2171, %vm2172
    %v2174 = vsel %vm2173, %v2166, %v2170
    %v2175 = vand.u32 2147483647, %v2150
    %vm2176 = vcmp.eq.f32.partialorder %v2175, 8.507059e+37
    %v2177 = vand.u32 %v2150, 2147483648
    %v2178 = vor.u32 1.1754944e-38, %v2177
    %v2179 = vsel %vm2176, %v2178, %v2174
    %v2180 = vmul.f32 1.0, %v2179
    %v2181 = vtanh.pop %v2141
    %v2182 = vtanh.pop %v2142
    %v2185 = vrot.slane %v1974, 1
    %v2186 = vrot.slane %v1975, 1
    %v2189 = vmul.f32 %v2165, %v2185
    %v2190 = vmul.f32 %v2180, %v2186
    %2193 = vrot.lane.b32.xlu0 %v2181, 64
    %v2194 = vpop.permute.xlu0 %2193
    %2195 = vrot.lane.b32.xlu0 %v2182, 64
    %v2196 = vpop.permute.xlu0 %2195
    %v2199 = vmul.f32 %v2165, %v2194
    %v2200 = vmul.f32 %v2180, %v2196
    %2203 = vrot.lane.b32.xlu0 %v2199, 32
    %v2204 = vpop.permute.xlu0 %2203
    %2205 = vrot.lane.b32.xlu0 %v2200, 32
    %v2206 = vpop.permute.xlu0 %2205
    %v2209 = vadd.f32 %v2189, %v2204
    %v2210 = vadd.f32 %v2190, %v2206
    %v2211 = vtanh.pop %v2209
    %v2212 = vtanh.pop %v2210
    %2215 = vrot.lane.b32.xlu0 %v2211, 64
    %v2216 = vpop.permute.xlu0 %2215
    %2217 = vrot.lane.b32.xlu0 %v2212, 64
    %v2218 = vpop.permute.xlu0 %2217
    %v2221 = vmul.f32 %v2165, %v2216
    %v2222 = vmul.f32 %v2180, %v2218
    %v2225 = vrot.slane %v2135, 7
    %vm2226 = vcmask 1044484
    %v2227 = vsel %vm2226, %v2225, %v2134
    %2228 = vrot.lane.b32.xlu0 %v2227, 32
    %v2229 = vpop.permute.xlu0 %2228
    %v2233 = vrot.slane %v2221, 1
    %v2234 = vsel %vm2226, %v2222, %v2233
    %2235 = vrot.lane.b32.xlu0 %v2234, 64
    %v2236 = vpop.permute.xlu0 %2235
    %v2238 = vsel %vm224, %v2229, %v2236
    %v2240 = vrot.slane %v2238, 3
    %v2241 = vsel %vm425, %v2240, 0
    %2243 = vmatpush.msra.mxu0 0.0
    %2244 = vmatpush.msra.mxu0 0.0
    %2245 = vmatpush.msra.mxu0 0.0
    %2246 = vmatpush.msra.mxu0 0.0
    %2247 = vmatpush.msra.mxu0 0.0
    %2248 = vmatpush.msra.mxu0 0.0
    %2249 = vmatpush.msra.mxu0 0.0
    %2250 = vmatpush.msra.mxu0 0.0
    %2251 = vmatpush.msra.mxu0 %v1257
    %2252 = vmatpush.msra.mxu0 %v1255
    %2253 = vmatpush.msra.mxu0 %v1253
    %2254 = vmatpush.msra.mxu0 %v1251
    %2255 = vmatpush.msra.mxu0 %v1249
    %2256 = vmatpush.msra.mxu0 %v1247
    %2257 = vmatpush.msra.mxu0 %v1245
    %2258 = vmatpush.msra.mxu0 %v1243
    %2259 = vmatmul.f32.gmra.mxu0 %v2241
    %v2260 = vpop.f32.mrf.mxu0
    %v2261 = vadd.f32 0.0, %v2260
    %2262 = vdwg.mxu0
    %2263 = vmatpush.msra.mxu0 0.0
    %2264 = vmatpush.msra.mxu0 0.0
    %2265 = vmatpush.msra.mxu0 0.0
    %2266 = vmatpush.msra.mxu0 0.0
    %2267 = vmatpush.msra.mxu0 0.0
    %2268 = vmatpush.msra.mxu0 0.0
    %2269 = vmatpush.msra.mxu0 0.0
    %2270 = vmatpush.msra.mxu0 0.0
    %2271 = vmatpush.msra.mxu0 %v1258
    %2272 = vmatpush.msra.mxu0 %v1256
    %2273 = vmatpush.msra.mxu0 %v1254
    %2274 = vmatpush.msra.mxu0 %v1252
    %2275 = vmatpush.msra.mxu0 %v1250
    %2276 = vmatpush.msra.mxu0 %v1248
    %2277 = vmatpush.msra.mxu0 %v1246
    %2278 = vmatpush.msra.mxu0 %v1244
    %2279 = vmatmul.f32.gmra.mxu0 %v2241
    %v2280 = vpop.f32.mrf.mxu0
    %v2281 = vadd.f32 0.0, %v2280
    %2282 = vdwg.mxu0
    %v2284 = vrot.slane %v2261, 4
    %v2285 = vrot.slane %v2261, 5
    %v2288 = vadd.f32 %v1288, %v2284
    %v2289 = vadd.f32 %v1291, %v2285
    %v2290 = vxor.u32 %v2288, 2147483648
    %v2291 = vxor.u32 %v2289, 2147483648
    %v2292 = vmul.f32 %v2290, 1.442695
    %v2293 = vpow.pop %v2292
    %v2294 = vmul.f32 %v2291, 1.442695
    %v2295 = vpow.pop %v2294
    %v2296 = vadd.f32 %v2293, 1.0
    %v2297 = vadd.f32 %v2295, 1.0
    %v2298 = vrcp.pop %v2296
    %v2299 = vmul.f32 %v2296, %v2298
    %v2300 = vsub.f32 1.0, %v2299
    %v2301 = vmul.f32 %v2298, %v2300
    %v2302 = vadd.f32 %v2298, %v2301
    %vm2303 = vweird.f32 %v2296
    %vm2304 = vweird.f32 %v2298
    %vm2305 = vmor %vm2303, %vm2304
    %v2306 = vsel %vm2305, %v2298, %v2302
    %v2307 = vand.u32 2147483647, %v2296
    %vm2308 = vcmp.eq.f32.partialorder %v2307, 8.507059e+37
    %v2309 = vand.u32 %v2296, 2147483648
    %v2310 = vor.u32 1.1754944e-38, %v2309
    %v2311 = vsel %vm2308, %v2310, %v2306
    %v2312 = vmul.f32 1.0, %v2311
    %v2313 = vrcp.pop %v2297
    %v2314 = vmul.f32 %v2297, %v2313
    %v2315 = vsub.f32 1.0, %v2314
    %v2316 = vmul.f32 %v2313, %v2315
    %v2317 = vadd.f32 %v2313, %v2316
    %vm2318 = vweird.f32 %v2297
    %vm2319 = vweird.f32 %v2313
    %vm2320 = vmor %vm2318, %vm2319
    %v2321 = vsel %vm2320, %v2313, %v2317
    %v2322 = vand.u32 2147483647, %v2297
    %vm2323 = vcmp.eq.f32.partialorder %v2322, 8.507059e+37
    %v2324 = vand.u32 %v2297, 2147483648
    %v2325 = vor.u32 1.1754944e-38, %v2324
    %v2326 = vsel %vm2323, %v2325, %v2321
    %v2327 = vmul.f32 1.0, %v2326
    %v2328 = vtanh.pop %v2288
    %v2329 = vtanh.pop %v2289
    %v2332 = vrot.slane %v2122, 7
    %v2333 = vrot.slane %v2123, 7
    %v2336 = vmul.f32 %v2312, %v2332
    %v2337 = vmul.f32 %v2327, %v2333
    %2340 = vrot.lane.b32.xlu0 %v2328, 64
    %v2341 = vpop.permute.xlu0 %2340
    %2342 = vrot.lane.b32.xlu0 %v2329, 64
    %v2343 = vpop.permute.xlu0 %2342
    %v2346 = vmul.f32 %v2312, %v2341
    %v2347 = vmul.f32 %v2327, %v2343
    %2350 = vrot.lane.b32.xlu0 %v2346, 32
    %v2351 = vpop.permute.xlu0 %2350
    %2352 = vrot.lane.b32.xlu0 %v2347, 32
    %v2353 = vpop.permute.xlu0 %2352
    %v2356 = vadd.f32 %v2336, %v2351
    %v2357 = vadd.f32 %v2337, %v2353
    %v2358 = vtanh.pop %v2356
    %v2359 = vtanh.pop %v2357
    %2362 = vrot.lane.b32.xlu0 %v2358, 64
    %v2363 = vpop.permute.xlu0 %2362
    %2364 = vrot.lane.b32.xlu0 %v2359, 64
    %v2365 = vpop.permute.xlu0 %2364
    %v2368 = vmul.f32 %v2312, %v2363
    %v2369 = vmul.f32 %v2327, %v2365
    %v2371 = vrot.slane %v2281, 5
    %v2372 = vrot.slane %v2281, 6
    %v2375 = vadd.f32 %v1311, %v2371
    %v2376 = vadd.f32 %v1314, %v2372
    %v2377 = vxor.u32 %v2375, 2147483648
    %v2378 = vxor.u32 %v2376, 2147483648
    %v2379 = vmul.f32 %v2377, 1.442695
    %v2380 = vpow.pop %v2379
    %v2381 = vmul.f32 %v2378, 1.442695
    %v2382 = vpow.pop %v2381
    %v2383 = vadd.f32 %v2380, 1.0
    %v2384 = vadd.f32 %v2382, 1.0
    %v2385 = vrcp.pop %v2383
    %v2386 = vmul.f32 %v2383, %v2385
    %v2387 = vsub.f32 1.0, %v2386
    %v2388 = vmul.f32 %v2385, %v2387
    %v2389 = vadd.f32 %v2385, %v2388
    %vm2390 = vweird.f32 %v2383
    %vm2391 = vweird.f32 %v2385
    %vm2392 = vmor %vm2390, %vm2391
    %v2393 = vsel %vm2392, %v2385, %v2389
    %v2394 = vand.u32 2147483647, %v2383
    %vm2395 = vcmp.eq.f32.partialorder %v2394, 8.507059e+37
    %v2396 = vand.u32 %v2383, 2147483648
    %v2397 = vor.u32 1.1754944e-38, %v2396
    %v2398 = vsel %vm2395, %v2397, %v2393
    %v2399 = vmul.f32 1.0, %v2398
    %v2400 = vrcp.pop %v2384
    %v2401 = vmul.f32 %v2384, %v2400
    %v2402 = vsub.f32 1.0, %v2401
    %v2403 = vmul.f32 %v2400, %v2402
    %v2404 = vadd.f32 %v2400, %v2403
    %vm2405 = vweird.f32 %v2384
    %vm2406 = vweird.f32 %v2400
    %vm2407 = vmor %vm2405, %vm2406
    %v2408 = vsel %vm2407, %v2400, %v2404
    %v2409 = vand.u32 2147483647, %v2384
    %vm2410 = vcmp.eq.f32.partialorder %v2409, 8.507059e+37
    %v2411 = vand.u32 %v2384, 2147483648
    %v2412 = vor.u32 1.1754944e-38, %v2411
    %v2413 = vsel %vm2410, %v2412, %v2408
    %v2414 = vmul.f32 1.0, %v2413
    %v2415 = vtanh.pop %v2375
    %v2416 = vtanh.pop %v2376
    %v2419 = vrot.slane %v2209, 1
    %v2420 = vrot.slane %v2210, 1
    %v2423 = vmul.f32 %v2399, %v2419
    %v2424 = vmul.f32 %v2414, %v2420
    %2427 = vrot.lane.b32.xlu0 %v2415, 64
    %v2428 = vpop.permute.xlu0 %2427
    %2429 = vrot.lane.b32.xlu0 %v2416, 64
    %v2430 = vpop.permute.xlu0 %2429
    %v2433 = vmul.f32 %v2399, %v2428
    %v2434 = vmul.f32 %v2414, %v2430
    %2437 = vrot.lane.b32.xlu0 %v2433, 32
    %v2438 = vpop.permute.xlu0 %2437
    %2439 = vrot.lane.b32.xlu0 %v2434, 32
    %v2440 = vpop.permute.xlu0 %2439
    %v2443 = vadd.f32 %v2423, %v2438
    %v2444 = vadd.f32 %v2424, %v2440
    %v2445 = vtanh.pop %v2443
    %v2446 = vtanh.pop %v2444
    %2449 = vrot.lane.b32.xlu0 %v2445, 64
    %v2450 = vpop.permute.xlu0 %2449
    %2451 = vrot.lane.b32.xlu0 %v2446, 64
    %v2452 = vpop.permute.xlu0 %2451
    %v2455 = vmul.f32 %v2399, %v2450
    %v2456 = vmul.f32 %v2414, %v2452
    %v2459 = vrot.slane %v2369, 7
    %vm2460 = vcmask 1045509
    %v2461 = vsel %vm2460, %v2459, %v2368
    %2462 = vrot.lane.b32.xlu0 %v2461, 32
    %v2463 = vpop.permute.xlu0 %2462
    %v2467 = vrot.slane %v2455, 7
    %v2468 = vrot.slane %v2456, 6
    %v2469 = vsel %vm2460, %v2468, %v2467
    %2470 = vrot.lane.b32.xlu0 %v2469, 64
    %v2471 = vpop.permute.xlu0 %2470
    %v2473 = vsel %vm224, %v2463, %v2471
    %v2475 = vrot.slane %v2473, 4
    %v2476 = vsel %vm425, %v2475, 0
    %2478 = vmatpush.msra.mxu0 0.0
    %2479 = vmatpush.msra.mxu0 0.0
    %2480 = vmatpush.msra.mxu0 0.0
    %2481 = vmatpush.msra.mxu0 0.0
    %2482 = vmatpush.msra.mxu0 0.0
    %2483 = vmatpush.msra.mxu0 0.0
    %2484 = vmatpush.msra.mxu0 0.0
    %2485 = vmatpush.msra.mxu0 0.0
    %2486 = vmatpush.msra.mxu0 %v1257
    %2487 = vmatpush.msra.mxu0 %v1255
    %2488 = vmatpush.msra.mxu0 %v1253
    %2489 = vmatpush.msra.mxu0 %v1251
    %2490 = vmatpush.msra.mxu0 %v1249
    %2491 = vmatpush.msra.mxu0 %v1247
    %2492 = vmatpush.msra.mxu0 %v1245
    %2493 = vmatpush.msra.mxu0 %v1243
    %2494 = vmatmul.f32.gmra.mxu0 %v2476
    %v2495 = vpop.f32.mrf.mxu0
    %v2496 = vadd.f32 0.0, %v2495
    %2497 = vdwg.mxu0
    %2498 = vmatpush.msra.mxu0 0.0
    %2499 = vmatpush.msra.mxu0 0.0
    %2500 = vmatpush.msra.mxu0 0.0
    %2501 = vmatpush.msra.mxu0 0.0
    %2502 = vmatpush.msra.mxu0 0.0
    %2503 = vmatpush.msra.mxu0 0.0
    %2504 = vmatpush.msra.mxu0 0.0
    %2505 = vmatpush.msra.mxu0 0.0
    %2506 = vmatpush.msra.mxu0 %v1258
    %2507 = vmatpush.msra.mxu0 %v1256
    %2508 = vmatpush.msra.mxu0 %v1254
    %2509 = vmatpush.msra.mxu0 %v1252
    %2510 = vmatpush.msra.mxu0 %v1250
    %2511 = vmatpush.msra.mxu0 %v1248
    %2512 = vmatpush.msra.mxu0 %v1246
    %2513 = vmatpush.msra.mxu0 %v1244
    %2514 = vmatmul.f32.gmra.mxu0 %v2476
    %v2515 = vpop.f32.mrf.mxu0
    %v2516 = vadd.f32 0.0, %v2515
    %2517 = vdwg.mxu0
    %v2519 = vrot.slane %v2496, 3
    %v2520 = vrot.slane %v2496, 4
    %v2523 = vadd.f32 %v1288, %v2519
    %v2524 = vadd.f32 %v1291, %v2520
    %v2525 = vxor.u32 %v2523, 2147483648
    %v2526 = vxor.u32 %v2524, 2147483648
    %v2527 = vmul.f32 %v2525, 1.442695
    %v2528 = vpow.pop %v2527
    %v2529 = vmul.f32 %v2526, 1.442695
    %v2530 = vpow.pop %v2529
    %v2531 = vadd.f32 %v2528, 1.0
    %v2532 = vadd.f32 %v2530, 1.0
    %v2533 = vrcp.pop %v2531
    %v2534 = vmul.f32 %v2531, %v2533
    %v2535 = vsub.f32 1.0, %v2534
    %v2536 = vmul.f32 %v2533, %v2535
    %v2537 = vadd.f32 %v2533, %v2536
    %vm2538 = vweird.f32 %v2531
    %vm2539 = vweird.f32 %v2533
    %vm2540 = vmor %vm2538, %vm2539
    %v2541 = vsel %vm2540, %v2533, %v2537
    %v2542 = vand.u32 2147483647, %v2531
    %vm2543 = vcmp.eq.f32.partialorder %v2542, 8.507059e+37
    %v2544 = vand.u32 %v2531, 2147483648
    %v2545 = vor.u32 1.1754944e-38, %v2544
    %v2546 = vsel %vm2543, %v2545, %v2541
    %v2547 = vmul.f32 1.0, %v2546
    %v2548 = vrcp.pop %v2532
    %v2549 = vmul.f32 %v2532, %v2548
    %v2550 = vsub.f32 1.0, %v2549
    %v2551 = vmul.f32 %v2548, %v2550
    %v2552 = vadd.f32 %v2548, %v2551
    %vm2553 = vweird.f32 %v2532
    %vm2554 = vweird.f32 %v2548
    %vm2555 = vmor %vm2553, %vm2554
    %v2556 = vsel %vm2555, %v2548, %v2552
    %v2557 = vand.u32 2147483647, %v2532
    %vm2558 = vcmp.eq.f32.partialorder %v2557, 8.507059e+37
    %v2559 = vand.u32 %v2532, 2147483648
    %v2560 = vor.u32 1.1754944e-38, %v2559
    %v2561 = vsel %vm2558, %v2560, %v2556
    %v2562 = vmul.f32 1.0, %v2561
    %v2563 = vtanh.pop %v2523
    %v2564 = vtanh.pop %v2524
    %v2567 = vrot.slane %v2356, 7
    %v2568 = vrot.slane %v2357, 7
    %v2571 = vmul.f32 %v2547, %v2567
    %v2572 = vmul.f32 %v2562, %v2568
    %2575 = vrot.lane.b32.xlu0 %v2563, 64
    %v2576 = vpop.permute.xlu0 %2575
    %2577 = vrot.lane.b32.xlu0 %v2564, 64
    %v2578 = vpop.permute.xlu0 %2577
    %v2581 = vmul.f32 %v2547, %v2576
    %v2582 = vmul.f32 %v2562, %v2578
    %2585 = vrot.lane.b32.xlu0 %v2581, 32
    %v2586 = vpop.permute.xlu0 %2585
    %2587 = vrot.lane.b32.xlu0 %v2582, 32
    %v2588 = vpop.permute.xlu0 %2587
    %v2591 = vadd.f32 %v2571, %v2586
    %v2592 = vadd.f32 %v2572, %v2588
    %v2593 = vtanh.pop %v2591
    %v2594 = vtanh.pop %v2592
    %2597 = vrot.lane.b32.xlu0 %v2593, 64
    %v2598 = vpop.permute.xlu0 %2597
    %2599 = vrot.lane.b32.xlu0 %v2594, 64
    %v2600 = vpop.permute.xlu0 %2599
    %v2603 = vmul.f32 %v2547, %v2598
    %v2604 = vmul.f32 %v2562, %v2600
    %v2606 = vrot.slane %v2516, 6
    %v2607 = vrot.slane %v2516, 7
    %v2610 = vadd.f32 %v1311, %v2606
    %v2611 = vadd.f32 %v1314, %v2607
    %v2612 = vxor.u32 %v2610, 2147483648
    %v2613 = vxor.u32 %v2611, 2147483648
    %v2614 = vmul.f32 %v2612, 1.442695
    %v2615 = vpow.pop %v2614
    %v2616 = vmul.f32 %v2613, 1.442695
    %v2617 = vpow.pop %v2616
    %v2618 = vadd.f32 %v2615, 1.0
    %v2619 = vadd.f32 %v2617, 1.0
    %v2620 = vrcp.pop %v2618
    %v2621 = vmul.f32 %v2618, %v2620
    %v2622 = vsub.f32 1.0, %v2621
    %v2623 = vmul.f32 %v2620, %v2622
    %v2624 = vadd.f32 %v2620, %v2623
    %vm2625 = vweird.f32 %v2618
    %vm2626 = vweird.f32 %v2620
    %vm2627 = vmor %vm2625, %vm2626
    %v2628 = vsel %vm2627, %v2620, %v2624
    %v2629 = vand.u32 2147483647, %v2618
    %vm2630 = vcmp.eq.f32.partialorder %v2629, 8.507059e+37
    %v2631 = vand.u32 %v2618, 2147483648
    %v2632 = vor.u32 1.1754944e-38, %v2631
    %v2633 = vsel %vm2630, %v2632, %v2628
    %v2634 = vmul.f32 1.0, %v2633
    %v2635 = vrcp.pop %v2619
    %v2636 = vmul.f32 %v2619, %v2635
    %v2637 = vsub.f32 1.0, %v2636
    %v2638 = vmul.f32 %v2635, %v2637
    %v2639 = vadd.f32 %v2635, %v2638
    %vm2640 = vweird.f32 %v2619
    %vm2641 = vweird.f32 %v2635
    %vm2642 = vmor %vm2640, %vm2641
    %v2643 = vsel %vm2642, %v2635, %v2639
    %v2644 = vand.u32 2147483647, %v2619
    %vm2645 = vcmp.eq.f32.partialorder %v2644, 8.507059e+37
    %v2646 = vand.u32 %v2619, 2147483648
    %v2647 = vor.u32 1.1754944e-38, %v2646
    %v2648 = vsel %vm2645, %v2647, %v2643
    %v2649 = vmul.f32 1.0, %v2648
    %v2650 = vtanh.pop %v2610
    %v2651 = vtanh.pop %v2611
    %v2654 = vrot.slane %v2443, 1
    %v2655 = vrot.slane %v2444, 1
    %v2658 = vmul.f32 %v2634, %v2654
    %v2659 = vmul.f32 %v2649, %v2655
    %2662 = vrot.lane.b32.xlu0 %v2650, 64
    %v2663 = vpop.permute.xlu0 %2662
    %2664 = vrot.lane.b32.xlu0 %v2651, 64
    %v2665 = vpop.permute.xlu0 %2664
    %v2668 = vmul.f32 %v2634, %v2663
    %v2669 = vmul.f32 %v2649, %v2665
    %2672 = vrot.lane.b32.xlu0 %v2668, 32
    %v2673 = vpop.permute.xlu0 %2672
    %2674 = vrot.lane.b32.xlu0 %v2669, 32
    %v2675 = vpop.permute.xlu0 %2674
    %v2678 = vadd.f32 %v2658, %v2673
    %v2679 = vadd.f32 %v2659, %v2675
    %v2680 = vtanh.pop %v2678
    %v2681 = vtanh.pop %v2679
    %2684 = vrot.lane.b32.xlu0 %v2680, 64
    %v2685 = vpop.permute.xlu0 %2684
    %2686 = vrot.lane.b32.xlu0 %v2681, 64
    %v2687 = vpop.permute.xlu0 %2686
    %v2690 = vmul.f32 %v2634, %v2685
    %v2691 = vmul.f32 %v2649, %v2687
    %v2694 = vrot.slane %v2604, 7
    %vm2695 = vcmask 1046534
    %v2696 = vsel %vm2695, %v2694, %v2603
    %2697 = vrot.lane.b32.xlu0 %v2696, 32
    %v2698 = vpop.permute.xlu0 %2697
    %v2702 = vrot.slane %v2690, 5
    %v2703 = vrot.slane %v2691, 4
    %v2704 = vsel %vm2695, %v2703, %v2702
    %2705 = vrot.lane.b32.xlu0 %v2704, 64
    %v2706 = vpop.permute.xlu0 %2705
    %v2708 = vsel %vm224, %v2698, %v2706
    %v2710 = vrot.slane %v2708, 5
    %v2711 = vsel %vm425, %v2710, 0
    %2713 = vmatpush.msra.mxu0 0.0
    %2714 = vmatpush.msra.mxu0 0.0
    %2715 = vmatpush.msra.mxu0 0.0
    %2716 = vmatpush.msra.mxu0 0.0
    %2717 = vmatpush.msra.mxu0 0.0
    %2718 = vmatpush.msra.mxu0 0.0
    %2719 = vmatpush.msra.mxu0 0.0
    %2720 = vmatpush.msra.mxu0 0.0
    %2721 = vmatpush.msra.mxu0 %v1257
    %2722 = vmatpush.msra.mxu0 %v1255
    %2723 = vmatpush.msra.mxu0 %v1253
    %2724 = vmatpush.msra.mxu0 %v1251
    %2725 = vmatpush.msra.mxu0 %v1249
    %2726 = vmatpush.msra.mxu0 %v1247
    %2727 = vmatpush.msra.mxu0 %v1245
    %2728 = vmatpush.msra.mxu0 %v1243
    %2729 = vmatmul.f32.gmra.mxu0 %v2711
    %v2730 = vpop.f32.mrf.mxu0
    %v2731 = vadd.f32 0.0, %v2730
    %2732 = vdwg.mxu0
    %2733 = vmatpush.msra.mxu0 0.0
    %2734 = vmatpush.msra.mxu0 0.0
    %2735 = vmatpush.msra.mxu0 0.0
    %2736 = vmatpush.msra.mxu0 0.0
    %2737 = vmatpush.msra.mxu0 0.0
    %2738 = vmatpush.msra.mxu0 0.0
    %2739 = vmatpush.msra.mxu0 0.0
    %2740 = vmatpush.msra.mxu0 0.0
    %2741 = vmatpush.msra.mxu0 %v1258
    %2742 = vmatpush.msra.mxu0 %v1256
    %2743 = vmatpush.msra.mxu0 %v1254
    %2744 = vmatpush.msra.mxu0 %v1252
    %2745 = vmatpush.msra.mxu0 %v1250
    %2746 = vmatpush.msra.mxu0 %v1248
    %2747 = vmatpush.msra.mxu0 %v1246
    %2748 = vmatpush.msra.mxu0 %v1244
    %2749 = vmatmul.f32.gmra.mxu0 %v2711
    %v2750 = vpop.f32.mrf.mxu0
    %v2751 = vadd.f32 0.0, %v2750
    %2752 = vdwg.mxu0
    %v2754 = vrot.slane %v2731, 2
    %v2755 = vrot.slane %v2731, 3
    %v2758 = vadd.f32 %v1288, %v2754
    %v2759 = vadd.f32 %v1291, %v2755
    %v2760 = vxor.u32 %v2758, 2147483648
    %v2761 = vxor.u32 %v2759, 2147483648
    %v2762 = vmul.f32 %v2760, 1.442695
    %v2763 = vpow.pop %v2762
    %v2764 = vmul.f32 %v2761, 1.442695
    %v2765 = vpow.pop %v2764
    %v2766 = vadd.f32 %v2763, 1.0
    %v2767 = vadd.f32 %v2765, 1.0
    %v2768 = vrcp.pop %v2766
    %v2769 = vmul.f32 %v2766, %v2768
    %v2770 = vsub.f32 1.0, %v2769
    %v2771 = vmul.f32 %v2768, %v2770
    %v2772 = vadd.f32 %v2768, %v2771
    %vm2773 = vweird.f32 %v2766
    %vm2774 = vweird.f32 %v2768
    %vm2775 = vmor %vm2773, %vm2774
    %v2776 = vsel %vm2775, %v2768, %v2772
    %v2777 = vand.u32 2147483647, %v2766
    %vm2778 = vcmp.eq.f32.partialorder %v2777, 8.507059e+37
    %v2779 = vand.u32 %v2766, 2147483648
    %v2780 = vor.u32 1.1754944e-38, %v2779
    %v2781 = vsel %vm2778, %v2780, %v2776
    %v2782 = vmul.f32 1.0, %v2781
    %v2783 = vrcp.pop %v2767
    %v2784 = vmul.f32 %v2767, %v2783
    %v2785 = vsub.f32 1.0, %v2784
    %v2786 = vmul.f32 %v2783, %v2785
    %v2787 = vadd.f32 %v2783, %v2786
    %vm2788 = vweird.f32 %v2767
    %vm2789 = vweird.f32 %v2783
    %vm2790 = vmor %vm2788, %vm2789
    %v2791 = vsel %vm2790, %v2783, %v2787
    %v2792 = vand.u32 2147483647, %v2767
    %vm2793 = vcmp.eq.f32.partialorder %v2792, 8.507059e+37
    %v2794 = vand.u32 %v2767, 2147483648
    %v2795 = vor.u32 1.1754944e-38, %v2794
    %v2796 = vsel %vm2793, %v2795, %v2791
    %v2797 = vmul.f32 1.0, %v2796
    %v2798 = vtanh.pop %v2758
    %v2799 = vtanh.pop %v2759
    %v2802 = vrot.slane %v2591, 7
    %v2803 = vrot.slane %v2592, 7
    %v2806 = vmul.f32 %v2782, %v2802
    %v2807 = vmul.f32 %v2797, %v2803
    %2810 = vrot.lane.b32.xlu0 %v2798, 64
    %v2811 = vpop.permute.xlu0 %2810
    %2812 = vrot.lane.b32.xlu0 %v2799, 64
    %v2813 = vpop.permute.xlu0 %2812
    %v2816 = vmul.f32 %v2782, %v2811
    %v2817 = vmul.f32 %v2797, %v2813
    %2820 = vrot.lane.b32.xlu0 %v2816, 32
    %v2821 = vpop.permute.xlu0 %2820
    %2822 = vrot.lane.b32.xlu0 %v2817, 32
    %v2823 = vpop.permute.xlu0 %2822
    %v2826 = vadd.f32 %v2806, %v2821
    %v2827 = vadd.f32 %v2807, %v2823
    %v2828 = vtanh.pop %v2826
    %v2829 = vtanh.pop %v2827
    %2832 = vrot.lane.b32.xlu0 %v2828, 64
    %v2833 = vpop.permute.xlu0 %2832
    %2834 = vrot.lane.b32.xlu0 %v2829, 64
    %v2835 = vpop.permute.xlu0 %2834
    %v2838 = vmul.f32 %v2782, %v2833
    %v2839 = vmul.f32 %v2797, %v2835
    %v2841 = vrot.slane %v2751, 7
    %v2844 = vadd.f32 %v1311, %v2841
    %v2845 = vadd.f32 %v1314, %v2751
    %v2846 = vxor.u32 %v2844, 2147483648
    %v2847 = vxor.u32 %v2845, 2147483648
    %v2848 = vmul.f32 %v2846, 1.442695
    %v2849 = vpow.pop %v2848
    %v2850 = vmul.f32 %v2847, 1.442695
    %v2851 = vpow.pop %v2850
    %v2852 = vadd.f32 %v2849, 1.0
    %v2853 = vadd.f32 %v2851, 1.0
    %v2854 = vrcp.pop %v2852
    %v2855 = vmul.f32 %v2852, %v2854
    %v2856 = vsub.f32 1.0, %v2855
    %v2857 = vmul.f32 %v2854, %v2856
    %v2858 = vadd.f32 %v2854, %v2857
    %vm2859 = vweird.f32 %v2852
    %vm2860 = vweird.f32 %v2854
    %vm2861 = vmor %vm2859, %vm2860
    %v2862 = vsel %vm2861, %v2854, %v2858
    %v2863 = vand.u32 2147483647, %v2852
    %vm2864 = vcmp.eq.f32.partialorder %v2863, 8.507059e+37
    %v2865 = vand.u32 %v2852, 2147483648
    %v2866 = vor.u32 1.1754944e-38, %v2865
    %v2867 = vsel %vm2864, %v2866, %v2862
    %v2868 = vmul.f32 1.0, %v2867
    %v2869 = vrcp.pop %v2853
    %v2870 = vmul.f32 %v2853, %v2869
    %v2871 = vsub.f32 1.0, %v2870
    %v2872 = vmul.f32 %v2869, %v2871
    %v2873 = vadd.f32 %v2869, %v2872
    %vm2874 = vweird.f32 %v2853
    %vm2875 = vweird.f32 %v2869
    %vm2876 = vmor %vm2874, %vm2875
    %v2877 = vsel %vm2876, %v2869, %v2873
    %v2878 = vand.u32 2147483647, %v2853
    %vm2879 = vcmp.eq.f32.partialorder %v2878, 8.507059e+37
    %v2880 = vand.u32 %v2853, 2147483648
    %v2881 = vor.u32 1.1754944e-38, %v2880
    %v2882 = vsel %vm2879, %v2881, %v2877
    %v2883 = vmul.f32 1.0, %v2882
    %v2884 = vtanh.pop %v2844
    %v2885 = vtanh.pop %v2845
    %v2888 = vrot.slane %v2678, 1
    %v2889 = vrot.slane %v2679, 1
    %v2892 = vmul.f32 %v2868, %v2888
    %v2893 = vmul.f32 %v2883, %v2889
    %2896 = vrot.lane.b32.xlu0 %v2884, 64
    %v2897 = vpop.permute.xlu0 %2896
    %2898 = vrot.lane.b32.xlu0 %v2885, 64
    %v2899 = vpop.permute.xlu0 %2898
    %v2902 = vmul.f32 %v2868, %v2897
    %v2903 = vmul.f32 %v2883, %v2899
    %2906 = vrot.lane.b32.xlu0 %v2902, 32
    %v2907 = vpop.permute.xlu0 %2906
    %2908 = vrot.lane.b32.xlu0 %v2903, 32
    %v2909 = vpop.permute.xlu0 %2908
    %v2912 = vadd.f32 %v2892, %v2907
    %v2913 = vadd.f32 %v2893, %v2909
    %v2914 = vtanh.pop %v2912
    %v2915 = vtanh.pop %v2913
    %2918 = vrot.lane.b32.xlu0 %v2914, 64
    %v2919 = vpop.permute.xlu0 %2918
    %2920 = vrot.lane.b32.xlu0 %v2915, 64
    %v2921 = vpop.permute.xlu0 %2920
    %v2924 = vmul.f32 %v2868, %v2919
    %v2925 = vmul.f32 %v2883, %v2921
    %v2928 = vrot.slane %v2839, 7
    %vm2929 = vcmask 1047559
    %v2930 = vsel %vm2929, %v2928, %v2838
    %2931 = vrot.lane.b32.xlu0 %v2930, 32
    %v2932 = vpop.permute.xlu0 %2931
    %v2936 = vrot.slane %v2924, 3
    %v2937 = vrot.slane %v2925, 2
    %v2938 = vsel %vm2929, %v2937, %v2936
    %2939 = vrot.lane.b32.xlu0 %v2938, 64
    %v2940 = vpop.permute.xlu0 %2939
    %v2942 = vsel %vm224, %v2932, %v2940
    %v2944 = vrot.slane %v2942, 6
    %v2945 = vsel %vm425, %v2944, 0
    %2947 = vmatpush.msra.mxu0 0.0
    %2948 = vmatpush.msra.mxu0 0.0
    %2949 = vmatpush.msra.mxu0 0.0
    %2950 = vmatpush.msra.mxu0 0.0
    %2951 = vmatpush.msra.mxu0 0.0
    %2952 = vmatpush.msra.mxu0 0.0
    %2953 = vmatpush.msra.mxu0 0.0
    %2954 = vmatpush.msra.mxu0 0.0
    %2955 = vmatpush.msra.mxu0 %v1257
    %2956 = vmatpush.msra.mxu0 %v1255
    %2957 = vmatpush.msra.mxu0 %v1253
    %2958 = vmatpush.msra.mxu0 %v1251
    %2959 = vmatpush.msra.mxu0 %v1249
    %2960 = vmatpush.msra.mxu0 %v1247
    %2961 = vmatpush.msra.mxu0 %v1245
    %2962 = vmatpush.msra.mxu0 %v1243
    %2963 = vmatmul.f32.gmra.mxu0 %v2945
    %v2964 = vpop.f32.mrf.mxu0
    %v2965 = vadd.f32 0.0, %v2964
    %2966 = vdwg.mxu0
    %2967 = vmatpush.msra.mxu0 0.0
    %2968 = vmatpush.msra.mxu0 0.0
    %2969 = vmatpush.msra.mxu0 0.0
    %2970 = vmatpush.msra.mxu0 0.0
    %2971 = vmatpush.msra.mxu0 0.0
    %2972 = vmatpush.msra.mxu0 0.0
    %2973 = vmatpush.msra.mxu0 0.0
    %2974 = vmatpush.msra.mxu0 0.0
    %2975 = vmatpush.msra.mxu0 %v1258
    %2976 = vmatpush.msra.mxu0 %v1256
    %2977 = vmatpush.msra.mxu0 %v1254
    %2978 = vmatpush.msra.mxu0 %v1252
    %2979 = vmatpush.msra.mxu0 %v1250
    %2980 = vmatpush.msra.mxu0 %v1248
    %2981 = vmatpush.msra.mxu0 %v1246
    %2982 = vmatpush.msra.mxu0 %v1244
    %2983 = vmatmul.f32.gmra.mxu0 %v2945
    %v2984 = vpop.f32.mrf.mxu0
    %v2985 = vadd.f32 0.0, %v2984
    %2986 = vdwg.mxu0
    %v2988 = vrot.slane %v2965, 1
    %v2989 = vrot.slane %v2965, 2
    %v2992 = vadd.f32 %v1288, %v2988
    %v2993 = vadd.f32 %v1291, %v2989
    %v2994 = vxor.u32 %v2992, 2147483648
    %v2995 = vxor.u32 %v2993, 2147483648
    %v2996 = vmul.f32 %v2994, 1.442695
    %v2997 = vpow.pop %v2996
    %v2998 = vmul.f32 %v2995, 1.442695
    %v2999 = vpow.pop %v2998
    %v3000 = vadd.f32 %v2997, 1.0
    %v3001 = vadd.f32 %v2999, 1.0
    %v3002 = vrcp.pop %v3000
    %v3003 = vmul.f32 %v3000, %v3002
    %v3004 = vsub.f32 1.0, %v3003
    %v3005 = vmul.f32 %v3002, %v3004
    %v3006 = vadd.f32 %v3002, %v3005
    %vm3007 = vweird.f32 %v3000
    %vm3008 = vweird.f32 %v3002
    %vm3009 = vmor %vm3007, %vm3008
    %v3010 = vsel %vm3009, %v3002, %v3006
    %v3011 = vand.u32 2147483647, %v3000
    %vm3012 = vcmp.eq.f32.partialorder %v3011, 8.507059e+37
    %v3013 = vand.u32 %v3000, 2147483648
    %v3014 = vor.u32 1.1754944e-38, %v3013
    %v3015 = vsel %vm3012, %v3014, %v3010
    %v3016 = vmul.f32 1.0, %v3015
    %v3017 = vrcp.pop %v3001
    %v3018 = vmul.f32 %v3001, %v3017
    %v3019 = vsub.f32 1.0, %v3018
    %v3020 = vmul.f32 %v3017, %v3019
    %v3021 = vadd.f32 %v3017, %v3020
    %vm3022 = vweird.f32 %v3001
    %vm3023 = vweird.f32 %v3017
    %vm3024 = vmor %vm3022, %vm3023
    %v3025 = vsel %vm3024, %v3017, %v3021
    %v3026 = vand.u32 2147483647, %v3001
    %vm3027 = vcmp.eq.f32.partialorder %v3026, 8.507059e+37
    %v3028 = vand.u32 %v3001, 2147483648
    %v3029 = vor.u32 1.1754944e-38, %v3028
    %v3030 = vsel %vm3027, %v3029, %v3025
    %v3031 = vmul.f32 1.0, %v3030
    %v3032 = vtanh.pop %v2992
    %v3033 = vtanh.pop %v2993
    %v3036 = vrot.slane %v2826, 7
    %v3037 = vrot.slane %v2827, 7
    %v3040 = vmul.f32 %v3016, %v3036
    %v3041 = vmul.f32 %v3031, %v3037
    %3044 = vrot.lane.b32.xlu0 %v3032, 64
    %v3045 = vpop.permute.xlu0 %3044
    %3046 = vrot.lane.b32.xlu0 %v3033, 64
    %v3047 = vpop.permute.xlu0 %3046
    %v3050 = vmul.f32 %v3016, %v3045
    %v3051 = vmul.f32 %v3031, %v3047
    %3054 = vrot.lane.b32.xlu0 %v3050, 32
    %v3055 = vpop.permute.xlu0 %3054
    %3056 = vrot.lane.b32.xlu0 %v3051, 32
    %v3057 = vpop.permute.xlu0 %3056
    %v3060 = vadd.f32 %v3040, %v3055
    %v3061 = vadd.f32 %v3041, %v3057
    %v3062 = vtanh.pop %v3060
    %v3063 = vtanh.pop %v3061
    %3066 = vrot.lane.b32.xlu0 %v3062, 64
    %v3067 = vpop.permute.xlu0 %3066
    %3068 = vrot.lane.b32.xlu0 %v3063, 64
    %v3069 = vpop.permute.xlu0 %3068
    %v3072 = vmul.f32 %v3016, %v3067
    %v3073 = vmul.f32 %v3031, %v3069
    %v3075 = vrot.slane %v2985, 1
    %v3078 = vadd.f32 %v1311, %v2985
    %v3079 = vadd.f32 %v1314, %v3075
    %v3080 = vxor.u32 %v3078, 2147483648
    %v3081 = vxor.u32 %v3079, 2147483648
    %v3082 = vmul.f32 %v3080, 1.442695
    %v3083 = vpow.pop %v3082
    %v3084 = vmul.f32 %v3081, 1.442695
    %v3085 = vpow.pop %v3084
    %v3086 = vadd.f32 %v3083, 1.0
    %v3087 = vadd.f32 %v3085, 1.0
    %v3088 = vrcp.pop %v3086
    %v3089 = vmul.f32 %v3086, %v3088
    %v3090 = vsub.f32 1.0, %v3089
    %v3091 = vmul.f32 %v3088, %v3090
    %v3092 = vadd.f32 %v3088, %v3091
    %vm3093 = vweird.f32 %v3086
    %vm3094 = vweird.f32 %v3088
    %vm3095 = vmor %vm3093, %vm3094
    %v3096 = vsel %vm3095, %v3088, %v3092
    %v3097 = vand.u32 2147483647, %v3086
    %vm3098 = vcmp.eq.f32.partialorder %v3097, 8.507059e+37
    %v3099 = vand.u32 %v3086, 2147483648
    %v3100 = vor.u32 1.1754944e-38, %v3099
    %v3101 = vsel %vm3098, %v3100, %v3096
    %v3102 = vmul.f32 1.0, %v3101
    %v3103 = vrcp.pop %v3087
    %v3104 = vmul.f32 %v3087, %v3103
    %v3105 = vsub.f32 1.0, %v3104
    %v3106 = vmul.f32 %v3103, %v3105
    %v3107 = vadd.f32 %v3103, %v3106
    %vm3108 = vweird.f32 %v3087
    %vm3109 = vweird.f32 %v3103
    %vm3110 = vmor %vm3108, %vm3109
    %v3111 = vsel %vm3110, %v3103, %v3107
    %v3112 = vand.u32 2147483647, %v3087
    %vm3113 = vcmp.eq.f32.partialorder %v3112, 8.507059e+37
    %v3114 = vand.u32 %v3087, 2147483648
    %v3115 = vor.u32 1.1754944e-38, %v3114
    %v3116 = vsel %vm3113, %v3115, %v3111
    %v3117 = vmul.f32 1.0, %v3116
    %v3118 = vtanh.pop %v3078
    %v3119 = vtanh.pop %v3079
    %v3122 = vrot.slane %v2912, 1
    %v3123 = vrot.slane %v2913, 1
    %v3126 = vmul.f32 %v3102, %v3122
    %v3127 = vmul.f32 %v3117, %v3123
    %3130 = vrot.lane.b32.xlu0 %v3118, 64
    %v3131 = vpop.permute.xlu0 %3130
    %3132 = vrot.lane.b32.xlu0 %v3119, 64
    %v3133 = vpop.permute.xlu0 %3132
    %v3136 = vmul.f32 %v3102, %v3131
    %v3137 = vmul.f32 %v3117, %v3133
    %3140 = vrot.lane.b32.xlu0 %v3136, 32
    %v3141 = vpop.permute.xlu0 %3140
    %3142 = vrot.lane.b32.xlu0 %v3137, 32
    %v3143 = vpop.permute.xlu0 %3142
    %v3146 = vadd.f32 %v3126, %v3141
    %v3147 = vadd.f32 %v3127, %v3143
    %v3148 = vtanh.pop %v3146
    %v3149 = vtanh.pop %v3147
    %3152 = vrot.lane.b32.xlu0 %v3148, 64
    %v3153 = vpop.permute.xlu0 %3152
    %3154 = vrot.lane.b32.xlu0 %v3149, 64
    %v3155 = vpop.permute.xlu0 %3154
    %v3158 = vmul.f32 %v3102, %v3153
    %v3159 = vmul.f32 %v3117, %v3155
    %v3160 = vsel %vm197, %v1437, %v1664
    %v3161 = vsel %vm197, %v1438, %v1665
    %vm3162 = vcmask 1041408
    %v3163 = vsel %vm3162, %v3160, %v1899
    %v3164 = vsel %vm3162, %v3161, %v1900
    %vm3165 = vcmask 1042432
    %v3166 = vsel %vm3165, %v3163, %v2134
    %v3167 = vsel %vm3165, %v3164, %v2135
    %v3168 = vsel %vm154, %v3166, %v2368
    %v3169 = vsel %vm154, %v3167, %v2369
    %vm3170 = vcmask 1044480
    %v3171 = vsel %vm3170, %v3168, %v2603
    %v3172 = vsel %vm3170, %v3169, %v2604
    %vm3173 = vcmask 1045504
    %v3174 = vsel %vm3173, %v3171, %v2838
    %v3175 = vsel %vm3173, %v3172, %v2839
    %v3176 = vsel %vm212, %v3174, %v3072
    %v3177 = vsel %vm212, %v3175, %v3073
    %v3178 = vsel %vm197, %v3158, %v2924
    %v3179 = vsel %vm197, %v3159, %v2925
    %v3180 = vsel %vm3162, %v3178, %v2690
    %v3181 = vsel %vm3162, %v3179, %v2691
    %v3182 = vsel %vm3165, %v3180, %v2455
    %v3183 = vsel %vm3165, %v3181, %v2456
    %v3184 = vsel %vm154, %v3182, %v2221
    %v3185 = vsel %vm154, %v3183, %v2222
    %v3186 = vsel %vm3170, %v3184, %v1986
    %v3187 = vsel %vm3170, %v3185, %v1987
    %v3188 = vsel %vm3173, %v3186, %v1751
    %v3189 = vsel %vm3173, %v3187, %v1752
    %v3190 = vsel %vm212, %v3188, %v1518
    %v3191 = vsel %vm212, %v3189, %v1519
    %3194 = vrot.lane.b32.xlu0 %v3176, 32
    %v3195 = vpop.permute.xlu0 %3194
    %3196 = vrot.lane.b32.xlu0 %v3177, 32
    %v3197 = vpop.permute.xlu0 %3196
    %3202 = vrot.lane.b32.xlu0 %v3190, 64
    %v3203 = vpop.permute.xlu0 %3202
    %3204 = vrot.lane.b32.xlu0 %v3191, 64
    %v3205 = vpop.permute.xlu0 %3204
    %v3208 = vsel %vm224, %v3195, %v3203
    %v3209 = vsel %vm224, %v3197, %v3205
    %v3210 = vld [vmem:[%s12] sm:$0xff]
    %v3211 = vld [vmem:[%s12 + $0x8] sm:$0xff]
    %v3212 = vld [vmem:[%s12 + $0x10] sm:$0xff]
    %v3213 = vld [vmem:[%s12 + $0x18] sm:$0xff]
    %v3214 = vld [vmem:[%s12 + $0x20] sm:$0xff]
    %v3215 = vld [vmem:[%s12 + $0x28] sm:$0xff]
    %v3216 = vld [vmem:[%s12 + $0x30] sm:$0xff]
    %v3217 = vld [vmem:[%s12 + $0x38] sm:$0xff]
    %v3218 = vld [vmem:[%s12 + $0x40] sm:$0xff]
    %v3219 = vld [vmem:[%s12 + $0x48] sm:$0xff]
    %v3220 = vld [vmem:[%s12 + $0x50] sm:$0xff]
    %v3221 = vld [vmem:[%s12 + $0x58] sm:$0xff]
    %v3222 = vld [vmem:[%s12 + $0x60] sm:$0xff]
    %v3223 = vld [vmem:[%s12 + $0x68] sm:$0xff]
    %v3224 = vld [vmem:[%s12 + $0x70] sm:$0xff]
    %v3225 = vld [vmem:[%s12 + $0x78] sm:$0xff]
    %v3226 = vld [vmem:[%s13] sm:$0x3]
    %v3227 = vld [vmem:[%s14] sm:$0xff]
    %v3228 = vld [vmem:[%s14 + $0x8] sm:$0xff]
    %v3229 = vld [vmem:[%s14 + $0x10] sm:$0xff]
    %v3230 = vld [vmem:[%s14 + $0x18] sm:$0xff]
    %v3231 = vld [vmem:[%s14 + $0x20] sm:$0xff]
    %v3232 = vld [vmem:[%s14 + $0x28] sm:$0xff]
    %v3233 = vld [vmem:[%s14 + $0x30] sm:$0xff]
    %v3234 = vld [vmem:[%s14 + $0x38] sm:$0xff]
    %v3235 = vld [vmem:[%s14 + $0x40] sm:$0xff]
    %v3236 = vld [vmem:[%s14 + $0x48] sm:$0xff]
    %v3237 = vld [vmem:[%s14 + $0x50] sm:$0xff]
    %v3238 = vld [vmem:[%s14 + $0x58] sm:$0xff]
    %v3239 = vld [vmem:[%s14 + $0x60] sm:$0xff]
    %v3240 = vld [vmem:[%s14 + $0x68] sm:$0xff]
    %v3241 = vld [vmem:[%s14 + $0x70] sm:$0xff]
    %v3242 = vld [vmem:[%s14 + $0x78] sm:$0xff]
    %v3244 = vperm.slane %v3226, 0
    %v3245 = vperm.slane %v3226, 1
    %v3249 = vsel %vm425, %v3208, 0
    %v3252 = vsel %vm425, %v3209, 0
    %3254 = vmatpush.msra.mxu0 0.0
    %3255 = vmatpush.msra.mxu0 0.0
    %3256 = vmatpush.msra.mxu0 0.0
    %3257 = vmatpush.msra.mxu0 0.0
    %3258 = vmatpush.msra.mxu0 0.0
    %3259 = vmatpush.msra.mxu0 0.0
    %3260 = vmatpush.msra.mxu0 0.0
    %3261 = vmatpush.msra.mxu0 0.0
    %3262 = vmatpush.msra.mxu0 %v3224
    %3263 = vmatpush.msra.mxu0 %v3222
    %3264 = vmatpush.msra.mxu0 %v3220
    %3265 = vmatpush.msra.mxu0 %v3218
    %3266 = vmatpush.msra.mxu0 %v3216
    %3267 = vmatpush.msra.mxu0 %v3214
    %3268 = vmatpush.msra.mxu0 %v3212
    %3269 = vmatpush.msra.mxu0 %v3210
    %3270 = vmatmul.f32.gmra.mxu0 %v3249
    %v3271 = vpop.f32.mrf.mxu0
    %v3272 = vadd.f32 %v3244, %v3271
    %3273 = vmatmul.f32.gmra.mxu0 %v3252
    %v3274 = vpop.f32.mrf.mxu0
    %v3275 = vadd.f32 %v3244, %v3274
    %3276 = vdwg.mxu0
    %3277 = vmatpush.msra.mxu0 0.0
    %3278 = vmatpush.msra.mxu0 0.0
    %3279 = vmatpush.msra.mxu0 0.0
    %3280 = vmatpush.msra.mxu0 0.0
    %3281 = vmatpush.msra.mxu0 0.0
    %3282 = vmatpush.msra.mxu0 0.0
    %3283 = vmatpush.msra.mxu0 0.0
    %3284 = vmatpush.msra.mxu0 0.0
    %3285 = vmatpush.msra.mxu0 %v3225
    %3286 = vmatpush.msra.mxu0 %v3223
    %3287 = vmatpush.msra.mxu0 %v3221
    %3288 = vmatpush.msra.mxu0 %v3219
    %3289 = vmatpush.msra.mxu0 %v3217
    %3290 = vmatpush.msra.mxu0 %v3215
    %3291 = vmatpush.msra.mxu0 %v3213
    %3292 = vmatpush.msra.mxu0 %v3211
    %3293 = vmatmul.f32.gmra.mxu0 %v3249
    %v3294 = vpop.f32.mrf.mxu0
    %v3295 = vadd.f32 %v3245, %v3294
    %3296 = vmatmul.f32.gmra.mxu0 %v3252
    %v3297 = vpop.f32.mrf.mxu0
    %v3298 = vadd.f32 %v3245, %v3297
    %3299 = vdwg.mxu0
    %3300 = vmatpush.msra.mxu0 0.0
    %3301 = vmatpush.msra.mxu0 0.0
    %3302 = vmatpush.msra.mxu0 0.0
    %3303 = vmatpush.msra.mxu0 0.0
    %3304 = vmatpush.msra.mxu0 0.0
    %3305 = vmatpush.msra.mxu0 0.0
    %3306 = vmatpush.msra.mxu0 0.0
    %3307 = vmatpush.msra.mxu0 0.0
    %3308 = vmatpush.msra.mxu0 %v3241
    %3309 = vmatpush.msra.mxu0 %v3239
    %3310 = vmatpush.msra.mxu0 %v3237
    %3311 = vmatpush.msra.mxu0 %v3235
    %3312 = vmatpush.msra.mxu0 %v3233
    %3313 = vmatpush.msra.mxu0 %v3231
    %3314 = vmatpush.msra.mxu0 %v3229
    %3315 = vmatpush.msra.mxu0 %v3227
    %3316 = vmatmul.f32.gmra.mxu0 %v1317
    %v3317 = vpop.f32.mrf.mxu0
    %v3318 = vadd.f32 0.0, %v3317
    %3319 = vdwg.mxu0
    %3320 = vmatpush.msra.mxu0 0.0
    %3321 = vmatpush.msra.mxu0 0.0
    %3322 = vmatpush.msra.mxu0 0.0
    %3323 = vmatpush.msra.mxu0 0.0
    %3324 = vmatpush.msra.mxu0 0.0
    %3325 = vmatpush.msra.mxu0 0.0
    %3326 = vmatpush.msra.mxu0 0.0
    %3327 = vmatpush.msra.mxu0 0.0
    %3328 = vmatpush.msra.mxu0 %v3242
    %3329 = vmatpush.msra.mxu0 %v3240
    %3330 = vmatpush.msra.mxu0 %v3238
    %3331 = vmatpush.msra.mxu0 %v3236
    %3332 = vmatpush.msra.mxu0 %v3234
    %3333 = vmatpush.msra.mxu0 %v3232
    %3334 = vmatpush.msra.mxu0 %v3230
    %3335 = vmatpush.msra.mxu0 %v3228
    %3336 = vmatmul.f32.gmra.mxu0 %v1317
    %v3337 = vpop.f32.mrf.mxu0
    %v3338 = vadd.f32 0.0, %v3337
    %3339 = vdwg.mxu0
    %v3341 = vrot.slane %v3318, 1
    %v3344 = vadd.f32 %v3272, %v3318
    %v3345 = vadd.f32 %v3275, %v3341
    %v3346 = vxor.u32 %v3344, 2147483648
    %v3347 = vxor.u32 %v3345, 2147483648
    %v3348 = vmul.f32 %v3346, 1.442695
    %v3349 = vpow.pop %v3348
    %v3350 = vmul.f32 %v3347, 1.442695
    %v3351 = vpow.pop %v3350
    %v3352 = vadd.f32 %v3349, 1.0
    %v3353 = vadd.f32 %v3351, 1.0
    %v3354 = vrcp.pop %v3352
    %v3355 = vmul.f32 %v3352, %v3354
    %v3356 = vsub.f32 1.0, %v3355
    %v3357 = vmul.f32 %v3354, %v3356
    %v3358 = vadd.f32 %v3354, %v3357
    %vm3359 = vweird.f32 %v3352
    %vm3360 = vweird.f32 %v3354
    %vm3361 = vmor %vm3359, %vm3360
    %v3362 = vsel %vm3361, %v3354, %v3358
    %v3363 = vand.u32 2147483647, %v3352
    %vm3364 = vcmp.eq.f32.partialorder %v3363, 8.507059e+37
    %v3365 = vand.u32 %v3352, 2147483648
    %v3366 = vor.u32 1.1754944e-38, %v3365
    %v3367 = vsel %vm3364, %v3366, %v3362
    %v3368 = vmul.f32 1.0, %v3367
    %v3369 = vrcp.pop %v3353
    %v3370 = vmul.f32 %v3353, %v3369
    %v3371 = vsub.f32 1.0, %v3370
    %v3372 = vmul.f32 %v3369, %v3371
    %v3373 = vadd.f32 %v3369, %v3372
    %vm3374 = vweird.f32 %v3353
    %vm3375 = vweird.f32 %v3369
    %vm3376 = vmor %vm3374, %vm3375
    %v3377 = vsel %vm3376, %v3369, %v3373
    %v3378 = vand.u32 2147483647, %v3353
    %vm3379 = vcmp.eq.f32.partialorder %v3378, 8.507059e+37
    %v3380 = vand.u32 %v3353, 2147483648
    %v3381 = vor.u32 1.1754944e-38, %v3380
    %v3382 = vsel %vm3379, %v3381, %v3377
    %v3383 = vmul.f32 1.0, %v3382
    %v3384 = vtanh.pop %v3344
    %v3385 = vtanh.pop %v3345
    %v3386 = vmul.f32 %v3368, 0.0
    %v3387 = vmul.f32 %v3383, 0.0
    %3390 = vrot.lane.b32.xlu0 %v3384, 64
    %v3391 = vpop.permute.xlu0 %3390
    %3392 = vrot.lane.b32.xlu0 %v3385, 64
    %v3393 = vpop.permute.xlu0 %3392
    %v3396 = vmul.f32 %v3368, %v3391
    %v3397 = vmul.f32 %v3383, %v3393
    %3400 = vrot.lane.b32.xlu0 %v3396, 32
    %v3401 = vpop.permute.xlu0 %3400
    %3402 = vrot.lane.b32.xlu0 %v3397, 32
    %v3403 = vpop.permute.xlu0 %3402
    %v3406 = vadd.f32 %v3386, %v3401
    %v3407 = vadd.f32 %v3387, %v3403
    %v3408 = vtanh.pop %v3406
    %v3409 = vtanh.pop %v3407
    %3412 = vrot.lane.b32.xlu0 %v3408, 64
    %v3413 = vpop.permute.xlu0 %3412
    %3414 = vrot.lane.b32.xlu0 %v3409, 64
    %v3415 = vpop.permute.xlu0 %3414
    %v3418 = vmul.f32 %v3368, %v3413
    %v3419 = vmul.f32 %v3383, %v3415
    %v3421 = vrot.slane %v3338, 1
    %v3422 = vrot.slane %v3338, 2
    %v3425 = vadd.f32 %v3295, %v3421
    %v3426 = vadd.f32 %v3298, %v3422
    %v3427 = vxor.u32 %v3425, 2147483648
    %v3428 = vxor.u32 %v3426, 2147483648
    %v3429 = vmul.f32 %v3427, 1.442695
    %v3430 = vpow.pop %v3429
    %v3431 = vmul.f32 %v3428, 1.442695
    %v3432 = vpow.pop %v3431
    %v3433 = vadd.f32 %v3430, 1.0
    %v3434 = vadd.f32 %v3432, 1.0
    %v3435 = vrcp.pop %v3433
    %v3436 = vmul.f32 %v3433, %v3435
    %v3437 = vsub.f32 1.0, %v3436
    %v3438 = vmul.f32 %v3435, %v3437
    %v3439 = vadd.f32 %v3435, %v3438
    %vm3440 = vweird.f32 %v3433
    %vm3441 = vweird.f32 %v3435
    %vm3442 = vmor %vm3440, %vm3441
    %v3443 = vsel %vm3442, %v3435, %v3439
    %v3444 = vand.u32 2147483647, %v3433
    %vm3445 = vcmp.eq.f32.partialorder %v3444, 8.507059e+37
    %v3446 = vand.u32 %v3433, 2147483648
    %v3447 = vor.u32 1.1754944e-38, %v3446
    %v3448 = vsel %vm3445, %v3447, %v3443
    %v3449 = vmul.f32 1.0, %v3448
    %v3450 = vrcp.pop %v3434
    %v3451 = vmul.f32 %v3434, %v3450
    %v3452 = vsub.f32 1.0, %v3451
    %v3453 = vmul.f32 %v3450, %v3452
    %v3454 = vadd.f32 %v3450, %v3453
    %vm3455 = vweird.f32 %v3434
    %vm3456 = vweird.f32 %v3450
    %vm3457 = vmor %vm3455, %vm3456
    %v3458 = vsel %vm3457, %v3450, %v3454
    %v3459 = vand.u32 2147483647, %v3434
    %vm3460 = vcmp.eq.f32.partialorder %v3459, 8.507059e+37
    %v3461 = vand.u32 %v3434, 2147483648
    %v3462 = vor.u32 1.1754944e-38, %v3461
    %v3463 = vsel %vm3460, %v3462, %v3458
    %v3464 = vmul.f32 1.0, %v3463
    %v3465 = vtanh.pop %v3425
    %v3466 = vtanh.pop %v3426
    %v3467 = vmul.f32 %v3449, 0.0
    %v3468 = vmul.f32 %v3464, 0.0
    %3471 = vrot.lane.b32.xlu0 %v3465, 64
    %v3472 = vpop.permute.xlu0 %3471
    %3473 = vrot.lane.b32.xlu0 %v3466, 64
    %v3474 = vpop.permute.xlu0 %3473
    %v3477 = vmul.f32 %v3449, %v3472
    %v3478 = vmul.f32 %v3464, %v3474
    %3481 = vrot.lane.b32.xlu0 %v3477, 32
    %v3482 = vpop.permute.xlu0 %3481
    %3483 = vrot.lane.b32.xlu0 %v3478, 32
    %v3484 = vpop.permute.xlu0 %3483
    %v3487 = vadd.f32 %v3467, %v3482
    %v3488 = vadd.f32 %v3468, %v3484
    %v3489 = vtanh.pop %v3487
    %v3490 = vtanh.pop %v3488
    %3493 = vrot.lane.b32.xlu0 %v3489, 64
    %v3494 = vpop.permute.xlu0 %3493
    %3495 = vrot.lane.b32.xlu0 %v3490, 64
    %v3496 = vpop.permute.xlu0 %3495
    %v3499 = vmul.f32 %v3449, %v3494
    %v3500 = vmul.f32 %v3464, %v3496
    %v3503 = vrot.slane %v3419, 7
    %v3504 = vsel %vm1523, %v3503, %v3418
    %3505 = vrot.lane.b32.xlu0 %v3504, 32
    %v3506 = vpop.permute.xlu0 %3505
    %v3510 = vrot.slane %v3499, 7
    %v3511 = vrot.slane %v3500, 6
    %v3512 = vsel %vm1523, %v3511, %v3510
    %3513 = vrot.lane.b32.xlu0 %v3512, 64
    %v3514 = vpop.permute.xlu0 %3513
    %v3516 = vsel %vm224, %v3506, %v3514
    %v3518 = vsel %vm425, %v3516, 0
    %3520 = vmatpush.msra.mxu0 0.0
    %3521 = vmatpush.msra.mxu0 0.0
    %3522 = vmatpush.msra.mxu0 0.0
    %3523 = vmatpush.msra.mxu0 0.0
    %3524 = vmatpush.msra.mxu0 0.0
    %3525 = vmatpush.msra.mxu0 0.0
    %3526 = vmatpush.msra.mxu0 0.0
    %3527 = vmatpush.msra.mxu0 0.0
    %3528 = vmatpush.msra.mxu0 %v3241
    %3529 = vmatpush.msra.mxu0 %v3239
    %3530 = vmatpush.msra.mxu0 %v3237
    %3531 = vmatpush.msra.mxu0 %v3235
    %3532 = vmatpush.msra.mxu0 %v3233
    %3533 = vmatpush.msra.mxu0 %v3231
    %3534 = vmatpush.msra.mxu0 %v3229
    %3535 = vmatpush.msra.mxu0 %v3227
    %3536 = vmatmul.f32.gmra.mxu0 %v3518
    %v3537 = vpop.f32.mrf.mxu0
    %v3538 = vadd.f32 0.0, %v3537
    %3539 = vdwg.mxu0
    %3540 = vmatpush.msra.mxu0 0.0
    %3541 = vmatpush.msra.mxu0 0.0
    %3542 = vmatpush.msra.mxu0 0.0
    %3543 = vmatpush.msra.mxu0 0.0
    %3544 = vmatpush.msra.mxu0 0.0
    %3545 = vmatpush.msra.mxu0 0.0
    %3546 = vmatpush.msra.mxu0 0.0
    %3547 = vmatpush.msra.mxu0 0.0
    %3548 = vmatpush.msra.mxu0 %v3242
    %3549 = vmatpush.msra.mxu0 %v3240
    %3550 = vmatpush.msra.mxu0 %v3238
    %3551 = vmatpush.msra.mxu0 %v3236
    %3552 = vmatpush.msra.mxu0 %v3234
    %3553 = vmatpush.msra.mxu0 %v3232
    %3554 = vmatpush.msra.mxu0 %v3230
    %3555 = vmatpush.msra.mxu0 %v3228
    %3556 = vmatmul.f32.gmra.mxu0 %v3518
    %v3557 = vpop.f32.mrf.mxu0
    %v3558 = vadd.f32 0.0, %v3557
    %3559 = vdwg.mxu0
    %v3561 = vrot.slane %v3538, 7
    %v3564 = vadd.f32 %v3272, %v3561
    %v3565 = vadd.f32 %v3275, %v3538
    %v3566 = vxor.u32 %v3564, 2147483648
    %v3567 = vxor.u32 %v3565, 2147483648
    %v3568 = vmul.f32 %v3566, 1.442695
    %v3569 = vpow.pop %v3568
    %v3570 = vmul.f32 %v3567, 1.442695
    %v3571 = vpow.pop %v3570
    %v3572 = vadd.f32 %v3569, 1.0
    %v3573 = vadd.f32 %v3571, 1.0
    %v3574 = vrcp.pop %v3572
    %v3575 = vmul.f32 %v3572, %v3574
    %v3576 = vsub.f32 1.0, %v3575
    %v3577 = vmul.f32 %v3574, %v3576
    %v3578 = vadd.f32 %v3574, %v3577
    %vm3579 = vweird.f32 %v3572
    %vm3580 = vweird.f32 %v3574
    %vm3581 = vmor %vm3579, %vm3580
    %v3582 = vsel %vm3581, %v3574, %v3578
    %v3583 = vand.u32 2147483647, %v3572
    %vm3584 = vcmp.eq.f32.partialorder %v3583, 8.507059e+37
    %v3585 = vand.u32 %v3572, 2147483648
    %v3586 = vor.u32 1.1754944e-38, %v3585
    %v3587 = vsel %vm3584, %v3586, %v3582
    %v3588 = vmul.f32 1.0, %v3587
    %v3589 = vrcp.pop %v3573
    %v3590 = vmul.f32 %v3573, %v3589
    %v3591 = vsub.f32 1.0, %v3590
    %v3592 = vmul.f32 %v3589, %v3591
    %v3593 = vadd.f32 %v3589, %v3592
    %vm3594 = vweird.f32 %v3573
    %vm3595 = vweird.f32 %v3589
    %vm3596 = vmor %vm3594, %vm3595
    %v3597 = vsel %vm3596, %v3589, %v3593
    %v3598 = vand.u32 2147483647, %v3573
    %vm3599 = vcmp.eq.f32.partialorder %v3598, 8.507059e+37
    %v3600 = vand.u32 %v3573, 2147483648
    %v3601 = vor.u32 1.1754944e-38, %v3600
    %v3602 = vsel %vm3599, %v3601, %v3597
    %v3603 = vmul.f32 1.0, %v3602
    %v3604 = vtanh.pop %v3564
    %v3605 = vtanh.pop %v3565
    %v3608 = vrot.slane %v3406, 7
    %v3609 = vrot.slane %v3407, 7
    %v3612 = vmul.f32 %v3588, %v3608
    %v3613 = vmul.f32 %v3603, %v3609
    %3616 = vrot.lane.b32.xlu0 %v3604, 64
    %v3617 = vpop.permute.xlu0 %3616
    %3618 = vrot.lane.b32.xlu0 %v3605, 64
    %v3619 = vpop.permute.xlu0 %3618
    %v3622 = vmul.f32 %v3588, %v3617
    %v3623 = vmul.f32 %v3603, %v3619
    %3626 = vrot.lane.b32.xlu0 %v3622, 32
    %v3627 = vpop.permute.xlu0 %3626
    %3628 = vrot.lane.b32.xlu0 %v3623, 32
    %v3629 = vpop.permute.xlu0 %3628
    %v3632 = vadd.f32 %v3612, %v3627
    %v3633 = vadd.f32 %v3613, %v3629
    %v3634 = vtanh.pop %v3632
    %v3635 = vtanh.pop %v3633
    %3638 = vrot.lane.b32.xlu0 %v3634, 64
    %v3639 = vpop.permute.xlu0 %3638
    %3640 = vrot.lane.b32.xlu0 %v3635, 64
    %v3641 = vpop.permute.xlu0 %3640
    %v3644 = vmul.f32 %v3588, %v3639
    %v3645 = vmul.f32 %v3603, %v3641
    %v3647 = vrot.slane %v3558, 2
    %v3648 = vrot.slane %v3558, 3
    %v3651 = vadd.f32 %v3295, %v3647
    %v3652 = vadd.f32 %v3298, %v3648
    %v3653 = vxor.u32 %v3651, 2147483648
    %v3654 = vxor.u32 %v3652, 2147483648
    %v3655 = vmul.f32 %v3653, 1.442695
    %v3656 = vpow.pop %v3655
    %v3657 = vmul.f32 %v3654, 1.442695
    %v3658 = vpow.pop %v3657
    %v3659 = vadd.f32 %v3656, 1.0
    %v3660 = vadd.f32 %v3658, 1.0
    %v3661 = vrcp.pop %v3659
    %v3662 = vmul.f32 %v3659, %v3661
    %v3663 = vsub.f32 1.0, %v3662
    %v3664 = vmul.f32 %v3661, %v3663
    %v3665 = vadd.f32 %v3661, %v3664
    %vm3666 = vweird.f32 %v3659
    %vm3667 = vweird.f32 %v3661
    %vm3668 = vmor %vm3666, %vm3667
    %v3669 = vsel %vm3668, %v3661, %v3665
    %v3670 = vand.u32 2147483647, %v3659
    %vm3671 = vcmp.eq.f32.partialorder %v3670, 8.507059e+37
    %v3672 = vand.u32 %v3659, 2147483648
    %v3673 = vor.u32 1.1754944e-38, %v3672
    %v3674 = vsel %vm3671, %v3673, %v3669
    %v3675 = vmul.f32 1.0, %v3674
    %v3676 = vrcp.pop %v3660
    %v3677 = vmul.f32 %v3660, %v3676
    %v3678 = vsub.f32 1.0, %v3677
    %v3679 = vmul.f32 %v3676, %v3678
    %v3680 = vadd.f32 %v3676, %v3679
    %vm3681 = vweird.f32 %v3660
    %vm3682 = vweird.f32 %v3676
    %vm3683 = vmor %vm3681, %vm3682
    %v3684 = vsel %vm3683, %v3676, %v3680
    %v3685 = vand.u32 2147483647, %v3660
    %vm3686 = vcmp.eq.f32.partialorder %v3685, 8.507059e+37
    %v3687 = vand.u32 %v3660, 2147483648
    %v3688 = vor.u32 1.1754944e-38, %v3687
    %v3689 = vsel %vm3686, %v3688, %v3684
    %v3690 = vmul.f32 1.0, %v3689
    %v3691 = vtanh.pop %v3651
    %v3692 = vtanh.pop %v3652
    %v3695 = vrot.slane %v3487, 1
    %v3696 = vrot.slane %v3488, 1
    %v3699 = vmul.f32 %v3675, %v3695
    %v3700 = vmul.f32 %v3690, %v3696
    %3703 = vrot.lane.b32.xlu0 %v3691, 64
    %v3704 = vpop.permute.xlu0 %3703
    %3705 = vrot.lane.b32.xlu0 %v3692, 64
    %v3706 = vpop.permute.xlu0 %3705
    %v3709 = vmul.f32 %v3675, %v3704
    %v3710 = vmul.f32 %v3690, %v3706
    %3713 = vrot.lane.b32.xlu0 %v3709, 32
    %v3714 = vpop.permute.xlu0 %3713
    %3715 = vrot.lane.b32.xlu0 %v3710, 32
    %v3716 = vpop.permute.xlu0 %3715
    %v3719 = vadd.f32 %v3699, %v3714
    %v3720 = vadd.f32 %v3700, %v3716
    %v3721 = vtanh.pop %v3719
    %v3722 = vtanh.pop %v3720
    %3725 = vrot.lane.b32.xlu0 %v3721, 64
    %v3726 = vpop.permute.xlu0 %3725
    %3727 = vrot.lane.b32.xlu0 %v3722, 64
    %v3728 = vpop.permute.xlu0 %3727
    %v3731 = vmul.f32 %v3675, %v3726
    %v3732 = vmul.f32 %v3690, %v3728
    %v3735 = vrot.slane %v3645, 7
    %v3736 = vsel %vm1756, %v3735, %v3644
    %3737 = vrot.lane.b32.xlu0 %v3736, 32
    %v3738 = vpop.permute.xlu0 %3737
    %v3742 = vrot.slane %v3731, 5
    %v3743 = vrot.slane %v3732, 4
    %v3744 = vsel %vm1756, %v3743, %v3742
    %3745 = vrot.lane.b32.xlu0 %v3744, 64
    %v3746 = vpop.permute.xlu0 %3745
    %v3748 = vsel %vm224, %v3738, %v3746
    %v3750 = vrot.slane %v3748, 1
    %v3751 = vsel %vm425, %v3750, 0
    %3753 = vmatpush.msra.mxu0 0.0
    %3754 = vmatpush.msra.mxu0 0.0
    %3755 = vmatpush.msra.mxu0 0.0
    %3756 = vmatpush.msra.mxu0 0.0
    %3757 = vmatpush.msra.mxu0 0.0
    %3758 = vmatpush.msra.mxu0 0.0
    %3759 = vmatpush.msra.mxu0 0.0
    %3760 = vmatpush.msra.mxu0 0.0
    %3761 = vmatpush.msra.mxu0 %v3241
    %3762 = vmatpush.msra.mxu0 %v3239
    %3763 = vmatpush.msra.mxu0 %v3237
    %3764 = vmatpush.msra.mxu0 %v3235
    %3765 = vmatpush.msra.mxu0 %v3233
    %3766 = vmatpush.msra.mxu0 %v3231
    %3767 = vmatpush.msra.mxu0 %v3229
    %3768 = vmatpush.msra.mxu0 %v3227
    %3769 = vmatmul.f32.gmra.mxu0 %v3751
    %v3770 = vpop.f32.mrf.mxu0
    %v3771 = vadd.f32 0.0, %v3770
    %3772 = vdwg.mxu0
    %3773 = vmatpush.msra.mxu0 0.0
    %3774 = vmatpush.msra.mxu0 0.0
    %3775 = vmatpush.msra.mxu0 0.0
    %3776 = vmatpush.msra.mxu0 0.0
    %3777 = vmatpush.msra.mxu0 0.0
    %3778 = vmatpush.msra.mxu0 0.0
    %3779 = vmatpush.msra.mxu0 0.0
    %3780 = vmatpush.msra.mxu0 0.0
    %3781 = vmatpush.msra.mxu0 %v3242
    %3782 = vmatpush.msra.mxu0 %v3240
    %3783 = vmatpush.msra.mxu0 %v3238
    %3784 = vmatpush.msra.mxu0 %v3236
    %3785 = vmatpush.msra.mxu0 %v3234
    %3786 = vmatpush.msra.mxu0 %v3232
    %3787 = vmatpush.msra.mxu0 %v3230
    %3788 = vmatpush.msra.mxu0 %v3228
    %3789 = vmatmul.f32.gmra.mxu0 %v3751
    %v3790 = vpop.f32.mrf.mxu0
    %v3791 = vadd.f32 0.0, %v3790
    %3792 = vdwg.mxu0
    %v3794 = vrot.slane %v3771, 6
    %v3795 = vrot.slane %v3771, 7
    %v3798 = vadd.f32 %v3272, %v3794
    %v3799 = vadd.f32 %v3275, %v3795
    %v3800 = vxor.u32 %v3798, 2147483648
    %v3801 = vxor.u32 %v3799, 2147483648
    %v3802 = vmul.f32 %v3800, 1.442695
    %v3803 = vpow.pop %v3802
    %v3804 = vmul.f32 %v3801, 1.442695
    %v3805 = vpow.pop %v3804
    %v3806 = vadd.f32 %v3803, 1.0
    %v3807 = vadd.f32 %v3805, 1.0
    %v3808 = vrcp.pop %v3806
    %v3809 = vmul.f32 %v3806, %v3808
    %v3810 = vsub.f32 1.0, %v3809
    %v3811 = vmul.f32 %v3808, %v3810
    %v3812 = vadd.f32 %v3808, %v3811
    %vm3813 = vweird.f32 %v3806
    %vm3814 = vweird.f32 %v3808
    %vm3815 = vmor %vm3813, %vm3814
    %v3816 = vsel %vm3815, %v3808, %v3812
    %v3817 = vand.u32 2147483647, %v3806
    %vm3818 = vcmp.eq.f32.partialorder %v3817, 8.507059e+37
    %v3819 = vand.u32 %v3806, 2147483648
    %v3820 = vor.u32 1.1754944e-38, %v3819
    %v3821 = vsel %vm3818, %v3820, %v3816
    %v3822 = vmul.f32 1.0, %v3821
    %v3823 = vrcp.pop %v3807
    %v3824 = vmul.f32 %v3807, %v3823
    %v3825 = vsub.f32 1.0, %v3824
    %v3826 = vmul.f32 %v3823, %v3825
    %v3827 = vadd.f32 %v3823, %v3826
    %vm3828 = vweird.f32 %v3807
    %vm3829 = vweird.f32 %v3823
    %vm3830 = vmor %vm3828, %vm3829
    %v3831 = vsel %vm3830, %v3823, %v3827
    %v3832 = vand.u32 2147483647, %v3807
    %vm3833 = vcmp.eq.f32.partialorder %v3832, 8.507059e+37
    %v3834 = vand.u32 %v3807, 2147483648
    %v3835 = vor.u32 1.1754944e-38, %v3834
    %v3836 = vsel %vm3833, %v3835, %v3831
    %v3837 = vmul.f32 1.0, %v3836
    %v3838 = vtanh.pop %v3798
    %v3839 = vtanh.pop %v3799
    %v3842 = vrot.slane %v3632, 7
    %v3843 = vrot.slane %v3633, 7
    %v3846 = vmul.f32 %v3822, %v3842
    %v3847 = vmul.f32 %v3837, %v3843
    %3850 = vrot.lane.b32.xlu0 %v3838, 64
    %v3851 = vpop.permute.xlu0 %3850
    %3852 = vrot.lane.b32.xlu0 %v3839, 64
    %v3853 = vpop.permute.xlu0 %3852
    %v3856 = vmul.f32 %v3822, %v3851
    %v3857 = vmul.f32 %v3837, %v3853
    %3860 = vrot.lane.b32.xlu0 %v3856, 32
    %v3861 = vpop.permute.xlu0 %3860
    %3862 = vrot.lane.b32.xlu0 %v3857, 32
    %v3863 = vpop.permute.xlu0 %3862
    %v3866 = vadd.f32 %v3846, %v3861
    %v3867 = vadd.f32 %v3847, %v3863
    %v3868 = vtanh.pop %v3866
    %v3869 = vtanh.pop %v3867
    %3872 = vrot.lane.b32.xlu0 %v3868, 64
    %v3873 = vpop.permute.xlu0 %3872
    %3874 = vrot.lane.b32.xlu0 %v3869, 64
    %v3875 = vpop.permute.xlu0 %3874
    %v3878 = vmul.f32 %v3822, %v3873
    %v3879 = vmul.f32 %v3837, %v3875
    %v3881 = vrot.slane %v3791, 3
    %v3882 = vrot.slane %v3791, 4
    %v3885 = vadd.f32 %v3295, %v3881
    %v3886 = vadd.f32 %v3298, %v3882
    %v3887 = vxor.u32 %v3885, 2147483648
    %v3888 = vxor.u32 %v3886, 2147483648
    %v3889 = vmul.f32 %v3887, 1.442695
    %v3890 = vpow.pop %v3889
    %v3891 = vmul.f32 %v3888, 1.442695
    %v3892 = vpow.pop %v3891
    %v3893 = vadd.f32 %v3890, 1.0
    %v3894 = vadd.f32 %v3892, 1.0
    %v3895 = vrcp.pop %v3893
    %v3896 = vmul.f32 %v3893, %v3895
    %v3897 = vsub.f32 1.0, %v3896
    %v3898 = vmul.f32 %v3895, %v3897
    %v3899 = vadd.f32 %v3895, %v3898
    %vm3900 = vweird.f32 %v3893
    %vm3901 = vweird.f32 %v3895
    %vm3902 = vmor %vm3900, %vm3901
    %v3903 = vsel %vm3902, %v3895, %v3899
    %v3904 = vand.u32 2147483647, %v3893
    %vm3905 = vcmp.eq.f32.partialorder %v3904, 8.507059e+37
    %v3906 = vand.u32 %v3893, 2147483648
    %v3907 = vor.u32 1.1754944e-38, %v3906
    %v3908 = vsel %vm3905, %v3907, %v3903
    %v3909 = vmul.f32 1.0, %v3908
    %v3910 = vrcp.pop %v3894
    %v3911 = vmul.f32 %v3894, %v3910
    %v3912 = vsub.f32 1.0, %v3911
    %v3913 = vmul.f32 %v3910, %v3912
    %v3914 = vadd.f32 %v3910, %v3913
    %vm3915 = vweird.f32 %v3894
    %vm3916 = vweird.f32 %v3910
    %vm3917 = vmor %vm3915, %vm3916
    %v3918 = vsel %vm3917, %v3910, %v3914
    %v3919 = vand.u32 2147483647, %v3894
    %vm3920 = vcmp.eq.f32.partialorder %v3919, 8.507059e+37
    %v3921 = vand.u32 %v3894, 2147483648
    %v3922 = vor.u32 1.1754944e-38, %v3921
    %v3923 = vsel %vm3920, %v3922, %v3918
    %v3924 = vmul.f32 1.0, %v3923
    %v3925 = vtanh.pop %v3885
    %v3926 = vtanh.pop %v3886
    %v3929 = vrot.slane %v3719, 1
    %v3930 = vrot.slane %v3720, 1
    %v3933 = vmul.f32 %v3909, %v3929
    %v3934 = vmul.f32 %v3924, %v3930
    %3937 = vrot.lane.b32.xlu0 %v3925, 64
    %v3938 = vpop.permute.xlu0 %3937
    %3939 = vrot.lane.b32.xlu0 %v3926, 64
    %v3940 = vpop.permute.xlu0 %3939
    %v3943 = vmul.f32 %v3909, %v3938
    %v3944 = vmul.f32 %v3924, %v3940
    %3947 = vrot.lane.b32.xlu0 %v3943, 32
    %v3948 = vpop.permute.xlu0 %3947
    %3949 = vrot.lane.b32.xlu0 %v3944, 32
    %v3950 = vpop.permute.xlu0 %3949
    %v3953 = vadd.f32 %v3933, %v3948
    %v3954 = vadd.f32 %v3934, %v3950
    %v3955 = vtanh.pop %v3953
    %v3956 = vtanh.pop %v3954
    %3959 = vrot.lane.b32.xlu0 %v3955, 64
    %v3960 = vpop.permute.xlu0 %3959
    %3961 = vrot.lane.b32.xlu0 %v3956, 64
    %v3962 = vpop.permute.xlu0 %3961
    %v3965 = vmul.f32 %v3909, %v3960
    %v3966 = vmul.f32 %v3924, %v3962
    %v3969 = vrot.slane %v3879, 7
    %v3970 = vsel %vm1991, %v3969, %v3878
    %3971 = vrot.lane.b32.xlu0 %v3970, 32
    %v3972 = vpop.permute.xlu0 %3971
    %v3976 = vrot.slane %v3965, 3
    %v3977 = vrot.slane %v3966, 2
    %v3978 = vsel %vm1991, %v3977, %v3976
    %3979 = vrot.lane.b32.xlu0 %v3978, 64
    %v3980 = vpop.permute.xlu0 %3979
    %v3982 = vsel %vm224, %v3972, %v3980
    %v3984 = vrot.slane %v3982, 2
    %v3985 = vsel %vm425, %v3984, 0
    %3987 = vmatpush.msra.mxu0 0.0
    %3988 = vmatpush.msra.mxu0 0.0
    %3989 = vmatpush.msra.mxu0 0.0
    %3990 = vmatpush.msra.mxu0 0.0
    %3991 = vmatpush.msra.mxu0 0.0
    %3992 = vmatpush.msra.mxu0 0.0
    %3993 = vmatpush.msra.mxu0 0.0
    %3994 = vmatpush.msra.mxu0 0.0
    %3995 = vmatpush.msra.mxu0 %v3241
    %3996 = vmatpush.msra.mxu0 %v3239
    %3997 = vmatpush.msra.mxu0 %v3237
    %3998 = vmatpush.msra.mxu0 %v3235
    %3999 = vmatpush.msra.mxu0 %v3233
    %4000 = vmatpush.msra.mxu0 %v3231
    %4001 = vmatpush.msra.mxu0 %v3229
    %4002 = vmatpush.msra.mxu0 %v3227
    %4003 = vmatmul.f32.gmra.mxu0 %v3985
    %v4004 = vpop.f32.mrf.mxu0
    %v4005 = vadd.f32 0.0, %v4004
    %4006 = vdwg.mxu0
    %4007 = vmatpush.msra.mxu0 0.0
    %4008 = vmatpush.msra.mxu0 0.0
    %4009 = vmatpush.msra.mxu0 0.0
    %4010 = vmatpush.msra.mxu0 0.0
    %4011 = vmatpush.msra.mxu0 0.0
    %4012 = vmatpush.msra.mxu0 0.0
    %4013 = vmatpush.msra.mxu0 0.0
    %4014 = vmatpush.msra.mxu0 0.0
    %4015 = vmatpush.msra.mxu0 %v3242
    %4016 = vmatpush.msra.mxu0 %v3240
    %4017 = vmatpush.msra.mxu0 %v3238
    %4018 = vmatpush.msra.mxu0 %v3236
    %4019 = vmatpush.msra.mxu0 %v3234
    %4020 = vmatpush.msra.mxu0 %v3232
    %4021 = vmatpush.msra.mxu0 %v3230
    %4022 = vmatpush.msra.mxu0 %v3228
    %4023 = vmatmul.f32.gmra.mxu0 %v3985
    %v4024 = vpop.f32.mrf.mxu0
    %v4025 = vadd.f32 0.0, %v4024
    %4026 = vdwg.mxu0
    %v4028 = vrot.slane %v4005, 5
    %v4029 = vrot.slane %v4005, 6
    %v4032 = vadd.f32 %v3272, %v4028
    %v4033 = vadd.f32 %v3275, %v4029
    %v4034 = vxor.u32 %v4032, 2147483648
    %v4035 = vxor.u32 %v4033, 2147483648
    %v4036 = vmul.f32 %v4034, 1.442695
    %v4037 = vpow.pop %v4036
    %v4038 = vmul.f32 %v4035, 1.442695
    %v4039 = vpow.pop %v4038
    %v4040 = vadd.f32 %v4037, 1.0
    %v4041 = vadd.f32 %v4039, 1.0
    %v4042 = vrcp.pop %v4040
    %v4043 = vmul.f32 %v4040, %v4042
    %v4044 = vsub.f32 1.0, %v4043
    %v4045 = vmul.f32 %v4042, %v4044
    %v4046 = vadd.f32 %v4042, %v4045
    %vm4047 = vweird.f32 %v4040
    %vm4048 = vweird.f32 %v4042
    %vm4049 = vmor %vm4047, %vm4048
    %v4050 = vsel %vm4049, %v4042, %v4046
    %v4051 = vand.u32 2147483647, %v4040
    %vm4052 = vcmp.eq.f32.partialorder %v4051, 8.507059e+37
    %v4053 = vand.u32 %v4040, 2147483648
    %v4054 = vor.u32 1.1754944e-38, %v4053
    %v4055 = vsel %vm4052, %v4054, %v4050
    %v4056 = vmul.f32 1.0, %v4055
    %v4057 = vrcp.pop %v4041
    %v4058 = vmul.f32 %v4041, %v4057
    %v4059 = vsub.f32 1.0, %v4058
    %v4060 = vmul.f32 %v4057, %v4059
    %v4061 = vadd.f32 %v4057, %v4060
    %vm4062 = vweird.f32 %v4041
    %vm4063 = vweird.f32 %v4057
    %vm4064 = vmor %vm4062, %vm4063
    %v4065 = vsel %vm4064, %v4057, %v4061
    %v4066 = vand.u32 2147483647, %v4041
    %vm4067 = vcmp.eq.f32.partialorder %v4066, 8.507059e+37
    %v4068 = vand.u32 %v4041, 2147483648
    %v4069 = vor.u32 1.1754944e-38, %v4068
    %v4070 = vsel %vm4067, %v4069, %v4065
    %v4071 = vmul.f32 1.0, %v4070
    %v4072 = vtanh.pop %v4032
    %v4073 = vtanh.pop %v4033
    %v4076 = vrot.slane %v3866, 7
    %v4077 = vrot.slane %v3867, 7
    %v4080 = vmul.f32 %v4056, %v4076
    %v4081 = vmul.f32 %v4071, %v4077
    %4084 = vrot.lane.b32.xlu0 %v4072, 64
    %v4085 = vpop.permute.xlu0 %4084
    %4086 = vrot.lane.b32.xlu0 %v4073, 64
    %v4087 = vpop.permute.xlu0 %4086
    %v4090 = vmul.f32 %v4056, %v4085
    %v4091 = vmul.f32 %v4071, %v4087
    %4094 = vrot.lane.b32.xlu0 %v4090, 32
    %v4095 = vpop.permute.xlu0 %4094
    %4096 = vrot.lane.b32.xlu0 %v4091, 32
    %v4097 = vpop.permute.xlu0 %4096
    %v4100 = vadd.f32 %v4080, %v4095
    %v4101 = vadd.f32 %v4081, %v4097
    %v4102 = vtanh.pop %v4100
    %v4103 = vtanh.pop %v4101
    %4106 = vrot.lane.b32.xlu0 %v4102, 64
    %v4107 = vpop.permute.xlu0 %4106
    %4108 = vrot.lane.b32.xlu0 %v4103, 64
    %v4109 = vpop.permute.xlu0 %4108
    %v4112 = vmul.f32 %v4056, %v4107
    %v4113 = vmul.f32 %v4071, %v4109
    %v4115 = vrot.slane %v4025, 4
    %v4116 = vrot.slane %v4025, 5
    %v4119 = vadd.f32 %v3295, %v4115
    %v4120 = vadd.f32 %v3298, %v4116
    %v4121 = vxor.u32 %v4119, 2147483648
    %v4122 = vxor.u32 %v4120, 2147483648
    %v4123 = vmul.f32 %v4121, 1.442695
    %v4124 = vpow.pop %v4123
    %v4125 = vmul.f32 %v4122, 1.442695
    %v4126 = vpow.pop %v4125
    %v4127 = vadd.f32 %v4124, 1.0
    %v4128 = vadd.f32 %v4126, 1.0
    %v4129 = vrcp.pop %v4127
    %v4130 = vmul.f32 %v4127, %v4129
    %v4131 = vsub.f32 1.0, %v4130
    %v4132 = vmul.f32 %v4129, %v4131
    %v4133 = vadd.f32 %v4129, %v4132
    %vm4134 = vweird.f32 %v4127
    %vm4135 = vweird.f32 %v4129
    %vm4136 = vmor %vm4134, %vm4135
    %v4137 = vsel %vm4136, %v4129, %v4133
    %v4138 = vand.u32 2147483647, %v4127
    %vm4139 = vcmp.eq.f32.partialorder %v4138, 8.507059e+37
    %v4140 = vand.u32 %v4127, 2147483648
    %v4141 = vor.u32 1.1754944e-38, %v4140
    %v4142 = vsel %vm4139, %v4141, %v4137
    %v4143 = vmul.f32 1.0, %v4142
    %v4144 = vrcp.pop %v4128
    %v4145 = vmul.f32 %v4128, %v4144
    %v4146 = vsub.f32 1.0, %v4145
    %v4147 = vmul.f32 %v4144, %v4146
    %v4148 = vadd.f32 %v4144, %v4147
    %vm4149 = vweird.f32 %v4128
    %vm4150 = vweird.f32 %v4144
    %vm4151 = vmor %vm4149, %vm4150
    %v4152 = vsel %vm4151, %v4144, %v4148
    %v4153 = vand.u32 2147483647, %v4128
    %vm4154 = vcmp.eq.f32.partialorder %v4153, 8.507059e+37
    %v4155 = vand.u32 %v4128, 2147483648
    %v4156 = vor.u32 1.1754944e-38, %v4155
    %v4157 = vsel %vm4154, %v4156, %v4152
    %v4158 = vmul.f32 1.0, %v4157
    %v4159 = vtanh.pop %v4119
    %v4160 = vtanh.pop %v4120
    %v4163 = vrot.slane %v3953, 1
    %v4164 = vrot.slane %v3954, 1
    %v4167 = vmul.f32 %v4143, %v4163
    %v4168 = vmul.f32 %v4158, %v4164
    %4171 = vrot.lane.b32.xlu0 %v4159, 64
    %v4172 = vpop.permute.xlu0 %4171
    %4173 = vrot.lane.b32.xlu0 %v4160, 64
    %v4174 = vpop.permute.xlu0 %4173
    %v4177 = vmul.f32 %v4143, %v4172
    %v4178 = vmul.f32 %v4158, %v4174
    %4181 = vrot.lane.b32.xlu0 %v4177, 32
    %v4182 = vpop.permute.xlu0 %4181
    %4183 = vrot.lane.b32.xlu0 %v4178, 32
    %v4184 = vpop.permute.xlu0 %4183
    %v4187 = vadd.f32 %v4167, %v4182
    %v4188 = vadd.f32 %v4168, %v4184
    %v4189 = vtanh.pop %v4187
    %v4190 = vtanh.pop %v4188
    %4193 = vrot.lane.b32.xlu0 %v4189, 64
    %v4194 = vpop.permute.xlu0 %4193
    %4195 = vrot.lane.b32.xlu0 %v4190, 64
    %v4196 = vpop.permute.xlu0 %4195
    %v4199 = vmul.f32 %v4143, %v4194
    %v4200 = vmul.f32 %v4158, %v4196
    %v4203 = vrot.slane %v4113, 7
    %v4204 = vsel %vm2226, %v4203, %v4112
    %4205 = vrot.lane.b32.xlu0 %v4204, 32
    %v4206 = vpop.permute.xlu0 %4205
    %v4210 = vrot.slane %v4199, 1
    %v4211 = vsel %vm2226, %v4200, %v4210
    %4212 = vrot.lane.b32.xlu0 %v4211, 64
    %v4213 = vpop.permute.xlu0 %4212
    %v4215 = vsel %vm224, %v4206, %v4213
    %v4217 = vrot.slane %v4215, 3
    %v4218 = vsel %vm425, %v4217, 0
    %4220 = vmatpush.msra.mxu0 0.0
    %4221 = vmatpush.msra.mxu0 0.0
    %4222 = vmatpush.msra.mxu0 0.0
    %4223 = vmatpush.msra.mxu0 0.0
    %4224 = vmatpush.msra.mxu0 0.0
    %4225 = vmatpush.msra.mxu0 0.0
    %4226 = vmatpush.msra.mxu0 0.0
    %4227 = vmatpush.msra.mxu0 0.0
    %4228 = vmatpush.msra.mxu0 %v3241
    %4229 = vmatpush.msra.mxu0 %v3239
    %4230 = vmatpush.msra.mxu0 %v3237
    %4231 = vmatpush.msra.mxu0 %v3235
    %4232 = vmatpush.msra.mxu0 %v3233
    %4233 = vmatpush.msra.mxu0 %v3231
    %4234 = vmatpush.msra.mxu0 %v3229
    %4235 = vmatpush.msra.mxu0 %v3227
    %4236 = vmatmul.f32.gmra.mxu0 %v4218
    %v4237 = vpop.f32.mrf.mxu0
    %v4238 = vadd.f32 0.0, %v4237
    %4239 = vdwg.mxu0
    %4240 = vmatpush.msra.mxu0 0.0
    %4241 = vmatpush.msra.mxu0 0.0
    %4242 = vmatpush.msra.mxu0 0.0
    %4243 = vmatpush.msra.mxu0 0.0
    %4244 = vmatpush.msra.mxu0 0.0
    %4245 = vmatpush.msra.mxu0 0.0
    %4246 = vmatpush.msra.mxu0 0.0
    %4247 = vmatpush.msra.mxu0 0.0
    %4248 = vmatpush.msra.mxu0 %v3242
    %4249 = vmatpush.msra.mxu0 %v3240
    %4250 = vmatpush.msra.mxu0 %v3238
    %4251 = vmatpush.msra.mxu0 %v3236
    %4252 = vmatpush.msra.mxu0 %v3234
    %4253 = vmatpush.msra.mxu0 %v3232
    %4254 = vmatpush.msra.mxu0 %v3230
    %4255 = vmatpush.msra.mxu0 %v3228
    %4256 = vmatmul.f32.gmra.mxu0 %v4218
    %v4257 = vpop.f32.mrf.mxu0
    %v4258 = vadd.f32 0.0, %v4257
    %4259 = vdwg.mxu0
    %v4261 = vrot.slane %v4238, 4
    %v4262 = vrot.slane %v4238, 5
    %v4265 = vadd.f32 %v3272, %v4261
    %v4266 = vadd.f32 %v3275, %v4262
    %v4267 = vxor.u32 %v4265, 2147483648
    %v4268 = vxor.u32 %v4266, 2147483648
    %v4269 = vmul.f32 %v4267, 1.442695
    %v4270 = vpow.pop %v4269
    %v4271 = vmul.f32 %v4268, 1.442695
    %v4272 = vpow.pop %v4271
    %v4273 = vadd.f32 %v4270, 1.0
    %v4274 = vadd.f32 %v4272, 1.0
    %v4275 = vrcp.pop %v4273
    %v4276 = vmul.f32 %v4273, %v4275
    %v4277 = vsub.f32 1.0, %v4276
    %v4278 = vmul.f32 %v4275, %v4277
    %v4279 = vadd.f32 %v4275, %v4278
    %vm4280 = vweird.f32 %v4273
    %vm4281 = vweird.f32 %v4275
    %vm4282 = vmor %vm4280, %vm4281
    %v4283 = vsel %vm4282, %v4275, %v4279
    %v4284 = vand.u32 2147483647, %v4273
    %vm4285 = vcmp.eq.f32.partialorder %v4284, 8.507059e+37
    %v4286 = vand.u32 %v4273, 2147483648
    %v4287 = vor.u32 1.1754944e-38, %v4286
    %v4288 = vsel %vm4285, %v4287, %v4283
    %v4289 = vmul.f32 1.0, %v4288
    %v4290 = vrcp.pop %v4274
    %v4291 = vmul.f32 %v4274, %v4290
    %v4292 = vsub.f32 1.0, %v4291
    %v4293 = vmul.f32 %v4290, %v4292
    %v4294 = vadd.f32 %v4290, %v4293
    %vm4295 = vweird.f32 %v4274
    %vm4296 = vweird.f32 %v4290
    %vm4297 = vmor %vm4295, %vm4296
    %v4298 = vsel %vm4297, %v4290, %v4294
    %v4299 = vand.u32 2147483647, %v4274
    %vm4300 = vcmp.eq.f32.partialorder %v4299, 8.507059e+37
    %v4301 = vand.u32 %v4274, 2147483648
    %v4302 = vor.u32 1.1754944e-38, %v4301
    %v4303 = vsel %vm4300, %v4302, %v4298
    %v4304 = vmul.f32 1.0, %v4303
    %v4305 = vtanh.pop %v4265
    %v4306 = vtanh.pop %v4266
    %v4309 = vrot.slane %v4100, 7
    %v4310 = vrot.slane %v4101, 7
    %v4313 = vmul.f32 %v4289, %v4309
    %v4314 = vmul.f32 %v4304, %v4310
    %4317 = vrot.lane.b32.xlu0 %v4305, 64
    %v4318 = vpop.permute.xlu0 %4317
    %4319 = vrot.lane.b32.xlu0 %v4306, 64
    %v4320 = vpop.permute.xlu0 %4319
    %v4323 = vmul.f32 %v4289, %v4318
    %v4324 = vmul.f32 %v4304, %v4320
    %4327 = vrot.lane.b32.xlu0 %v4323, 32
    %v4328 = vpop.permute.xlu0 %4327
    %4329 = vrot.lane.b32.xlu0 %v4324, 32
    %v4330 = vpop.permute.xlu0 %4329
    %v4333 = vadd.f32 %v4313, %v4328
    %v4334 = vadd.f32 %v4314, %v4330
    %v4335 = vtanh.pop %v4333
    %v4336 = vtanh.pop %v4334
    %4339 = vrot.lane.b32.xlu0 %v4335, 64
    %v4340 = vpop.permute.xlu0 %4339
    %4341 = vrot.lane.b32.xlu0 %v4336, 64
    %v4342 = vpop.permute.xlu0 %4341
    %v4345 = vmul.f32 %v4289, %v4340
    %v4346 = vmul.f32 %v4304, %v4342
    %v4348 = vrot.slane %v4258, 5
    %v4349 = vrot.slane %v4258, 6
    %v4352 = vadd.f32 %v3295, %v4348
    %v4353 = vadd.f32 %v3298, %v4349
    %v4354 = vxor.u32 %v4352, 2147483648
    %v4355 = vxor.u32 %v4353, 2147483648
    %v4356 = vmul.f32 %v4354, 1.442695
    %v4357 = vpow.pop %v4356
    %v4358 = vmul.f32 %v4355, 1.442695
    %v4359 = vpow.pop %v4358
    %v4360 = vadd.f32 %v4357, 1.0
    %v4361 = vadd.f32 %v4359, 1.0
    %v4362 = vrcp.pop %v4360
    %v4363 = vmul.f32 %v4360, %v4362
    %v4364 = vsub.f32 1.0, %v4363
    %v4365 = vmul.f32 %v4362, %v4364
    %v4366 = vadd.f32 %v4362, %v4365
    %vm4367 = vweird.f32 %v4360
    %vm4368 = vweird.f32 %v4362
    %vm4369 = vmor %vm4367, %vm4368
    %v4370 = vsel %vm4369, %v4362, %v4366
    %v4371 = vand.u32 2147483647, %v4360
    %vm4372 = vcmp.eq.f32.partialorder %v4371, 8.507059e+37
    %v4373 = vand.u32 %v4360, 2147483648
    %v4374 = vor.u32 1.1754944e-38, %v4373
    %v4375 = vsel %vm4372, %v4374, %v4370
    %v4376 = vmul.f32 1.0, %v4375
    %v4377 = vrcp.pop %v4361
    %v4378 = vmul.f32 %v4361, %v4377
    %v4379 = vsub.f32 1.0, %v4378
    %v4380 = vmul.f32 %v4377, %v4379
    %v4381 = vadd.f32 %v4377, %v4380
    %vm4382 = vweird.f32 %v4361
    %vm4383 = vweird.f32 %v4377
    %vm4384 = vmor %vm4382, %vm4383
    %v4385 = vsel %vm4384, %v4377, %v4381
    %v4386 = vand.u32 2147483647, %v4361
    %vm4387 = vcmp.eq.f32.partialorder %v4386, 8.507059e+37
    %v4388 = vand.u32 %v4361, 2147483648
    %v4389 = vor.u32 1.1754944e-38, %v4388
    %v4390 = vsel %vm4387, %v4389, %v4385
    %v4391 = vmul.f32 1.0, %v4390
    %v4392 = vtanh.pop %v4352
    %v4393 = vtanh.pop %v4353
    %v4396 = vrot.slane %v4187, 1
    %v4397 = vrot.slane %v4188, 1
    %v4400 = vmul.f32 %v4376, %v4396
    %v4401 = vmul.f32 %v4391, %v4397
    %4404 = vrot.lane.b32.xlu0 %v4392, 64
    %v4405 = vpop.permute.xlu0 %4404
    %4406 = vrot.lane.b32.xlu0 %v4393, 64
    %v4407 = vpop.permute.xlu0 %4406
    %v4410 = vmul.f32 %v4376, %v4405
    %v4411 = vmul.f32 %v4391, %v4407
    %4414 = vrot.lane.b32.xlu0 %v4410, 32
    %v4415 = vpop.permute.xlu0 %4414
    %4416 = vrot.lane.b32.xlu0 %v4411, 32
    %v4417 = vpop.permute.xlu0 %4416
    %v4420 = vadd.f32 %v4400, %v4415
    %v4421 = vadd.f32 %v4401, %v4417
    %v4422 = vtanh.pop %v4420
    %v4423 = vtanh.pop %v4421
    %4426 = vrot.lane.b32.xlu0 %v4422, 64
    %v4427 = vpop.permute.xlu0 %4426
    %4428 = vrot.lane.b32.xlu0 %v4423, 64
    %v4429 = vpop.permute.xlu0 %4428
    %v4432 = vmul.f32 %v4376, %v4427
    %v4433 = vmul.f32 %v4391, %v4429
    %v4436 = vrot.slane %v4346, 7
    %v4437 = vsel %vm2460, %v4436, %v4345
    %4438 = vrot.lane.b32.xlu0 %v4437, 32
    %v4439 = vpop.permute.xlu0 %4438
    %v4443 = vrot.slane %v4432, 7
    %v4444 = vrot.slane %v4433, 6
    %v4445 = vsel %vm2460, %v4444, %v4443
    %4446 = vrot.lane.b32.xlu0 %v4445, 64
    %v4447 = vpop.permute.xlu0 %4446
    %v4449 = vsel %vm224, %v4439, %v4447
    %v4451 = vrot.slane %v4449, 4
    %v4452 = vsel %vm425, %v4451, 0
    %4454 = vmatpush.msra.mxu0 0.0
    %4455 = vmatpush.msra.mxu0 0.0
    %4456 = vmatpush.msra.mxu0 0.0
    %4457 = vmatpush.msra.mxu0 0.0
    %4458 = vmatpush.msra.mxu0 0.0
    %4459 = vmatpush.msra.mxu0 0.0
    %4460 = vmatpush.msra.mxu0 0.0
    %4461 = vmatpush.msra.mxu0 0.0
    %4462 = vmatpush.msra.mxu0 %v3241
    %4463 = vmatpush.msra.mxu0 %v3239
    %4464 = vmatpush.msra.mxu0 %v3237
    %4465 = vmatpush.msra.mxu0 %v3235
    %4466 = vmatpush.msra.mxu0 %v3233
    %4467 = vmatpush.msra.mxu0 %v3231
    %4468 = vmatpush.msra.mxu0 %v3229
    %4469 = vmatpush.msra.mxu0 %v3227
    %4470 = vmatmul.f32.gmra.mxu0 %v4452
    %v4471 = vpop.f32.mrf.mxu0
    %v4472 = vadd.f32 0.0, %v4471
    %4473 = vdwg.mxu0
    %4474 = vmatpush.msra.mxu0 0.0
    %4475 = vmatpush.msra.mxu0 0.0
    %4476 = vmatpush.msra.mxu0 0.0
    %4477 = vmatpush.msra.mxu0 0.0
    %4478 = vmatpush.msra.mxu0 0.0
    %4479 = vmatpush.msra.mxu0 0.0
    %4480 = vmatpush.msra.mxu0 0.0
    %4481 = vmatpush.msra.mxu0 0.0
    %4482 = vmatpush.msra.mxu0 %v3242
    %4483 = vmatpush.msra.mxu0 %v3240
    %4484 = vmatpush.msra.mxu0 %v3238
    %4485 = vmatpush.msra.mxu0 %v3236
    %4486 = vmatpush.msra.mxu0 %v3234
    %4487 = vmatpush.msra.mxu0 %v3232
    %4488 = vmatpush.msra.mxu0 %v3230
    %4489 = vmatpush.msra.mxu0 %v3228
    %4490 = vmatmul.f32.gmra.mxu0 %v4452
    %v4491 = vpop.f32.mrf.mxu0
    %v4492 = vadd.f32 0.0, %v4491
    %4493 = vdwg.mxu0
    %v4495 = vrot.slane %v4472, 3
    %v4496 = vrot.slane %v4472, 4
    %v4499 = vadd.f32 %v3272, %v4495
    %v4500 = vadd.f32 %v3275, %v4496
    %v4501 = vxor.u32 %v4499, 2147483648
    %v4502 = vxor.u32 %v4500, 2147483648
    %v4503 = vmul.f32 %v4501, 1.442695
    %v4504 = vpow.pop %v4503
    %v4505 = vmul.f32 %v4502, 1.442695
    %v4506 = vpow.pop %v4505
    %v4507 = vadd.f32 %v4504, 1.0
    %v4508 = vadd.f32 %v4506, 1.0
    %v4509 = vrcp.pop %v4507
    %v4510 = vmul.f32 %v4507, %v4509
    %v4511 = vsub.f32 1.0, %v4510
    %v4512 = vmul.f32 %v4509, %v4511
    %v4513 = vadd.f32 %v4509, %v4512
    %vm4514 = vweird.f32 %v4507
    %vm4515 = vweird.f32 %v4509
    %vm4516 = vmor %vm4514, %vm4515
    %v4517 = vsel %vm4516, %v4509, %v4513
    %v4518 = vand.u32 2147483647, %v4507
    %vm4519 = vcmp.eq.f32.partialorder %v4518, 8.507059e+37
    %v4520 = vand.u32 %v4507, 2147483648
    %v4521 = vor.u32 1.1754944e-38, %v4520
    %v4522 = vsel %vm4519, %v4521, %v4517
    %v4523 = vmul.f32 1.0, %v4522
    %v4524 = vrcp.pop %v4508
    %v4525 = vmul.f32 %v4508, %v4524
    %v4526 = vsub.f32 1.0, %v4525
    %v4527 = vmul.f32 %v4524, %v4526
    %v4528 = vadd.f32 %v4524, %v4527
    %vm4529 = vweird.f32 %v4508
    %vm4530 = vweird.f32 %v4524
    %vm4531 = vmor %vm4529, %vm4530
    %v4532 = vsel %vm4531, %v4524, %v4528
    %v4533 = vand.u32 2147483647, %v4508
    %vm4534 = vcmp.eq.f32.partialorder %v4533, 8.507059e+37
    %v4535 = vand.u32 %v4508, 2147483648
    %v4536 = vor.u32 1.1754944e-38, %v4535
    %v4537 = vsel %vm4534, %v4536, %v4532
    %v4538 = vmul.f32 1.0, %v4537
    %v4539 = vtanh.pop %v4499
    %v4540 = vtanh.pop %v4500
    %v4543 = vrot.slane %v4333, 7
    %v4544 = vrot.slane %v4334, 7
    %v4547 = vmul.f32 %v4523, %v4543
    %v4548 = vmul.f32 %v4538, %v4544
    %4551 = vrot.lane.b32.xlu0 %v4539, 64
    %v4552 = vpop.permute.xlu0 %4551
    %4553 = vrot.lane.b32.xlu0 %v4540, 64
    %v4554 = vpop.permute.xlu0 %4553
    %v4557 = vmul.f32 %v4523, %v4552
    %v4558 = vmul.f32 %v4538, %v4554
    %4561 = vrot.lane.b32.xlu0 %v4557, 32
    %v4562 = vpop.permute.xlu0 %4561
    %4563 = vrot.lane.b32.xlu0 %v4558, 32
    %v4564 = vpop.permute.xlu0 %4563
    %v4567 = vadd.f32 %v4547, %v4562
    %v4568 = vadd.f32 %v4548, %v4564
    %v4569 = vtanh.pop %v4567
    %v4570 = vtanh.pop %v4568
    %4573 = vrot.lane.b32.xlu0 %v4569, 64
    %v4574 = vpop.permute.xlu0 %4573
    %4575 = vrot.lane.b32.xlu0 %v4570, 64
    %v4576 = vpop.permute.xlu0 %4575
    %v4579 = vmul.f32 %v4523, %v4574
    %v4580 = vmul.f32 %v4538, %v4576
    %v4582 = vrot.slane %v4492, 6
    %v4583 = vrot.slane %v4492, 7
    %v4586 = vadd.f32 %v3295, %v4582
    %v4587 = vadd.f32 %v3298, %v4583
    %v4588 = vxor.u32 %v4586, 2147483648
    %v4589 = vxor.u32 %v4587, 2147483648
    %v4590 = vmul.f32 %v4588, 1.442695
    %v4591 = vpow.pop %v4590
    %v4592 = vmul.f32 %v4589, 1.442695
    %v4593 = vpow.pop %v4592
    %v4594 = vadd.f32 %v4591, 1.0
    %v4595 = vadd.f32 %v4593, 1.0
    %v4596 = vrcp.pop %v4594
    %v4597 = vmul.f32 %v4594, %v4596
    %v4598 = vsub.f32 1.0, %v4597
    %v4599 = vmul.f32 %v4596, %v4598
    %v4600 = vadd.f32 %v4596, %v4599
    %vm4601 = vweird.f32 %v4594
    %vm4602 = vweird.f32 %v4596
    %vm4603 = vmor %vm4601, %vm4602
    %v4604 = vsel %vm4603, %v4596, %v4600
    %v4605 = vand.u32 2147483647, %v4594
    %vm4606 = vcmp.eq.f32.partialorder %v4605, 8.507059e+37
    %v4607 = vand.u32 %v4594, 2147483648
    %v4608 = vor.u32 1.1754944e-38, %v4607
    %v4609 = vsel %vm4606, %v4608, %v4604
    %v4610 = vmul.f32 1.0, %v4609
    %v4611 = vrcp.pop %v4595
    %v4612 = vmul.f32 %v4595, %v4611
    %v4613 = vsub.f32 1.0, %v4612
    %v4614 = vmul.f32 %v4611, %v4613
    %v4615 = vadd.f32 %v4611, %v4614
    %vm4616 = vweird.f32 %v4595
    %vm4617 = vweird.f32 %v4611
    %vm4618 = vmor %vm4616, %vm4617
    %v4619 = vsel %vm4618, %v4611, %v4615
    %v4620 = vand.u32 2147483647, %v4595
    %vm4621 = vcmp.eq.f32.partialorder %v4620, 8.507059e+37
    %v4622 = vand.u32 %v4595, 2147483648
    %v4623 = vor.u32 1.1754944e-38, %v4622
    %v4624 = vsel %vm4621, %v4623, %v4619
    %v4625 = vmul.f32 1.0, %v4624
    %v4626 = vtanh.pop %v4586
    %v4627 = vtanh.pop %v4587
    %v4630 = vrot.slane %v4420, 1
    %v4631 = vrot.slane %v4421, 1
    %v4634 = vmul.f32 %v4610, %v4630
    %v4635 = vmul.f32 %v4625, %v4631
    %4638 = vrot.lane.b32.xlu0 %v4626, 64
    %v4639 = vpop.permute.xlu0 %4638
    %4640 = vrot.lane.b32.xlu0 %v4627, 64
    %v4641 = vpop.permute.xlu0 %4640
    %v4644 = vmul.f32 %v4610, %v4639
    %v4645 = vmul.f32 %v4625, %v4641
    %4648 = vrot.lane.b32.xlu0 %v4644, 32
    %v4649 = vpop.permute.xlu0 %4648
    %4650 = vrot.lane.b32.xlu0 %v4645, 32
    %v4651 = vpop.permute.xlu0 %4650
    %v4654 = vadd.f32 %v4634, %v4649
    %v4655 = vadd.f32 %v4635, %v4651
    %v4656 = vtanh.pop %v4654
    %v4657 = vtanh.pop %v4655
    %4660 = vrot.lane.b32.xlu0 %v4656, 64
    %v4661 = vpop.permute.xlu0 %4660
    %4662 = vrot.lane.b32.xlu0 %v4657, 64
    %v4663 = vpop.permute.xlu0 %4662
    %v4666 = vmul.f32 %v4610, %v4661
    %v4667 = vmul.f32 %v4625, %v4663
    %v4670 = vrot.slane %v4580, 7
    %v4671 = vsel %vm2695, %v4670, %v4579
    %4672 = vrot.lane.b32.xlu0 %v4671, 32
    %v4673 = vpop.permute.xlu0 %4672
    %v4677 = vrot.slane %v4666, 5
    %v4678 = vrot.slane %v4667, 4
    %v4679 = vsel %vm2695, %v4678, %v4677
    %4680 = vrot.lane.b32.xlu0 %v4679, 64
    %v4681 = vpop.permute.xlu0 %4680
    %v4683 = vsel %vm224, %v4673, %v4681
    %v4685 = vrot.slane %v4683, 5
    %v4686 = vsel %vm425, %v4685, 0
    %4688 = vmatpush.msra.mxu0 0.0
    %4689 = vmatpush.msra.mxu0 0.0
    %4690 = vmatpush.msra.mxu0 0.0
    %4691 = vmatpush.msra.mxu0 0.0
    %4692 = vmatpush.msra.mxu0 0.0
    %4693 = vmatpush.msra.mxu0 0.0
    %4694 = vmatpush.msra.mxu0 0.0
    %4695 = vmatpush.msra.mxu0 0.0
    %4696 = vmatpush.msra.mxu0 %v3241
    %4697 = vmatpush.msra.mxu0 %v3239
    %4698 = vmatpush.msra.mxu0 %v3237
    %4699 = vmatpush.msra.mxu0 %v3235
    %4700 = vmatpush.msra.mxu0 %v3233
    %4701 = vmatpush.msra.mxu0 %v3231
    %4702 = vmatpush.msra.mxu0 %v3229
    %4703 = vmatpush.msra.mxu0 %v3227
    %4704 = vmatmul.f32.gmra.mxu0 %v4686
    %v4705 = vpop.f32.mrf.mxu0
    %v4706 = vadd.f32 0.0, %v4705
    %4707 = vdwg.mxu0
    %4708 = vmatpush.msra.mxu0 0.0
    %4709 = vmatpush.msra.mxu0 0.0
    %4710 = vmatpush.msra.mxu0 0.0
    %4711 = vmatpush.msra.mxu0 0.0
    %4712 = vmatpush.msra.mxu0 0.0
    %4713 = vmatpush.msra.mxu0 0.0
    %4714 = vmatpush.msra.mxu0 0.0
    %4715 = vmatpush.msra.mxu0 0.0
    %4716 = vmatpush.msra.mxu0 %v3242
    %4717 = vmatpush.msra.mxu0 %v3240
    %4718 = vmatpush.msra.mxu0 %v3238
    %4719 = vmatpush.msra.mxu0 %v3236
    %4720 = vmatpush.msra.mxu0 %v3234
    %4721 = vmatpush.msra.mxu0 %v3232
    %4722 = vmatpush.msra.mxu0 %v3230
    %4723 = vmatpush.msra.mxu0 %v3228
    %4724 = vmatmul.f32.gmra.mxu0 %v4686
    %v4725 = vpop.f32.mrf.mxu0
    %v4726 = vadd.f32 0.0, %v4725
    %4727 = vdwg.mxu0
    %v4729 = vrot.slane %v4706, 2
    %v4730 = vrot.slane %v4706, 3
    %v4733 = vadd.f32 %v3272, %v4729
    %v4734 = vadd.f32 %v3275, %v4730
    %v4735 = vxor.u32 %v4733, 2147483648
    %v4736 = vxor.u32 %v4734, 2147483648
    %v4737 = vmul.f32 %v4735, 1.442695
    %v4738 = vpow.pop %v4737
    %v4739 = vmul.f32 %v4736, 1.442695
    %v4740 = vpow.pop %v4739
    %v4741 = vadd.f32 %v4738, 1.0
    %v4742 = vadd.f32 %v4740, 1.0
    %v4743 = vrcp.pop %v4741
    %v4744 = vmul.f32 %v4741, %v4743
    %v4745 = vsub.f32 1.0, %v4744
    %v4746 = vmul.f32 %v4743, %v4745
    %v4747 = vadd.f32 %v4743, %v4746
    %vm4748 = vweird.f32 %v4741
    %vm4749 = vweird.f32 %v4743
    %vm4750 = vmor %vm4748, %vm4749
    %v4751 = vsel %vm4750, %v4743, %v4747
    %v4752 = vand.u32 2147483647, %v4741
    %vm4753 = vcmp.eq.f32.partialorder %v4752, 8.507059e+37
    %v4754 = vand.u32 %v4741, 2147483648
    %v4755 = vor.u32 1.1754944e-38, %v4754
    %v4756 = vsel %vm4753, %v4755, %v4751
    %v4757 = vmul.f32 1.0, %v4756
    %v4758 = vrcp.pop %v4742
    %v4759 = vmul.f32 %v4742, %v4758
    %v4760 = vsub.f32 1.0, %v4759
    %v4761 = vmul.f32 %v4758, %v4760
    %v4762 = vadd.f32 %v4758, %v4761
    %vm4763 = vweird.f32 %v4742
    %vm4764 = vweird.f32 %v4758
    %vm4765 = vmor %vm4763, %vm4764
    %v4766 = vsel %vm4765, %v4758, %v4762
    %v4767 = vand.u32 2147483647, %v4742
    %vm4768 = vcmp.eq.f32.partialorder %v4767, 8.507059e+37
    %v4769 = vand.u32 %v4742, 2147483648
    %v4770 = vor.u32 1.1754944e-38, %v4769
    %v4771 = vsel %vm4768, %v4770, %v4766
    %v4772 = vmul.f32 1.0, %v4771
    %v4773 = vtanh.pop %v4733
    %v4774 = vtanh.pop %v4734
    %v4777 = vrot.slane %v4567, 7
    %v4778 = vrot.slane %v4568, 7
    %v4781 = vmul.f32 %v4757, %v4777
    %v4782 = vmul.f32 %v4772, %v4778
    %4785 = vrot.lane.b32.xlu0 %v4773, 64
    %v4786 = vpop.permute.xlu0 %4785
    %4787 = vrot.lane.b32.xlu0 %v4774, 64
    %v4788 = vpop.permute.xlu0 %4787
    %v4791 = vmul.f32 %v4757, %v4786
    %v4792 = vmul.f32 %v4772, %v4788
    %4795 = vrot.lane.b32.xlu0 %v4791, 32
    %v4796 = vpop.permute.xlu0 %4795
    %4797 = vrot.lane.b32.xlu0 %v4792, 32
    %v4798 = vpop.permute.xlu0 %4797
    %v4801 = vadd.f32 %v4781, %v4796
    %v4802 = vadd.f32 %v4782, %v4798
    %v4803 = vtanh.pop %v4801
    %v4804 = vtanh.pop %v4802
    %4807 = vrot.lane.b32.xlu0 %v4803, 64
    %v4808 = vpop.permute.xlu0 %4807
    %4809 = vrot.lane.b32.xlu0 %v4804, 64
    %v4810 = vpop.permute.xlu0 %4809
    %v4813 = vmul.f32 %v4757, %v4808
    %v4814 = vmul.f32 %v4772, %v4810
    %v4816 = vrot.slane %v4726, 7
    %v4819 = vadd.f32 %v3295, %v4816
    %v4820 = vadd.f32 %v3298, %v4726
    %v4821 = vxor.u32 %v4819, 2147483648
    %v4822 = vxor.u32 %v4820, 2147483648
    %v4823 = vmul.f32 %v4821, 1.442695
    %v4824 = vpow.pop %v4823
    %v4825 = vmul.f32 %v4822, 1.442695
    %v4826 = vpow.pop %v4825
    %v4827 = vadd.f32 %v4824, 1.0
    %v4828 = vadd.f32 %v4826, 1.0
    %v4829 = vrcp.pop %v4827
    %v4830 = vmul.f32 %v4827, %v4829
    %v4831 = vsub.f32 1.0, %v4830
    %v4832 = vmul.f32 %v4829, %v4831
    %v4833 = vadd.f32 %v4829, %v4832
    %vm4834 = vweird.f32 %v4827
    %vm4835 = vweird.f32 %v4829
    %vm4836 = vmor %vm4834, %vm4835
    %v4837 = vsel %vm4836, %v4829, %v4833
    %v4838 = vand.u32 2147483647, %v4827
    %vm4839 = vcmp.eq.f32.partialorder %v4838, 8.507059e+37
    %v4840 = vand.u32 %v4827, 2147483648
    %v4841 = vor.u32 1.1754944e-38, %v4840
    %v4842 = vsel %vm4839, %v4841, %v4837
    %v4843 = vmul.f32 1.0, %v4842
    %v4844 = vrcp.pop %v4828
    %v4845 = vmul.f32 %v4828, %v4844
    %v4846 = vsub.f32 1.0, %v4845
    %v4847 = vmul.f32 %v4844, %v4846
    %v4848 = vadd.f32 %v4844, %v4847
    %vm4849 = vweird.f32 %v4828
    %vm4850 = vweird.f32 %v4844
    %vm4851 = vmor %vm4849, %vm4850
    %v4852 = vsel %vm4851, %v4844, %v4848
    %v4853 = vand.u32 2147483647, %v4828
    %vm4854 = vcmp.eq.f32.partialorder %v4853, 8.507059e+37
    %v4855 = vand.u32 %v4828, 2147483648
    %v4856 = vor.u32 1.1754944e-38, %v4855
    %v4857 = vsel %vm4854, %v4856, %v4852
    %v4858 = vmul.f32 1.0, %v4857
    %v4859 = vtanh.pop %v4819
    %v4860 = vtanh.pop %v4820
    %v4863 = vrot.slane %v4654, 1
    %v4864 = vrot.slane %v4655, 1
    %v4867 = vmul.f32 %v4843, %v4863
    %v4868 = vmul.f32 %v4858, %v4864
    %4871 = vrot.lane.b32.xlu0 %v4859, 64
    %v4872 = vpop.permute.xlu0 %4871
    %4873 = vrot.lane.b32.xlu0 %v4860, 64
    %v4874 = vpop.permute.xlu0 %4873
    %v4877 = vmul.f32 %v4843, %v4872
    %v4878 = vmul.f32 %v4858, %v4874
    %4881 = vrot.lane.b32.xlu0 %v4877, 32
    %v4882 = vpop.permute.xlu0 %4881
    %4883 = vrot.lane.b32.xlu0 %v4878, 32
    %v4884 = vpop.permute.xlu0 %4883
    %v4887 = vadd.f32 %v4867, %v4882
    %v4888 = vadd.f32 %v4868, %v4884
    %v4889 = vtanh.pop %v4887
    %v4890 = vtanh.pop %v4888
    %4893 = vrot.lane.b32.xlu0 %v4889, 64
    %v4894 = vpop.permute.xlu0 %4893
    %4895 = vrot.lane.b32.xlu0 %v4890, 64
    %v4896 = vpop.permute.xlu0 %4895
    %v4899 = vmul.f32 %v4843, %v4894
    %v4900 = vmul.f32 %v4858, %v4896
    %v4903 = vrot.slane %v4814, 7
    %v4904 = vsel %vm2929, %v4903, %v4813
    %4905 = vrot.lane.b32.xlu0 %v4904, 32
    %v4906 = vpop.permute.xlu0 %4905
    %v4910 = vrot.slane %v4899, 3
    %v4911 = vrot.slane %v4900, 2
    %v4912 = vsel %vm2929, %v4911, %v4910
    %4913 = vrot.lane.b32.xlu0 %v4912, 64
    %v4914 = vpop.permute.xlu0 %4913
    %v4916 = vsel %vm224, %v4906, %v4914
    %v4918 = vrot.slane %v4916, 6
    %v4919 = vsel %vm425, %v4918, 0
    %4921 = vmatpush.msra.mxu0 0.0
    %4922 = vmatpush.msra.mxu0 0.0
    %4923 = vmatpush.msra.mxu0 0.0
    %4924 = vmatpush.msra.mxu0 0.0
    %4925 = vmatpush.msra.mxu0 0.0
    %4926 = vmatpush.msra.mxu0 0.0
    %4927 = vmatpush.msra.mxu0 0.0
    %4928 = vmatpush.msra.mxu0 0.0
    %4929 = vmatpush.msra.mxu0 %v3241
    %4930 = vmatpush.msra.mxu0 %v3239
    %4931 = vmatpush.msra.mxu0 %v3237
    %4932 = vmatpush.msra.mxu0 %v3235
    %4933 = vmatpush.msra.mxu0 %v3233
    %4934 = vmatpush.msra.mxu0 %v3231
    %4935 = vmatpush.msra.mxu0 %v3229
    %4936 = vmatpush.msra.mxu0 %v3227
    %4937 = vmatmul.f32.gmra.mxu0 %v4919
    %v4938 = vpop.f32.mrf.mxu0
    %v4939 = vadd.f32 0.0, %v4938
    %4940 = vdwg.mxu0
    %4941 = vmatpush.msra.mxu0 0.0
    %4942 = vmatpush.msra.mxu0 0.0
    %4943 = vmatpush.msra.mxu0 0.0
    %4944 = vmatpush.msra.mxu0 0.0
    %4945 = vmatpush.msra.mxu0 0.0
    %4946 = vmatpush.msra.mxu0 0.0
    %4947 = vmatpush.msra.mxu0 0.0
    %4948 = vmatpush.msra.mxu0 0.0
    %4949 = vmatpush.msra.mxu0 %v3242
    %4950 = vmatpush.msra.mxu0 %v3240
    %4951 = vmatpush.msra.mxu0 %v3238
    %4952 = vmatpush.msra.mxu0 %v3236
    %4953 = vmatpush.msra.mxu0 %v3234
    %4954 = vmatpush.msra.mxu0 %v3232
    %4955 = vmatpush.msra.mxu0 %v3230
    %4956 = vmatpush.msra.mxu0 %v3228
    %4957 = vmatmul.f32.gmra.mxu0 %v4919
    %v4958 = vpop.f32.mrf.mxu0
    %v4959 = vadd.f32 0.0, %v4958
    %4960 = vdwg.mxu0
    %v4962 = vrot.slane %v4939, 1
    %v4963 = vrot.slane %v4939, 2
    %v4966 = vadd.f32 %v3272, %v4962
    %v4967 = vadd.f32 %v3275, %v4963
    %v4968 = vxor.u32 %v4966, 2147483648
    %v4969 = vxor.u32 %v4967, 2147483648
    %v4970 = vmul.f32 %v4968, 1.442695
    %v4971 = vpow.pop %v4970
    %v4972 = vmul.f32 %v4969, 1.442695
    %v4973 = vpow.pop %v4972
    %v4974 = vadd.f32 %v4971, 1.0
    %v4975 = vadd.f32 %v4973, 1.0
    %v4976 = vrcp.pop %v4974
    %v4977 = vmul.f32 %v4974, %v4976
    %v4978 = vsub.f32 1.0, %v4977
    %v4979 = vmul.f32 %v4976, %v4978
    %v4980 = vadd.f32 %v4976, %v4979
    %vm4981 = vweird.f32 %v4974
    %vm4982 = vweird.f32 %v4976
    %vm4983 = vmor %vm4981, %vm4982
    %v4984 = vsel %vm4983, %v4976, %v4980
    %v4985 = vand.u32 2147483647, %v4974
    %vm4986 = vcmp.eq.f32.partialorder %v4985, 8.507059e+37
    %v4987 = vand.u32 %v4974, 2147483648
    %v4988 = vor.u32 1.1754944e-38, %v4987
    %v4989 = vsel %vm4986, %v4988, %v4984
    %v4990 = vmul.f32 1.0, %v4989
    %v4991 = vrcp.pop %v4975
    %v4992 = vmul.f32 %v4975, %v4991
    %v4993 = vsub.f32 1.0, %v4992
    %v4994 = vmul.f32 %v4991, %v4993
    %v4995 = vadd.f32 %v4991, %v4994
    %vm4996 = vweird.f32 %v4975
    %vm4997 = vweird.f32 %v4991
    %vm4998 = vmor %vm4996, %vm4997
    %v4999 = vsel %vm4998, %v4991, %v4995
    %v5000 = vand.u32 2147483647, %v4975
    %vm5001 = vcmp.eq.f32.partialorder %v5000, 8.507059e+37
    %v5002 = vand.u32 %v4975, 2147483648
    %v5003 = vor.u32 1.1754944e-38, %v5002
    %v5004 = vsel %vm5001, %v5003, %v4999
    %v5005 = vmul.f32 1.0, %v5004
    %v5006 = vtanh.pop %v4966
    %v5007 = vtanh.pop %v4967
    %v5010 = vrot.slane %v4801, 7
    %v5011 = vrot.slane %v4802, 7
    %v5014 = vmul.f32 %v4990, %v5010
    %v5015 = vmul.f32 %v5005, %v5011
    %5018 = vrot.lane.b32.xlu0 %v5006, 64
    %v5019 = vpop.permute.xlu0 %5018
    %5020 = vrot.lane.b32.xlu0 %v5007, 64
    %v5021 = vpop.permute.xlu0 %5020
    %v5024 = vmul.f32 %v4990, %v5019
    %v5025 = vmul.f32 %v5005, %v5021
    %5028 = vrot.lane.b32.xlu0 %v5024, 32
    %v5029 = vpop.permute.xlu0 %5028
    %5030 = vrot.lane.b32.xlu0 %v5025, 32
    %v5031 = vpop.permute.xlu0 %5030
    %v5034 = vadd.f32 %v5014, %v5029
    %v5035 = vadd.f32 %v5015, %v5031
    %v5036 = vtanh.pop %v5034
    %v5037 = vtanh.pop %v5035
    %5040 = vrot.lane.b32.xlu0 %v5036, 64
    %v5041 = vpop.permute.xlu0 %5040
    %5042 = vrot.lane.b32.xlu0 %v5037, 64
    %v5043 = vpop.permute.xlu0 %5042
    %v5046 = vmul.f32 %v4990, %v5041
    %v5047 = vmul.f32 %v5005, %v5043
    %v5049 = vrot.slane %v4959, 1
    %v5052 = vadd.f32 %v3295, %v4959
    %v5053 = vadd.f32 %v3298, %v5049
    %v5054 = vxor.u32 %v5052, 2147483648
    %v5055 = vxor.u32 %v5053, 2147483648
    %v5056 = vmul.f32 %v5054, 1.442695
    %v5057 = vpow.pop %v5056
    %v5058 = vmul.f32 %v5055, 1.442695
    %v5059 = vpow.pop %v5058
    %v5060 = vadd.f32 %v5057, 1.0
    %v5061 = vadd.f32 %v5059, 1.0
    %v5062 = vrcp.pop %v5060
    %v5063 = vmul.f32 %v5060, %v5062
    %v5064 = vsub.f32 1.0, %v5063
    %v5065 = vmul.f32 %v5062, %v5064
    %v5066 = vadd.f32 %v5062, %v5065
    %vm5067 = vweird.f32 %v5060
    %vm5068 = vweird.f32 %v5062
    %vm5069 = vmor %vm5067, %vm5068
    %v5070 = vsel %vm5069, %v5062, %v5066
    %v5071 = vand.u32 2147483647, %v5060
    %vm5072 = vcmp.eq.f32.partialorder %v5071, 8.507059e+37
    %v5073 = vand.u32 %v5060, 2147483648
    %v5074 = vor.u32 1.1754944e-38, %v5073
    %v5075 = vsel %vm5072, %v5074, %v5070
    %v5076 = vmul.f32 1.0, %v5075
    %v5077 = vrcp.pop %v5061
    %v5078 = vmul.f32 %v5061, %v5077
    %v5079 = vsub.f32 1.0, %v5078
    %v5080 = vmul.f32 %v5077, %v5079
    %v5081 = vadd.f32 %v5077, %v5080
    %vm5082 = vweird.f32 %v5061
    %vm5083 = vweird.f32 %v5077
    %vm5084 = vmor %vm5082, %vm5083
    %v5085 = vsel %vm5084, %v5077, %v5081
    %v5086 = vand.u32 2147483647, %v5061
    %vm5087 = vcmp.eq.f32.partialorder %v5086, 8.507059e+37
    %v5088 = vand.u32 %v5061, 2147483648
    %v5089 = vor.u32 1.1754944e-38, %v5088
    %v5090 = vsel %vm5087, %v5089, %v5085
    %v5091 = vmul.f32 1.0, %v5090
    %v5092 = vtanh.pop %v5052
    %v5093 = vtanh.pop %v5053
    %v5096 = vrot.slane %v4887, 1
    %v5097 = vrot.slane %v4888, 1
    %v5100 = vmul.f32 %v5076, %v5096
    %v5101 = vmul.f32 %v5091, %v5097
    %5104 = vrot.lane.b32.xlu0 %v5092, 64
    %v5105 = vpop.permute.xlu0 %5104
    %5106 = vrot.lane.b32.xlu0 %v5093, 64
    %v5107 = vpop.permute.xlu0 %5106
    %v5110 = vmul.f32 %v5076, %v5105
    %v5111 = vmul.f32 %v5091, %v5107
    %5114 = vrot.lane.b32.xlu0 %v5110, 32
    %v5115 = vpop.permute.xlu0 %5114
    %5116 = vrot.lane.b32.xlu0 %v5111, 32
    %v5117 = vpop.permute.xlu0 %5116
    %v5120 = vadd.f32 %v5100, %v5115
    %v5121 = vadd.f32 %v5101, %v5117
    %v5122 = vtanh.pop %v5120
    %v5123 = vtanh.pop %v5121
    %5126 = vrot.lane.b32.xlu0 %v5122, 64
    %v5127 = vpop.permute.xlu0 %5126
    %5128 = vrot.lane.b32.xlu0 %v5123, 64
    %v5129 = vpop.permute.xlu0 %5128
    %v5132 = vmul.f32 %v5076, %v5127
    %v5133 = vmul.f32 %v5091, %v5129
    %v5134 = vsel %vm197, %v3418, %v3644
    %v5135 = vsel %vm197, %v3419, %v3645
    %v5136 = vsel %vm3162, %v5134, %v3878
    %v5137 = vsel %vm3162, %v5135, %v3879
    %v5138 = vsel %vm3165, %v5136, %v4112
    %v5139 = vsel %vm3165, %v5137, %v4113
    %v5140 = vsel %vm154, %v5138, %v4345
    %v5141 = vsel %vm154, %v5139, %v4346
    %v5142 = vsel %vm3170, %v5140, %v4579
    %v5143 = vsel %vm3170, %v5141, %v4580
    %v5144 = vsel %vm3173, %v5142, %v4813
    %v5145 = vsel %vm3173, %v5143, %v4814
    %v5146 = vsel %vm212, %v5144, %v5046
    %v5147 = vsel %vm212, %v5145, %v5047
    %v5148 = vsel %vm197, %v5132, %v4899
    %v5149 = vsel %vm197, %v5133, %v4900
    %v5150 = vsel %vm3162, %v5148, %v4666
    %v5151 = vsel %vm3162, %v5149, %v4667
    %v5152 = vsel %vm3165, %v5150, %v4432
    %v5153 = vsel %vm3165, %v5151, %v4433
    %v5154 = vsel %vm154, %v5152, %v4199
    %v5155 = vsel %vm154, %v5153, %v4200
    %v5156 = vsel %vm3170, %v5154, %v3965
    %v5157 = vsel %vm3170, %v5155, %v3966
    %v5158 = vsel %vm3173, %v5156, %v3731
    %v5159 = vsel %vm3173, %v5157, %v3732
    %v5160 = vsel %vm212, %v5158, %v3499
    %v5161 = vsel %vm212, %v5159, %v3500
    %5164 = vrot.lane.b32.xlu0 %v5146, 32
    %v5165 = vpop.permute.xlu0 %5164
    %5166 = vrot.lane.b32.xlu0 %v5147, 32
    %v5167 = vpop.permute.xlu0 %5166
    %5172 = vrot.lane.b32.xlu0 %v5160, 64
    %v5173 = vpop.permute.xlu0 %5172
    %5174 = vrot.lane.b32.xlu0 %v5161, 64
    %v5175 = vpop.permute.xlu0 %5174
    %v5178 = vsel %vm224, %v5165, %v5173
    %v5179 = vsel %vm224, %v5167, %v5175
    %v5180 = vld [vmem:[#allocation2] sm:$0xff]
    %v5181 = vld [vmem:[#allocation2 + $0x8] sm:$0xff]
    %v5182 = vld [vmem:[#allocation2 + $0x10] sm:$0xff]
    %v5183 = vld [vmem:[#allocation2 + $0x18] sm:$0xff]
    %v5184 = vld [vmem:[#allocation2 + $0x20] sm:$0xff]
    %v5185 = vld [vmem:[#allocation2 + $0x28] sm:$0xff]
    %v5186 = vld [vmem:[#allocation2 + $0x30] sm:$0xff]
    %v5187 = vld [vmem:[#allocation2 + $0x38] sm:$0xff]
    %v5188 = vld [vmem:[#allocation2 + $0x40] sm:$0xff]
    %v5189 = vld [vmem:[#allocation2 + $0x48] sm:$0xff]
    %v5190 = vld [vmem:[#allocation2 + $0x50] sm:$0xff]
    %v5191 = vld [vmem:[#allocation2 + $0x58] sm:$0xff]
    %v5192 = vld [vmem:[#allocation2 + $0x60] sm:$0xff]
    %v5193 = vld [vmem:[#allocation2 + $0x68] sm:$0xff]
    %v5194 = vld [vmem:[#allocation2 + $0x70] sm:$0xff]
    %v5195 = vld [vmem:[#allocation2 + $0x78] sm:$0xff]
    %v5196 = vld [vmem:[%s16] sm:$0x3]
    %v5197 = vld [vmem:[%s17] sm:$0xff]
    %v5198 = vld [vmem:[%s17 + $0x8] sm:$0xff]
    %v5199 = vld [vmem:[%s17 + $0x10] sm:$0xff]
    %v5200 = vld [vmem:[%s17 + $0x18] sm:$0xff]
    %v5201 = vld [vmem:[%s17 + $0x20] sm:$0xff]
    %v5202 = vld [vmem:[%s17 + $0x28] sm:$0xff]
    %v5203 = vld [vmem:[%s17 + $0x30] sm:$0xff]
    %v5204 = vld [vmem:[%s17 + $0x38] sm:$0xff]
    %v5205 = vld [vmem:[%s18] sm:$0x1]
    %v5207 = vperm.slane %v5196, 0
    %v5208 = vperm.slane %v5196, 1
    %v5212 = vsel %vm425, %v5178, 0
    %v5215 = vsel %vm425, %v5179, 0
    %5217 = vmatpush.msra.mxu0 0.0
    %5218 = vmatpush.msra.mxu0 0.0
    %5219 = vmatpush.msra.mxu0 0.0
    %5220 = vmatpush.msra.mxu0 0.0
    %5221 = vmatpush.msra.mxu0 0.0
    %5222 = vmatpush.msra.mxu0 0.0
    %5223 = vmatpush.msra.mxu0 0.0
    %5224 = vmatpush.msra.mxu0 0.0
    %5225 = vmatpush.msra.mxu0 %v5194
    %5226 = vmatpush.msra.mxu0 %v5192
    %5227 = vmatpush.msra.mxu0 %v5190
    %5228 = vmatpush.msra.mxu0 %v5188
    %5229 = vmatpush.msra.mxu0 %v5186
    %5230 = vmatpush.msra.mxu0 %v5184
    %5231 = vmatpush.msra.mxu0 %v5182
    %5232 = vmatpush.msra.mxu0 %v5180
    %5233 = vmatmul.f32.gmra.mxu0 %v5212
    %v5234 = vpop.f32.mrf.mxu0
    %v5235 = vadd.f32 %v5207, %v5234
    %5236 = vmatmul.f32.gmra.mxu0 %v5215
    %v5237 = vpop.f32.mrf.mxu0
    %v5238 = vadd.f32 %v5207, %v5237
    %5239 = vdwg.mxu0
    %5240 = vmatpush.msra.mxu0 0.0
    %5241 = vmatpush.msra.mxu0 0.0
    %5242 = vmatpush.msra.mxu0 0.0
    %5243 = vmatpush.msra.mxu0 0.0
    %5244 = vmatpush.msra.mxu0 0.0
    %5245 = vmatpush.msra.mxu0 0.0
    %5246 = vmatpush.msra.mxu0 0.0
    %5247 = vmatpush.msra.mxu0 0.0
    %5248 = vmatpush.msra.mxu0 %v5195
    %5249 = vmatpush.msra.mxu0 %v5193
    %5250 = vmatpush.msra.mxu0 %v5191
    %5251 = vmatpush.msra.mxu0 %v5189
    %5252 = vmatpush.msra.mxu0 %v5187
    %5253 = vmatpush.msra.mxu0 %v5185
    %5254 = vmatpush.msra.mxu0 %v5183
    %5255 = vmatpush.msra.mxu0 %v5181
    %5256 = vmatmul.f32.gmra.mxu0 %v5212
    %v5257 = vpop.f32.mrf.mxu0
    %v5258 = vadd.f32 %v5208, %v5257
    %5259 = vmatmul.f32.gmra.mxu0 %v5215
    %v5260 = vpop.f32.mrf.mxu0
    %v5261 = vadd.f32 %v5208, %v5260
    %5262 = vdwg.mxu0
    %v5264 = vperm.slane %v5205, 0
    %v5266 = vadd.f32 %v5264, 0.0
    %5268 = vrot.lane.b32.xlu0 %v5235, 64
    %v5269 = vpop.permute.xlu0 %5268
    %v5270 = vsel %vm485, %v5235, 0
    %v5272 = vsel %vm485, %v5269, 0
    %5274 = vmatpush.xpose.msra.mxu0 0.0
    %5275 = vmatpush.xpose.msra.mxu0 0.0
    %5276 = vmatpush.xpose.msra.mxu0 0.0
    %5277 = vmatpush.xpose.msra.mxu0 0.0
    %5278 = vmatpush.xpose.msra.mxu0 0.0
    %5279 = vmatpush.xpose.msra.mxu0 0.0
    %5280 = vmatpush.xpose.msra.mxu0 0.0
    %5281 = vmatpush.xpose.msra.mxu0 0.0
    %5282 = vmatpush.xpose.msra.mxu0 0.0
    %5283 = vmatpush.xpose.msra.mxu0 0.0
    %5284 = vmatpush.xpose.msra.mxu0 0.0
    %5285 = vmatpush.xpose.msra.mxu0 0.0
    %5286 = vmatpush.xpose.msra.mxu0 0.0
    %5287 = vmatpush.xpose.msra.mxu0 0.0
    %5288 = vmatpush.xpose.msra.mxu0 0.0
    %5289 = vmatpush.xpose.msra.mxu0 %v5272
    %5290 = vmatmul.f32.gmra.mxu0 %v5270
    %v5291 = vpop.f32.mrf.mxu0
    %v5292 = vadd.f32 0.0, %v5291
    %5293 = vdwg.mxu0
    %5295 = vrot.lane.b32.xlu0 %v5238, 64
    %v5296 = vpop.permute.xlu0 %5295
    %v5297 = vsel %vm485, %v5238, 0
    %v5299 = vsel %vm485, %v5296, 0
    %5301 = vmatpush.xpose.msra.mxu0 0.0
    %5302 = vmatpush.xpose.msra.mxu0 0.0
    %5303 = vmatpush.xpose.msra.mxu0 0.0
    %5304 = vmatpush.xpose.msra.mxu0 0.0
    %5305 = vmatpush.xpose.msra.mxu0 0.0
    %5306 = vmatpush.xpose.msra.mxu0 0.0
    %5307 = vmatpush.xpose.msra.mxu0 0.0
    %5308 = vmatpush.xpose.msra.mxu0 0.0
    %5309 = vmatpush.xpose.msra.mxu0 0.0
    %5310 = vmatpush.xpose.msra.mxu0 0.0
    %5311 = vmatpush.xpose.msra.mxu0 0.0
    %5312 = vmatpush.xpose.msra.mxu0 0.0
    %5313 = vmatpush.xpose.msra.mxu0 0.0
    %5314 = vmatpush.xpose.msra.mxu0 0.0
    %5315 = vmatpush.xpose.msra.mxu0 0.0
    %5316 = vmatpush.xpose.msra.mxu0 %v5299
    %5317 = vmatmul.f32.gmra.mxu0 %v5297
    %v5318 = vpop.f32.mrf.mxu0
    %v5319 = vadd.f32 0.0, %v5318
    %5320 = vdwg.mxu0
    %v5321 = vsel %vm537, %v5292, -inf
    %5322 = vmax.xlane.f32.xlu0 %v5321
    %v5323 = vpop.xlane.xlu0 %5322
    %v5324 = vsel %vm537, %v5319, -inf
    %5325 = vmax.xlane.f32.xlu0 %v5324
    %v5326 = vpop.xlane.xlu0 %5325
    %v5327 = vsub.f32 %v5292, %v5323
    %v5328 = vsub.f32 %v5319, %v5326
    %v5329 = vmul.f32 %v5327, 1.442695
    %v5330 = vpow.pop %v5329
    %v5331 = vmul.f32 %v5328, 1.442695
    %v5332 = vpow.pop %v5331
    %v5333 = vsel %vm537, %v5330, 0.0
    %5334 = vadd.xlane.f32.xlu0 %v5333
    %v5335 = vpop.xlane.xlu0 %5334
    %v5336 = vsel %vm537, %v5332, 0.0
    %5337 = vadd.xlane.f32.xlu0 %v5336
    %v5338 = vpop.xlane.xlu0 %5337
    %v5339 = vrcp.pop %v5335
    %v5340 = vmul.f32 %v5335, %v5339
    %v5341 = vsub.f32 1.0, %v5340
    %v5342 = vmul.f32 %v5339, %v5341
    %v5343 = vadd.f32 %v5339, %v5342
    %vm5344 = vweird.f32 %v5335
    %vm5345 = vweird.f32 %v5339
    %vm5346 = vmor %vm5344, %vm5345
    %v5347 = vsel %vm5346, %v5339, %v5343
    %v5348 = vand.u32 2147483647, %v5335
    %vm5349 = vcmp.eq.f32.partialorder %v5348, 8.507059e+37
    %v5350 = vand.u32 %v5335, 2147483648
    %v5351 = vor.u32 1.1754944e-38, %v5350
    %v5352 = vsel %vm5349, %v5351, %v5347
    %v5353 = vmul.f32 %v5330, %v5352
    %v5354 = vrcp.pop %v5338
    %v5355 = vmul.f32 %v5338, %v5354
    %v5356 = vsub.f32 1.0, %v5355
    %v5357 = vmul.f32 %v5354, %v5356
    %v5358 = vadd.f32 %v5354, %v5357
    %vm5359 = vweird.f32 %v5338
    %vm5360 = vweird.f32 %v5354
    %vm5361 = vmor %vm5359, %vm5360
    %v5362 = vsel %vm5361, %v5354, %v5358
    %v5363 = vand.u32 2147483647, %v5338
    %vm5364 = vcmp.eq.f32.partialorder %v5363, 8.507059e+37
    %v5365 = vand.u32 %v5338, 2147483648
    %v5366 = vor.u32 1.1754944e-38, %v5365
    %v5367 = vsel %vm5364, %v5366, %v5362
    %v5368 = vmul.f32 %v5332, %v5367
    %v5370 = vsel %vm537, %v5353, 0
    %5372 = vmatpush.msra.mxu0 0.0
    %5373 = vmatpush.msra.mxu0 0.0
    %5374 = vmatpush.msra.mxu0 0.0
    %5375 = vmatpush.msra.mxu0 0.0
    %5376 = vmatpush.msra.mxu0 0.0
    %5377 = vmatpush.msra.mxu0 0.0
    %5378 = vmatpush.msra.mxu0 0.0
    %5379 = vmatpush.msra.mxu0 0.0
    %5380 = vmatpush.msra.mxu0 0.0
    %5381 = vmatpush.msra.mxu0 0.0
    %5382 = vmatpush.msra.mxu0 0.0
    %5383 = vmatpush.msra.mxu0 0.0
    %5384 = vmatpush.msra.mxu0 0.0
    %5385 = vmatpush.msra.mxu0 0.0
    %5386 = vmatpush.msra.mxu0 0.0
    %5387 = vmatpush.msra.mxu0 %v5258
    %5388 = vmatmul.f32.gmra.mxu0 %v5370
    %v5389 = vpop.f32.mrf.mxu0
    %v5390 = vadd.f32 0.0, %v5389
    %5391 = vdwg.mxu0
    %v5393 = vsel %vm537, %v5368, 0
    %5395 = vmatpush.msra.mxu0 0.0
    %5396 = vmatpush.msra.mxu0 0.0
    %5397 = vmatpush.msra.mxu0 0.0
    %5398 = vmatpush.msra.mxu0 0.0
    %5399 = vmatpush.msra.mxu0 0.0
    %5400 = vmatpush.msra.mxu0 0.0
    %5401 = vmatpush.msra.mxu0 0.0
    %5402 = vmatpush.msra.mxu0 0.0
    %5403 = vmatpush.msra.mxu0 0.0
    %5404 = vmatpush.msra.mxu0 0.0
    %5405 = vmatpush.msra.mxu0 0.0
    %5406 = vmatpush.msra.mxu0 0.0
    %5407 = vmatpush.msra.mxu0 0.0
    %5408 = vmatpush.msra.mxu0 0.0
    %5409 = vmatpush.msra.mxu0 0.0
    %5410 = vmatpush.msra.mxu0 %v5261
    %5411 = vmatmul.f32.gmra.mxu0 %v5393
    %v5412 = vpop.f32.mrf.mxu0
    %v5413 = vadd.f32 0.0, %v5412
    %5414 = vdwg.mxu0
    %v5416 = vsel %vm485, %v5390, 0
    %v5419 = vsel %vm485, %v5413, 0
    %5421 = vmatpush.msra.mxu0 0.0
    %5422 = vmatpush.msra.mxu0 0.0
    %5423 = vmatpush.msra.mxu0 0.0
    %5424 = vmatpush.msra.mxu0 0.0
    %5425 = vmatpush.msra.mxu0 0.0
    %5426 = vmatpush.msra.mxu0 0.0
    %5427 = vmatpush.msra.mxu0 0.0
    %5428 = vmatpush.msra.mxu0 0.0
    %5429 = vmatpush.msra.mxu0 0.0
    %5430 = vmatpush.msra.mxu0 0.0
    %5431 = vmatpush.msra.mxu0 0.0
    %5432 = vmatpush.msra.mxu0 0.0
    %5433 = vmatpush.msra.mxu0 0.0
    %5434 = vmatpush.msra.mxu0 0.0
    %5435 = vmatpush.msra.mxu0 %v5198
    %5436 = vmatpush.msra.mxu0 %v5197
    %5437 = vmatmul.f32.gmra.mxu0 %v5416
    %v5438 = vpop.f32.mrf.mxu0
    %v5439 = vadd.f32 0.0, %v5438
    %5440 = vmatmul.f32.gmra.mxu0 %v5419
    %v5441 = vpop.f32.mrf.mxu0
    %v5442 = vadd.f32 0.0, %v5441
    %5443 = vdwg.mxu0
    %v5444 = vadd.f32 %v5266, %v5439
    %v5445 = vadd.f32 %v5266, %v5442
    %5446 = vrot.lane.b32.xlu0 %v5235, 112
    %v5447 = vpop.permute.xlu0 %5446
    %5448 = vrot.lane.b32.xlu0 %v5235, 48
    %v5449 = vpop.permute.xlu0 %5448
    %v5450 = vsel %vm485, %v5447, 0
    %v5452 = vsel %vm485, %v5449, 0
    %5454 = vmatpush.xpose.msra.mxu0 0.0
    %5455 = vmatpush.xpose.msra.mxu0 0.0
    %5456 = vmatpush.xpose.msra.mxu0 0.0
    %5457 = vmatpush.xpose.msra.mxu0 0.0
    %5458 = vmatpush.xpose.msra.mxu0 0.0
    %5459 = vmatpush.xpose.msra.mxu0 0.0
    %5460 = vmatpush.xpose.msra.mxu0 0.0
    %5461 = vmatpush.xpose.msra.mxu0 0.0
    %5462 = vmatpush.xpose.msra.mxu0 0.0
    %5463 = vmatpush.xpose.msra.mxu0 0.0
    %5464 = vmatpush.xpose.msra.mxu0 0.0
    %5465 = vmatpush.xpose.msra.mxu0 0.0
    %5466 = vmatpush.xpose.msra.mxu0 0.0
    %5467 = vmatpush.xpose.msra.mxu0 0.0
    %5468 = vmatpush.xpose.msra.mxu0 0.0
    %5469 = vmatpush.xpose.msra.mxu0 %v5452
    %5470 = vmatmul.f32.gmra.mxu0 %v5450
    %v5471 = vpop.f32.mrf.mxu0
    %v5472 = vadd.f32 0.0, %v5471
    %5473 = vdwg.mxu0
    %5474 = vrot.lane.b32.xlu0 %v5238, 112
    %v5475 = vpop.permute.xlu0 %5474
    %5476 = vrot.lane.b32.xlu0 %v5238, 48
    %v5477 = vpop.permute.xlu0 %5476
    %v5478 = vsel %vm485, %v5475, 0
    %v5480 = vsel %vm485, %v5477, 0
    %5482 = vmatpush.xpose.msra.mxu0 0.0
    %5483 = vmatpush.xpose.msra.mxu0 0.0
    %5484 = vmatpush.xpose.msra.mxu0 0.0
    %5485 = vmatpush.xpose.msra.mxu0 0.0
    %5486 = vmatpush.xpose.msra.mxu0 0.0
    %5487 = vmatpush.xpose.msra.mxu0 0.0
    %5488 = vmatpush.xpose.msra.mxu0 0.0
    %5489 = vmatpush.xpose.msra.mxu0 0.0
    %5490 = vmatpush.xpose.msra.mxu0 0.0
    %5491 = vmatpush.xpose.msra.mxu0 0.0
    %5492 = vmatpush.xpose.msra.mxu0 0.0
    %5493 = vmatpush.xpose.msra.mxu0 0.0
    %5494 = vmatpush.xpose.msra.mxu0 0.0
    %5495 = vmatpush.xpose.msra.mxu0 0.0
    %5496 = vmatpush.xpose.msra.mxu0 0.0
    %5497 = vmatpush.xpose.msra.mxu0 %v5480
    %5498 = vmatmul.f32.gmra.mxu0 %v5478
    %v5499 = vpop.f32.mrf.mxu0
    %v5500 = vadd.f32 0.0, %v5499
    %5501 = vdwg.mxu0
    %v5502 = vsel %vm537, %v5472, -inf
    %5503 = vmax.xlane.f32.xlu0 %v5502
    %v5504 = vpop.xlane.xlu0 %5503
    %v5505 = vsel %vm537, %v5500, -inf
    %5506 = vmax.xlane.f32.xlu0 %v5505
    %v5507 = vpop.xlane.xlu0 %5506
    %v5508 = vsub.f32 %v5472, %v5504
    %v5509 = vsub.f32 %v5500, %v5507
    %v5510 = vmul.f32 %v5508, 1.442695
    %v5511 = vpow.pop %v5510
    %v5512 = vmul.f32 %v5509, 1.442695
    %v5513 = vpow.pop %v5512
    %v5514 = vsel %vm537, %v5511, 0.0
    %5515 = vadd.xlane.f32.xlu0 %v5514
    %v5516 = vpop.xlane.xlu0 %5515
    %v5517 = vsel %vm537, %v5513, 0.0
    %5518 = vadd.xlane.f32.xlu0 %v5517
    %v5519 = vpop.xlane.xlu0 %5518
    %v5520 = vrcp.pop %v5516
    %v5521 = vmul.f32 %v5516, %v5520
    %v5522 = vsub.f32 1.0, %v5521
    %v5523 = vmul.f32 %v5520, %v5522
    %v5524 = vadd.f32 %v5520, %v5523
    %vm5525 = vweird.f32 %v5516
    %vm5526 = vweird.f32 %v5520
    %vm5527 = vmor %vm5525, %vm5526
    %v5528 = vsel %vm5527, %v5520, %v5524
    %v5529 = vand.u32 2147483647, %v5516
    %vm5530 = vcmp.eq.f32.partialorder %v5529, 8.507059e+37
    %v5531 = vand.u32 %v5516, 2147483648
    %v5532 = vor.u32 1.1754944e-38, %v5531
    %v5533 = vsel %vm5530, %v5532, %v5528
    %v5534 = vmul.f32 %v5511, %v5533
    %v5535 = vrcp.pop %v5519
    %v5536 = vmul.f32 %v5519, %v5535
    %v5537 = vsub.f32 1.0, %v5536
    %v5538 = vmul.f32 %v5535, %v5537
    %v5539 = vadd.f32 %v5535, %v5538
    %vm5540 = vweird.f32 %v5519
    %vm5541 = vweird.f32 %v5535
    %vm5542 = vmor %vm5540, %vm5541
    %v5543 = vsel %vm5542, %v5535, %v5539
    %v5544 = vand.u32 2147483647, %v5519
    %vm5545 = vcmp.eq.f32.partialorder %v5544, 8.507059e+37
    %v5546 = vand.u32 %v5519, 2147483648
    %v5547 = vor.u32 1.1754944e-38, %v5546
    %v5548 = vsel %vm5545, %v5547, %v5543
    %v5549 = vmul.f32 %v5513, %v5548
    %5551 = vrot.lane.b32.xlu0 %v5258, 112
    %v5552 = vpop.permute.xlu0 %5551
    %v5555 = vsel %vm537, %v5534, 0
    %5557 = vmatpush.msra.mxu0 0.0
    %5558 = vmatpush.msra.mxu0 0.0
    %5559 = vmatpush.msra.mxu0 0.0
    %5560 = vmatpush.msra.mxu0 0.0
    %5561 = vmatpush.msra.mxu0 0.0
    %5562 = vmatpush.msra.mxu0 0.0
    %5563 = vmatpush.msra.mxu0 0.0
    %5564 = vmatpush.msra.mxu0 0.0
    %5565 = vmatpush.msra.mxu0 0.0
    %5566 = vmatpush.msra.mxu0 0.0
    %5567 = vmatpush.msra.mxu0 0.0
    %5568 = vmatpush.msra.mxu0 0.0
    %5569 = vmatpush.msra.mxu0 0.0
    %5570 = vmatpush.msra.mxu0 0.0
    %5571 = vmatpush.msra.mxu0 0.0
    %5572 = vmatpush.msra.mxu0 %v5552
    %5573 = vmatmul.f32.gmra.mxu0 %v5555
    %v5574 = vpop.f32.mrf.mxu0
    %v5575 = vadd.f32 0.0, %v5574
    %5576 = vdwg.mxu0
    %5578 = vrot.lane.b32.xlu0 %v5261, 112
    %v5579 = vpop.permute.xlu0 %5578
    %v5582 = vsel %vm537, %v5549, 0
    %5584 = vmatpush.msra.mxu0 0.0
    %5585 = vmatpush.msra.mxu0 0.0
    %5586 = vmatpush.msra.mxu0 0.0
    %5587 = vmatpush.msra.mxu0 0.0
    %5588 = vmatpush.msra.mxu0 0.0
    %5589 = vmatpush.msra.mxu0 0.0
    %5590 = vmatpush.msra.mxu0 0.0
    %5591 = vmatpush.msra.mxu0 0.0
    %5592 = vmatpush.msra.mxu0 0.0
    %5593 = vmatpush.msra.mxu0 0.0
    %5594 = vmatpush.msra.mxu0 0.0
    %5595 = vmatpush.msra.mxu0 0.0
    %5596 = vmatpush.msra.mxu0 0.0
    %5597 = vmatpush.msra.mxu0 0.0
    %5598 = vmatpush.msra.mxu0 0.0
    %5599 = vmatpush.msra.mxu0 %v5579
    %5600 = vmatmul.f32.gmra.mxu0 %v5582
    %v5601 = vpop.f32.mrf.mxu0
    %v5602 = vadd.f32 0.0, %v5601
    %5603 = vdwg.mxu0
    %v5605 = vsel %vm485, %v5575, 0
    %v5608 = vsel %vm485, %v5602, 0
    %5610 = vmatpush.msra.mxu0 0.0
    %5611 = vmatpush.msra.mxu0 0.0
    %5612 = vmatpush.msra.mxu0 0.0
    %5613 = vmatpush.msra.mxu0 0.0
    %5614 = vmatpush.msra.mxu0 0.0
    %5615 = vmatpush.msra.mxu0 0.0
    %5616 = vmatpush.msra.mxu0 0.0
    %5617 = vmatpush.msra.mxu0 0.0
    %5618 = vmatpush.msra.mxu0 0.0
    %5619 = vmatpush.msra.mxu0 0.0
    %5620 = vmatpush.msra.mxu0 0.0
    %5621 = vmatpush.msra.mxu0 0.0
    %5622 = vmatpush.msra.mxu0 0.0
    %5623 = vmatpush.msra.mxu0 0.0
    %5624 = vmatpush.msra.mxu0 %v5200
    %5625 = vmatpush.msra.mxu0 %v5199
    %5626 = vmatmul.f32.gmra.mxu0 %v5605
    %v5627 = vpop.f32.mrf.mxu0
    %v5628 = vadd.f32 0.0, %v5627
    %5629 = vmatmul.f32.gmra.mxu0 %v5608
    %v5630 = vpop.f32.mrf.mxu0
    %v5631 = vadd.f32 0.0, %v5630
    %5632 = vdwg.mxu0
    %v5633 = vadd.f32 %v5444, %v5628
    %v5634 = vadd.f32 %v5445, %v5631
    %5635 = vrot.lane.b32.xlu0 %v5235, 96
    %v5636 = vpop.permute.xlu0 %5635
    %5637 = vrot.lane.b32.xlu0 %v5235, 32
    %v5638 = vpop.permute.xlu0 %5637
    %v5639 = vsel %vm485, %v5636, 0
    %v5641 = vsel %vm485, %v5638, 0
    %5643 = vmatpush.xpose.msra.mxu0 0.0
    %5644 = vmatpush.xpose.msra.mxu0 0.0
    %5645 = vmatpush.xpose.msra.mxu0 0.0
    %5646 = vmatpush.xpose.msra.mxu0 0.0
    %5647 = vmatpush.xpose.msra.mxu0 0.0
    %5648 = vmatpush.xpose.msra.mxu0 0.0
    %5649 = vmatpush.xpose.msra.mxu0 0.0
    %5650 = vmatpush.xpose.msra.mxu0 0.0
    %5651 = vmatpush.xpose.msra.mxu0 0.0
    %5652 = vmatpush.xpose.msra.mxu0 0.0
    %5653 = vmatpush.xpose.msra.mxu0 0.0
    %5654 = vmatpush.xpose.msra.mxu0 0.0
    %5655 = vmatpush.xpose.msra.mxu0 0.0
    %5656 = vmatpush.xpose.msra.mxu0 0.0
    %5657 = vmatpush.xpose.msra.mxu0 0.0
    %5658 = vmatpush.xpose.msra.mxu0 %v5641
    %5659 = vmatmul.f32.gmra.mxu0 %v5639
    %v5660 = vpop.f32.mrf.mxu0
    %v5661 = vadd.f32 0.0, %v5660
    %5662 = vdwg.mxu0
    %5663 = vrot.lane.b32.xlu0 %v5238, 96
    %v5664 = vpop.permute.xlu0 %5663
    %5665 = vrot.lane.b32.xlu0 %v5238, 32
    %v5666 = vpop.permute.xlu0 %5665
    %v5667 = vsel %vm485, %v5664, 0
    %v5669 = vsel %vm485, %v5666, 0
    %5671 = vmatpush.xpose.msra.mxu0 0.0
    %5672 = vmatpush.xpose.msra.mxu0 0.0
    %5673 = vmatpush.xpose.msra.mxu0 0.0
    %5674 = vmatpush.xpose.msra.mxu0 0.0
    %5675 = vmatpush.xpose.msra.mxu0 0.0
    %5676 = vmatpush.xpose.msra.mxu0 0.0
    %5677 = vmatpush.xpose.msra.mxu0 0.0
    %5678 = vmatpush.xpose.msra.mxu0 0.0
    %5679 = vmatpush.xpose.msra.mxu0 0.0
    %5680 = vmatpush.xpose.msra.mxu0 0.0
    %5681 = vmatpush.xpose.msra.mxu0 0.0
    %5682 = vmatpush.xpose.msra.mxu0 0.0
    %5683 = vmatpush.xpose.msra.mxu0 0.0
    %5684 = vmatpush.xpose.msra.mxu0 0.0
    %5685 = vmatpush.xpose.msra.mxu0 0.0
    %5686 = vmatpush.xpose.msra.mxu0 %v5669
    %5687 = vmatmul.f32.gmra.mxu0 %v5667
    %v5688 = vpop.f32.mrf.mxu0
    %v5689 = vadd.f32 0.0, %v5688
    %5690 = vdwg.mxu0
    %v5691 = vsel %vm537, %v5661, -inf
    %5692 = vmax.xlane.f32.xlu0 %v5691
    %v5693 = vpop.xlane.xlu0 %5692
    %v5694 = vsel %vm537, %v5689, -inf
    %5695 = vmax.xlane.f32.xlu0 %v5694
    %v5696 = vpop.xlane.xlu0 %5695
    %v5697 = vsub.f32 %v5661, %v5693
    %v5698 = vsub.f32 %v5689, %v5696
    %v5699 = vmul.f32 %v5697, 1.442695
    %v5700 = vpow.pop %v5699
    %v5701 = vmul.f32 %v5698, 1.442695
    %v5702 = vpow.pop %v5701
    %v5703 = vsel %vm537, %v5700, 0.0
    %5704 = vadd.xlane.f32.xlu0 %v5703
    %v5705 = vpop.xlane.xlu0 %5704
    %v5706 = vsel %vm537, %v5702, 0.0
    %5707 = vadd.xlane.f32.xlu0 %v5706
    %v5708 = vpop.xlane.xlu0 %5707
    %v5709 = vrcp.pop %v5705
    %v5710 = vmul.f32 %v5705, %v5709
    %v5711 = vsub.f32 1.0, %v5710
    %v5712 = vmul.f32 %v5709, %v5711
    %v5713 = vadd.f32 %v5709, %v5712
    %vm5714 = vweird.f32 %v5705
    %vm5715 = vweird.f32 %v5709
    %vm5716 = vmor %vm5714, %vm5715
    %v5717 = vsel %vm5716, %v5709, %v5713
    %v5718 = vand.u32 2147483647, %v5705
    %vm5719 = vcmp.eq.f32.partialorder %v5718, 8.507059e+37
    %v5720 = vand.u32 %v5705, 2147483648
    %v5721 = vor.u32 1.1754944e-38, %v5720
    %v5722 = vsel %vm5719, %v5721, %v5717
    %v5723 = vmul.f32 %v5700, %v5722
    %v5724 = vrcp.pop %v5708
    %v5725 = vmul.f32 %v5708, %v5724
    %v5726 = vsub.f32 1.0, %v5725
    %v5727 = vmul.f32 %v5724, %v5726
    %v5728 = vadd.f32 %v5724, %v5727
    %vm5729 = vweird.f32 %v5708
    %vm5730 = vweird.f32 %v5724
    %vm5731 = vmor %vm5729, %vm5730
    %v5732 = vsel %vm5731, %v5724, %v5728
    %v5733 = vand.u32 2147483647, %v5708
    %vm5734 = vcmp.eq.f32.partialorder %v5733, 8.507059e+37
    %v5735 = vand.u32 %v5708, 2147483648
    %v5736 = vor.u32 1.1754944e-38, %v5735
    %v5737 = vsel %vm5734, %v5736, %v5732
    %v5738 = vmul.f32 %v5702, %v5737
    %5739 = vrot.lane.b32.xlu0 %v5258, 96
    %v5740 = vpop.permute.xlu0 %5739
    %v5743 = vsel %vm537, %v5723, 0
    %5745 = vmatpush.msra.mxu0 0.0
    %5746 = vmatpush.msra.mxu0 0.0
    %5747 = vmatpush.msra.mxu0 0.0
    %5748 = vmatpush.msra.mxu0 0.0
    %5749 = vmatpush.msra.mxu0 0.0
    %5750 = vmatpush.msra.mxu0 0.0
    %5751 = vmatpush.msra.mxu0 0.0
    %5752 = vmatpush.msra.mxu0 0.0
    %5753 = vmatpush.msra.mxu0 0.0
    %5754 = vmatpush.msra.mxu0 0.0
    %5755 = vmatpush.msra.mxu0 0.0
    %5756 = vmatpush.msra.mxu0 0.0
    %5757 = vmatpush.msra.mxu0 0.0
    %5758 = vmatpush.msra.mxu0 0.0
    %5759 = vmatpush.msra.mxu0 0.0
    %5760 = vmatpush.msra.mxu0 %v5740
    %5761 = vmatmul.f32.gmra.mxu0 %v5743
    %v5762 = vpop.f32.mrf.mxu0
    %v5763 = vadd.f32 0.0, %v5762
    %5764 = vdwg.mxu0
    %5765 = vrot.lane.b32.xlu0 %v5261, 96
    %v5766 = vpop.permute.xlu0 %5765
    %v5769 = vsel %vm537, %v5738, 0
    %5771 = vmatpush.msra.mxu0 0.0
    %5772 = vmatpush.msra.mxu0 0.0
    %5773 = vmatpush.msra.mxu0 0.0
    %5774 = vmatpush.msra.mxu0 0.0
    %5775 = vmatpush.msra.mxu0 0.0
    %5776 = vmatpush.msra.mxu0 0.0
    %5777 = vmatpush.msra.mxu0 0.0
    %5778 = vmatpush.msra.mxu0 0.0
    %5779 = vmatpush.msra.mxu0 0.0
    %5780 = vmatpush.msra.mxu0 0.0
    %5781 = vmatpush.msra.mxu0 0.0
    %5782 = vmatpush.msra.mxu0 0.0
    %5783 = vmatpush.msra.mxu0 0.0
    %5784 = vmatpush.msra.mxu0 0.0
    %5785 = vmatpush.msra.mxu0 0.0
    %5786 = vmatpush.msra.mxu0 %v5766
    %5787 = vmatmul.f32.gmra.mxu0 %v5769
    %v5788 = vpop.f32.mrf.mxu0
    %v5789 = vadd.f32 0.0, %v5788
    %5790 = vdwg.mxu0
    %v5792 = vsel %vm485, %v5763, 0
    %v5795 = vsel %vm485, %v5789, 0
    %5797 = vmatpush.msra.mxu0 0.0
    %5798 = vmatpush.msra.mxu0 0.0
    %5799 = vmatpush.msra.mxu0 0.0
    %5800 = vmatpush.msra.mxu0 0.0
    %5801 = vmatpush.msra.mxu0 0.0
    %5802 = vmatpush.msra.mxu0 0.0
    %5803 = vmatpush.msra.mxu0 0.0
    %5804 = vmatpush.msra.mxu0 0.0
    %5805 = vmatpush.msra.mxu0 0.0
    %5806 = vmatpush.msra.mxu0 0.0
    %5807 = vmatpush.msra.mxu0 0.0
    %5808 = vmatpush.msra.mxu0 0.0
    %5809 = vmatpush.msra.mxu0 0.0
    %5810 = vmatpush.msra.mxu0 0.0
    %5811 = vmatpush.msra.mxu0 %v5202
    %5812 = vmatpush.msra.mxu0 %v5201
    %5813 = vmatmul.f32.gmra.mxu0 %v5792
    %v5814 = vpop.f32.mrf.mxu0
    %v5815 = vadd.f32 0.0, %v5814
    %5816 = vmatmul.f32.gmra.mxu0 %v5795
    %v5817 = vpop.f32.mrf.mxu0
    %v5818 = vadd.f32 0.0, %v5817
    %5819 = vdwg.mxu0
    %v5820 = vadd.f32 %v5633, %v5815
    %v5821 = vadd.f32 %v5634, %v5818
    %5822 = vrot.lane.b32.xlu0 %v5235, 80
    %v5823 = vpop.permute.xlu0 %5822
    %5824 = vrot.lane.b32.xlu0 %v5235, 16
    %v5825 = vpop.permute.xlu0 %5824
    %v5826 = vsel %vm485, %v5823, 0
    %v5828 = vsel %vm485, %v5825, 0
    %5830 = vmatpush.xpose.msra.mxu0 0.0
    %5831 = vmatpush.xpose.msra.mxu0 0.0
    %5832 = vmatpush.xpose.msra.mxu0 0.0
    %5833 = vmatpush.xpose.msra.mxu0 0.0
    %5834 = vmatpush.xpose.msra.mxu0 0.0
    %5835 = vmatpush.xpose.msra.mxu0 0.0
    %5836 = vmatpush.xpose.msra.mxu0 0.0
    %5837 = vmatpush.xpose.msra.mxu0 0.0
    %5838 = vmatpush.xpose.msra.mxu0 0.0
    %5839 = vmatpush.xpose.msra.mxu0 0.0
    %5840 = vmatpush.xpose.msra.mxu0 0.0
    %5841 = vmatpush.xpose.msra.mxu0 0.0
    %5842 = vmatpush.xpose.msra.mxu0 0.0
    %5843 = vmatpush.xpose.msra.mxu0 0.0
    %5844 = vmatpush.xpose.msra.mxu0 0.0
    %5845 = vmatpush.xpose.msra.mxu0 %v5828
    %5846 = vmatmul.f32.gmra.mxu0 %v5826
    %v5847 = vpop.f32.mrf.mxu0
    %v5848 = vadd.f32 0.0, %v5847
    %5849 = vdwg.mxu0
    %5850 = vrot.lane.b32.xlu0 %v5238, 80
    %v5851 = vpop.permute.xlu0 %5850
    %5852 = vrot.lane.b32.xlu0 %v5238, 16
    %v5853 = vpop.permute.xlu0 %5852
    %v5854 = vsel %vm485, %v5851, 0
    %v5856 = vsel %vm485, %v5853, 0
    %5858 = vmatpush.xpose.msra.mxu0 0.0
    %5859 = vmatpush.xpose.msra.mxu0 0.0
    %5860 = vmatpush.xpose.msra.mxu0 0.0
    %5861 = vmatpush.xpose.msra.mxu0 0.0
    %5862 = vmatpush.xpose.msra.mxu0 0.0
    %5863 = vmatpush.xpose.msra.mxu0 0.0
    %5864 = vmatpush.xpose.msra.mxu0 0.0
    %5865 = vmatpush.xpose.msra.mxu0 0.0
    %5866 = vmatpush.xpose.msra.mxu0 0.0
    %5867 = vmatpush.xpose.msra.mxu0 0.0
    %5868 = vmatpush.xpose.msra.mxu0 0.0
    %5869 = vmatpush.xpose.msra.mxu0 0.0
    %5870 = vmatpush.xpose.msra.mxu0 0.0
    %5871 = vmatpush.xpose.msra.mxu0 0.0
    %5872 = vmatpush.xpose.msra.mxu0 0.0
    %5873 = vmatpush.xpose.msra.mxu0 %v5856
    %5874 = vmatmul.f32.gmra.mxu0 %v5854
    %v5875 = vpop.f32.mrf.mxu0
    %v5876 = vadd.f32 0.0, %v5875
    %5877 = vdwg.mxu0
    %v5878 = vsel %vm537, %v5848, -inf
    %5879 = vmax.xlane.f32.xlu0 %v5878
    %v5880 = vpop.xlane.xlu0 %5879
    %v5881 = vsel %vm537, %v5876, -inf
    %5882 = vmax.xlane.f32.xlu0 %v5881
    %v5883 = vpop.xlane.xlu0 %5882
    %v5884 = vsub.f32 %v5848, %v5880
    %v5885 = vsub.f32 %v5876, %v5883
    %v5886 = vmul.f32 %v5884, 1.442695
    %v5887 = vpow.pop %v5886
    %v5888 = vmul.f32 %v5885, 1.442695
    %v5889 = vpow.pop %v5888
    %v5890 = vsel %vm537, %v5887, 0.0
    %5891 = vadd.xlane.f32.xlu0 %v5890
    %v5892 = vpop.xlane.xlu0 %5891
    %v5893 = vsel %vm537, %v5889, 0.0
    %5894 = vadd.xlane.f32.xlu0 %v5893
    %v5895 = vpop.xlane.xlu0 %5894
    %v5896 = vrcp.pop %v5892
    %v5897 = vmul.f32 %v5892, %v5896
    %v5898 = vsub.f32 1.0, %v5897
    %v5899 = vmul.f32 %v5896, %v5898
    %v5900 = vadd.f32 %v5896, %v5899
    %vm5901 = vweird.f32 %v5892
    %vm5902 = vweird.f32 %v5896
    %vm5903 = vmor %vm5901, %vm5902
    %v5904 = vsel %vm5903, %v5896, %v5900
    %v5905 = vand.u32 2147483647, %v5892
    %vm5906 = vcmp.eq.f32.partialorder %v5905, 8.507059e+37
    %v5907 = vand.u32 %v5892, 2147483648
    %v5908 = vor.u32 1.1754944e-38, %v5907
    %v5909 = vsel %vm5906, %v5908, %v5904
    %v5910 = vmul.f32 %v5887, %v5909
    %v5911 = vrcp.pop %v5895
    %v5912 = vmul.f32 %v5895, %v5911
    %v5913 = vsub.f32 1.0, %v5912
    %v5914 = vmul.f32 %v5911, %v5913
    %v5915 = vadd.f32 %v5911, %v5914
    %vm5916 = vweird.f32 %v5895
    %vm5917 = vweird.f32 %v5911
    %vm5918 = vmor %vm5916, %vm5917
    %v5919 = vsel %vm5918, %v5911, %v5915
    %v5920 = vand.u32 2147483647, %v5895
    %vm5921 = vcmp.eq.f32.partialorder %v5920, 8.507059e+37
    %v5922 = vand.u32 %v5895, 2147483648
    %v5923 = vor.u32 1.1754944e-38, %v5922
    %v5924 = vsel %vm5921, %v5923, %v5919
    %v5925 = vmul.f32 %v5889, %v5924
    %5926 = vrot.lane.b32.xlu0 %v5258, 80
    %v5927 = vpop.permute.xlu0 %5926
    %v5930 = vsel %vm537, %v5910, 0
    %5932 = vmatpush.msra.mxu0 0.0
    %5933 = vmatpush.msra.mxu0 0.0
    %5934 = vmatpush.msra.mxu0 0.0
    %5935 = vmatpush.msra.mxu0 0.0
    %5936 = vmatpush.msra.mxu0 0.0
    %5937 = vmatpush.msra.mxu0 0.0
    %5938 = vmatpush.msra.mxu0 0.0
    %5939 = vmatpush.msra.mxu0 0.0
    %5940 = vmatpush.msra.mxu0 0.0
    %5941 = vmatpush.msra.mxu0 0.0
    %5942 = vmatpush.msra.mxu0 0.0
    %5943 = vmatpush.msra.mxu0 0.0
    %5944 = vmatpush.msra.mxu0 0.0
    %5945 = vmatpush.msra.mxu0 0.0
    %5946 = vmatpush.msra.mxu0 0.0
    %5947 = vmatpush.msra.mxu0 %v5927
    %5948 = vmatmul.f32.gmra.mxu0 %v5930
    %v5949 = vpop.f32.mrf.mxu0
    %v5950 = vadd.f32 0.0, %v5949
    %5951 = vdwg.mxu0
    %5952 = vrot.lane.b32.xlu0 %v5261, 80
    %v5953 = vpop.permute.xlu0 %5952
    %v5956 = vsel %vm537, %v5925, 0
    %5958 = vmatpush.msra.mxu0 0.0
    %5959 = vmatpush.msra.mxu0 0.0
    %5960 = vmatpush.msra.mxu0 0.0
    %5961 = vmatpush.msra.mxu0 0.0
    %5962 = vmatpush.msra.mxu0 0.0
    %5963 = vmatpush.msra.mxu0 0.0
    %5964 = vmatpush.msra.mxu0 0.0
    %5965 = vmatpush.msra.mxu0 0.0
    %5966 = vmatpush.msra.mxu0 0.0
    %5967 = vmatpush.msra.mxu0 0.0
    %5968 = vmatpush.msra.mxu0 0.0
    %5969 = vmatpush.msra.mxu0 0.0
    %5970 = vmatpush.msra.mxu0 0.0
    %5971 = vmatpush.msra.mxu0 0.0
    %5972 = vmatpush.msra.mxu0 0.0
    %5973 = vmatpush.msra.mxu0 %v5953
    %5974 = vmatmul.f32.gmra.mxu0 %v5956
    %v5975 = vpop.f32.mrf.mxu0
    %v5976 = vadd.f32 0.0, %v5975
    %5977 = vdwg.mxu0
    %v5979 = vsel %vm485, %v5950, 0
    %v5982 = vsel %vm485, %v5976, 0
    %5984 = vmatpush.msra.mxu0 0.0
    %5985 = vmatpush.msra.mxu0 0.0
    %5986 = vmatpush.msra.mxu0 0.0
    %5987 = vmatpush.msra.mxu0 0.0
    %5988 = vmatpush.msra.mxu0 0.0
    %5989 = vmatpush.msra.mxu0 0.0
    %5990 = vmatpush.msra.mxu0 0.0
    %5991 = vmatpush.msra.mxu0 0.0
    %5992 = vmatpush.msra.mxu0 0.0
    %5993 = vmatpush.msra.mxu0 0.0
    %5994 = vmatpush.msra.mxu0 0.0
    %5995 = vmatpush.msra.mxu0 0.0
    %5996 = vmatpush.msra.mxu0 0.0
    %5997 = vmatpush.msra.mxu0 0.0
    %5998 = vmatpush.msra.mxu0 %v5204
    %5999 = vmatpush.msra.mxu0 %v5203
    %6000 = vmatmul.f32.gmra.mxu0 %v5979
    %v6001 = vpop.f32.mrf.mxu0
    %v6002 = vadd.f32 0.0, %v6001
    %6003 = vmatmul.f32.gmra.mxu0 %v5982
    %v6004 = vpop.f32.mrf.mxu0
    %v6005 = vadd.f32 0.0, %v6004
    %6006 = vdwg.mxu0
    %v6007 = vadd.f32 %v5820, %v6002
    %v6008 = vadd.f32 %v5821, %v6005
    %v6009 = vsel %vm425, %v6007, 0.0
    %v6010 = vrot.slane %v6009, 4
    %v6011 = vadd.f32 %v6009, %v6010
    %v6012 = vrot.slane %v6011, 2
    %v6013 = vadd.f32 %v6011, %v6012
    %v6014 = vrot.slane %v6013, 1
    %v6015 = vadd.f32 %v6013, %v6014
    %v6016 = vsel %vm425, %v6008, 0.0
    %v6017 = vrot.slane %v6016, 4
    %v6018 = vadd.f32 %v6016, %v6017
    %v6019 = vrot.slane %v6018, 2
    %v6020 = vadd.f32 %v6018, %v6019
    %v6021 = vrot.slane %v6020, 1
    %v6022 = vadd.f32 %v6020, %v6021
    %v6023 = vrcp.pop 8.0
    %v6024 = vmul.f32 8.0, %v6023
    %v6025 = vsub.f32 1.0, %v6024
    %v6026 = vmul.f32 %v6023, %v6025
    %v6027 = vadd.f32 %v6023, %v6026
    %vm6028 = vweird.f32 %v6023
    %v6029 = vsel %vm6028, %v6023, %v6027
    %v6030 = vmul.f32 %v6015, %v6029
    %v6031 = vmul.f32 %v6022, %v6029
    %v6032 = vld [vmem:[#allocation5] sm:$0xff]
    %v6033 = vld [vmem:[#allocation5 + $0x8] sm:$0xff]
    %v6034 = vld [vmem:[#allocation5 + $0x10] sm:$0xff]
    %v6035 = vld [vmem:[#allocation5 + $0x18] sm:$0xff]
    %v6036 = vld [vmem:[#allocation5 + $0x20] sm:$0xff]
    %v6037 = vld [vmem:[#allocation5 + $0x28] sm:$0xff]
    %v6038 = vld [vmem:[#allocation5 + $0x30] sm:$0xff]
    %v6039 = vld [vmem:[#allocation5 + $0x38] sm:$0xff]
    %v6040 = vld [vmem:[%s20] sm:$0x1]
    %v6042 = vperm.slane %v6040, 0
    %v6046 = vsel %vm1523, %v6031, %v6030
    %v6047 = vsel %vm425, %v6046, 0
    %6049 = vmatpush.msra.mxu0 0.0
    %6050 = vmatpush.msra.mxu0 0.0
    %6051 = vmatpush.msra.mxu0 0.0
    %6052 = vmatpush.msra.mxu0 0.0
    %6053 = vmatpush.msra.mxu0 0.0
    %6054 = vmatpush.msra.mxu0 0.0
    %6055 = vmatpush.msra.mxu0 0.0
    %6056 = vmatpush.msra.mxu0 0.0
    %6057 = vmatpush.msra.mxu0 %v6039
    %6058 = vmatpush.msra.mxu0 %v6038
    %6059 = vmatpush.msra.mxu0 %v6037
    %6060 = vmatpush.msra.mxu0 %v6036
    %6061 = vmatpush.msra.mxu0 %v6035
    %6062 = vmatpush.msra.mxu0 %v6034
    %6063 = vmatpush.msra.mxu0 %v6033
    %6064 = vmatpush.msra.mxu0 %v6032
    %6065 = vmatmul.f32.gmra.mxu0 %v6047
    %v6066 = vpop.f32.mrf.mxu0
    %v6067 = vadd.f32 %v6042, %v6066
    %6068 = vdwg.mxu0
    %v6069 = vmul.f32 %v6067, 0.5
    %v6070 = vmul.f32 %v6067, 0.70710677
    %v6071 = vand.u32 2147483647, %v6070
    %v6072 = vmul.f32 %v6071, 0.3275911
    %v6073 = vadd.f32 %v6072, 1.0
    %v6074 = vrcp.pop %v6073
    %v6075 = vmul.f32 %v6073, %v6074
    %v6076 = vsub.f32 1.0, %v6075
    %v6077 = vmul.f32 %v6074, %v6076
    %v6078 = vadd.f32 %v6074, %v6077
    %vm6079 = vweird.f32 %v6073
    %vm6080 = vweird.f32 %v6074
    %vm6081 = vmor %vm6079, %vm6080
    %v6082 = vsel %vm6081, %v6074, %v6078
    %v6083 = vand.u32 2147483647, %v6073
    %vm6084 = vcmp.eq.f32.partialorder %v6083, 8.507059e+37
    %v6085 = vand.u32 %v6073, 2147483648
    %v6086 = vor.u32 1.1754944e-38, %v6085
    %v6087 = vsel %vm6084, %v6086, %v6082
    %v6088 = vmul.f32 1.0, %v6087
    %v6089 = vmul.f32 %v6088, 1.0614054
    %v6090 = vadd.f32 %v6089, -1.4531521
    %v6091 = vmul.f32 %v6090, %v6088
    %v6092 = vadd.f32 %v6091, 1.4214138
    %v6093 = vmul.f32 %v6092, %v6088
    %v6094 = vadd.f32 %v6093, -0.28449672
    %v6095 = vmul.f32 %v6094, %v6088
    %v6096 = vadd.f32 %v6095, 0.2548296
    %v6097 = vmul.f32 %v6096, %v6088
    %v6098 = vsub.f32 0.0, %v6071
    %v6099 = vmul.f32 %v6098, %v6071
    %v6100 = vmul.f32 %v6099, 1.442695
    %v6101 = vpow.pop %v6100
    %v6102 = vmul.f32 %v6097, %v6101
    %v6103 = vsub.f32 1.0, %v6102
    %vm6104 = vcmp.lt.f32.partialorder %v6070, 0.0
    %v6105 = vsub.f32 0.0, %v6103
    %v6106 = vsel %vm6104, %v6105, %v6103
    %v6107 = vadd.f32 %v6106, 1.0
    %v6108 = vmul.f32 %v6069, %v6107
    %v6109 = vld [vmem:[#allocation7] sm:$0xff]
    %v6110 = vld [vmem:[#allocation7 + $0x8] sm:$0xff]
    %v6111 = vld [vmem:[#allocation7 + $0x10] sm:$0xff]
    %v6112 = vld [vmem:[#allocation7 + $0x18] sm:$0xff]
    %v6113 = vld [vmem:[#allocation7 + $0x20] sm:$0xff]
    %v6114 = vld [vmem:[#allocation7 + $0x28] sm:$0xff]
    %v6115 = vld [vmem:[#allocation7 + $0x30] sm:$0xff]
    %v6116 = vld [vmem:[#allocation7 + $0x38] sm:$0xff]
    %v6117 = vld [vmem:[%s22] sm:$0x1]
    %v6119 = vperm.slane %v6117, 0
    %v6122 = vsel %vm425, %v6108, 0
    %6124 = vmatpush.msra.mxu0 0.0
    %6125 = vmatpush.msra.mxu0 0.0
    %6126 = vmatpush.msra.mxu0 0.0
    %6127 = vmatpush.msra.mxu0 0.0
    %6128 = vmatpush.msra.mxu0 0.0
    %6129 = vmatpush.msra.mxu0 0.0
    %6130 = vmatpush.msra.mxu0 0.0
    %6131 = vmatpush.msra.mxu0 0.0
    %6132 = vmatpush.msra.mxu0 %v6116
    %6133 = vmatpush.msra.mxu0 %v6115
    %6134 = vmatpush.msra.mxu0 %v6114
    %6135 = vmatpush.msra.mxu0 %v6113
    %6136 = vmatpush.msra.mxu0 %v6112
    %6137 = vmatpush.msra.mxu0 %v6111
    %6138 = vmatpush.msra.mxu0 %v6110
    %6139 = vmatpush.msra.mxu0 %v6109
    %6140 = vmatmul.f32.gmra.mxu0 %v6122
    %v6141 = vpop.f32.mrf.mxu0
    %v6142 = vadd.f32 %v6119, %v6141
    %6143 = vdwg.mxu0
    %v6144 = vmul.f32 %v6142, 0.5
    %v6145 = vmul.f32 %v6142, 0.70710677
    %v6146 = vand.u32 2147483647, %v6145
    %v6147 = vmul.f32 %v6146, 0.3275911
    %v6148 = vadd.f32 %v6147, 1.0
    %v6149 = vrcp.pop %v6148
    %v6150 = vmul.f32 %v6148, %v6149
    %v6151 = vsub.f32 1.0, %v6150
    %v6152 = vmul.f32 %v6149, %v6151
    %v6153 = vadd.f32 %v6149, %v6152
    %vm6154 = vweird.f32 %v6148
    %vm6155 = vweird.f32 %v6149
    %vm6156 = vmor %vm6154, %vm6155
    %v6157 = vsel %vm6156, %v6149, %v6153
    %v6158 = vand.u32 2147483647, %v6148
    %vm6159 = vcmp.eq.f32.partialorder %v6158, 8.507059e+37
    %v6160 = vand.u32 %v6148, 2147483648
    %v6161 = vor.u32 1.1754944e-38, %v6160
    %v6162 = vsel %vm6159, %v6161, %v6157
    %v6163 = vmul.f32 1.0, %v6162
    %v6164 = vmul.f32 %v6163, 1.0614054
    %v6165 = vadd.f32 %v6164, -1.4531521
    %v6166 = vmul.f32 %v6165, %v6163
    %v6167 = vadd.f32 %v6166, 1.4214138
    %v6168 = vmul.f32 %v6167, %v6163
    %v6169 = vadd.f32 %v6168, -0.28449672
    %v6170 = vmul.f32 %v6169, %v6163
    %v6171 = vadd.f32 %v6170, 0.2548296
    %v6172 = vmul.f32 %v6171, %v6163
    %v6173 = vsub.f32 0.0, %v6146
    %v6174 = vmul.f32 %v6173, %v6146
    %v6175 = vmul.f32 %v6174, 1.442695
    %v6176 = vpow.pop %v6175
    %v6177 = vmul.f32 %v6172, %v6176
    %v6178 = vsub.f32 1.0, %v6177
    %vm6179 = vcmp.lt.f32.partialorder %v6145, 0.0
    %v6180 = vsub.f32 0.0, %v6178
    %v6181 = vsel %vm6179, %v6180, %v6178
    %v6182 = vadd.f32 %v6181, 1.0
    %v6183 = vmul.f32 %v6144, %v6182
    %v6184 = vld [vmem:[%s23] sm:$0xff]
    %v6185 = vld [vmem:[%s23 + $0x8] sm:$0xff]
    %v6186 = vld [vmem:[%s23 + $0x10] sm:$0xff]
    %v6187 = vld [vmem:[%s23 + $0x18] sm:$0xff]
    %v6188 = vld [vmem:[%s23 + $0x20] sm:$0xff]
    %v6189 = vld [vmem:[%s23 + $0x28] sm:$0xff]
    %v6190 = vld [vmem:[%s23 + $0x30] sm:$0xff]
    %v6191 = vld [vmem:[%s23 + $0x38] sm:$0xff]
    %v6192 = vld [vmem:[%s24] sm:$0x1]
    %v6194 = vperm.slane %v6192, 0
    %v6197 = vsel %vm425, %v6183, 0
    %6199 = vmatpush.msra.mxu0 0.0
    %6200 = vmatpush.msra.mxu0 0.0
    %6201 = vmatpush.msra.mxu0 0.0
    %6202 = vmatpush.msra.mxu0 0.0
    %6203 = vmatpush.msra.mxu0 0.0
    %6204 = vmatpush.msra.mxu0 0.0
    %6205 = vmatpush.msra.mxu0 0.0
    %6206 = vmatpush.msra.mxu0 0.0
    %6207 = vmatpush.msra.mxu0 %v6191
    %6208 = vmatpush.msra.mxu0 %v6190
    %6209 = vmatpush.msra.mxu0 %v6189
    %6210 = vmatpush.msra.mxu0 %v6188
    %6211 = vmatpush.msra.mxu0 %v6187
    %6212 = vmatpush.msra.mxu0 %v6186
    %6213 = vmatpush.msra.mxu0 %v6185
    %6214 = vmatpush.msra.mxu0 %v6184
    %6215 = vmatmul.f32.gmra.mxu0 %v6197
    %v6216 = vpop.f32.mrf.mxu0
    %v6217 = vadd.f32 %v6194, %v6216
    %6218 = vdwg.mxu0
    %vm6219 = vcmask 33792
    %6220 = vst.msk [vmem:[#allocation8] sm:$0x3] %vm6219, %v6217
    // Predicated region
    $region114: #{model_forward.1} parent=1 // pred_check
      _
    $region115: #{model_forward.1} parent=1 // pred_check_branch
      %6222 = sbr.rel (0) target = $region117
    $region116: #{model_forward.1} parent=1 // pred_region
      %6224 = vsyncadd [#allocation4], 0
      %s6226 = sshll.u32 [#allocation8], 4
      %s6227 = int_to_ptr.vmem [resolvable:$true] %s6226
      %s6228 = sshll.u32 %s25, 4
      %s6229 = int_to_ptr.hbm [resolvable:$true] %s6228
      %6231 = dma.vmem_to_hbm [thread:$0]  %s6227, 32, %s6229, [#allocation4]
    $region117: #{model_forward.1} parent=1 // pred_fallthru
      _
    // Predicated region
    $region118: #{model_forward.1} parent=1 // pred_check
      _
    $region119: #{model_forward.1} parent=1 // pred_check_branch
      %6233 = sbr.rel (0) target = $region121
    $region120: #{model_forward.1} parent=1 // pred_region
      %6235 = dma.done [#allocation4], 32
    $region121: #{model_forward.1} parent=1 // pred_fallthru
      _
    %6236 = vsyncpa [#allocation3], 1
    %6237 = vsyncpa [#allocation6], 1
    %6238 = vsyncpa [#allocation4], 1

</llo_original>
